<compile_context>
chip_gen: v7x
topology: tpu7x:2x2x1
jax: 0.10.0
libtpu: 0.0.40
codegen_flags: <defaults>
</compile_context>

<pallas_src>
import numpy as np
import jax
import jax.numpy as jnp
from jax import lax
from jax.experimental import pallas as pl
from jax.experimental.pallas import tpu as pltpu

TB = 8  # images per grid step (multiple of 8 keeps every sublane slice aligned)


# ------------------------------ fused kernel --------------------------------

def fused_net_kernel(a1_ref, w1b_ref, b1t_ref, w2b_ref, b2t_ref,
                     fc1w_ref, fc1b_ref, fc2w_ref, fc2b_ref, out_ref):
    f32 = jnp.float32
    ne = 12 * TB  # rows per H-parity in the conv1 LHS

    # ---- conv1 (banded matmul) + ReLU + 2x2 max-pool -> s1: [12*TB, 384] ----
    m = jnp.dot(a1_ref[0], w1b_ref[...], preferred_element_type=f32)  # [2*ne, 768]
    cand = jnp.maximum(jnp.maximum(m[:ne, :384], m[:ne, 384:]),
                       jnp.maximum(m[ne:, :384], m[ne:, 384:]))
    s1 = jnp.maximum(cand + b1t_ref[...], 0.0)     # rows = (ph, b), lanes = (pw, ic)

    # ---- conv2 (banded matmul per kh) + ReLU + 2x2 max-pool, fused with fc1 ----
    w2k = [w2b_ref[kh] for kh in range(4)]          # each [384, 512]
    h_acc = jnp.zeros((TB, 128), f32)
    for qh in range(4):
        acc = jnp.zeros((2 * TB, 512), f32)         # rows: dh=0 (first TB) / dh=1
        for kh in range(4):
            r0 = (2 * qh + kh) * TB
            acc = acc + jnp.dot(s1[r0:r0 + 2 * TB, :], w2k[kh],
                                preferred_element_type=f32)
        acc_e, acc_o = acc[:TB], acc[TB:]
        mm = jnp.maximum(jnp.maximum(acc_e[:, :256], acc_e[:, 256:]),
                         jnp.maximum(acc_o[:, :256], acc_o[:, 256:]))
        p2q = jnp.maximum(mm + b2t_ref[...], 0.0)               # [TB, 256]
        h_acc = h_acc + jnp.dot(p2q, fc1w_ref[qh],
                                preferred_element_type=f32)     # fc1 partial sum
    h = jnp.maximum(h_acc + fc1b_ref[...], 0.0)                 # [TB, 128]
    # TODO(synk): Dropout(0.25)/Dropout(0.5) are inference-mode identities here.

    # ---- fc2 (zero-padded to 128 lanes) + log-softmax ----
    logits = jnp.dot(h, fc2w_ref[...], preferred_element_type=f32) + fc2b_ref[...]
    lane = lax.broadcasted_iota(jnp.int32, logits.shape, 1)
    logits = jnp.where(lane < 10, logits, -1e30)
    mx = jnp.max(logits, axis=-1, keepdims=True)
    s = logits - mx
    lse = jnp.log(jnp.sum(jnp.exp(s), axis=-1, keepdims=True))
    out_ref[...] = (s - lse).astype(out_ref.dtype)


# ------------------------- parameter initialization -------------------------

def init_torch_params(key):
    """Parameters in PyTorch layout (Conv2d OIHW, Linear [out, in])."""
    ks = jax.random.split(key, 8)

    def u(k, shape, fan_in):
        bound = 1.0 / (fan_in ** 0.5)
        return jax.random.uniform(k, shape, jnp.float32, -bound, bound)

    return {
        "conv1_w": u(ks[0], (32, 1, 4, 4), 1 * 16),
        "conv1_b": u(ks[1], (32,), 1 * 16),
        "conv2_w": u(ks[2], (64, 32, 4, 4), 32 * 16),
        "conv2_b": u(ks[3], (64,), 32 * 16),
        "fc1_w": u(ks[4], (128, 1024), 1024),
        "fc1_b": u(ks[5], (128,), 1024),
        "fc2_w": u(ks[6], (10, 128), 128),
        "fc2_b": u(ks[7], (10,), 128),
    }


def prepare_params(tp):
    """One-time re-layout of torch-style weights into kernel-ready operands."""
    W1, B1 = tp["conv1_w"], tp["conv1_b"]
    W2, B2 = tp["conv2_w"], tp["conv2_b"]
    FC1, FB1 = tp["fc1_w"], tp["fc1_b"]
    FC2, FB2 = tp["fc2_w"], tp["fc2_b"]

    # conv1 banded weight: rows (kh, iw) = 112, cols (dw, pw, oc) = 2*12*32 = 768
    kh = np.arange(4).reshape(4, 1, 1, 1, 1)
    iw = np.arange(28).reshape(1, 28, 1, 1, 1)
    dw = np.arange(2).reshape(1, 1, 2, 1, 1)
    pw = np.arange(12).reshape(1, 1, 1, 12, 1)
    oc = np.arange(32).reshape(1, 1, 1, 1, 32)
    kw = iw - (2 * pw + dw)
    valid = (kw >= 0) & (kw < 4)
    w1b = jnp.where(valid, W1[oc, 0, kh, np.clip(kw, 0, 3)], 0.0).reshape(112, 768)

    # conv2 banded weights per kh: rows (iw, ic) = 384, cols (dw, qw, oc2) = 512
    kh = np.arange(4).reshape(4, 1, 1, 1, 1, 1)
    iw = np.arange(12).reshape(1, 12, 1, 1, 1, 1)
    ic = np.arange(32).reshape(1, 1, 32, 1, 1, 1)
    dw = np.arange(2).reshape(1, 1, 1, 2, 1, 1)
    qw = np.arange(4).reshape(1, 1, 1, 1, 4, 1)
    oc2 = np.arange(64).reshape(1, 1, 1, 1, 1, 64)
    kw = iw - (2 * qw + dw)
    valid = (kw >= 0) & (kw < 4)
    w2b = jnp.where(valid, W2[oc2, ic, kh, np.clip(kw, 0, 3)], 0.0).reshape(4, 384, 512)

    # fc1: absorb the NCHW flatten permutation (torch order f = oc2*16 + qh*4 + qw,
    # kernel order g = qh*256 + qw*64 + oc2) and pre-transpose to [in, out].
    qh = np.arange(4).reshape(4, 1, 1)
    qw = np.arange(4).reshape(1, 4, 1)
    oc2 = np.arange(64).reshape(1, 1, 64)
    torch_f = (oc2 * 16 + qh * 4 + qw).reshape(1024)
    fc1w = jnp.transpose(FC1[:, torch_f]).reshape(4, 256, 128)

    # fc2: pre-transpose and zero-pad N 10 -> 128 for a lane-dense output store.
    fc2w = jnp.zeros((128, 128), jnp.float32).at[:, :10].set(jnp.transpose(FC2))
    fc2b = jnp.zeros((1, 128), jnp.float32).at[0, :10].set(FB2)

    return {
        "w1b": w1b,
        "b1t": jnp.tile(B1, 12).reshape(1, 384),
        "w2b": w2b,
        "b2t": jnp.tile(B2, 4).reshape(1, 256),
        "fc1w": fc1w,
        "fc1b": FB1.reshape(1, 128),
        "fc2w": fc2w,
        "fc2b": fc2b,
    }


# ---------------------------------- forward ----------------------------------

@jax.jit
def net_forward(kp, x):
    """x: [B, 1, 28, 28] float32 (NCHW, like the PyTorch module)."""
    B = x.shape[0]
    img = x.reshape(B, 28, 28).astype(jnp.float32)
    Bp = ((B + TB - 1) // TB) * TB
    if Bp != B:
        img = jnp.pad(img, ((0, Bp - B), (0, 0), (0, 0)))
    nbt = Bp // TB

    # conv1 LHS: for each H-parity dh, rows (ph, b) with K = (kh, iw);
    # the two parities are stacked along rows -> [nbt, 2*12*TB, 112].
    def half(dh):
        cols = [img[:, dh + kh: dh + kh + 24: 2, :] for kh in range(4)]
        a = jnp.concatenate(cols, axis=-1)                    # [Bp, 12, 112]
        a = jnp.transpose(a, (1, 0, 2))                       # [12, Bp, 112]
        a = a.reshape(12, nbt, TB, 112).transpose(1, 0, 2, 3)
        return a.reshape(nbt, 12 * TB, 112)

    a1 = jnp.concatenate([half(0), half(1)], axis=1)          # [nbt, 192, 112]

    out = pl.pallas_call(
        fused_net_kernel,
        out_shape=jax.ShapeDtypeStruct((Bp, 128), jnp.float32),
        grid=(nbt,),
        in_specs=[
            pl.BlockSpec((1, 2 * 12 * TB, 112), lambda i: (i, 0, 0)),  # a1
            pl.BlockSpec((112, 768), lambda i: (0, 0)),                # w1b
            pl.BlockSpec((1, 384), lambda i: (0, 0)),                  # b1t
            pl.BlockSpec((4, 384, 512), lambda i: (0, 0, 0)),          # w2b
            pl.BlockSpec((1, 256), lambda i: (0, 0)),                  # b2t
            pl.BlockSpec((4, 256, 128), lambda i: (0, 0, 0)),          # fc1w
            pl.BlockSpec((1, 128), lambda i: (0, 0)),                  # fc1b
            pl.BlockSpec((128, 128), lambda i: (0, 0)),                # fc2w
            pl.BlockSpec((1, 128), lambda i: (0, 0)),                  # fc2b
        ],
        out_specs=pl.BlockSpec((TB, 128), lambda i: (i, 0)),
        compiler_params=pltpu.CompilerParams(
            dimension_semantics=("parallel",),
            vmem_limit_bytes=32 * 1024 * 1024),
    )(a1, kp["w1b"], kp["b1t"], kp["w2b"], kp["b2t"],
      kp["fc1w"], kp["fc1b"], kp["fc2w"], kp["fc2b"])

    return out[:B, :10]


# ----------------------------- pure-JAX reference ----------------------------

def net_reference(tp, x):
    dn = ("NCHW", "OIHW", "NCHW")
    y = lax.conv_general_dilated(x, tp["conv1_w"], (1, 1), "VALID",
                                 dimension_numbers=dn)
    y = jnp.maximum(y + tp["conv1_b"][None, :, None, None], 0.0)
    y = lax.reduce_window(y, -jnp.inf, lax.max, (1, 1, 2, 2), (1, 1, 2, 2), "VALID")
    y = lax.conv_general_dilated(y, tp["conv2_w"], (1, 1), "VALID",
                                 dimension_numbers=dn)
    y = jnp.maximum(y + tp["conv2_b"][None, :, None, None], 0.0)
    y = lax.reduce_window(y, -jnp.inf, lax.max, (1, 1, 2, 2), (1, 1, 2, 2), "VALID")
    y = y.reshape(y.shape[0], -1)
    y = jnp.maximum(y @ tp["fc1_w"].T + tp["fc1_b"], 0.0)
    y = y @ tp["fc2_w"].T + tp["fc2_b"]
    return jax.nn.log_softmax(y, axis=-1)


if __name__ == "__main__":
    key = jax.random.PRNGKey(0)
    pkey, xkey = jax.random.split(key)
    tparams = init_torch_params(pkey)
    kparams = prepare_params(tparams)
    x = jax.random.normal(xkey, (2, 1, 28, 28), jnp.float32)  # MNIST-shaped input

    out = jax.block_until_ready(net_forward(kparams, x))
    assert out.shape == (2, 10)
    assert bool(jnp.all(jnp.isfinite(out)))
    # log-softmax rows should exp-sum to 1
    assert bool(jnp.allclose(jnp.sum(jnp.exp(out), axis=1), 1.0, atol=1e-4))
    # numerical check against a plain-JAX reference of the same module
    ref = net_reference(tparams, x)
    err = float(jnp.max(jnp.abs(out - ref)))
    assert err < 1e-1, f"mismatch vs reference: {err}"
    print("KERNEL_OK")
</pallas_src>

<mosaic_0001>
module attributes {stable_mosaic.version = 11 : i64} {
  func.func @fused_net_kernel(%arg0: i32, %arg1: memref<1x192x112xf32, #tpu.memory_space<vmem>>, %arg2: memref<112x768xf32, #tpu.memory_space<vmem>>, %arg3: memref<1x384xf32, #tpu.memory_space<vmem>>, %arg4: memref<4x384x512xf32, #tpu.memory_space<vmem>>, %arg5: memref<1x256xf32, #tpu.memory_space<vmem>>, %arg6: memref<4x256x128xf32, #tpu.memory_space<vmem>>, %arg7: memref<1x128xf32, #tpu.memory_space<vmem>>, %arg8: memref<128x128xf32, #tpu.memory_space<vmem>>, %arg9: memref<1x128xf32, #tpu.memory_space<vmem>>, %arg10: memref<8x128xf32, #tpu.memory_space<vmem>>) attributes {dimension_semantics = [#tpu.dimension_semantics<parallel>], iteration_bounds = array<i64: 1>, scalar_prefetch = 0 : i64, scratch_operands = 0 : i64, tpu.core_type = #tpu.core_type<tc>, window_params = [{transform_indices = @transform_0, window_bounds = array<i64: 1, 192, 112>}, {pipeline_mode = #tpu.pipeline_mode<synchronous>, transform_indices = @transform_1, window_bounds = array<i64: 112, 768>}, {pipeline_mode = #tpu.pipeline_mode<synchronous>, transform_indices = @transform_2, window_bounds = array<i64: 1, 384>}, {pipeline_mode = #tpu.pipeline_mode<synchronous>, transform_indices = @transform_3, window_bounds = array<i64: 4, 384, 512>}, {pipeline_mode = #tpu.pipeline_mode<synchronous>, transform_indices = @transform_4, window_bounds = array<i64: 1, 256>}, {pipeline_mode = #tpu.pipeline_mode<synchronous>, transform_indices = @transform_5, window_bounds = array<i64: 4, 256, 128>}, {pipeline_mode = #tpu.pipeline_mode<synchronous>, transform_indices = @transform_6, window_bounds = array<i64: 1, 128>}, {pipeline_mode = #tpu.pipeline_mode<synchronous>, transform_indices = @transform_7, window_bounds = array<i64: 128, 128>}, {pipeline_mode = #tpu.pipeline_mode<synchronous>, transform_indices = @transform_8, window_bounds = array<i64: 1, 128>}, {transform_indices = @transform_9, window_bounds = array<i64: 8, 128>}]} {
    %c0 = arith.constant 0 : index
    %c0_0 = arith.constant 0 : index
    %c0_1 = arith.constant 0 : index
    %0 = vector.load %arg1[%c0, %c0_0, %c0_1] : memref<1x192x112xf32, #tpu.memory_space<vmem>>, vector<1x192x112xf32>
    %1 = vector.shape_cast %0 : vector<1x192x112xf32> to vector<192x112xf32>
    %c0_2 = arith.constant 0 : index
    %c0_3 = arith.constant 0 : index
    %2 = vector.load %arg2[%c0_2, %c0_3] : memref<112x768xf32, #tpu.memory_space<vmem>>, vector<112x768xf32>
    %cst = arith.constant dense<0.000000e+00> : vector<192x768xf32>
    %3 = tpu.matmul %1, %2, %cst {dimension_numbers = #tpu.dot_dimension_numbers<[1], [0], [0], [1], [0, 0, 1, 1], [], []>} : vector<192x112xf32>, vector<112x768xf32>, vector<192x768xf32> -> vector<192x768xf32>
    %4 = vector.extract_strided_slice %3 {offsets = [0, 0], sizes = [96, 384], strides = [1, 1]} : vector<192x768xf32> to vector<96x384xf32>
    %5 = vector.extract_strided_slice %3 {offsets = [0, 384], sizes = [96, 384], strides = [1, 1]} : vector<192x768xf32> to vector<96x384xf32>
    %6 = arith.maximumf %4, %5 : vector<96x384xf32>
    %7 = vector.extract_strided_slice %3 {offsets = [96, 0], sizes = [96, 384], strides = [1, 1]} : vector<192x768xf32> to vector<96x384xf32>
    %8 = vector.extract_strided_slice %3 {offsets = [96, 384], sizes = [96, 384], strides = [1, 1]} : vector<192x768xf32> to vector<96x384xf32>
    %9 = arith.maximumf %7, %8 : vector<96x384xf32>
    %10 = arith.maximumf %6, %9 : vector<96x384xf32>
    %c0_4 = arith.constant 0 : index
    %c0_5 = arith.constant 0 : index
    %11 = vector.load %arg3[%c0_4, %c0_5] : memref<1x384xf32, #tpu.memory_space<vmem>>, vector<1x384xf32>
    %12 = vector.broadcast %11 : vector<1x384xf32> to vector<96x384xf32>
    %13 = arith.addf %10, %12 : vector<96x384xf32>
    %cst_6 = arith.constant 0.000000e+00 : f32
    %14 = vector.broadcast %cst_6 : f32 to vector<96x384xf32>
    %15 = arith.maximumf %13, %14 : vector<96x384xf32>
    %c0_7 = arith.constant 0 : index
    %c0_8 = arith.constant 0 : index
    %c0_9 = arith.constant 0 : index
    %16 = vector.load %arg4[%c0_7, %c0_8, %c0_9] : memref<4x384x512xf32, #tpu.memory_space<vmem>>, vector<1x384x512xf32>
    %17 = vector.shape_cast %16 : vector<1x384x512xf32> to vector<384x512xf32>
    %c1 = arith.constant 1 : index
    %c0_10 = arith.constant 0 : index
    %c0_11 = arith.constant 0 : index
    %18 = vector.load %arg4[%c1, %c0_10, %c0_11] : memref<4x384x512xf32, #tpu.memory_space<vmem>>, vector<1x384x512xf32>
    %19 = vector.shape_cast %18 : vector<1x384x512xf32> to vector<384x512xf32>
    %c2 = arith.constant 2 : index
    %c0_12 = arith.constant 0 : index
    %c0_13 = arith.constant 0 : index
    %20 = vector.load %arg4[%c2, %c0_12, %c0_13] : memref<4x384x512xf32, #tpu.memory_space<vmem>>, vector<1x384x512xf32>
    %21 = vector.shape_cast %20 : vector<1x384x512xf32> to vector<384x512xf32>
    %c3 = arith.constant 3 : index
    %c0_14 = arith.constant 0 : index
    %c0_15 = arith.constant 0 : index
    %22 = vector.load %arg4[%c3, %c0_14, %c0_15] : memref<4x384x512xf32, #tpu.memory_space<vmem>>, vector<1x384x512xf32>
    %23 = vector.shape_cast %22 : vector<1x384x512xf32> to vector<384x512xf32>
    %cst_16 = arith.constant 0.000000e+00 : f32
    %24 = vector.broadcast %cst_16 : f32 to vector<8x128xf32>
    %cst_17 = arith.constant 0.000000e+00 : f32
    %25 = vector.broadcast %cst_17 : f32 to vector<16x512xf32>
    %26 = vector.extract_strided_slice %15 {offsets = [0, 0], sizes = [16, 384], strides = [1, 1]} : vector<96x384xf32> to vector<16x384xf32>
    %cst_18 = arith.constant dense<0.000000e+00> : vector<16x512xf32>
    %27 = tpu.matmul %26, %17, %cst_18 {dimension_numbers = #tpu.dot_dimension_numbers<[1], [0], [0], [1], [0, 0, 1, 1], [], []>} : vector<16x384xf32>, vector<384x512xf32>, vector<16x512xf32> -> vector<16x512xf32>
    %28 = arith.addf %25, %27 : vector<16x512xf32>
    %29 = vector.extract_strided_slice %15 {offsets = [8, 0], sizes = [16, 384], strides = [1, 1]} : vector<96x384xf32> to vector<16x384xf32>
    %cst_19 = arith.constant dense<0.000000e+00> : vector<16x512xf32>
    %30 = tpu.matmul %29, %19, %cst_19 {dimension_numbers = #tpu.dot_dimension_numbers<[1], [0], [0], [1], [0, 0, 1, 1], [], []>} : vector<16x384xf32>, vector<384x512xf32>, vector<16x512xf32> -> vector<16x512xf32>
    %31 = arith.addf %28, %30 : vector<16x512xf32>
    %32 = vector.extract_strided_slice %15 {offsets = [16, 0], sizes = [16, 384], strides = [1, 1]} : vector<96x384xf32> to vector<16x384xf32>
    %cst_20 = arith.constant dense<0.000000e+00> : vector<16x512xf32>
    %33 = tpu.matmul %32, %21, %cst_20 {dimension_numbers = #tpu.dot_dimension_numbers<[1], [0], [0], [1], [0, 0, 1, 1], [], []>} : vector<16x384xf32>, vector<384x512xf32>, vector<16x512xf32> -> vector<16x512xf32>
    %34 = arith.addf %31, %33 : vector<16x512xf32>
    %35 = vector.extract_strided_slice %15 {offsets = [24, 0], sizes = [16, 384], strides = [1, 1]} : vector<96x384xf32> to vector<16x384xf32>
    %cst_21 = arith.constant dense<0.000000e+00> : vector<16x512xf32>
    %36 = tpu.matmul %35, %23, %cst_21 {dimension_numbers = #tpu.dot_dimension_numbers<[1], [0], [0], [1], [0, 0, 1, 1], [], []>} : vector<16x384xf32>, vector<384x512xf32>, vector<16x512xf32> -> vector<16x512xf32>
    %37 = arith.addf %34, %36 : vector<16x512xf32>
    %38 = vector.extract_strided_slice %37 {offsets = [0, 0], sizes = [8, 512], strides = [1, 1]} : vector<16x512xf32> to vector<8x512xf32>
    %39 = vector.extract_strided_slice %37 {offsets = [8, 0], sizes = [8, 512], strides = [1, 1]} : vector<16x512xf32> to vector<8x512xf32>
    %40 = vector.extract_strided_slice %38 {offsets = [0, 0], sizes = [8, 256], strides = [1, 1]} : vector<8x512xf32> to vector<8x256xf32>
    %41 = vector.extract_strided_slice %38 {offsets = [0, 256], sizes = [8, 256], strides = [1, 1]} : vector<8x512xf32> to vector<8x256xf32>
    %42 = arith.maximumf %40, %41 : vector<8x256xf32>
    %43 = vector.extract_strided_slice %39 {offsets = [0, 0], sizes = [8, 256], strides = [1, 1]} : vector<8x512xf32> to vector<8x256xf32>
    %44 = vector.extract_strided_slice %39 {offsets = [0, 256], sizes = [8, 256], strides = [1, 1]} : vector<8x512xf32> to vector<8x256xf32>
    %45 = arith.maximumf %43, %44 : vector<8x256xf32>
    %46 = arith.maximumf %42, %45 : vector<8x256xf32>
    %c0_22 = arith.constant 0 : index
    %c0_23 = arith.constant 0 : index
    %47 = vector.load %arg5[%c0_22, %c0_23] : memref<1x256xf32, #tpu.memory_space<vmem>>, vector<1x256xf32>
    %48 = vector.broadcast %47 : vector<1x256xf32> to vector<8x256xf32>
    %49 = arith.addf %46, %48 : vector<8x256xf32>
    %cst_24 = arith.constant 0.000000e+00 : f32
    %50 = vector.broadcast %cst_24 : f32 to vector<8x256xf32>
    %51 = arith.maximumf %49, %50 : vector<8x256xf32>
    %c0_25 = arith.constant 0 : index
    %c0_26 = arith.constant 0 : index
    %c0_27 = arith.constant 0 : index
    %52 = vector.load %arg6[%c0_25, %c0_26, %c0_27] : memref<4x256x128xf32, #tpu.memory_space<vmem>>, vector<1x256x128xf32>
    %53 = vector.shape_cast %52 : vector<1x256x128xf32> to vector<256x128xf32>
    %cst_28 = arith.constant dense<0.000000e+00> : vector<8x128xf32>
    %54 = tpu.matmul %51, %53, %cst_28 {dimension_numbers = #tpu.dot_dimension_numbers<[1], [0], [0], [1], [0, 0, 1, 1], [], []>} : vector<8x256xf32>, vector<256x128xf32>, vector<8x128xf32> -> vector<8x128xf32>
    %55 = arith.addf %24, %54 : vector<8x128xf32>
    %cst_29 = arith.constant 0.000000e+00 : f32
    %56 = vector.broadcast %cst_29 : f32 to vector<16x512xf32>
    %57 = vector.extract_strided_slice %15 {offsets = [16, 0], sizes = [16, 384], strides = [1, 1]} : vector<96x384xf32> to vector<16x384xf32>
    %cst_30 = arith.constant dense<0.000000e+00> : vector<16x512xf32>
    %58 = tpu.matmul %57, %17, %cst_30 {dimension_numbers = #tpu.dot_dimension_numbers<[1], [0], [0], [1], [0, 0, 1, 1], [], []>} : vector<16x384xf32>, vector<384x512xf32>, vector<16x512xf32> -> vector<16x512xf32>
    %59 = arith.addf %56, %58 : vector<16x512xf32>
    %60 = vector.extract_strided_slice %15 {offsets = [24, 0], sizes = [16, 384], strides = [1, 1]} : vector<96x384xf32> to vector<16x384xf32>
    %cst_31 = arith.constant dense<0.000000e+00> : vector<16x512xf32>
    %61 = tpu.matmul %60, %19, %cst_31 {dimension_numbers = #tpu.dot_dimension_numbers<[1], [0], [0], [1], [0, 0, 1, 1], [], []>} : vector<16x384xf32>, vector<384x512xf32>, vector<16x512xf32> -> vector<16x512xf32>
    %62 = arith.addf %59, %61 : vector<16x512xf32>
    %63 = vector.extract_strided_slice %15 {offsets = [32, 0], sizes = [16, 384], strides = [1, 1]} : vector<96x384xf32> to vector<16x384xf32>
    %cst_32 = arith.constant dense<0.000000e+00> : vector<16x512xf32>
    %64 = tpu.matmul %63, %21, %cst_32 {dimension_numbers = #tpu.dot_dimension_numbers<[1], [0], [0], [1], [0, 0, 1, 1], [], []>} : vector<16x384xf32>, vector<384x512xf32>, vector<16x512xf32> -> vector<16x512xf32>
    %65 = arith.addf %62, %64 : vector<16x512xf32>
    %66 = vector.extract_strided_slice %15 {offsets = [40, 0], sizes = [16, 384], strides = [1, 1]} : vector<96x384xf32> to vector<16x384xf32>
    %cst_33 = arith.constant dense<0.000000e+00> : vector<16x512xf32>
    %67 = tpu.matmul %66, %23, %cst_33 {dimension_numbers = #tpu.dot_dimension_numbers<[1], [0], [0], [1], [0, 0, 1, 1], [], []>} : vector<16x384xf32>, vector<384x512xf32>, vector<16x512xf32> -> vector<16x512xf32>
    %68 = arith.addf %65, %67 : vector<16x512xf32>
    %69 = vector.extract_strided_slice %68 {offsets = [0, 0], sizes = [8, 512], strides = [1, 1]} : vector<16x512xf32> to vector<8x512xf32>
    %70 = vector.extract_strided_slice %68 {offsets = [8, 0], sizes = [8, 512], strides = [1, 1]} : vector<16x512xf32> to vector<8x512xf32>
    %71 = vector.extract_strided_slice %69 {offsets = [0, 0], sizes = [8, 256], strides = [1, 1]} : vector<8x512xf32> to vector<8x256xf32>
    %72 = vector.extract_strided_slice %69 {offsets = [0, 256], sizes = [8, 256], strides = [1, 1]} : vector<8x512xf32> to vector<8x256xf32>
    %73 = arith.maximumf %71, %72 : vector<8x256xf32>
    %74 = vector.extract_strided_slice %70 {offsets = [0, 0], sizes = [8, 256], strides = [1, 1]} : vector<8x512xf32> to vector<8x256xf32>
    %75 = vector.extract_strided_slice %70 {offsets = [0, 256], sizes = [8, 256], strides = [1, 1]} : vector<8x512xf32> to vector<8x256xf32>
    %76 = arith.maximumf %74, %75 : vector<8x256xf32>
    %77 = arith.maximumf %73, %76 : vector<8x256xf32>
    %c0_34 = arith.constant 0 : index
    %c0_35 = arith.constant 0 : index
    %78 = vector.load %arg5[%c0_34, %c0_35] : memref<1x256xf32, #tpu.memory_space<vmem>>, vector<1x256xf32>
    %79 = vector.broadcast %78 : vector<1x256xf32> to vector<8x256xf32>
    %80 = arith.addf %77, %79 : vector<8x256xf32>
    %cst_36 = arith.constant 0.000000e+00 : f32
    %81 = vector.broadcast %cst_36 : f32 to vector<8x256xf32>
    %82 = arith.maximumf %80, %81 : vector<8x256xf32>
    %c1_37 = arith.constant 1 : index
    %c0_38 = arith.constant 0 : index
    %c0_39 = arith.constant 0 : index
    %83 = vector.load %arg6[%c1_37, %c0_38, %c0_39] : memref<4x256x128xf32, #tpu.memory_space<vmem>>, vector<1x256x128xf32>
    %84 = vector.shape_cast %83 : vector<1x256x128xf32> to vector<256x128xf32>
    %cst_40 = arith.constant dense<0.000000e+00> : vector<8x128xf32>
    %85 = tpu.matmul %82, %84, %cst_40 {dimension_numbers = #tpu.dot_dimension_numbers<[1], [0], [0], [1], [0, 0, 1, 1], [], []>} : vector<8x256xf32>, vector<256x128xf32>, vector<8x128xf32> -> vector<8x128xf32>
    %86 = arith.addf %55, %85 : vector<8x128xf32>
    %cst_41 = arith.constant 0.000000e+00 : f32
    %87 = vector.broadcast %cst_41 : f32 to vector<16x512xf32>
    %88 = vector.extract_strided_slice %15 {offsets = [32, 0], sizes = [16, 384], strides = [1, 1]} : vector<96x384xf32> to vector<16x384xf32>
    %cst_42 = arith.constant dense<0.000000e+00> : vector<16x512xf32>
    %89 = tpu.matmul %88, %17, %cst_42 {dimension_numbers = #tpu.dot_dimension_numbers<[1], [0], [0], [1], [0, 0, 1, 1], [], []>} : vector<16x384xf32>, vector<384x512xf32>, vector<16x512xf32> -> vector<16x512xf32>
    %90 = arith.addf %87, %89 : vector<16x512xf32>
    %91 = vector.extract_strided_slice %15 {offsets = [40, 0], sizes = [16, 384], strides = [1, 1]} : vector<96x384xf32> to vector<16x384xf32>
    %cst_43 = arith.constant dense<0.000000e+00> : vector<16x512xf32>
    %92 = tpu.matmul %91, %19, %cst_43 {dimension_numbers = #tpu.dot_dimension_numbers<[1], [0], [0], [1], [0, 0, 1, 1], [], []>} : vector<16x384xf32>, vector<384x512xf32>, vector<16x512xf32> -> vector<16x512xf32>
    %93 = arith.addf %90, %92 : vector<16x512xf32>
    %94 = vector.extract_strided_slice %15 {offsets = [48, 0], sizes = [16, 384], strides = [1, 1]} : vector<96x384xf32> to vector<16x384xf32>
    %cst_44 = arith.constant dense<0.000000e+00> : vector<16x512xf32>
    %95 = tpu.matmul %94, %21, %cst_44 {dimension_numbers = #tpu.dot_dimension_numbers<[1], [0], [0], [1], [0, 0, 1, 1], [], []>} : vector<16x384xf32>, vector<384x512xf32>, vector<16x512xf32> -> vector<16x512xf32>
    %96 = arith.addf %93, %95 : vector<16x512xf32>
    %97 = vector.extract_strided_slice %15 {offsets = [56, 0], sizes = [16, 384], strides = [1, 1]} : vector<96x384xf32> to vector<16x384xf32>
    %cst_45 = arith.constant dense<0.000000e+00> : vector<16x512xf32>
    %98 = tpu.matmul %97, %23, %cst_45 {dimension_numbers = #tpu.dot_dimension_numbers<[1], [0], [0], [1], [0, 0, 1, 1], [], []>} : vector<16x384xf32>, vector<384x512xf32>, vector<16x512xf32> -> vector<16x512xf32>
    %99 = arith.addf %96, %98 : vector<16x512xf32>
    %100 = vector.extract_strided_slice %99 {offsets = [0, 0], sizes = [8, 512], strides = [1, 1]} : vector<16x512xf32> to vector<8x512xf32>
    %101 = vector.extract_strided_slice %99 {offsets = [8, 0], sizes = [8, 512], strides = [1, 1]} : vector<16x512xf32> to vector<8x512xf32>
    %102 = vector.extract_strided_slice %100 {offsets = [0, 0], sizes = [8, 256], strides = [1, 1]} : vector<8x512xf32> to vector<8x256xf32>
    %103 = vector.extract_strided_slice %100 {offsets = [0, 256], sizes = [8, 256], strides = [1, 1]} : vector<8x512xf32> to vector<8x256xf32>
    %104 = arith.maximumf %102, %103 : vector<8x256xf32>
    %105 = vector.extract_strided_slice %101 {offsets = [0, 0], sizes = [8, 256], strides = [1, 1]} : vector<8x512xf32> to vector<8x256xf32>
    %106 = vector.extract_strided_slice %101 {offsets = [0, 256], sizes = [8, 256], strides = [1, 1]} : vector<8x512xf32> to vector<8x256xf32>
    %107 = arith.maximumf %105, %106 : vector<8x256xf32>
    %108 = arith.maximumf %104, %107 : vector<8x256xf32>
    %c0_46 = arith.constant 0 : index
    %c0_47 = arith.constant 0 : index
    %109 = vector.load %arg5[%c0_46, %c0_47] : memref<1x256xf32, #tpu.memory_space<vmem>>, vector<1x256xf32>
    %110 = vector.broadcast %109 : vector<1x256xf32> to vector<8x256xf32>
    %111 = arith.addf %108, %110 : vector<8x256xf32>
    %cst_48 = arith.constant 0.000000e+00 : f32
    %112 = vector.broadcast %cst_48 : f32 to vector<8x256xf32>
    %113 = arith.maximumf %111, %112 : vector<8x256xf32>
    %c2_49 = arith.constant 2 : index
    %c0_50 = arith.constant 0 : index
    %c0_51 = arith.constant 0 : index
    %114 = vector.load %arg6[%c2_49, %c0_50, %c0_51] : memref<4x256x128xf32, #tpu.memory_space<vmem>>, vector<1x256x128xf32>
    %115 = vector.shape_cast %114 : vector<1x256x128xf32> to vector<256x128xf32>
    %cst_52 = arith.constant dense<0.000000e+00> : vector<8x128xf32>
    %116 = tpu.matmul %113, %115, %cst_52 {dimension_numbers = #tpu.dot_dimension_numbers<[1], [0], [0], [1], [0, 0, 1, 1], [], []>} : vector<8x256xf32>, vector<256x128xf32>, vector<8x128xf32> -> vector<8x128xf32>
    %117 = arith.addf %86, %116 : vector<8x128xf32>
    %cst_53 = arith.constant 0.000000e+00 : f32
    %118 = vector.broadcast %cst_53 : f32 to vector<16x512xf32>
    %119 = vector.extract_strided_slice %15 {offsets = [48, 0], sizes = [16, 384], strides = [1, 1]} : vector<96x384xf32> to vector<16x384xf32>
    %cst_54 = arith.constant dense<0.000000e+00> : vector<16x512xf32>
    %120 = tpu.matmul %119, %17, %cst_54 {dimension_numbers = #tpu.dot_dimension_numbers<[1], [0], [0], [1], [0, 0, 1, 1], [], []>} : vector<16x384xf32>, vector<384x512xf32>, vector<16x512xf32> -> vector<16x512xf32>
    %121 = arith.addf %118, %120 : vector<16x512xf32>
    %122 = vector.extract_strided_slice %15 {offsets = [56, 0], sizes = [16, 384], strides = [1, 1]} : vector<96x384xf32> to vector<16x384xf32>
    %cst_55 = arith.constant dense<0.000000e+00> : vector<16x512xf32>
    %123 = tpu.matmul %122, %19, %cst_55 {dimension_numbers = #tpu.dot_dimension_numbers<[1], [0], [0], [1], [0, 0, 1, 1], [], []>} : vector<16x384xf32>, vector<384x512xf32>, vector<16x512xf32> -> vector<16x512xf32>
    %124 = arith.addf %121, %123 : vector<16x512xf32>
    %125 = vector.extract_strided_slice %15 {offsets = [64, 0], sizes = [16, 384], strides = [1, 1]} : vector<96x384xf32> to vector<16x384xf32>
    %cst_56 = arith.constant dense<0.000000e+00> : vector<16x512xf32>
    %126 = tpu.matmul %125, %21, %cst_56 {dimension_numbers = #tpu.dot_dimension_numbers<[1], [0], [0], [1], [0, 0, 1, 1], [], []>} : vector<16x384xf32>, vector<384x512xf32>, vector<16x512xf32> -> vector<16x512xf32>
    %127 = arith.addf %124, %126 : vector<16x512xf32>
    %128 = vector.extract_strided_slice %15 {offsets = [72, 0], sizes = [16, 384], strides = [1, 1]} : vector<96x384xf32> to vector<16x384xf32>
    %cst_57 = arith.constant dense<0.000000e+00> : vector<16x512xf32>
    %129 = tpu.matmul %128, %23, %cst_57 {dimension_numbers = #tpu.dot_dimension_numbers<[1], [0], [0], [1], [0, 0, 1, 1], [], []>} : vector<16x384xf32>, vector<384x512xf32>, vector<16x512xf32> -> vector<16x512xf32>
    %130 = arith.addf %127, %129 : vector<16x512xf32>
    %131 = vector.extract_strided_slice %130 {offsets = [0, 0], sizes = [8, 512], strides = [1, 1]} : vector<16x512xf32> to vector<8x512xf32>
    %132 = vector.extract_strided_slice %130 {offsets = [8, 0], sizes = [8, 512], strides = [1, 1]} : vector<16x512xf32> to vector<8x512xf32>
    %133 = vector.extract_strided_slice %131 {offsets = [0, 0], sizes = [8, 256], strides = [1, 1]} : vector<8x512xf32> to vector<8x256xf32>
    %134 = vector.extract_strided_slice %131 {offsets = [0, 256], sizes = [8, 256], strides = [1, 1]} : vector<8x512xf32> to vector<8x256xf32>
    %135 = arith.maximumf %133, %134 : vector<8x256xf32>
    %136 = vector.extract_strided_slice %132 {offsets = [0, 0], sizes = [8, 256], strides = [1, 1]} : vector<8x512xf32> to vector<8x256xf32>
    %137 = vector.extract_strided_slice %132 {offsets = [0, 256], sizes = [8, 256], strides = [1, 1]} : vector<8x512xf32> to vector<8x256xf32>
    %138 = arith.maximumf %136, %137 : vector<8x256xf32>
    %139 = arith.maximumf %135, %138 : vector<8x256xf32>
    %c0_58 = arith.constant 0 : index
    %c0_59 = arith.constant 0 : index
    %140 = vector.load %arg5[%c0_58, %c0_59] : memref<1x256xf32, #tpu.memory_space<vmem>>, vector<1x256xf32>
    %141 = vector.broadcast %140 : vector<1x256xf32> to vector<8x256xf32>
    %142 = arith.addf %139, %141 : vector<8x256xf32>
    %cst_60 = arith.constant 0.000000e+00 : f32
    %143 = vector.broadcast %cst_60 : f32 to vector<8x256xf32>
    %144 = arith.maximumf %142, %143 : vector<8x256xf32>
    %c3_61 = arith.constant 3 : index
    %c0_62 = arith.constant 0 : index
    %c0_63 = arith.constant 0 : index
    %145 = vector.load %arg6[%c3_61, %c0_62, %c0_63] : memref<4x256x128xf32, #tpu.memory_space<vmem>>, vector<1x256x128xf32>
    %146 = vector.shape_cast %145 : vector<1x256x128xf32> to vector<256x128xf32>
    %cst_64 = arith.constant dense<0.000000e+00> : vector<8x128xf32>
    %147 = tpu.matmul %144, %146, %cst_64 {dimension_numbers = #tpu.dot_dimension_numbers<[1], [0], [0], [1], [0, 0, 1, 1], [], []>} : vector<8x256xf32>, vector<256x128xf32>, vector<8x128xf32> -> vector<8x128xf32>
    %148 = arith.addf %117, %147 : vector<8x128xf32>
    %c0_65 = arith.constant 0 : index
    %c0_66 = arith.constant 0 : index
    %149 = vector.load %arg7[%c0_65, %c0_66] : memref<1x128xf32, #tpu.memory_space<vmem>>, vector<1x128xf32>
    %150 = vector.broadcast %149 : vector<1x128xf32> to vector<8x128xf32>
    %151 = arith.addf %148, %150 : vector<8x128xf32>
    %cst_67 = arith.constant 0.000000e+00 : f32
    %152 = vector.broadcast %cst_67 : f32 to vector<8x128xf32>
    %153 = arith.maximumf %151, %152 : vector<8x128xf32>
    %c0_68 = arith.constant 0 : index
    %c0_69 = arith.constant 0 : index
    %154 = vector.load %arg8[%c0_68, %c0_69] : memref<128x128xf32, #tpu.memory_space<vmem>>, vector<128x128xf32>
    %cst_70 = arith.constant dense<0.000000e+00> : vector<8x128xf32>
    %155 = tpu.matmul %153, %154, %cst_70 {dimension_numbers = #tpu.dot_dimension_numbers<[1], [0], [0], [1], [0, 0, 1, 1], [], []>} : vector<8x128xf32>, vector<128x128xf32>, vector<8x128xf32> -> vector<8x128xf32>
    %c0_71 = arith.constant 0 : index
    %c0_72 = arith.constant 0 : index
    %156 = vector.load %arg9[%c0_71, %c0_72] : memref<1x128xf32, #tpu.memory_space<vmem>>, vector<1x128xf32>
    %157 = vector.broadcast %156 : vector<1x128xf32> to vector<8x128xf32>
    %158 = arith.addf %155, %157 : vector<8x128xf32>
    %159 = tpu.iota {dimensions = array<i32: 1>} : vector<8x128xi32>
    %c10_i32 = arith.constant 10 : i32
    %160 = vector.broadcast %c10_i32 : i32 to vector<8x128xi32>
    %161 = arith.cmpi slt, %159, %160 : vector<8x128xi32>
    %cst_73 = arith.constant -1.000000e+30 : f32
    %162 = vector.broadcast %cst_73 : f32 to vector<8x128xf32>
    %163 = arith.select %161, %158, %162 : vector<8x128xi1>, vector<8x128xf32>
    %cst_74 = arith.constant dense<0xFF800000> : vector<8xf32>
    %164 = vector.multi_reduction <maximumf>, %163, %cst_74 [1] : vector<8x128xf32> to vector<8xf32>
    %165 = vector.shape_cast %164 : vector<8xf32> to vector<8x1xf32>
    %166 = vector.broadcast %165 : vector<8x1xf32> to vector<8x128xf32>
    %167 = arith.subf %163, %166 : vector<8x128xf32>
    %168 = math.exp %167 : vector<8x128xf32>
    %cst_75 = arith.constant dense<0.000000e+00> : vector<8xf32>
    %169 = vector.multi_reduction <add>, %168, %cst_75 [1] : vector<8x128xf32> to vector<8xf32>
    %170 = vector.shape_cast %169 : vector<8xf32> to vector<8x1xf32>
    %171 = math.log %170 : vector<8x1xf32>
    %172 = vector.broadcast %171 : vector<8x1xf32> to vector<8x128xf32>
    %173 = arith.subf %167, %172 : vector<8x128xf32>
    %c0_76 = arith.constant 0 : index
    %c0_77 = arith.constant 0 : index
    %174 = vector.load %arg10[%c0_76, %c0_77] : memref<8x128xf32, #tpu.memory_space<vmem>>, vector<8x128xf32>
    tpu.vector_store %arg10[%c0_76, %c0_77], %173 {strides = array<i32>} : memref<8x128xf32, #tpu.memory_space<vmem>>, vector<8x128xf32>,
    return
  }
  func.func @transform_0(%arg0: i32) -> (i32, i32, i32) {
    %c0_i32 = arith.constant 0 : i32
    %c0_i32_0 = arith.constant 0 : i32
    %c0_i32_1 = arith.constant 0 : i32
    return %arg0, %c0_i32, %c0_i32_0 : i32, i32, i32
  }
  func.func @transform_1(%arg0: i32) -> (i32, i32) {
    %c0_i32 = arith.constant 0 : i32
    %c0_i32_0 = arith.constant 0 : i32
    %c0_i32_1 = arith.constant 0 : i32
    return %c0_i32, %c0_i32_0 : i32, i32
  }
  func.func @transform_2(%arg0: i32) -> (i32, i32) {
    %c0_i32 = arith.constant 0 : i32
    %c0_i32_0 = arith.constant 0 : i32
    %c0_i32_1 = arith.constant 0 : i32
    return %c0_i32, %c0_i32_0 : i32, i32
  }
  func.func @transform_3(%arg0: i32) -> (i32, i32, i32) {
    %c0_i32 = arith.constant 0 : i32
    %c0_i32_0 = arith.constant 0 : i32
    %c0_i32_1 = arith.constant 0 : i32
    %c0_i32_2 = arith.constant 0 : i32
    return %c0_i32, %c0_i32_0, %c0_i32_1 : i32, i32, i32
  }
  func.func @transform_4(%arg0: i32) -> (i32, i32) {
    %c0_i32 = arith.constant 0 : i32
    %c0_i32_0 = arith.constant 0 : i32
    %c0_i32_1 = arith.constant 0 : i32
    return %c0_i32, %c0_i32_0 : i32, i32
  }
  func.func @transform_5(%arg0: i32) -> (i32, i32, i32) {
    %c0_i32 = arith.constant 0 : i32
    %c0_i32_0 = arith.constant 0 : i32
    %c0_i32_1 = arith.constant 0 : i32
    %c0_i32_2 = arith.constant 0 : i32
    return %c0_i32, %c0_i32_0, %c0_i32_1 : i32, i32, i32
  }
  func.func @transform_6(%arg0: i32) -> (i32, i32) {
    %c0_i32 = arith.constant 0 : i32
    %c0_i32_0 = arith.constant 0 : i32
    %c0_i32_1 = arith.constant 0 : i32
    return %c0_i32, %c0_i32_0 : i32, i32
  }
  func.func @transform_7(%arg0: i32) -> (i32, i32) {
    %c0_i32 = arith.constant 0 : i32
    %c0_i32_0 = arith.constant 0 : i32
    %c0_i32_1 = arith.constant 0 : i32
    return %c0_i32, %c0_i32_0 : i32, i32
  }
  func.func @transform_8(%arg0: i32) -> (i32, i32) {
    %c0_i32 = arith.constant 0 : i32
    %c0_i32_0 = arith.constant 0 : i32
    %c0_i32_1 = arith.constant 0 : i32
    return %c0_i32, %c0_i32_0 : i32, i32
  }
  func.func @transform_9(%arg0: i32) -> (i32, i32) {
    %c0_i32 = arith.constant 0 : i32
    %c0_i32_0 = arith.constant 0 : i32
    return %arg0, %c0_i32 : i32, i32
  }
}

</mosaic_0001>

<llo_original>
// kernel: net_forward.1
$region0: #{net_forward.1}
  #allocation0 [shape = 'u32[]', space=smem, size = 0x4, offset = 0x4, fixed_abs, tag = 'smem constant byte address 0x4 - core index']
  #allocation1 [shape = 'u32[144,128]{1,0:T(1,128)}', space=vmem, size = 0x12000, scoped, tag = 'internal scratch']
  %s0 = inlined_call_operand.vmem [shape: f32[1,192,112], index: 0, kind: input, shape index: {}]
  %s1 = inlined_call_operand.hbm [shape: f32[112,768], index: 1, kind: input, shape index: {}]
  %s2 = inlined_call_operand.hbm [shape: f32[1,384], index: 2, kind: input, shape index: {}]
  %s3 = inlined_call_operand.hbm [shape: f32[4,384,512], index: 3, kind: input, shape index: {}]
  %s4 = inlined_call_operand.hbm [shape: f32[1,256], index: 4, kind: input, shape index: {}]
  %s5 = inlined_call_operand.hbm [shape: f32[4,256,128], index: 5, kind: input, shape index: {}]
  %s6 = inlined_call_operand.hbm [shape: f32[1,128], index: 6, kind: input, shape index: {}]
  %s7 = inlined_call_operand.hbm [shape: f32[128,128], index: 7, kind: input, shape index: {}]
  %s8 = inlined_call_operand.hbm [shape: f32[1,128], index: 8, kind: input, shape index: {}]
  %s9 = inlined_call_operand.vmem [shape: f32[8,128], index: 9, kind: output, shape index: {}]
  %s10 = sld [smem:[#allocation0]]
  $region78: #{net_forward.1} parent=0
    _
  %s12 = ssub.s32 1, %s10
  %s13 = scalar_select 0, %s12, %s10
  $region1: #{net_forward.1} parent=0
    #allocation2 [shape = 'u8[344064]{0}', space=vmem, size = 0x54000, scoped, tag = 'input window, operand 1, single buffered']
    #allocation3 [shape = 's32[1]{0}', space=sflag, size = 0x4, scoped, tag = 'scoped memory for net_forward.1']
    #allocation4 [shape = 'u8[1536]{0}', space=vmem, size = 0x800, scoped, tag = 'input window, operand 2, single buffered']
    #allocation5 [shape = 's32[1]{0}', space=sflag, size = 0x4, scoped, tag = 'scoped memory for net_forward.1']
    #allocation6 [shape = 'u8[3145728]{0}', space=vmem, size = 0x300000, scoped, tag = 'input window, operand 3, single buffered']
    #allocation7 [shape = 'u8[1024]{0}', space=vmem, size = 0x400, scoped, tag = 'input window, operand 4, single buffered']
    #allocation8 [shape = 's32[1]{0}', space=sflag, size = 0x4, scoped, tag = 'scoped memory for net_forward.1']
    #allocation9 [shape = 'u8[524288]{0}', space=vmem, size = 0x80000, scoped, tag = 'input window, operand 5, single buffered']
    #allocation10 [shape = 'u8[512]{0}', space=vmem, size = 0x400, scoped, tag = 'input window, operand 6, single buffered']
    #allocation11 [shape = 's32[1]{0}', space=sflag, size = 0x4, scoped, tag = 'scoped memory for net_forward.1']
    #allocation12 [shape = 'u8[65536]{0}', space=vmem, size = 0x10000, scoped, tag = 'input window, operand 7, single buffered']
    #allocation13 [shape = 'u8[512]{0}', space=vmem, size = 0x400, scoped, tag = 'input window, operand 8, single buffered']
    #allocation14 [shape = 's32[1]{0}', space=sflag, size = 0x4, scoped, tag = 'scoped memory for net_forward.1']
    %14 = vsyncpa [#allocation3], 0
    %15 = vsyncpa [#allocation5], 0
    %16 = vsyncpa [#allocation8], 0
    %17 = vsyncpa [#allocation11], 0
    %18 = vsyncpa [#allocation14], 0
    // Predicated region
    $region2: #{net_forward.1} parent=1 // pred_check
      _
    $region3: #{net_forward.1} parent=1 // pred_check_branch
      %20 = sbr.rel (0) target = $region5
    $region4: #{net_forward.1} parent=1 // pred_region
      _
    $region5: #{net_forward.1} parent=1 // pred_fallthru
      _
    // Predicated region
    $region6: #{net_forward.1} parent=1 // pred_check
      _
    $region7: #{net_forward.1} parent=1 // pred_check_branch
      %22 = sbr.rel (0) target = $region9
    $region8: #{net_forward.1} parent=1 // pred_region
      %s24 = ssub.s32 10752, 10752
      %25 = vsyncadd [#allocation3], %s24
      %s26 = sshll.u32 [#allocation2], 4
      %s27 = int_to_ptr.vmem [resolvable:$true] %s26
      %32 = dma.hbm_to_vmem [thread:$0]  %s1, 10752, %s27, [#allocation3], 768, 768, 48
    $region9: #{net_forward.1} parent=1 // pred_fallthru
      _
    // Predicated region
    $region10: #{net_forward.1} parent=1 // pred_check
      _
    $region11: #{net_forward.1} parent=1 // pred_check_branch
      %34 = sbr.rel (0) target = $region13
    $region12: #{net_forward.1} parent=1 // pred_region
      %s36 = ssub.s32 48, 48
      %37 = vsyncadd [#allocation5], %s36
      %s39 = sshll.u32 [#allocation4], 4
      %s40 = int_to_ptr.vmem [resolvable:$true] %s39
      %42 = dma.hbm_to_vmem [thread:$0]  %s2, 48, %s40, [#allocation5]
    $region13: #{net_forward.1} parent=1 // pred_fallthru
      _
    // Predicated region
    $region14: #{net_forward.1} parent=1 // pred_check
      _
    $region15: #{net_forward.1} parent=1 // pred_check_branch
      %44 = sbr.rel (0) target = $region17
    $region16: #{net_forward.1} parent=1 // pred_region
      %s46 = ssub.s32 98304, 98304
      %47 = vsyncadd [#allocation5], %s46
      %s48 = sshll.u32 [#allocation6], 4
      %s49 = int_to_ptr.vmem [resolvable:$true] %s48
      %54 = dma.hbm_to_vmem [thread:$0]  %s3, 98304, %s49, [#allocation5], 512, 512, 32
    $region17: #{net_forward.1} parent=1 // pred_fallthru
      _
    // Predicated region
    $region18: #{net_forward.1} parent=1 // pred_check
      _
    $region19: #{net_forward.1} parent=1 // pred_check_branch
      %56 = sbr.rel (0) target = $region21
    $region20: #{net_forward.1} parent=1 // pred_region
      %s58 = ssub.s32 32, 32
      %59 = vsyncadd [#allocation8], %s58
      %s61 = sshll.u32 [#allocation7], 4
      %s62 = int_to_ptr.vmem [resolvable:$true] %s61
      %64 = dma.hbm_to_vmem [thread:$0]  %s4, 32, %s62, [#allocation8]
    $region21: #{net_forward.1} parent=1 // pred_fallthru
      _
    // Predicated region
    $region22: #{net_forward.1} parent=1 // pred_check
      _
    $region23: #{net_forward.1} parent=1 // pred_check_branch
      %66 = sbr.rel (0) target = $region25
    $region24: #{net_forward.1} parent=1 // pred_region
      %s68 = ssub.s32 16384, 16384
      %69 = vsyncadd [#allocation8], %s68
      %s70 = sshll.u32 [#allocation9], 4
      %s71 = int_to_ptr.vmem [resolvable:$true] %s70
      %76 = dma.hbm_to_vmem [thread:$0]  %s5, 16384, %s71, [#allocation8], 128, 128, 8
    $region25: #{net_forward.1} parent=1 // pred_fallthru
      _
    // Predicated region
    $region26: #{net_forward.1} parent=1 // pred_check
      _
    $region27: #{net_forward.1} parent=1 // pred_check_branch
      %78 = sbr.rel (0) target = $region29
    $region28: #{net_forward.1} parent=1 // pred_region
      %s80 = ssub.s32 16, 16
      %81 = vsyncadd [#allocation11], %s80
      %s83 = sshll.u32 [#allocation10], 4
      %s84 = int_to_ptr.vmem [resolvable:$true] %s83
      %86 = dma.hbm_to_vmem [thread:$0]  %s6, 16, %s84, [#allocation11]
    $region29: #{net_forward.1} parent=1 // pred_fallthru
      _
    // Predicated region
    $region30: #{net_forward.1} parent=1 // pred_check
      _
    $region31: #{net_forward.1} parent=1 // pred_check_branch
      %88 = sbr.rel (0) target = $region33
    $region32: #{net_forward.1} parent=1 // pred_region
      %s90 = ssub.s32 2048, 2048
      %91 = vsyncadd [#allocation11], %s90
      %s92 = sshll.u32 [#allocation12], 4
      %s93 = int_to_ptr.vmem [resolvable:$true] %s92
      %98 = dma.hbm_to_vmem [thread:$0]  %s7, 2048, %s93, [#allocation11], 128, 128, 8
    $region33: #{net_forward.1} parent=1 // pred_fallthru
      _
    // Predicated region
    $region34: #{net_forward.1} parent=1 // pred_check
      _
    $region35: #{net_forward.1} parent=1 // pred_check_branch
      %100 = sbr.rel (0) target = $region37
    $region36: #{net_forward.1} parent=1 // pred_region
      %s102 = ssub.s32 16, 16
      %103 = vsyncadd [#allocation14], %s102
      %s105 = sshll.u32 [#allocation13], 4
      %s106 = int_to_ptr.vmem [resolvable:$true] %s105
      %108 = dma.hbm_to_vmem [thread:$0]  %s8, 16, %s106, [#allocation14]
    $region37: #{net_forward.1} parent=1 // pred_fallthru
      _
    // Predicated region
    $region38: #{net_forward.1} parent=1 // pred_check
      _
    $region39: #{net_forward.1} parent=1 // pred_check_branch
      %110 = sbr.rel (0) target = $region41
    $region40: #{net_forward.1} parent=1 // pred_region
      %111 = dma.done [#allocation3], 10752
    $region41: #{net_forward.1} parent=1 // pred_fallthru
      _
    // Predicated region
    $region42: #{net_forward.1} parent=1 // pred_check
      _
    $region43: #{net_forward.1} parent=1 // pred_check_branch
      %113 = sbr.rel (0) target = $region45
    $region44: #{net_forward.1} parent=1 // pred_region
      %114 = dma.done [#allocation5], 48
    $region45: #{net_forward.1} parent=1 // pred_fallthru
      _
    // Predicated region
    $region46: #{net_forward.1} parent=1 // pred_check
      _
    $region47: #{net_forward.1} parent=1 // pred_check_branch
      %116 = sbr.rel (0) target = $region49
    $region48: #{net_forward.1} parent=1 // pred_region
      %117 = dma.done [#allocation5], 98304
    $region49: #{net_forward.1} parent=1 // pred_fallthru
      _
    // Predicated region
    $region50: #{net_forward.1} parent=1 // pred_check
      _
    $region51: #{net_forward.1} parent=1 // pred_check_branch
      %119 = sbr.rel (0) target = $region53
    $region52: #{net_forward.1} parent=1 // pred_region
      %120 = dma.done [#allocation8], 32
    $region53: #{net_forward.1} parent=1 // pred_fallthru
      _
    // Predicated region
    $region54: #{net_forward.1} parent=1 // pred_check
      _
    $region55: #{net_forward.1} parent=1 // pred_check_branch
      %122 = sbr.rel (0) target = $region57
    $region56: #{net_forward.1} parent=1 // pred_region
      %123 = dma.done [#allocation8], 16384
    $region57: #{net_forward.1} parent=1 // pred_fallthru
      _
    // Predicated region
    $region58: #{net_forward.1} parent=1 // pred_check
      _
    $region59: #{net_forward.1} parent=1 // pred_check_branch
      %125 = sbr.rel (0) target = $region61
    $region60: #{net_forward.1} parent=1 // pred_region
      %126 = dma.done [#allocation11], 16
    $region61: #{net_forward.1} parent=1 // pred_fallthru
      _
    // Predicated region
    $region62: #{net_forward.1} parent=1 // pred_check
      _
    $region63: #{net_forward.1} parent=1 // pred_check_branch
      %128 = sbr.rel (0) target = $region65
    $region64: #{net_forward.1} parent=1 // pred_region
      %129 = dma.done [#allocation11], 2048
    $region65: #{net_forward.1} parent=1 // pred_fallthru
      _
    // Predicated region
    $region66: #{net_forward.1} parent=1 // pred_check
      _
    $region67: #{net_forward.1} parent=1 // pred_check_branch
      %131 = sbr.rel (0) target = $region69
    $region68: #{net_forward.1} parent=1 // pred_region
      %132 = dma.done [#allocation14], 16
    $region69: #{net_forward.1} parent=1 // pred_fallthru
      _
    %v133 = vld [vmem:[%s0] sm:$0xff]
    %v134 = vld [vmem:[%s0 + $0x8] sm:$0xff]
    %v135 = vld [vmem:[%s0 + $0x10] sm:$0xff]
    %v136 = vld [vmem:[%s0 + $0x18] sm:$0xff]
    %v137 = vld [vmem:[%s0 + $0x20] sm:$0xff]
    %v138 = vld [vmem:[%s0 + $0x28] sm:$0xff]
    %v139 = vld [vmem:[%s0 + $0x30] sm:$0xff]
    %v140 = vld [vmem:[%s0 + $0x38] sm:$0xff]
    %v141 = vld [vmem:[%s0 + $0x40] sm:$0xff]
    %v142 = vld [vmem:[%s0 + $0x48] sm:$0xff]
    %v143 = vld [vmem:[%s0 + $0x50] sm:$0xff]
    %v144 = vld [vmem:[%s0 + $0x58] sm:$0xff]
    %v145 = vld [vmem:[%s0 + $0x60] sm:$0xff]
    %v146 = vld [vmem:[%s0 + $0x68] sm:$0xff]
    %v147 = vld [vmem:[%s0 + $0x70] sm:$0xff]
    %v148 = vld [vmem:[%s0 + $0x78] sm:$0xff]
    %v149 = vld [vmem:[%s0 + $0x80] sm:$0xff]
    %v150 = vld [vmem:[%s0 + $0x88] sm:$0xff]
    %v151 = vld [vmem:[%s0 + $0x90] sm:$0xff]
    %v152 = vld [vmem:[%s0 + $0x98] sm:$0xff]
    %v153 = vld [vmem:[%s0 + $0xa0] sm:$0xff]
    %v154 = vld [vmem:[%s0 + $0xa8] sm:$0xff]
    %v155 = vld [vmem:[%s0 + $0xb0] sm:$0xff]
    %v156 = vld [vmem:[%s0 + $0xb8] sm:$0xff]
    %v157 = vld [vmem:[#allocation2] sm:$0xff]
    %v158 = vld [vmem:[#allocation2 + $0x8] sm:$0xff]
    %v159 = vld [vmem:[#allocation2 + $0x10] sm:$0xff]
    %v160 = vld [vmem:[#allocation2 + $0x18] sm:$0xff]
    %v161 = vld [vmem:[#allocation2 + $0x20] sm:$0xff]
    %v162 = vld [vmem:[#allocation2 + $0x28] sm:$0xff]
    %v163 = vld [vmem:[#allocation2 + $0x30] sm:$0xff]
    %v164 = vld [vmem:[#allocation2 + $0x38] sm:$0xff]
    %v165 = vld [vmem:[#allocation2 + $0x40] sm:$0xff]
    %v166 = vld [vmem:[#allocation2 + $0x48] sm:$0xff]
    %v167 = vld [vmem:[#allocation2 + $0x50] sm:$0xff]
    %v168 = vld [vmem:[#allocation2 + $0x58] sm:$0xff]
    %v169 = vld [vmem:[#allocation2 + $0x60] sm:$0xff]
    %v170 = vld [vmem:[#allocation2 + $0x68] sm:$0xff]
    %v171 = vld [vmem:[#allocation2 + $0x70] sm:$0xff]
    %v172 = vld [vmem:[#allocation2 + $0x78] sm:$0xff]
    %v173 = vld [vmem:[#allocation2 + $0x80] sm:$0xff]
    %v174 = vld [vmem:[#allocation2 + $0x88] sm:$0xff]
    %v175 = vld [vmem:[#allocation2 + $0x90] sm:$0xff]
    %v176 = vld [vmem:[#allocation2 + $0x98] sm:$0xff]
    %v177 = vld [vmem:[#allocation2 + $0xa0] sm:$0xff]
    %v178 = vld [vmem:[#allocation2 + $0xa8] sm:$0xff]
    %v179 = vld [vmem:[#allocation2 + $0xb0] sm:$0xff]
    %v180 = vld [vmem:[#allocation2 + $0xb8] sm:$0xff]
    %v181 = vld [vmem:[#allocation2 + $0xc0] sm:$0xff]
    %v182 = vld [vmem:[#allocation2 + $0xc8] sm:$0xff]
    %v183 = vld [vmem:[#allocation2 + $0xd0] sm:$0xff]
    %v184 = vld [vmem:[#allocation2 + $0xd8] sm:$0xff]
    %v185 = vld [vmem:[#allocation2 + $0xe0] sm:$0xff]
    %v186 = vld [vmem:[#allocation2 + $0xe8] sm:$0xff]
    %v187 = vld [vmem:[#allocation2 + $0xf0] sm:$0xff]
    %v188 = vld [vmem:[#allocation2 + $0xf8] sm:$0xff]
    %v189 = vld [vmem:[#allocation2 + $0x100] sm:$0xff]
    %v190 = vld [vmem:[#allocation2 + $0x108] sm:$0xff]
    %v191 = vld [vmem:[#allocation2 + $0x110] sm:$0xff]
    %v192 = vld [vmem:[#allocation2 + $0x118] sm:$0xff]
    %v193 = vld [vmem:[#allocation2 + $0x120] sm:$0xff]
    %v194 = vld [vmem:[#allocation2 + $0x128] sm:$0xff]
    %v195 = vld [vmem:[#allocation2 + $0x130] sm:$0xff]
    %v196 = vld [vmem:[#allocation2 + $0x138] sm:$0xff]
    %v197 = vld [vmem:[#allocation2 + $0x140] sm:$0xff]
    %v198 = vld [vmem:[#allocation2 + $0x148] sm:$0xff]
    %v199 = vld [vmem:[#allocation2 + $0x150] sm:$0xff]
    %v200 = vld [vmem:[#allocation2 + $0x158] sm:$0xff]
    %v201 = vld [vmem:[#allocation2 + $0x160] sm:$0xff]
    %v202 = vld [vmem:[#allocation2 + $0x168] sm:$0xff]
    %v203 = vld [vmem:[#allocation2 + $0x170] sm:$0xff]
    %v204 = vld [vmem:[#allocation2 + $0x178] sm:$0xff]
    %v205 = vld [vmem:[#allocation2 + $0x180] sm:$0xff]
    %v206 = vld [vmem:[#allocation2 + $0x188] sm:$0xff]
    %v207 = vld [vmem:[#allocation2 + $0x190] sm:$0xff]
    %v208 = vld [vmem:[#allocation2 + $0x198] sm:$0xff]
    %v209 = vld [vmem:[#allocation2 + $0x1a0] sm:$0xff]
    %v210 = vld [vmem:[#allocation2 + $0x1a8] sm:$0xff]
    %v211 = vld [vmem:[#allocation2 + $0x1b0] sm:$0xff]
    %v212 = vld [vmem:[#allocation2 + $0x1b8] sm:$0xff]
    %v213 = vld [vmem:[#allocation2 + $0x1c0] sm:$0xff]
    %v214 = vld [vmem:[#allocation2 + $0x1c8] sm:$0xff]
    %v215 = vld [vmem:[#allocation2 + $0x1d0] sm:$0xff]
    %v216 = vld [vmem:[#allocation2 + $0x1d8] sm:$0xff]
    %v217 = vld [vmem:[#allocation2 + $0x1e0] sm:$0xff]
    %v218 = vld [vmem:[#allocation2 + $0x1e8] sm:$0xff]
    %v219 = vld [vmem:[#allocation2 + $0x1f0] sm:$0xff]
    %v220 = vld [vmem:[#allocation2 + $0x1f8] sm:$0xff]
    %v221 = vld [vmem:[#allocation2 + $0x200] sm:$0xff]
    %v222 = vld [vmem:[#allocation2 + $0x208] sm:$0xff]
    %v223 = vld [vmem:[#allocation2 + $0x210] sm:$0xff]
    %v224 = vld [vmem:[#allocation2 + $0x218] sm:$0xff]
    %v225 = vld [vmem:[#allocation2 + $0x220] sm:$0xff]
    %v226 = vld [vmem:[#allocation2 + $0x228] sm:$0xff]
    %v227 = vld [vmem:[#allocation2 + $0x230] sm:$0xff]
    %v228 = vld [vmem:[#allocation2 + $0x238] sm:$0xff]
    %v229 = vld [vmem:[#allocation2 + $0x240] sm:$0xff]
    %v230 = vld [vmem:[#allocation2 + $0x248] sm:$0xff]
    %v231 = vld [vmem:[#allocation2 + $0x250] sm:$0xff]
    %v232 = vld [vmem:[#allocation2 + $0x258] sm:$0xff]
    %v233 = vld [vmem:[#allocation2 + $0x260] sm:$0xff]
    %v234 = vld [vmem:[#allocation2 + $0x268] sm:$0xff]
    %v235 = vld [vmem:[#allocation2 + $0x270] sm:$0xff]
    %v236 = vld [vmem:[#allocation2 + $0x278] sm:$0xff]
    %v237 = vld [vmem:[#allocation2 + $0x280] sm:$0xff]
    %v238 = vld [vmem:[#allocation2 + $0x288] sm:$0xff]
    %v239 = vld [vmem:[#allocation2 + $0x290] sm:$0xff]
    %v240 = vld [vmem:[#allocation2 + $0x298] sm:$0xff]
    %vm241 = vcmask 916480
    %v243 = vsel %vm241, %v133, 0
    %v246 = vsel %vm241, %v134, 0
    %v249 = vsel %vm241, %v135, 0
    %v252 = vsel %vm241, %v136, 0
    %v255 = vsel %vm241, %v137, 0
    %v258 = vsel %vm241, %v138, 0
    %v261 = vsel %vm241, %v139, 0
    %v264 = vsel %vm241, %v140, 0
    %v267 = vsel %vm241, %v141, 0
    %v270 = vsel %vm241, %v142, 0
    %v273 = vsel %vm241, %v143, 0
    %v276 = vsel %vm241, %v144, 0
    %v279 = vsel %vm241, %v145, 0
    %v282 = vsel %vm241, %v146, 0
    %v285 = vsel %vm241, %v147, 0
    %v288 = vsel %vm241, %v148, 0
    %v291 = vsel %vm241, %v149, 0
    %v294 = vsel %vm241, %v150, 0
    %v297 = vsel %vm241, %v151, 0
    %v300 = vsel %vm241, %v152, 0
    %v303 = vsel %vm241, %v153, 0
    %v306 = vsel %vm241, %v154, 0
    %v309 = vsel %vm241, %v155, 0
    %v312 = vsel %vm241, %v156, 0
    %314 = vmatprep.subr.mxu0 %v158
    %315 = vmatpush1.msra.mxu0 %v157
    %316 = vmatprep.subr.mxu0 %v164
    %317 = vmatpush1.msra.mxu0 %v163
    %318 = vmatprep.subr.mxu0 %v170
    %319 = vmatpush1.msra.mxu0 %v169
    %320 = vmatprep.subr.mxu0 %v176
    %321 = vmatpush1.msra.mxu0 %v175
    %322 = vmatprep.subr.mxu0 %v182
    %323 = vmatpush1.msra.mxu0 %v181
    %324 = vmatprep.subr.mxu0 %v188
    %325 = vmatpush1.msra.mxu0 %v187
    %326 = vmatprep.subr.mxu0 %v194
    %327 = vmatpush1.msra.mxu0 %v193
    %328 = vmatprep.subr.mxu0 %v200
    %329 = vmatpush1.msra.mxu0 %v199
    %330 = vmatprep.subr.mxu0 %v206
    %331 = vmatpush1.msra.mxu0 %v205
    %332 = vmatprep.subr.mxu0 %v212
    %333 = vmatpush1.msra.mxu0 %v211
    %334 = vmatprep.subr.mxu0 %v218
    %335 = vmatpush1.msra.mxu0 %v217
    %336 = vmatprep.subr.mxu0 %v224
    %337 = vmatpush1.msra.mxu0 %v223
    %338 = vmatprep.subr.mxu0 %v230
    %339 = vmatpush1.msra.mxu0 %v229
    %340 = vmatprep.subr.mxu0 %v236
    %341 = vmatpush1.msra.mxu0 %v235
    %342 = vmatprep.subr.mxu0 0.0
    %343 = vmatpush1.msra.mxu0 0.0
    %344 = vmatprep.subr.mxu0 0.0
    %345 = vmatpush1.msra.mxu0 0.0
    %346 = vmatprep.subr.mxu0 0.0
    %347 = vmatpush1.msra.mxu0 0.0
    %348 = vmatprep.subr.mxu0 0.0
    %349 = vmatpush1.msra.mxu0 0.0
    %350 = vmatprep.subr.mxu0 0.0
    %351 = vmatpush1.msra.mxu0 0.0
    %352 = vmatprep.subr.mxu0 0.0
    %353 = vmatpush1.msra.mxu0 0.0
    %354 = vmatprep.subr.mxu0 0.0
    %355 = vmatpush1.msra.mxu0 0.0
    %356 = vmatprep.subr.mxu0 0.0
    %357 = vmatpush1.msra.mxu0 0.0
    %358 = vmatprep.subr.mxu0 0.0
    %359 = vmatpush1.msra.mxu0 0.0
    %360 = vmatprep.subr.mxu0 0.0
    %361 = vmatpush1.msra.mxu0 0.0
    %362 = vmatprep.subr.mxu0 0.0
    %363 = vmatpush1.msra.mxu0 0.0
    %364 = vmatprep.subr.mxu0 0.0
    %365 = vmatpush1.msra.mxu0 0.0
    %366 = vmatprep.subr.mxu0 0.0
    %367 = vmatpush1.msra.mxu0 0.0
    %368 = vmatprep.subr.mxu0 0.0
    %369 = vmatpush1.msra.mxu0 0.0
    %370 = vmatprep.subr.mxu0 0.0
    %371 = vmatpush1.msra.mxu0 0.0
    %372 = vmatprep.subr.mxu0 0.0
    %373 = vmatpush1.msra.mxu0 0.0
    %374 = vmatprep.subr.mxu0 0.0
    %375 = vmatpush1.msra.mxu0 0.0
    %376 = vmatprep.subr.mxu0 0.0
    %377 = vmatpush1.msra.mxu0 0.0
    %378 = vmatprep.mubr.f32.mxu0 0.0
    %379 = vmatmul.mubr.f32.gmra.mrb[0].mxu0 %v243
    %v380 = vpop.f32.mrb[0].mxu0
    %v381 = vadd.f32 0.0, %v380
    %v382 = vpop.f32.mrb[0].mxu0
    %v383 = vadd.f32 0.0, %v382
    %384 = vmatprep.mubr.f32.mxu0 0.0
    %385 = vmatmul.mubr.f32.gmra.mrb[0].mxu0 %v246
    %v386 = vpop.f32.mrb[0].mxu0
    %v387 = vadd.f32 0.0, %v386
    %v388 = vpop.f32.mrb[0].mxu0
    %v389 = vadd.f32 0.0, %v388
    %390 = vmatprep.mubr.f32.mxu0 0.0
    %391 = vmatmul.mubr.f32.gmra.mrb[0].mxu0 %v249
    %v392 = vpop.f32.mrb[0].mxu0
    %v393 = vadd.f32 0.0, %v392
    %v394 = vpop.f32.mrb[0].mxu0
    %v395 = vadd.f32 0.0, %v394
    %396 = vmatprep.mubr.f32.mxu0 0.0
    %397 = vmatmul.mubr.f32.gmra.mrb[0].mxu0 %v252
    %v398 = vpop.f32.mrb[0].mxu0
    %v399 = vadd.f32 0.0, %v398
    %v400 = vpop.f32.mrb[0].mxu0
    %v401 = vadd.f32 0.0, %v400
    %402 = vmatprep.mubr.f32.mxu0 0.0
    %403 = vmatmul.mubr.f32.gmra.mrb[0].mxu0 %v255
    %v404 = vpop.f32.mrb[0].mxu0
    %v405 = vadd.f32 0.0, %v404
    %v406 = vpop.f32.mrb[0].mxu0
    %v407 = vadd.f32 0.0, %v406
    %408 = vmatprep.mubr.f32.mxu0 0.0
    %409 = vmatmul.mubr.f32.gmra.mrb[0].mxu0 %v258
    %v410 = vpop.f32.mrb[0].mxu0
    %v411 = vadd.f32 0.0, %v410
    %v412 = vpop.f32.mrb[0].mxu0
    %v413 = vadd.f32 0.0, %v412
    %414 = vmatprep.mubr.f32.mxu0 0.0
    %415 = vmatmul.mubr.f32.gmra.mrb[0].mxu0 %v261
    %v416 = vpop.f32.mrb[0].mxu0
    %v417 = vadd.f32 0.0, %v416
    %v418 = vpop.f32.mrb[0].mxu0
    %v419 = vadd.f32 0.0, %v418
    %420 = vmatprep.mubr.f32.mxu0 0.0
    %421 = vmatmul.mubr.f32.gmra.mrb[0].mxu0 %v264
    %v422 = vpop.f32.mrb[0].mxu0
    %v423 = vadd.f32 0.0, %v422
    %v424 = vpop.f32.mrb[0].mxu0
    %v425 = vadd.f32 0.0, %v424
    %426 = vmatprep.mubr.f32.mxu0 0.0
    %427 = vmatmul.mubr.f32.gmra.mrb[0].mxu0 %v267
    %v428 = vpop.f32.mrb[0].mxu0
    %v429 = vadd.f32 0.0, %v428
    %v430 = vpop.f32.mrb[0].mxu0
    %v431 = vadd.f32 0.0, %v430
    %432 = vmatprep.mubr.f32.mxu0 0.0
    %433 = vmatmul.mubr.f32.gmra.mrb[0].mxu0 %v270
    %v434 = vpop.f32.mrb[0].mxu0
    %v435 = vadd.f32 0.0, %v434
    %v436 = vpop.f32.mrb[0].mxu0
    %v437 = vadd.f32 0.0, %v436
    %438 = vmatprep.mubr.f32.mxu0 0.0
    %439 = vmatmul.mubr.f32.gmra.mrb[0].mxu0 %v273
    %v440 = vpop.f32.mrb[0].mxu0
    %v441 = vadd.f32 0.0, %v440
    %v442 = vpop.f32.mrb[0].mxu0
    %v443 = vadd.f32 0.0, %v442
    %444 = vmatprep.mubr.f32.mxu0 0.0
    %445 = vmatmul.mubr.f32.gmra.mrb[0].mxu0 %v276
    %v446 = vpop.f32.mrb[0].mxu0
    %v447 = vpop.f32.mrb[0].mxu0
    %448 = vmatprep.mubr.f32.mxu0 0.0
    %449 = vmatmul.mubr.f32.gmra.mrb[0].mxu0 %v279
    %v450 = vpop.f32.mrb[0].mxu0
    %v451 = vadd.f32 0.0, %v450
    %v452 = vpop.f32.mrb[0].mxu0
    %v453 = vadd.f32 0.0, %v452
    %454 = vmatprep.mubr.f32.mxu0 0.0
    %455 = vmatmul.mubr.f32.gmra.mrb[0].mxu0 %v282
    %v456 = vpop.f32.mrb[0].mxu0
    %v457 = vadd.f32 0.0, %v456
    %v458 = vpop.f32.mrb[0].mxu0
    %v459 = vadd.f32 0.0, %v458
    %460 = vmatprep.mubr.f32.mxu0 0.0
    %461 = vmatmul.mubr.f32.gmra.mrb[0].mxu0 %v285
    %v462 = vpop.f32.mrb[0].mxu0
    %v463 = vadd.f32 0.0, %v462
    %v464 = vpop.f32.mrb[0].mxu0
    %v465 = vadd.f32 0.0, %v464
    %466 = vmatprep.mubr.f32.mxu0 0.0
    %467 = vmatmul.mubr.f32.gmra.mrb[0].mxu0 %v288
    %v468 = vpop.f32.mrb[0].mxu0
    %v469 = vadd.f32 0.0, %v468
    %v470 = vpop.f32.mrb[0].mxu0
    %v471 = vadd.f32 0.0, %v470
    %472 = vmatprep.mubr.f32.mxu0 0.0
    %473 = vmatmul.mubr.f32.gmra.mrb[0].mxu0 %v291
    %v474 = vpop.f32.mrb[0].mxu0
    %v475 = vadd.f32 0.0, %v474
    %v476 = vpop.f32.mrb[0].mxu0
    %v477 = vadd.f32 0.0, %v476
    %478 = vmatprep.mubr.f32.mxu0 0.0
    %479 = vmatmul.mubr.f32.gmra.mrb[0].mxu0 %v294
    %v480 = vpop.f32.mrb[0].mxu0
    %v481 = vadd.f32 0.0, %v480
    %v482 = vpop.f32.mrb[0].mxu0
    %v483 = vadd.f32 0.0, %v482
    %484 = vmatprep.mubr.f32.mxu0 0.0
    %485 = vmatmul.mubr.f32.gmra.mrb[0].mxu0 %v297
    %v486 = vpop.f32.mrb[0].mxu0
    %v487 = vadd.f32 0.0, %v486
    %v488 = vpop.f32.mrb[0].mxu0
    %v489 = vadd.f32 0.0, %v488
    %490 = vmatprep.mubr.f32.mxu0 0.0
    %491 = vmatmul.mubr.f32.gmra.mrb[0].mxu0 %v300
    %v492 = vpop.f32.mrb[0].mxu0
    %v493 = vadd.f32 0.0, %v492
    %v494 = vpop.f32.mrb[0].mxu0
    %v495 = vadd.f32 0.0, %v494
    %496 = vmatprep.mubr.f32.mxu0 0.0
    %497 = vmatmul.mubr.f32.gmra.mrb[0].mxu0 %v303
    %v498 = vpop.f32.mrb[0].mxu0
    %v499 = vadd.f32 0.0, %v498
    %v500 = vpop.f32.mrb[0].mxu0
    %v501 = vadd.f32 0.0, %v500
    %502 = vmatprep.mubr.f32.mxu0 0.0
    %503 = vmatmul.mubr.f32.gmra.mrb[0].mxu0 %v306
    %v504 = vpop.f32.mrb[0].mxu0
    %v505 = vadd.f32 0.0, %v504
    %v506 = vpop.f32.mrb[0].mxu0
    %v507 = vadd.f32 0.0, %v506
    %508 = vmatprep.mubr.f32.mxu0 0.0
    %509 = vmatmul.mubr.f32.gmra.mrb[0].mxu0 %v309
    %v510 = vpop.f32.mrb[0].mxu0
    %v511 = vadd.f32 0.0, %v510
    %v512 = vpop.f32.mrb[0].mxu0
    %v513 = vadd.f32 0.0, %v512
    %514 = vmatprep.mubr.f32.mxu0 0.0
    %515 = vmatmul.mubr.f32.gmra.mrb[0].mxu0 %v312
    %v516 = vpop.f32.mrb[0].mxu0
    %v517 = vpop.f32.mrb[0].mxu0
    %518 = vdwg.mxu0
    %519 = vmatprep.subr.mxu0 %v160
    %520 = vmatpush1.msra.mxu0 %v159
    %521 = vmatprep.subr.mxu0 %v166
    %522 = vmatpush1.msra.mxu0 %v165
    %523 = vmatprep.subr.mxu0 %v172
    %524 = vmatpush1.msra.mxu0 %v171
    %525 = vmatprep.subr.mxu0 %v178
    %526 = vmatpush1.msra.mxu0 %v177
    %527 = vmatprep.subr.mxu0 %v184
    %528 = vmatpush1.msra.mxu0 %v183
    %529 = vmatprep.subr.mxu0 %v190
    %530 = vmatpush1.msra.mxu0 %v189
    %531 = vmatprep.subr.mxu0 %v196
    %532 = vmatpush1.msra.mxu0 %v195
    %533 = vmatprep.subr.mxu0 %v202
    %534 = vmatpush1.msra.mxu0 %v201
    %535 = vmatprep.subr.mxu0 %v208
    %536 = vmatpush1.msra.mxu0 %v207
    %537 = vmatprep.subr.mxu0 %v214
    %538 = vmatpush1.msra.mxu0 %v213
    %539 = vmatprep.subr.mxu0 %v220
    %540 = vmatpush1.msra.mxu0 %v219
    %541 = vmatprep.subr.mxu0 %v226
    %542 = vmatpush1.msra.mxu0 %v225
    %543 = vmatprep.subr.mxu0 %v232
    %544 = vmatpush1.msra.mxu0 %v231
    %545 = vmatprep.subr.mxu0 %v238
    %546 = vmatpush1.msra.mxu0 %v237
    %547 = vmatprep.subr.mxu0 0.0
    %548 = vmatpush1.msra.mxu0 0.0
    %549 = vmatprep.subr.mxu0 0.0
    %550 = vmatpush1.msra.mxu0 0.0
    %551 = vmatprep.subr.mxu0 0.0
    %552 = vmatpush1.msra.mxu0 0.0
    %553 = vmatprep.subr.mxu0 0.0
    %554 = vmatpush1.msra.mxu0 0.0
    %555 = vmatprep.subr.mxu0 0.0
    %556 = vmatpush1.msra.mxu0 0.0
    %557 = vmatprep.subr.mxu0 0.0
    %558 = vmatpush1.msra.mxu0 0.0
    %559 = vmatprep.subr.mxu0 0.0
    %560 = vmatpush1.msra.mxu0 0.0
    %561 = vmatprep.subr.mxu0 0.0
    %562 = vmatpush1.msra.mxu0 0.0
    %563 = vmatprep.subr.mxu0 0.0
    %564 = vmatpush1.msra.mxu0 0.0
    %565 = vmatprep.subr.mxu0 0.0
    %566 = vmatpush1.msra.mxu0 0.0
    %567 = vmatprep.subr.mxu0 0.0
    %568 = vmatpush1.msra.mxu0 0.0
    %569 = vmatprep.subr.mxu0 0.0
    %570 = vmatpush1.msra.mxu0 0.0
    %571 = vmatprep.subr.mxu0 0.0
    %572 = vmatpush1.msra.mxu0 0.0
    %573 = vmatprep.subr.mxu0 0.0
    %574 = vmatpush1.msra.mxu0 0.0
    %575 = vmatprep.subr.mxu0 0.0
    %576 = vmatpush1.msra.mxu0 0.0
    %577 = vmatprep.subr.mxu0 0.0
    %578 = vmatpush1.msra.mxu0 0.0
    %579 = vmatprep.subr.mxu0 0.0
    %580 = vmatpush1.msra.mxu0 0.0
    %581 = vmatprep.subr.mxu0 0.0
    %582 = vmatpush1.msra.mxu0 0.0
    %583 = vmatprep.mubr.f32.mxu0 0.0
    %584 = vmatmul.mubr.f32.gmra.mrb[0].mxu0 %v243
    %v585 = vpop.f32.mrb[0].mxu0
    %v586 = vadd.f32 0.0, %v585
    %v587 = vpop.f32.mrb[0].mxu0
    %v588 = vadd.f32 0.0, %v587
    %589 = vmatprep.mubr.f32.mxu0 0.0
    %590 = vmatmul.mubr.f32.gmra.mrb[0].mxu0 %v246
    %v591 = vpop.f32.mrb[0].mxu0
    %v592 = vadd.f32 0.0, %v591
    %v593 = vpop.f32.mrb[0].mxu0
    %v594 = vadd.f32 0.0, %v593
    %595 = vmatprep.mubr.f32.mxu0 0.0
    %596 = vmatmul.mubr.f32.gmra.mrb[0].mxu0 %v249
    %v597 = vpop.f32.mrb[0].mxu0
    %v598 = vadd.f32 0.0, %v597
    %v599 = vpop.f32.mrb[0].mxu0
    %v600 = vadd.f32 0.0, %v599
    %601 = vmatprep.mubr.f32.mxu0 0.0
    %602 = vmatmul.mubr.f32.gmra.mrb[0].mxu0 %v252
    %v603 = vpop.f32.mrb[0].mxu0
    %v604 = vadd.f32 0.0, %v603
    %v605 = vpop.f32.mrb[0].mxu0
    %v606 = vadd.f32 0.0, %v605
    %607 = vmatprep.mubr.f32.mxu0 0.0
    %608 = vmatmul.mubr.f32.gmra.mrb[0].mxu0 %v255
    %v609 = vpop.f32.mrb[0].mxu0
    %v610 = vadd.f32 0.0, %v609
    %v611 = vpop.f32.mrb[0].mxu0
    %v612 = vadd.f32 0.0, %v611
    %613 = vmatprep.mubr.f32.mxu0 0.0
    %614 = vmatmul.mubr.f32.gmra.mrb[0].mxu0 %v258
    %v615 = vpop.f32.mrb[0].mxu0
    %v616 = vadd.f32 0.0, %v615
    %v617 = vpop.f32.mrb[0].mxu0
    %v618 = vadd.f32 0.0, %v617
    %619 = vmatprep.mubr.f32.mxu0 0.0
    %620 = vmatmul.mubr.f32.gmra.mrb[0].mxu0 %v261
    %v621 = vpop.f32.mrb[0].mxu0
    %v622 = vadd.f32 0.0, %v621
    %v623 = vpop.f32.mrb[0].mxu0
    %v624 = vadd.f32 0.0, %v623
    %625 = vmatprep.mubr.f32.mxu0 0.0
    %626 = vmatmul.mubr.f32.gmra.mrb[0].mxu0 %v264
    %v627 = vpop.f32.mrb[0].mxu0
    %v628 = vadd.f32 0.0, %v627
    %v629 = vpop.f32.mrb[0].mxu0
    %v630 = vadd.f32 0.0, %v629
    %631 = vmatprep.mubr.f32.mxu0 0.0
    %632 = vmatmul.mubr.f32.gmra.mrb[0].mxu0 %v267
    %v633 = vpop.f32.mrb[0].mxu0
    %v634 = vadd.f32 0.0, %v633
    %v635 = vpop.f32.mrb[0].mxu0
    %v636 = vadd.f32 0.0, %v635
    %637 = vmatprep.mubr.f32.mxu0 0.0
    %638 = vmatmul.mubr.f32.gmra.mrb[0].mxu0 %v270
    %v639 = vpop.f32.mrb[0].mxu0
    %v640 = vadd.f32 0.0, %v639
    %v641 = vpop.f32.mrb[0].mxu0
    %v642 = vadd.f32 0.0, %v641
    %643 = vmatprep.mubr.f32.mxu0 0.0
    %644 = vmatmul.mubr.f32.gmra.mrb[0].mxu0 %v273
    %v645 = vpop.f32.mrb[0].mxu0
    %v646 = vadd.f32 0.0, %v645
    %v647 = vpop.f32.mrb[0].mxu0
    %v648 = vadd.f32 0.0, %v647
    %649 = vmatprep.mubr.f32.mxu0 0.0
    %650 = vmatmul.mubr.f32.gmra.mrb[0].mxu0 %v276
    %v651 = vpop.f32.mrb[0].mxu0
    %v652 = vpop.f32.mrb[0].mxu0
    %653 = vmatprep.mubr.f32.mxu0 0.0
    %654 = vmatmul.mubr.f32.gmra.mrb[0].mxu0 %v279
    %v655 = vpop.f32.mrb[0].mxu0
    %v656 = vadd.f32 0.0, %v655
    %v657 = vpop.f32.mrb[0].mxu0
    %v658 = vadd.f32 0.0, %v657
    %659 = vmatprep.mubr.f32.mxu0 0.0
    %660 = vmatmul.mubr.f32.gmra.mrb[0].mxu0 %v282
    %v661 = vpop.f32.mrb[0].mxu0
    %v662 = vadd.f32 0.0, %v661
    %v663 = vpop.f32.mrb[0].mxu0
    %v664 = vadd.f32 0.0, %v663
    %665 = vmatprep.mubr.f32.mxu0 0.0
    %666 = vmatmul.mubr.f32.gmra.mrb[0].mxu0 %v285
    %v667 = vpop.f32.mrb[0].mxu0
    %v668 = vadd.f32 0.0, %v667
    %v669 = vpop.f32.mrb[0].mxu0
    %v670 = vadd.f32 0.0, %v669
    %671 = vmatprep.mubr.f32.mxu0 0.0
    %672 = vmatmul.mubr.f32.gmra.mrb[0].mxu0 %v288
    %v673 = vpop.f32.mrb[0].mxu0
    %v674 = vadd.f32 0.0, %v673
    %v675 = vpop.f32.mrb[0].mxu0
    %v676 = vadd.f32 0.0, %v675
    %677 = vmatprep.mubr.f32.mxu0 0.0
    %678 = vmatmul.mubr.f32.gmra.mrb[0].mxu0 %v291
    %v679 = vpop.f32.mrb[0].mxu0
    %v680 = vadd.f32 0.0, %v679
    %v681 = vpop.f32.mrb[0].mxu0
    %v682 = vadd.f32 0.0, %v681
    %683 = vmatprep.mubr.f32.mxu0 0.0
    %684 = vmatmul.mubr.f32.gmra.mrb[0].mxu0 %v294
    %v685 = vpop.f32.mrb[0].mxu0
    %v686 = vadd.f32 0.0, %v685
    %v687 = vpop.f32.mrb[0].mxu0
    %v688 = vadd.f32 0.0, %v687
    %689 = vmatprep.mubr.f32.mxu0 0.0
    %690 = vmatmul.mubr.f32.gmra.mrb[0].mxu0 %v297
    %v691 = vpop.f32.mrb[0].mxu0
    %v692 = vadd.f32 0.0, %v691
    %v693 = vpop.f32.mrb[0].mxu0
    %v694 = vadd.f32 0.0, %v693
    %695 = vmatprep.mubr.f32.mxu0 0.0
    %696 = vmatmul.mubr.f32.gmra.mrb[0].mxu0 %v300
    %v697 = vpop.f32.mrb[0].mxu0
    %v698 = vadd.f32 0.0, %v697
    %v699 = vpop.f32.mrb[0].mxu0
    %v700 = vadd.f32 0.0, %v699
    %701 = vmatprep.mubr.f32.mxu0 0.0
    %702 = vmatmul.mubr.f32.gmra.mrb[0].mxu0 %v303
    %v703 = vpop.f32.mrb[0].mxu0
    %v704 = vadd.f32 0.0, %v703
    %v705 = vpop.f32.mrb[0].mxu0
    %v706 = vadd.f32 0.0, %v705
    %707 = vmatprep.mubr.f32.mxu0 0.0
    %708 = vmatmul.mubr.f32.gmra.mrb[0].mxu0 %v306
    %v709 = vpop.f32.mrb[0].mxu0
    %v710 = vadd.f32 0.0, %v709
    %v711 = vpop.f32.mrb[0].mxu0
    %v712 = vadd.f32 0.0, %v711
    %713 = vmatprep.mubr.f32.mxu0 0.0
    %714 = vmatmul.mubr.f32.gmra.mrb[0].mxu0 %v309
    %v715 = vpop.f32.mrb[0].mxu0
    %v716 = vadd.f32 0.0, %v715
    %v717 = vpop.f32.mrb[0].mxu0
    %v718 = vadd.f32 0.0, %v717
    %719 = vmatprep.mubr.f32.mxu0 0.0
    %720 = vmatmul.mubr.f32.gmra.mrb[0].mxu0 %v312
    %v721 = vpop.f32.mrb[0].mxu0
    %v722 = vpop.f32.mrb[0].mxu0
    %723 = vdwg.mxu0
    %724 = vmatprep.subr.mxu0 %v162
    %725 = vmatpush1.msra.mxu0 %v161
    %726 = vmatprep.subr.mxu0 %v168
    %727 = vmatpush1.msra.mxu0 %v167
    %728 = vmatprep.subr.mxu0 %v174
    %729 = vmatpush1.msra.mxu0 %v173
    %730 = vmatprep.subr.mxu0 %v180
    %731 = vmatpush1.msra.mxu0 %v179
    %732 = vmatprep.subr.mxu0 %v186
    %733 = vmatpush1.msra.mxu0 %v185
    %734 = vmatprep.subr.mxu0 %v192
    %735 = vmatpush1.msra.mxu0 %v191
    %736 = vmatprep.subr.mxu0 %v198
    %737 = vmatpush1.msra.mxu0 %v197
    %738 = vmatprep.subr.mxu0 %v204
    %739 = vmatpush1.msra.mxu0 %v203
    %740 = vmatprep.subr.mxu0 %v210
    %741 = vmatpush1.msra.mxu0 %v209
    %742 = vmatprep.subr.mxu0 %v216
    %743 = vmatpush1.msra.mxu0 %v215
    %744 = vmatprep.subr.mxu0 %v222
    %745 = vmatpush1.msra.mxu0 %v221
    %746 = vmatprep.subr.mxu0 %v228
    %747 = vmatpush1.msra.mxu0 %v227
    %748 = vmatprep.subr.mxu0 %v234
    %749 = vmatpush1.msra.mxu0 %v233
    %750 = vmatprep.subr.mxu0 %v240
    %751 = vmatpush1.msra.mxu0 %v239
    %752 = vmatprep.subr.mxu0 0.0
    %753 = vmatpush1.msra.mxu0 0.0
    %754 = vmatprep.subr.mxu0 0.0
    %755 = vmatpush1.msra.mxu0 0.0
    %756 = vmatprep.subr.mxu0 0.0
    %757 = vmatpush1.msra.mxu0 0.0
    %758 = vmatprep.subr.mxu0 0.0
    %759 = vmatpush1.msra.mxu0 0.0
    %760 = vmatprep.subr.mxu0 0.0
    %761 = vmatpush1.msra.mxu0 0.0
    %762 = vmatprep.subr.mxu0 0.0
    %763 = vmatpush1.msra.mxu0 0.0
    %764 = vmatprep.subr.mxu0 0.0
    %765 = vmatpush1.msra.mxu0 0.0
    %766 = vmatprep.subr.mxu0 0.0
    %767 = vmatpush1.msra.mxu0 0.0
    %768 = vmatprep.subr.mxu0 0.0
    %769 = vmatpush1.msra.mxu0 0.0
    %770 = vmatprep.subr.mxu0 0.0
    %771 = vmatpush1.msra.mxu0 0.0
    %772 = vmatprep.subr.mxu0 0.0
    %773 = vmatpush1.msra.mxu0 0.0
    %774 = vmatprep.subr.mxu0 0.0
    %775 = vmatpush1.msra.mxu0 0.0
    %776 = vmatprep.subr.mxu0 0.0
    %777 = vmatpush1.msra.mxu0 0.0
    %778 = vmatprep.subr.mxu0 0.0
    %779 = vmatpush1.msra.mxu0 0.0
    %780 = vmatprep.subr.mxu0 0.0
    %781 = vmatpush1.msra.mxu0 0.0
    %782 = vmatprep.subr.mxu0 0.0
    %783 = vmatpush1.msra.mxu0 0.0
    %784 = vmatprep.subr.mxu0 0.0
    %785 = vmatpush1.msra.mxu0 0.0
    %786 = vmatprep.subr.mxu0 0.0
    %787 = vmatpush1.msra.mxu0 0.0
    %788 = vmatprep.mubr.f32.mxu0 0.0
    %789 = vmatmul.mubr.f32.gmra.mrb[0].mxu0 %v243
    %v790 = vpop.f32.mrb[0].mxu0
    %v791 = vadd.f32 0.0, %v790
    %v792 = vpop.f32.mrb[0].mxu0
    %v793 = vadd.f32 0.0, %v792
    %794 = vmatprep.mubr.f32.mxu0 0.0
    %795 = vmatmul.mubr.f32.gmra.mrb[0].mxu0 %v246
    %v796 = vpop.f32.mrb[0].mxu0
    %v797 = vadd.f32 0.0, %v796
    %v798 = vpop.f32.mrb[0].mxu0
    %v799 = vadd.f32 0.0, %v798
    %800 = vmatprep.mubr.f32.mxu0 0.0
    %801 = vmatmul.mubr.f32.gmra.mrb[0].mxu0 %v249
    %v802 = vpop.f32.mrb[0].mxu0
    %v803 = vadd.f32 0.0, %v802
    %v804 = vpop.f32.mrb[0].mxu0
    %v805 = vadd.f32 0.0, %v804
    %806 = vmatprep.mubr.f32.mxu0 0.0
    %807 = vmatmul.mubr.f32.gmra.mrb[0].mxu0 %v252
    %v808 = vpop.f32.mrb[0].mxu0
    %v809 = vadd.f32 0.0, %v808
    %v810 = vpop.f32.mrb[0].mxu0
    %v811 = vadd.f32 0.0, %v810
    %812 = vmatprep.mubr.f32.mxu0 0.0
    %813 = vmatmul.mubr.f32.gmra.mrb[0].mxu0 %v255
    %v814 = vpop.f32.mrb[0].mxu0
    %v815 = vadd.f32 0.0, %v814
    %v816 = vpop.f32.mrb[0].mxu0
    %v817 = vadd.f32 0.0, %v816
    %818 = vmatprep.mubr.f32.mxu0 0.0
    %819 = vmatmul.mubr.f32.gmra.mrb[0].mxu0 %v258
    %v820 = vpop.f32.mrb[0].mxu0
    %v821 = vadd.f32 0.0, %v820
    %v822 = vpop.f32.mrb[0].mxu0
    %v823 = vadd.f32 0.0, %v822
    %824 = vmatprep.mubr.f32.mxu0 0.0
    %825 = vmatmul.mubr.f32.gmra.mrb[0].mxu0 %v261
    %v826 = vpop.f32.mrb[0].mxu0
    %v827 = vadd.f32 0.0, %v826
    %v828 = vpop.f32.mrb[0].mxu0
    %v829 = vadd.f32 0.0, %v828
    %830 = vmatprep.mubr.f32.mxu0 0.0
    %831 = vmatmul.mubr.f32.gmra.mrb[0].mxu0 %v264
    %v832 = vpop.f32.mrb[0].mxu0
    %v833 = vadd.f32 0.0, %v832
    %v834 = vpop.f32.mrb[0].mxu0
    %v835 = vadd.f32 0.0, %v834
    %836 = vmatprep.mubr.f32.mxu0 0.0
    %837 = vmatmul.mubr.f32.gmra.mrb[0].mxu0 %v267
    %v838 = vpop.f32.mrb[0].mxu0
    %v839 = vadd.f32 0.0, %v838
    %v840 = vpop.f32.mrb[0].mxu0
    %v841 = vadd.f32 0.0, %v840
    %842 = vmatprep.mubr.f32.mxu0 0.0
    %843 = vmatmul.mubr.f32.gmra.mrb[0].mxu0 %v270
    %v844 = vpop.f32.mrb[0].mxu0
    %v845 = vadd.f32 0.0, %v844
    %v846 = vpop.f32.mrb[0].mxu0
    %v847 = vadd.f32 0.0, %v846
    %848 = vmatprep.mubr.f32.mxu0 0.0
    %849 = vmatmul.mubr.f32.gmra.mrb[0].mxu0 %v273
    %v850 = vpop.f32.mrb[0].mxu0
    %v851 = vadd.f32 0.0, %v850
    %v852 = vpop.f32.mrb[0].mxu0
    %v853 = vadd.f32 0.0, %v852
    %854 = vmatprep.mubr.f32.mxu0 0.0
    %855 = vmatmul.mubr.f32.gmra.mrb[0].mxu0 %v276
    %v856 = vpop.f32.mrb[0].mxu0
    %v857 = vpop.f32.mrb[0].mxu0
    %858 = vmatprep.mubr.f32.mxu0 0.0
    %859 = vmatmul.mubr.f32.gmra.mrb[0].mxu0 %v279
    %v860 = vpop.f32.mrb[0].mxu0
    %v861 = vadd.f32 0.0, %v860
    %v862 = vpop.f32.mrb[0].mxu0
    %v863 = vadd.f32 0.0, %v862
    %864 = vmatprep.mubr.f32.mxu0 0.0
    %865 = vmatmul.mubr.f32.gmra.mrb[0].mxu0 %v282
    %v866 = vpop.f32.mrb[0].mxu0
    %v867 = vadd.f32 0.0, %v866
    %v868 = vpop.f32.mrb[0].mxu0
    %v869 = vadd.f32 0.0, %v868
    %870 = vmatprep.mubr.f32.mxu0 0.0
    %871 = vmatmul.mubr.f32.gmra.mrb[0].mxu0 %v285
    %v872 = vpop.f32.mrb[0].mxu0
    %v873 = vadd.f32 0.0, %v872
    %v874 = vpop.f32.mrb[0].mxu0
    %v875 = vadd.f32 0.0, %v874
    %876 = vmatprep.mubr.f32.mxu0 0.0
    %877 = vmatmul.mubr.f32.gmra.mrb[0].mxu0 %v288
    %v878 = vpop.f32.mrb[0].mxu0
    %v879 = vadd.f32 0.0, %v878
    %v880 = vpop.f32.mrb[0].mxu0
    %v881 = vadd.f32 0.0, %v880
    %882 = vmatprep.mubr.f32.mxu0 0.0
    %883 = vmatmul.mubr.f32.gmra.mrb[0].mxu0 %v291
    %v884 = vpop.f32.mrb[0].mxu0
    %v885 = vadd.f32 0.0, %v884
    %v886 = vpop.f32.mrb[0].mxu0
    %v887 = vadd.f32 0.0, %v886
    %888 = vmatprep.mubr.f32.mxu0 0.0
    %889 = vmatmul.mubr.f32.gmra.mrb[0].mxu0 %v294
    %v890 = vpop.f32.mrb[0].mxu0
    %v891 = vadd.f32 0.0, %v890
    %v892 = vpop.f32.mrb[0].mxu0
    %v893 = vadd.f32 0.0, %v892
    %894 = vmatprep.mubr.f32.mxu0 0.0
    %895 = vmatmul.mubr.f32.gmra.mrb[0].mxu0 %v297
    %v896 = vpop.f32.mrb[0].mxu0
    %v897 = vadd.f32 0.0, %v896
    %v898 = vpop.f32.mrb[0].mxu0
    %v899 = vadd.f32 0.0, %v898
    %900 = vmatprep.mubr.f32.mxu0 0.0
    %901 = vmatmul.mubr.f32.gmra.mrb[0].mxu0 %v300
    %v902 = vpop.f32.mrb[0].mxu0
    %v903 = vadd.f32 0.0, %v902
    %v904 = vpop.f32.mrb[0].mxu0
    %v905 = vadd.f32 0.0, %v904
    %906 = vmatprep.mubr.f32.mxu0 0.0
    %907 = vmatmul.mubr.f32.gmra.mrb[0].mxu0 %v303
    %v908 = vpop.f32.mrb[0].mxu0
    %v909 = vadd.f32 0.0, %v908
    %v910 = vpop.f32.mrb[0].mxu0
    %v911 = vadd.f32 0.0, %v910
    %912 = vmatprep.mubr.f32.mxu0 0.0
    %913 = vmatmul.mubr.f32.gmra.mrb[0].mxu0 %v306
    %v914 = vpop.f32.mrb[0].mxu0
    %v915 = vadd.f32 0.0, %v914
    %v916 = vpop.f32.mrb[0].mxu0
    %v917 = vadd.f32 0.0, %v916
    %918 = vmatprep.mubr.f32.mxu0 0.0
    %919 = vmatmul.mubr.f32.gmra.mrb[0].mxu0 %v309
    %v920 = vpop.f32.mrb[0].mxu0
    %v921 = vadd.f32 0.0, %v920
    %v922 = vpop.f32.mrb[0].mxu0
    %v923 = vadd.f32 0.0, %v922
    %924 = vmatprep.mubr.f32.mxu0 0.0
    %925 = vmatmul.mubr.f32.gmra.mrb[0].mxu0 %v312
    %v926 = vpop.f32.mrb[0].mxu0
    %v927 = vpop.f32.mrb[0].mxu0
    %928 = vdwg.mxu0
    %v929 = vmax.f32 %v381, %v588
    %v930 = vmax.f32 %v383, %v791
    %v931 = vmax.f32 %v586, %v793
    %v932 = vmax.f32 %v387, %v594
    %v933 = vmax.f32 %v389, %v797
    %v934 = vmax.f32 %v592, %v799
    %v935 = vmax.f32 %v393, %v600
    %v936 = vmax.f32 %v395, %v803
    %v937 = vmax.f32 %v598, %v805
    %v938 = vmax.f32 %v399, %v606
    %v939 = vmax.f32 %v401, %v809
    %v940 = vmax.f32 %v604, %v811
    %v941 = vmax.f32 %v405, %v612
    %v942 = vmax.f32 %v407, %v815
    %v943 = vmax.f32 %v610, %v817
    %v944 = vmax.f32 %v411, %v618
    %v945 = vmax.f32 %v413, %v821
    %v946 = vmax.f32 %v616, %v823
    %v947 = vmax.f32 %v417, %v624
    %v948 = vmax.f32 %v419, %v827
    %v949 = vmax.f32 %v622, %v829
    %v950 = vmax.f32 %v423, %v630
    %v951 = vmax.f32 %v425, %v833
    %v952 = vmax.f32 %v628, %v835
    %v953 = vmax.f32 %v429, %v636
    %v954 = vmax.f32 %v431, %v839
    %v955 = vmax.f32 %v634, %v841
    %v956 = vmax.f32 %v435, %v642
    %v957 = vmax.f32 %v437, %v845
    %v958 = vmax.f32 %v640, %v847
    %v959 = vmax.f32 %v441, %v648
    %v960 = vmax.f32 %v443, %v851
    %v961 = vmax.f32 %v646, %v853
    %v962 = vmax.f32 %v451, %v658
    %v963 = vmax.f32 %v453, %v861
    %v964 = vmax.f32 %v656, %v863
    %v965 = vmax.f32 %v457, %v664
    %v966 = vmax.f32 %v459, %v867
    %v967 = vmax.f32 %v662, %v869
    %v968 = vmax.f32 %v463, %v670
    %v969 = vmax.f32 %v465, %v873
    %v970 = vmax.f32 %v668, %v875
    %v971 = vmax.f32 %v469, %v676
    %v972 = vmax.f32 %v471, %v879
    %v973 = vmax.f32 %v674, %v881
    %v974 = vmax.f32 %v475, %v682
    %v975 = vmax.f32 %v477, %v885
    %v976 = vmax.f32 %v680, %v887
    %v977 = vmax.f32 %v481, %v688
    %v978 = vmax.f32 %v483, %v891
    %v979 = vmax.f32 %v686, %v893
    %v980 = vmax.f32 %v487, %v694
    %v981 = vmax.f32 %v489, %v897
    %v982 = vmax.f32 %v692, %v899
    %v983 = vmax.f32 %v493, %v700
    %v984 = vmax.f32 %v495, %v903
    %v985 = vmax.f32 %v698, %v905
    %v986 = vmax.f32 %v499, %v706
    %v987 = vmax.f32 %v501, %v909
    %v988 = vmax.f32 %v704, %v911
    %v989 = vmax.f32 %v505, %v712
    %v990 = vmax.f32 %v507, %v915
    %v991 = vmax.f32 %v710, %v917
    %v992 = vmax.f32 %v511, %v718
    %v993 = vmax.f32 %v513, %v921
    %v994 = vmax.f32 %v716, %v923
    %v995 = vmax.f32 %v929, %v962
    %v996 = vmax.f32 %v930, %v963
    %v997 = vmax.f32 %v931, %v964
    %v998 = vmax.f32 %v932, %v965
    %v999 = vmax.f32 %v933, %v966
    %v1000 = vmax.f32 %v934, %v967
    %v1001 = vmax.f32 %v935, %v968
    %v1002 = vmax.f32 %v936, %v969
    %v1003 = vmax.f32 %v937, %v970
    %v1004 = vmax.f32 %v938, %v971
    %v1005 = vmax.f32 %v939, %v972
    %v1006 = vmax.f32 %v940, %v973
    %v1007 = vmax.f32 %v941, %v974
    %v1008 = vmax.f32 %v942, %v975
    %v1009 = vmax.f32 %v943, %v976
    %v1010 = vmax.f32 %v944, %v977
    %v1011 = vmax.f32 %v945, %v978
    %v1012 = vmax.f32 %v946, %v979
    %v1013 = vmax.f32 %v947, %v980
    %v1014 = vmax.f32 %v948, %v981
    %v1015 = vmax.f32 %v949, %v982
    %v1016 = vmax.f32 %v950, %v983
    %v1017 = vmax.f32 %v951, %v984
    %v1018 = vmax.f32 %v952, %v985
    %v1019 = vmax.f32 %v953, %v986
    %v1020 = vmax.f32 %v954, %v987
    %v1021 = vmax.f32 %v955, %v988
    %v1022 = vmax.f32 %v956, %v989
    %v1023 = vmax.f32 %v957, %v990
    %v1024 = vmax.f32 %v958, %v991
    %v1025 = vmax.f32 %v959, %v992
    %v1026 = vmax.f32 %v960, %v993
    %v1027 = vmax.f32 %v961, %v994
    %v1028 = vld [vmem:[#allocation4] sm:$0x7]
    %v1030 = vlaneseq
    %v1031 = vshrl.u32 %v1030, 7
    %v1032 = vsub.s32 0, %v1031
    %v1033 = vrot.slane %v1028, %v1032
    %v1034 = vlaneseq
    %v1035 = vshrl.u32 %v1034, 7
    %v1036 = vsub.s32 1, %v1035
    %v1037 = vrot.slane %v1028, %v1036
    %v1038 = vlaneseq
    %v1039 = vshrl.u32 %v1038, 7
    %v1040 = vsub.s32 2, %v1039
    %v1041 = vrot.slane %v1028, %v1040
    %v1045 = vadd.f32 %v995, %v1033
    %v1046 = vadd.f32 %v996, %v1037
    %v1047 = vadd.f32 %v997, %v1041
    %v1048 = vadd.f32 %v998, %v1033
    %v1049 = vadd.f32 %v999, %v1037
    %v1050 = vadd.f32 %v1000, %v1041
    %v1051 = vadd.f32 %v1001, %v1033
    %v1052 = vadd.f32 %v1002, %v1037
    %v1053 = vadd.f32 %v1003, %v1041
    %v1054 = vadd.f32 %v1004, %v1033
    %v1055 = vadd.f32 %v1005, %v1037
    %v1056 = vadd.f32 %v1006, %v1041
    %v1057 = vadd.f32 %v1007, %v1033
    %v1058 = vadd.f32 %v1008, %v1037
    %v1059 = vadd.f32 %v1009, %v1041
    %v1060 = vadd.f32 %v1010, %v1033
    %v1061 = vadd.f32 %v1011, %v1037
    %v1062 = vadd.f32 %v1012, %v1041
    %v1063 = vadd.f32 %v1013, %v1033
    %v1064 = vadd.f32 %v1014, %v1037
    %v1065 = vadd.f32 %v1015, %v1041
    %v1066 = vadd.f32 %v1016, %v1033
    %v1067 = vadd.f32 %v1017, %v1037
    %v1068 = vadd.f32 %v1018, %v1041
    %v1069 = vadd.f32 %v1019, %v1033
    %v1070 = vadd.f32 %v1020, %v1037
    %v1071 = vadd.f32 %v1021, %v1041
    %v1072 = vadd.f32 %v1022, %v1033
    %v1073 = vadd.f32 %v1023, %v1037
    %v1074 = vadd.f32 %v1024, %v1041
    %v1075 = vadd.f32 %v1025, %v1033
    %v1076 = vadd.f32 %v1026, %v1037
    %v1077 = vadd.f32 %v1027, %v1041
    %v1078 = vmax.f32 %v1045, 0.0
    %v1079 = vmax.f32 %v1046, 0.0
    %v1080 = vmax.f32 %v1047, 0.0
    %v1081 = vmax.f32 %v1048, 0.0
    %v1082 = vmax.f32 %v1049, 0.0
    %v1083 = vmax.f32 %v1050, 0.0
    %v1084 = vmax.f32 %v1051, 0.0
    %v1085 = vmax.f32 %v1052, 0.0
    %v1086 = vmax.f32 %v1053, 0.0
    %v1087 = vmax.f32 %v1054, 0.0
    %v1088 = vmax.f32 %v1055, 0.0
    %v1089 = vmax.f32 %v1056, 0.0
    %v1090 = vmax.f32 %v1057, 0.0
    %v1091 = vmax.f32 %v1058, 0.0
    %v1092 = vmax.f32 %v1059, 0.0
    %v1093 = vmax.f32 %v1060, 0.0
    %v1094 = vmax.f32 %v1061, 0.0
    %v1095 = vmax.f32 %v1062, 0.0
    %v1096 = vmax.f32 %v1063, 0.0
    %v1097 = vmax.f32 %v1064, 0.0
    %v1098 = vmax.f32 %v1065, 0.0
    %v1099 = vmax.f32 %v1066, 0.0
    %v1100 = vmax.f32 %v1067, 0.0
    %v1101 = vmax.f32 %v1068, 0.0
    %v1102 = vmax.f32 %v1069, 0.0
    %v1103 = vmax.f32 %v1070, 0.0
    %v1104 = vmax.f32 %v1071, 0.0
    %v1105 = vmax.f32 %v1072, 0.0
    %v1106 = vmax.f32 %v1073, 0.0
    %v1107 = vmax.f32 %v1074, 0.0
    %v1108 = vmax.f32 %v1075, 0.0
    %v1109 = vmax.f32 %v1076, 0.0
    %v1110 = vmax.f32 %v1077, 0.0
    %v1111 = vld [vmem:[#allocation6] sm:$0xff]
    %v1112 = vld [vmem:[#allocation6 + $0x8] sm:$0xff]
    %v1113 = vld [vmem:[#allocation6 + $0x10] sm:$0xff]
    %v1114 = vld [vmem:[#allocation6 + $0x18] sm:$0xff]
    %v1115 = vld [vmem:[#allocation6 + $0x20] sm:$0xff]
    %v1116 = vld [vmem:[#allocation6 + $0x28] sm:$0xff]
    %v1117 = vld [vmem:[#allocation6 + $0x30] sm:$0xff]
    %v1118 = vld [vmem:[#allocation6 + $0x38] sm:$0xff]
    %v1119 = vld [vmem:[#allocation6 + $0x40] sm:$0xff]
    %v1120 = vld [vmem:[#allocation6 + $0x48] sm:$0xff]
    %v1121 = vld [vmem:[#allocation6 + $0x50] sm:$0xff]
    %v1122 = vld [vmem:[#allocation6 + $0x58] sm:$0xff]
    %v1123 = vld [vmem:[#allocation6 + $0x60] sm:$0xff]
    %v1124 = vld [vmem:[#allocation6 + $0x68] sm:$0xff]
    %v1125 = vld [vmem:[#allocation6 + $0x70] sm:$0xff]
    %v1126 = vld [vmem:[#allocation6 + $0x78] sm:$0xff]
    %v1127 = vld [vmem:[#allocation6 + $0x80] sm:$0xff]
    %v1128 = vld [vmem:[#allocation6 + $0x88] sm:$0xff]
    %v1129 = vld [vmem:[#allocation6 + $0x90] sm:$0xff]
    %v1130 = vld [vmem:[#allocation6 + $0x98] sm:$0xff]
    %v1131 = vld [vmem:[#allocation6 + $0xa0] sm:$0xff]
    %v1132 = vld [vmem:[#allocation6 + $0xa8] sm:$0xff]
    %v1133 = vld [vmem:[#allocation6 + $0xb0] sm:$0xff]
    %v1134 = vld [vmem:[#allocation6 + $0xb8] sm:$0xff]
    %v1135 = vld [vmem:[#allocation6 + $0xc0] sm:$0xff]
    %v1136 = vld [vmem:[#allocation6 + $0xc8] sm:$0xff]
    %v1137 = vld [vmem:[#allocation6 + $0xd0] sm:$0xff]
    %v1138 = vld [vmem:[#allocation6 + $0xd8] sm:$0xff]
    %v1139 = vld [vmem:[#allocation6 + $0xe0] sm:$0xff]
    %v1140 = vld [vmem:[#allocation6 + $0xe8] sm:$0xff]
    %v1141 = vld [vmem:[#allocation6 + $0xf0] sm:$0xff]
    %v1142 = vld [vmem:[#allocation6 + $0xf8] sm:$0xff]
    %v1143 = vld [vmem:[#allocation6 + $0x100] sm:$0xff]
    %v1144 = vld [vmem:[#allocation6 + $0x108] sm:$0xff]
    %v1145 = vld [vmem:[#allocation6 + $0x110] sm:$0xff]
    %v1146 = vld [vmem:[#allocation6 + $0x118] sm:$0xff]
    %v1147 = vld [vmem:[#allocation6 + $0x120] sm:$0xff]
    %v1148 = vld [vmem:[#allocation6 + $0x128] sm:$0xff]
    %v1149 = vld [vmem:[#allocation6 + $0x130] sm:$0xff]
    %v1150 = vld [vmem:[#allocation6 + $0x138] sm:$0xff]
    %v1151 = vld [vmem:[#allocation6 + $0x140] sm:$0xff]
    %v1152 = vld [vmem:[#allocation6 + $0x148] sm:$0xff]
    %v1153 = vld [vmem:[#allocation6 + $0x150] sm:$0xff]
    %v1154 = vld [vmem:[#allocation6 + $0x158] sm:$0xff]
    %v1155 = vld [vmem:[#allocation6 + $0x160] sm:$0xff]
    %v1156 = vld [vmem:[#allocation6 + $0x168] sm:$0xff]
    %v1157 = vld [vmem:[#allocation6 + $0x170] sm:$0xff]
    %v1158 = vld [vmem:[#allocation6 + $0x178] sm:$0xff]
    %v1159 = vld [vmem:[#allocation6 + $0x180] sm:$0xff]
    %v1160 = vld [vmem:[#allocation6 + $0x188] sm:$0xff]
    %v1161 = vld [vmem:[#allocation6 + $0x190] sm:$0xff]
    %v1162 = vld [vmem:[#allocation6 + $0x198] sm:$0xff]
    %v1163 = vld [vmem:[#allocation6 + $0x1a0] sm:$0xff]
    %v1164 = vld [vmem:[#allocation6 + $0x1a8] sm:$0xff]
    %v1165 = vld [vmem:[#allocation6 + $0x1b0] sm:$0xff]
    %v1166 = vld [vmem:[#allocation6 + $0x1b8] sm:$0xff]
    %v1167 = vld [vmem:[#allocation6 + $0x1c0] sm:$0xff]
    %v1168 = vld [vmem:[#allocation6 + $0x1c8] sm:$0xff]
    %v1169 = vld [vmem:[#allocation6 + $0x1d0] sm:$0xff]
    %v1170 = vld [vmem:[#allocation6 + $0x1d8] sm:$0xff]
    %v1171 = vld [vmem:[#allocation6 + $0x1e0] sm:$0xff]
    %v1172 = vld [vmem:[#allocation6 + $0x1e8] sm:$0xff]
    %v1173 = vld [vmem:[#allocation6 + $0x1f0] sm:$0xff]
    %v1174 = vld [vmem:[#allocation6 + $0x1f8] sm:$0xff]
    %v1175 = vld [vmem:[#allocation6 + $0x200] sm:$0xff]
    %v1176 = vld [vmem:[#allocation6 + $0x208] sm:$0xff]
    %v1177 = vld [vmem:[#allocation6 + $0x210] sm:$0xff]
    %v1178 = vld [vmem:[#allocation6 + $0x218] sm:$0xff]
    %v1179 = vld [vmem:[#allocation6 + $0x220] sm:$0xff]
    %v1180 = vld [vmem:[#allocation6 + $0x228] sm:$0xff]
    %v1181 = vld [vmem:[#allocation6 + $0x230] sm:$0xff]
    %v1182 = vld [vmem:[#allocation6 + $0x238] sm:$0xff]
    %v1183 = vld [vmem:[#allocation6 + $0x240] sm:$0xff]
    %v1184 = vld [vmem:[#allocation6 + $0x248] sm:$0xff]
    %v1185 = vld [vmem:[#allocation6 + $0x250] sm:$0xff]
    %v1186 = vld [vmem:[#allocation6 + $0x258] sm:$0xff]
    %v1187 = vld [vmem:[#allocation6 + $0x260] sm:$0xff]
    %v1188 = vld [vmem:[#allocation6 + $0x268] sm:$0xff]
    %v1189 = vld [vmem:[#allocation6 + $0x270] sm:$0xff]
    %v1190 = vld [vmem:[#allocation6 + $0x278] sm:$0xff]
    %v1191 = vld [vmem:[#allocation6 + $0x280] sm:$0xff]
    %v1192 = vld [vmem:[#allocation6 + $0x288] sm:$0xff]
    %v1193 = vld [vmem:[#allocation6 + $0x290] sm:$0xff]
    %v1194 = vld [vmem:[#allocation6 + $0x298] sm:$0xff]
    %v1195 = vld [vmem:[#allocation6 + $0x2a0] sm:$0xff]
    %v1196 = vld [vmem:[#allocation6 + $0x2a8] sm:$0xff]
    %v1197 = vld [vmem:[#allocation6 + $0x2b0] sm:$0xff]
    %v1198 = vld [vmem:[#allocation6 + $0x2b8] sm:$0xff]
    %v1199 = vld [vmem:[#allocation6 + $0x2c0] sm:$0xff]
    %v1200 = vld [vmem:[#allocation6 + $0x2c8] sm:$0xff]
    %v1201 = vld [vmem:[#allocation6 + $0x2d0] sm:$0xff]
    %v1202 = vld [vmem:[#allocation6 + $0x2d8] sm:$0xff]
    %v1203 = vld [vmem:[#allocation6 + $0x2e0] sm:$0xff]
    %v1204 = vld [vmem:[#allocation6 + $0x2e8] sm:$0xff]
    %v1205 = vld [vmem:[#allocation6 + $0x2f0] sm:$0xff]
    %v1206 = vld [vmem:[#allocation6 + $0x2f8] sm:$0xff]
    %v1207 = vld [vmem:[#allocation6 + $0x300] sm:$0xff]
    %v1208 = vld [vmem:[#allocation6 + $0x308] sm:$0xff]
    %v1209 = vld [vmem:[#allocation6 + $0x310] sm:$0xff]
    %v1210 = vld [vmem:[#allocation6 + $0x318] sm:$0xff]
    %v1211 = vld [vmem:[#allocation6 + $0x320] sm:$0xff]
    %v1212 = vld [vmem:[#allocation6 + $0x328] sm:$0xff]
    %v1213 = vld [vmem:[#allocation6 + $0x330] sm:$0xff]
    %v1214 = vld [vmem:[#allocation6 + $0x338] sm:$0xff]
    %v1215 = vld [vmem:[#allocation6 + $0x340] sm:$0xff]
    %v1216 = vld [vmem:[#allocation6 + $0x348] sm:$0xff]
    %v1217 = vld [vmem:[#allocation6 + $0x350] sm:$0xff]
    %v1218 = vld [vmem:[#allocation6 + $0x358] sm:$0xff]
    %v1219 = vld [vmem:[#allocation6 + $0x360] sm:$0xff]
    %v1220 = vld [vmem:[#allocation6 + $0x368] sm:$0xff]
    %v1221 = vld [vmem:[#allocation6 + $0x370] sm:$0xff]
    %v1222 = vld [vmem:[#allocation6 + $0x378] sm:$0xff]
    %v1223 = vld [vmem:[#allocation6 + $0x380] sm:$0xff]
    %v1224 = vld [vmem:[#allocation6 + $0x388] sm:$0xff]
    %v1225 = vld [vmem:[#allocation6 + $0x390] sm:$0xff]
    %v1226 = vld [vmem:[#allocation6 + $0x398] sm:$0xff]
    %v1227 = vld [vmem:[#allocation6 + $0x3a0] sm:$0xff]
    %v1228 = vld [vmem:[#allocation6 + $0x3a8] sm:$0xff]
    %v1229 = vld [vmem:[#allocation6 + $0x3b0] sm:$0xff]
    %v1230 = vld [vmem:[#allocation6 + $0x3b8] sm:$0xff]
    %v1231 = vld [vmem:[#allocation6 + $0x3c0] sm:$0xff]
    %v1232 = vld [vmem:[#allocation6 + $0x3c8] sm:$0xff]
    %v1233 = vld [vmem:[#allocation6 + $0x3d0] sm:$0xff]
    %v1234 = vld [vmem:[#allocation6 + $0x3d8] sm:$0xff]
    %v1235 = vld [vmem:[#allocation6 + $0x3e0] sm:$0xff]
    %v1236 = vld [vmem:[#allocation6 + $0x3e8] sm:$0xff]
    %v1237 = vld [vmem:[#allocation6 + $0x3f0] sm:$0xff]
    %v1238 = vld [vmem:[#allocation6 + $0x3f8] sm:$0xff]
    %v1239 = vld [vmem:[#allocation6 + $0x400] sm:$0xff]
    %v1240 = vld [vmem:[#allocation6 + $0x408] sm:$0xff]
    %v1241 = vld [vmem:[#allocation6 + $0x410] sm:$0xff]
    %v1242 = vld [vmem:[#allocation6 + $0x418] sm:$0xff]
    %v1243 = vld [vmem:[#allocation6 + $0x420] sm:$0xff]
    %v1244 = vld [vmem:[#allocation6 + $0x428] sm:$0xff]
    %v1245 = vld [vmem:[#allocation6 + $0x430] sm:$0xff]
    %v1246 = vld [vmem:[#allocation6 + $0x438] sm:$0xff]
    %v1247 = vld [vmem:[#allocation6 + $0x440] sm:$0xff]
    %v1248 = vld [vmem:[#allocation6 + $0x448] sm:$0xff]
    %v1249 = vld [vmem:[#allocation6 + $0x450] sm:$0xff]
    %v1250 = vld [vmem:[#allocation6 + $0x458] sm:$0xff]
    %v1251 = vld [vmem:[#allocation6 + $0x460] sm:$0xff]
    %v1252 = vld [vmem:[#allocation6 + $0x468] sm:$0xff]
    %v1253 = vld [vmem:[#allocation6 + $0x470] sm:$0xff]
    %v1254 = vld [vmem:[#allocation6 + $0x478] sm:$0xff]
    %v1255 = vld [vmem:[#allocation6 + $0x480] sm:$0xff]
    %v1256 = vld [vmem:[#allocation6 + $0x488] sm:$0xff]
    %v1257 = vld [vmem:[#allocation6 + $0x490] sm:$0xff]
    %v1258 = vld [vmem:[#allocation6 + $0x498] sm:$0xff]
    %v1259 = vld [vmem:[#allocation6 + $0x4a0] sm:$0xff]
    %v1260 = vld [vmem:[#allocation6 + $0x4a8] sm:$0xff]
    %v1261 = vld [vmem:[#allocation6 + $0x4b0] sm:$0xff]
    %v1262 = vld [vmem:[#allocation6 + $0x4b8] sm:$0xff]
    %v1263 = vld [vmem:[#allocation6 + $0x4c0] sm:$0xff]
    %v1264 = vld [vmem:[#allocation6 + $0x4c8] sm:$0xff]
    %v1265 = vld [vmem:[#allocation6 + $0x4d0] sm:$0xff]
    %v1266 = vld [vmem:[#allocation6 + $0x4d8] sm:$0xff]
    %v1267 = vld [vmem:[#allocation6 + $0x4e0] sm:$0xff]
    %v1268 = vld [vmem:[#allocation6 + $0x4e8] sm:$0xff]
    %v1269 = vld [vmem:[#allocation6 + $0x4f0] sm:$0xff]
    %v1270 = vld [vmem:[#allocation6 + $0x4f8] sm:$0xff]
    %v1271 = vld [vmem:[#allocation6 + $0x500] sm:$0xff]
    %v1272 = vld [vmem:[#allocation6 + $0x508] sm:$0xff]
    %v1273 = vld [vmem:[#allocation6 + $0x510] sm:$0xff]
    %v1274 = vld [vmem:[#allocation6 + $0x518] sm:$0xff]
    %v1275 = vld [vmem:[#allocation6 + $0x520] sm:$0xff]
    %v1276 = vld [vmem:[#allocation6 + $0x528] sm:$0xff]
    %v1277 = vld [vmem:[#allocation6 + $0x530] sm:$0xff]
    %v1278 = vld [vmem:[#allocation6 + $0x538] sm:$0xff]
    %v1279 = vld [vmem:[#allocation6 + $0x540] sm:$0xff]
    %v1280 = vld [vmem:[#allocation6 + $0x548] sm:$0xff]
    %v1281 = vld [vmem:[#allocation6 + $0x550] sm:$0xff]
    %v1282 = vld [vmem:[#allocation6 + $0x558] sm:$0xff]
    %v1283 = vld [vmem:[#allocation6 + $0x560] sm:$0xff]
    %v1284 = vld [vmem:[#allocation6 + $0x568] sm:$0xff]
    %v1285 = vld [vmem:[#allocation6 + $0x570] sm:$0xff]
    %v1286 = vld [vmem:[#allocation6 + $0x578] sm:$0xff]
    %v1287 = vld [vmem:[#allocation6 + $0x580] sm:$0xff]
    %v1288 = vld [vmem:[#allocation6 + $0x588] sm:$0xff]
    %v1289 = vld [vmem:[#allocation6 + $0x590] sm:$0xff]
    %v1290 = vld [vmem:[#allocation6 + $0x598] sm:$0xff]
    %v1291 = vld [vmem:[#allocation6 + $0x5a0] sm:$0xff]
    %v1292 = vld [vmem:[#allocation6 + $0x5a8] sm:$0xff]
    %v1293 = vld [vmem:[#allocation6 + $0x5b0] sm:$0xff]
    %v1294 = vld [vmem:[#allocation6 + $0x5b8] sm:$0xff]
    %v1295 = vld [vmem:[#allocation6 + $0x5c0] sm:$0xff]
    %v1296 = vld [vmem:[#allocation6 + $0x5c8] sm:$0xff]
    %v1297 = vld [vmem:[#allocation6 + $0x5d0] sm:$0xff]
    %v1298 = vld [vmem:[#allocation6 + $0x5d8] sm:$0xff]
    %v1299 = vld [vmem:[#allocation6 + $0x5e0] sm:$0xff]
    %v1300 = vld [vmem:[#allocation6 + $0x5e8] sm:$0xff]
    %v1301 = vld [vmem:[#allocation6 + $0x5f0] sm:$0xff]
    %v1302 = vld [vmem:[#allocation6 + $0x5f8] sm:$0xff]
    %s1303 = scalar_lea.vmem [#allocation6], 1536
    %v1304 = vld [vmem:[%s1303] sm:$0xff]
    %v1305 = vld [vmem:[%s1303 + $0x8] sm:$0xff]
    %v1306 = vld [vmem:[%s1303 + $0x10] sm:$0xff]
    %v1307 = vld [vmem:[%s1303 + $0x18] sm:$0xff]
    %v1308 = vld [vmem:[%s1303 + $0x20] sm:$0xff]
    %v1309 = vld [vmem:[%s1303 + $0x28] sm:$0xff]
    %v1310 = vld [vmem:[%s1303 + $0x30] sm:$0xff]
    %v1311 = vld [vmem:[%s1303 + $0x38] sm:$0xff]
    %v1312 = vld [vmem:[%s1303 + $0x40] sm:$0xff]
    %v1313 = vld [vmem:[%s1303 + $0x48] sm:$0xff]
    %v1314 = vld [vmem:[%s1303 + $0x50] sm:$0xff]
    %v1315 = vld [vmem:[%s1303 + $0x58] sm:$0xff]
    %v1316 = vld [vmem:[%s1303 + $0x60] sm:$0xff]
    %v1317 = vld [vmem:[%s1303 + $0x68] sm:$0xff]
    %v1318 = vld [vmem:[%s1303 + $0x70] sm:$0xff]
    %v1319 = vld [vmem:[%s1303 + $0x78] sm:$0xff]
    %v1320 = vld [vmem:[%s1303 + $0x80] sm:$0xff]
    %v1321 = vld [vmem:[%s1303 + $0x88] sm:$0xff]
    %v1322 = vld [vmem:[%s1303 + $0x90] sm:$0xff]
    %v1323 = vld [vmem:[%s1303 + $0x98] sm:$0xff]
    %v1324 = vld [vmem:[%s1303 + $0xa0] sm:$0xff]
    %v1325 = vld [vmem:[%s1303 + $0xa8] sm:$0xff]
    %v1326 = vld [vmem:[%s1303 + $0xb0] sm:$0xff]
    %v1327 = vld [vmem:[%s1303 + $0xb8] sm:$0xff]
    %v1328 = vld [vmem:[%s1303 + $0xc0] sm:$0xff]
    %v1329 = vld [vmem:[%s1303 + $0xc8] sm:$0xff]
    %v1330 = vld [vmem:[%s1303 + $0xd0] sm:$0xff]
    %v1331 = vld [vmem:[%s1303 + $0xd8] sm:$0xff]
    %v1332 = vld [vmem:[%s1303 + $0xe0] sm:$0xff]
    %v1333 = vld [vmem:[%s1303 + $0xe8] sm:$0xff]
    %v1334 = vld [vmem:[%s1303 + $0xf0] sm:$0xff]
    %v1335 = vld [vmem:[%s1303 + $0xf8] sm:$0xff]
    %v1336 = vld [vmem:[%s1303 + $0x100] sm:$0xff]
    %v1337 = vld [vmem:[%s1303 + $0x108] sm:$0xff]
    %v1338 = vld [vmem:[%s1303 + $0x110] sm:$0xff]
    %v1339 = vld [vmem:[%s1303 + $0x118] sm:$0xff]
    %v1340 = vld [vmem:[%s1303 + $0x120] sm:$0xff]
    %v1341 = vld [vmem:[%s1303 + $0x128] sm:$0xff]
    %v1342 = vld [vmem:[%s1303 + $0x130] sm:$0xff]
    %v1343 = vld [vmem:[%s1303 + $0x138] sm:$0xff]
    %v1344 = vld [vmem:[%s1303 + $0x140] sm:$0xff]
    %v1345 = vld [vmem:[%s1303 + $0x148] sm:$0xff]
    %v1346 = vld [vmem:[%s1303 + $0x150] sm:$0xff]
    %v1347 = vld [vmem:[%s1303 + $0x158] sm:$0xff]
    %v1348 = vld [vmem:[%s1303 + $0x160] sm:$0xff]
    %v1349 = vld [vmem:[%s1303 + $0x168] sm:$0xff]
    %v1350 = vld [vmem:[%s1303 + $0x170] sm:$0xff]
    %v1351 = vld [vmem:[%s1303 + $0x178] sm:$0xff]
    %v1352 = vld [vmem:[%s1303 + $0x180] sm:$0xff]
    %v1353 = vld [vmem:[%s1303 + $0x188] sm:$0xff]
    %v1354 = vld [vmem:[%s1303 + $0x190] sm:$0xff]
    %v1355 = vld [vmem:[%s1303 + $0x198] sm:$0xff]
    %v1356 = vld [vmem:[%s1303 + $0x1a0] sm:$0xff]
    %v1357 = vld [vmem:[%s1303 + $0x1a8] sm:$0xff]
    %v1358 = vld [vmem:[%s1303 + $0x1b0] sm:$0xff]
    %v1359 = vld [vmem:[%s1303 + $0x1b8] sm:$0xff]
    %v1360 = vld [vmem:[%s1303 + $0x1c0] sm:$0xff]
    %v1361 = vld [vmem:[%s1303 + $0x1c8] sm:$0xff]
    %v1362 = vld [vmem:[%s1303 + $0x1d0] sm:$0xff]
    %v1363 = vld [vmem:[%s1303 + $0x1d8] sm:$0xff]
    %v1364 = vld [vmem:[%s1303 + $0x1e0] sm:$0xff]
    %v1365 = vld [vmem:[%s1303 + $0x1e8] sm:$0xff]
    %v1366 = vld [vmem:[%s1303 + $0x1f0] sm:$0xff]
    %v1367 = vld [vmem:[%s1303 + $0x1f8] sm:$0xff]
    %v1368 = vld [vmem:[%s1303 + $0x200] sm:$0xff]
    %v1369 = vld [vmem:[%s1303 + $0x208] sm:$0xff]
    %v1370 = vld [vmem:[%s1303 + $0x210] sm:$0xff]
    %v1371 = vld [vmem:[%s1303 + $0x218] sm:$0xff]
    %v1372 = vld [vmem:[%s1303 + $0x220] sm:$0xff]
    %v1373 = vld [vmem:[%s1303 + $0x228] sm:$0xff]
    %v1374 = vld [vmem:[%s1303 + $0x230] sm:$0xff]
    %v1375 = vld [vmem:[%s1303 + $0x238] sm:$0xff]
    %v1376 = vld [vmem:[%s1303 + $0x240] sm:$0xff]
    %v1377 = vld [vmem:[%s1303 + $0x248] sm:$0xff]
    %v1378 = vld [vmem:[%s1303 + $0x250] sm:$0xff]
    %v1379 = vld [vmem:[%s1303 + $0x258] sm:$0xff]
    %v1380 = vld [vmem:[%s1303 + $0x260] sm:$0xff]
    %v1381 = vld [vmem:[%s1303 + $0x268] sm:$0xff]
    %v1382 = vld [vmem:[%s1303 + $0x270] sm:$0xff]
    %v1383 = vld [vmem:[%s1303 + $0x278] sm:$0xff]
    %v1384 = vld [vmem:[%s1303 + $0x280] sm:$0xff]
    %v1385 = vld [vmem:[%s1303 + $0x288] sm:$0xff]
    %v1386 = vld [vmem:[%s1303 + $0x290] sm:$0xff]
    %v1387 = vld [vmem:[%s1303 + $0x298] sm:$0xff]
    %v1388 = vld [vmem:[%s1303 + $0x2a0] sm:$0xff]
    %v1389 = vld [vmem:[%s1303 + $0x2a8] sm:$0xff]
    %v1390 = vld [vmem:[%s1303 + $0x2b0] sm:$0xff]
    %v1391 = vld [vmem:[%s1303 + $0x2b8] sm:$0xff]
    %v1392 = vld [vmem:[%s1303 + $0x2c0] sm:$0xff]
    %v1393 = vld [vmem:[%s1303 + $0x2c8] sm:$0xff]
    %v1394 = vld [vmem:[%s1303 + $0x2d0] sm:$0xff]
    %v1395 = vld [vmem:[%s1303 + $0x2d8] sm:$0xff]
    %v1396 = vld [vmem:[%s1303 + $0x2e0] sm:$0xff]
    %v1397 = vld [vmem:[%s1303 + $0x2e8] sm:$0xff]
    %v1398 = vld [vmem:[%s1303 + $0x2f0] sm:$0xff]
    %v1399 = vld [vmem:[%s1303 + $0x2f8] sm:$0xff]
    %v1400 = vld [vmem:[%s1303 + $0x300] sm:$0xff]
    %v1401 = vld [vmem:[%s1303 + $0x308] sm:$0xff]
    %v1402 = vld [vmem:[%s1303 + $0x310] sm:$0xff]
    %v1403 = vld [vmem:[%s1303 + $0x318] sm:$0xff]
    %v1404 = vld [vmem:[%s1303 + $0x320] sm:$0xff]
    %v1405 = vld [vmem:[%s1303 + $0x328] sm:$0xff]
    %v1406 = vld [vmem:[%s1303 + $0x330] sm:$0xff]
    %v1407 = vld [vmem:[%s1303 + $0x338] sm:$0xff]
    %v1408 = vld [vmem:[%s1303 + $0x340] sm:$0xff]
    %v1409 = vld [vmem:[%s1303 + $0x348] sm:$0xff]
    %v1410 = vld [vmem:[%s1303 + $0x350] sm:$0xff]
    %v1411 = vld [vmem:[%s1303 + $0x358] sm:$0xff]
    %v1412 = vld [vmem:[%s1303 + $0x360] sm:$0xff]
    %v1413 = vld [vmem:[%s1303 + $0x368] sm:$0xff]
    %v1414 = vld [vmem:[%s1303 + $0x370] sm:$0xff]
    %v1415 = vld [vmem:[%s1303 + $0x378] sm:$0xff]
    %v1416 = vld [vmem:[%s1303 + $0x380] sm:$0xff]
    %v1417 = vld [vmem:[%s1303 + $0x388] sm:$0xff]
    %v1418 = vld [vmem:[%s1303 + $0x390] sm:$0xff]
    %v1419 = vld [vmem:[%s1303 + $0x398] sm:$0xff]
    %v1420 = vld [vmem:[%s1303 + $0x3a0] sm:$0xff]
    %v1421 = vld [vmem:[%s1303 + $0x3a8] sm:$0xff]
    %v1422 = vld [vmem:[%s1303 + $0x3b0] sm:$0xff]
    %v1423 = vld [vmem:[%s1303 + $0x3b8] sm:$0xff]
    %v1424 = vld [vmem:[%s1303 + $0x3c0] sm:$0xff]
    %v1425 = vld [vmem:[%s1303 + $0x3c8] sm:$0xff]
    %v1426 = vld [vmem:[%s1303 + $0x3d0] sm:$0xff]
    %v1427 = vld [vmem:[%s1303 + $0x3d8] sm:$0xff]
    %v1428 = vld [vmem:[%s1303 + $0x3e0] sm:$0xff]
    %v1429 = vld [vmem:[%s1303 + $0x3e8] sm:$0xff]
    %v1430 = vld [vmem:[%s1303 + $0x3f0] sm:$0xff]
    %v1431 = vld [vmem:[%s1303 + $0x3f8] sm:$0xff]
    %v1432 = vld [vmem:[%s1303 + $0x400] sm:$0xff]
    %v1433 = vld [vmem:[%s1303 + $0x408] sm:$0xff]
    %v1434 = vld [vmem:[%s1303 + $0x410] sm:$0xff]
    %v1435 = vld [vmem:[%s1303 + $0x418] sm:$0xff]
    %v1436 = vld [vmem:[%s1303 + $0x420] sm:$0xff]
    %v1437 = vld [vmem:[%s1303 + $0x428] sm:$0xff]
    %v1438 = vld [vmem:[%s1303 + $0x430] sm:$0xff]
    %v1439 = vld [vmem:[%s1303 + $0x438] sm:$0xff]
    %v1440 = vld [vmem:[%s1303 + $0x440] sm:$0xff]
    %v1441 = vld [vmem:[%s1303 + $0x448] sm:$0xff]
    %v1442 = vld [vmem:[%s1303 + $0x450] sm:$0xff]
    %v1443 = vld [vmem:[%s1303 + $0x458] sm:$0xff]
    %v1444 = vld [vmem:[%s1303 + $0x460] sm:$0xff]
    %v1445 = vld [vmem:[%s1303 + $0x468] sm:$0xff]
    %v1446 = vld [vmem:[%s1303 + $0x470] sm:$0xff]
    %v1447 = vld [vmem:[%s1303 + $0x478] sm:$0xff]
    %v1448 = vld [vmem:[%s1303 + $0x480] sm:$0xff]
    %v1449 = vld [vmem:[%s1303 + $0x488] sm:$0xff]
    %v1450 = vld [vmem:[%s1303 + $0x490] sm:$0xff]
    %v1451 = vld [vmem:[%s1303 + $0x498] sm:$0xff]
    %v1452 = vld [vmem:[%s1303 + $0x4a0] sm:$0xff]
    %v1453 = vld [vmem:[%s1303 + $0x4a8] sm:$0xff]
    %v1454 = vld [vmem:[%s1303 + $0x4b0] sm:$0xff]
    %v1455 = vld [vmem:[%s1303 + $0x4b8] sm:$0xff]
    %v1456 = vld [vmem:[%s1303 + $0x4c0] sm:$0xff]
    %v1457 = vld [vmem:[%s1303 + $0x4c8] sm:$0xff]
    %v1458 = vld [vmem:[%s1303 + $0x4d0] sm:$0xff]
    %v1459 = vld [vmem:[%s1303 + $0x4d8] sm:$0xff]
    %v1460 = vld [vmem:[%s1303 + $0x4e0] sm:$0xff]
    %v1461 = vld [vmem:[%s1303 + $0x4e8] sm:$0xff]
    %v1462 = vld [vmem:[%s1303 + $0x4f0] sm:$0xff]
    %v1463 = vld [vmem:[%s1303 + $0x4f8] sm:$0xff]
    %v1464 = vld [vmem:[%s1303 + $0x500] sm:$0xff]
    %v1465 = vld [vmem:[%s1303 + $0x508] sm:$0xff]
    %v1466 = vld [vmem:[%s1303 + $0x510] sm:$0xff]
    %v1467 = vld [vmem:[%s1303 + $0x518] sm:$0xff]
    %v1468 = vld [vmem:[%s1303 + $0x520] sm:$0xff]
    %v1469 = vld [vmem:[%s1303 + $0x528] sm:$0xff]
    %v1470 = vld [vmem:[%s1303 + $0x530] sm:$0xff]
    %v1471 = vld [vmem:[%s1303 + $0x538] sm:$0xff]
    %v1472 = vld [vmem:[%s1303 + $0x540] sm:$0xff]
    %v1473 = vld [vmem:[%s1303 + $0x548] sm:$0xff]
    %v1474 = vld [vmem:[%s1303 + $0x550] sm:$0xff]
    %v1475 = vld [vmem:[%s1303 + $0x558] sm:$0xff]
    %v1476 = vld [vmem:[%s1303 + $0x560] sm:$0xff]
    %v1477 = vld [vmem:[%s1303 + $0x568] sm:$0xff]
    %v1478 = vld [vmem:[%s1303 + $0x570] sm:$0xff]
    %v1479 = vld [vmem:[%s1303 + $0x578] sm:$0xff]
    %v1480 = vld [vmem:[%s1303 + $0x580] sm:$0xff]
    %v1481 = vld [vmem:[%s1303 + $0x588] sm:$0xff]
    %v1482 = vld [vmem:[%s1303 + $0x590] sm:$0xff]
    %v1483 = vld [vmem:[%s1303 + $0x598] sm:$0xff]
    %v1484 = vld [vmem:[%s1303 + $0x5a0] sm:$0xff]
    %v1485 = vld [vmem:[%s1303 + $0x5a8] sm:$0xff]
    %v1486 = vld [vmem:[%s1303 + $0x5b0] sm:$0xff]
    %v1487 = vld [vmem:[%s1303 + $0x5b8] sm:$0xff]
    %v1488 = vld [vmem:[%s1303 + $0x5c0] sm:$0xff]
    %v1489 = vld [vmem:[%s1303 + $0x5c8] sm:$0xff]
    %v1490 = vld [vmem:[%s1303 + $0x5d0] sm:$0xff]
    %v1491 = vld [vmem:[%s1303 + $0x5d8] sm:$0xff]
    %v1492 = vld [vmem:[%s1303 + $0x5e0] sm:$0xff]
    %v1493 = vld [vmem:[%s1303 + $0x5e8] sm:$0xff]
    %v1494 = vld [vmem:[%s1303 + $0x5f0] sm:$0xff]
    %v1495 = vld [vmem:[%s1303 + $0x5f8] sm:$0xff]
    %s1496 = scalar_lea.vmem [#allocation6], 3072
    %v1497 = vld [vmem:[%s1496] sm:$0xff]
    %v1498 = vld [vmem:[%s1496 + $0x8] sm:$0xff]
    %v1499 = vld [vmem:[%s1496 + $0x10] sm:$0xff]
    %v1500 = vld [vmem:[%s1496 + $0x18] sm:$0xff]
    %v1501 = vld [vmem:[%s1496 + $0x20] sm:$0xff]
    %v1502 = vld [vmem:[%s1496 + $0x28] sm:$0xff]
    %v1503 = vld [vmem:[%s1496 + $0x30] sm:$0xff]
    %v1504 = vld [vmem:[%s1496 + $0x38] sm:$0xff]
    %v1505 = vld [vmem:[%s1496 + $0x40] sm:$0xff]
    %v1506 = vld [vmem:[%s1496 + $0x48] sm:$0xff]
    %v1507 = vld [vmem:[%s1496 + $0x50] sm:$0xff]
    %v1508 = vld [vmem:[%s1496 + $0x58] sm:$0xff]
    %v1509 = vld [vmem:[%s1496 + $0x60] sm:$0xff]
    %v1510 = vld [vmem:[%s1496 + $0x68] sm:$0xff]
    %v1511 = vld [vmem:[%s1496 + $0x70] sm:$0xff]
    %v1512 = vld [vmem:[%s1496 + $0x78] sm:$0xff]
    %v1513 = vld [vmem:[%s1496 + $0x80] sm:$0xff]
    %v1514 = vld [vmem:[%s1496 + $0x88] sm:$0xff]
    %v1515 = vld [vmem:[%s1496 + $0x90] sm:$0xff]
    %v1516 = vld [vmem:[%s1496 + $0x98] sm:$0xff]
    %v1517 = vld [vmem:[%s1496 + $0xa0] sm:$0xff]
    %v1518 = vld [vmem:[%s1496 + $0xa8] sm:$0xff]
    %v1519 = vld [vmem:[%s1496 + $0xb0] sm:$0xff]
    %v1520 = vld [vmem:[%s1496 + $0xb8] sm:$0xff]
    %v1521 = vld [vmem:[%s1496 + $0xc0] sm:$0xff]
    %v1522 = vld [vmem:[%s1496 + $0xc8] sm:$0xff]
    %v1523 = vld [vmem:[%s1496 + $0xd0] sm:$0xff]
    %v1524 = vld [vmem:[%s1496 + $0xd8] sm:$0xff]
    %v1525 = vld [vmem:[%s1496 + $0xe0] sm:$0xff]
    %v1526 = vld [vmem:[%s1496 + $0xe8] sm:$0xff]
    %v1527 = vld [vmem:[%s1496 + $0xf0] sm:$0xff]
    %v1528 = vld [vmem:[%s1496 + $0xf8] sm:$0xff]
    %v1529 = vld [vmem:[%s1496 + $0x100] sm:$0xff]
    %v1530 = vld [vmem:[%s1496 + $0x108] sm:$0xff]
    %v1531 = vld [vmem:[%s1496 + $0x110] sm:$0xff]
    %v1532 = vld [vmem:[%s1496 + $0x118] sm:$0xff]
    %v1533 = vld [vmem:[%s1496 + $0x120] sm:$0xff]
    %v1534 = vld [vmem:[%s1496 + $0x128] sm:$0xff]
    %v1535 = vld [vmem:[%s1496 + $0x130] sm:$0xff]
    %v1536 = vld [vmem:[%s1496 + $0x138] sm:$0xff]
    %v1537 = vld [vmem:[%s1496 + $0x140] sm:$0xff]
    %v1538 = vld [vmem:[%s1496 + $0x148] sm:$0xff]
    %v1539 = vld [vmem:[%s1496 + $0x150] sm:$0xff]
    %v1540 = vld [vmem:[%s1496 + $0x158] sm:$0xff]
    %v1541 = vld [vmem:[%s1496 + $0x160] sm:$0xff]
    %v1542 = vld [vmem:[%s1496 + $0x168] sm:$0xff]
    %v1543 = vld [vmem:[%s1496 + $0x170] sm:$0xff]
    %v1544 = vld [vmem:[%s1496 + $0x178] sm:$0xff]
    %v1545 = vld [vmem:[%s1496 + $0x180] sm:$0xff]
    %v1546 = vld [vmem:[%s1496 + $0x188] sm:$0xff]
    %v1547 = vld [vmem:[%s1496 + $0x190] sm:$0xff]
    %v1548 = vld [vmem:[%s1496 + $0x198] sm:$0xff]
    %v1549 = vld [vmem:[%s1496 + $0x1a0] sm:$0xff]
    %v1550 = vld [vmem:[%s1496 + $0x1a8] sm:$0xff]
    %v1551 = vld [vmem:[%s1496 + $0x1b0] sm:$0xff]
    %v1552 = vld [vmem:[%s1496 + $0x1b8] sm:$0xff]
    %v1553 = vld [vmem:[%s1496 + $0x1c0] sm:$0xff]
    %v1554 = vld [vmem:[%s1496 + $0x1c8] sm:$0xff]
    %v1555 = vld [vmem:[%s1496 + $0x1d0] sm:$0xff]
    %v1556 = vld [vmem:[%s1496 + $0x1d8] sm:$0xff]
    %v1557 = vld [vmem:[%s1496 + $0x1e0] sm:$0xff]
    %v1558 = vld [vmem:[%s1496 + $0x1e8] sm:$0xff]
    %v1559 = vld [vmem:[%s1496 + $0x1f0] sm:$0xff]
    %v1560 = vld [vmem:[%s1496 + $0x1f8] sm:$0xff]
    %v1561 = vld [vmem:[%s1496 + $0x200] sm:$0xff]
    %v1562 = vld [vmem:[%s1496 + $0x208] sm:$0xff]
    %v1563 = vld [vmem:[%s1496 + $0x210] sm:$0xff]
    %v1564 = vld [vmem:[%s1496 + $0x218] sm:$0xff]
    %v1565 = vld [vmem:[%s1496 + $0x220] sm:$0xff]
    %v1566 = vld [vmem:[%s1496 + $0x228] sm:$0xff]
    %v1567 = vld [vmem:[%s1496 + $0x230] sm:$0xff]
    %v1568 = vld [vmem:[%s1496 + $0x238] sm:$0xff]
    %v1569 = vld [vmem:[%s1496 + $0x240] sm:$0xff]
    %v1570 = vld [vmem:[%s1496 + $0x248] sm:$0xff]
    %v1571 = vld [vmem:[%s1496 + $0x250] sm:$0xff]
    %v1572 = vld [vmem:[%s1496 + $0x258] sm:$0xff]
    %v1573 = vld [vmem:[%s1496 + $0x260] sm:$0xff]
    %v1574 = vld [vmem:[%s1496 + $0x268] sm:$0xff]
    %v1575 = vld [vmem:[%s1496 + $0x270] sm:$0xff]
    %v1576 = vld [vmem:[%s1496 + $0x278] sm:$0xff]
    %v1577 = vld [vmem:[%s1496 + $0x280] sm:$0xff]
    %v1578 = vld [vmem:[%s1496 + $0x288] sm:$0xff]
    %v1579 = vld [vmem:[%s1496 + $0x290] sm:$0xff]
    %v1580 = vld [vmem:[%s1496 + $0x298] sm:$0xff]
    %v1581 = vld [vmem:[%s1496 + $0x2a0] sm:$0xff]
    %v1582 = vld [vmem:[%s1496 + $0x2a8] sm:$0xff]
    %v1583 = vld [vmem:[%s1496 + $0x2b0] sm:$0xff]
    %v1584 = vld [vmem:[%s1496 + $0x2b8] sm:$0xff]
    %v1585 = vld [vmem:[%s1496 + $0x2c0] sm:$0xff]
    %v1586 = vld [vmem:[%s1496 + $0x2c8] sm:$0xff]
    %v1587 = vld [vmem:[%s1496 + $0x2d0] sm:$0xff]
    %v1588 = vld [vmem:[%s1496 + $0x2d8] sm:$0xff]
    %v1589 = vld [vmem:[%s1496 + $0x2e0] sm:$0xff]
    %v1590 = vld [vmem:[%s1496 + $0x2e8] sm:$0xff]
    %v1591 = vld [vmem:[%s1496 + $0x2f0] sm:$0xff]
    %v1592 = vld [vmem:[%s1496 + $0x2f8] sm:$0xff]
    %v1593 = vld [vmem:[%s1496 + $0x300] sm:$0xff]
    %v1594 = vld [vmem:[%s1496 + $0x308] sm:$0xff]
    %v1595 = vld [vmem:[%s1496 + $0x310] sm:$0xff]
    %v1596 = vld [vmem:[%s1496 + $0x318] sm:$0xff]
    %v1597 = vld [vmem:[%s1496 + $0x320] sm:$0xff]
    %v1598 = vld [vmem:[%s1496 + $0x328] sm:$0xff]
    %v1599 = vld [vmem:[%s1496 + $0x330] sm:$0xff]
    %v1600 = vld [vmem:[%s1496 + $0x338] sm:$0xff]
    %v1601 = vld [vmem:[%s1496 + $0x340] sm:$0xff]
    %v1602 = vld [vmem:[%s1496 + $0x348] sm:$0xff]
    %v1603 = vld [vmem:[%s1496 + $0x350] sm:$0xff]
    %v1604 = vld [vmem:[%s1496 + $0x358] sm:$0xff]
    %v1605 = vld [vmem:[%s1496 + $0x360] sm:$0xff]
    %v1606 = vld [vmem:[%s1496 + $0x368] sm:$0xff]
    %v1607 = vld [vmem:[%s1496 + $0x370] sm:$0xff]
    %v1608 = vld [vmem:[%s1496 + $0x378] sm:$0xff]
    %v1609 = vld [vmem:[%s1496 + $0x380] sm:$0xff]
    %v1610 = vld [vmem:[%s1496 + $0x388] sm:$0xff]
    %v1611 = vld [vmem:[%s1496 + $0x390] sm:$0xff]
    %v1612 = vld [vmem:[%s1496 + $0x398] sm:$0xff]
    %v1613 = vld [vmem:[%s1496 + $0x3a0] sm:$0xff]
    %v1614 = vld [vmem:[%s1496 + $0x3a8] sm:$0xff]
    %v1615 = vld [vmem:[%s1496 + $0x3b0] sm:$0xff]
    %v1616 = vld [vmem:[%s1496 + $0x3b8] sm:$0xff]
    %v1617 = vld [vmem:[%s1496 + $0x3c0] sm:$0xff]
    %v1618 = vld [vmem:[%s1496 + $0x3c8] sm:$0xff]
    %v1619 = vld [vmem:[%s1496 + $0x3d0] sm:$0xff]
    %v1620 = vld [vmem:[%s1496 + $0x3d8] sm:$0xff]
    %v1621 = vld [vmem:[%s1496 + $0x3e0] sm:$0xff]
    %v1622 = vld [vmem:[%s1496 + $0x3e8] sm:$0xff]
    %v1623 = vld [vmem:[%s1496 + $0x3f0] sm:$0xff]
    %v1624 = vld [vmem:[%s1496 + $0x3f8] sm:$0xff]
    %v1625 = vld [vmem:[%s1496 + $0x400] sm:$0xff]
    %v1626 = vld [vmem:[%s1496 + $0x408] sm:$0xff]
    %v1627 = vld [vmem:[%s1496 + $0x410] sm:$0xff]
    %v1628 = vld [vmem:[%s1496 + $0x418] sm:$0xff]
    %v1629 = vld [vmem:[%s1496 + $0x420] sm:$0xff]
    %v1630 = vld [vmem:[%s1496 + $0x428] sm:$0xff]
    %v1631 = vld [vmem:[%s1496 + $0x430] sm:$0xff]
    %v1632 = vld [vmem:[%s1496 + $0x438] sm:$0xff]
    %v1633 = vld [vmem:[%s1496 + $0x440] sm:$0xff]
    %v1634 = vld [vmem:[%s1496 + $0x448] sm:$0xff]
    %v1635 = vld [vmem:[%s1496 + $0x450] sm:$0xff]
    %v1636 = vld [vmem:[%s1496 + $0x458] sm:$0xff]
    %v1637 = vld [vmem:[%s1496 + $0x460] sm:$0xff]
    %v1638 = vld [vmem:[%s1496 + $0x468] sm:$0xff]
    %v1639 = vld [vmem:[%s1496 + $0x470] sm:$0xff]
    %v1640 = vld [vmem:[%s1496 + $0x478] sm:$0xff]
    %v1641 = vld [vmem:[%s1496 + $0x480] sm:$0xff]
    %v1642 = vld [vmem:[%s1496 + $0x488] sm:$0xff]
    %v1643 = vld [vmem:[%s1496 + $0x490] sm:$0xff]
    %v1644 = vld [vmem:[%s1496 + $0x498] sm:$0xff]
    %v1645 = vld [vmem:[%s1496 + $0x4a0] sm:$0xff]
    %v1646 = vld [vmem:[%s1496 + $0x4a8] sm:$0xff]
    %v1647 = vld [vmem:[%s1496 + $0x4b0] sm:$0xff]
    %v1648 = vld [vmem:[%s1496 + $0x4b8] sm:$0xff]
    %v1649 = vld [vmem:[%s1496 + $0x4c0] sm:$0xff]
    %v1650 = vld [vmem:[%s1496 + $0x4c8] sm:$0xff]
    %v1651 = vld [vmem:[%s1496 + $0x4d0] sm:$0xff]
    %v1652 = vld [vmem:[%s1496 + $0x4d8] sm:$0xff]
    %v1653 = vld [vmem:[%s1496 + $0x4e0] sm:$0xff]
    %v1654 = vld [vmem:[%s1496 + $0x4e8] sm:$0xff]
    %v1655 = vld [vmem:[%s1496 + $0x4f0] sm:$0xff]
    %v1656 = vld [vmem:[%s1496 + $0x4f8] sm:$0xff]
    %v1657 = vld [vmem:[%s1496 + $0x500] sm:$0xff]
    %v1658 = vld [vmem:[%s1496 + $0x508] sm:$0xff]
    %v1659 = vld [vmem:[%s1496 + $0x510] sm:$0xff]
    %v1660 = vld [vmem:[%s1496 + $0x518] sm:$0xff]
    %v1661 = vld [vmem:[%s1496 + $0x520] sm:$0xff]
    %v1662 = vld [vmem:[%s1496 + $0x528] sm:$0xff]
    %v1663 = vld [vmem:[%s1496 + $0x530] sm:$0xff]
    %v1664 = vld [vmem:[%s1496 + $0x538] sm:$0xff]
    %v1665 = vld [vmem:[%s1496 + $0x540] sm:$0xff]
    %v1666 = vld [vmem:[%s1496 + $0x548] sm:$0xff]
    %v1667 = vld [vmem:[%s1496 + $0x550] sm:$0xff]
    %v1668 = vld [vmem:[%s1496 + $0x558] sm:$0xff]
    %v1669 = vld [vmem:[%s1496 + $0x560] sm:$0xff]
    %v1670 = vld [vmem:[%s1496 + $0x568] sm:$0xff]
    %v1671 = vld [vmem:[%s1496 + $0x570] sm:$0xff]
    %v1672 = vld [vmem:[%s1496 + $0x578] sm:$0xff]
    %v1673 = vld [vmem:[%s1496 + $0x580] sm:$0xff]
    %v1674 = vld [vmem:[%s1496 + $0x588] sm:$0xff]
    %v1675 = vld [vmem:[%s1496 + $0x590] sm:$0xff]
    %v1676 = vld [vmem:[%s1496 + $0x598] sm:$0xff]
    %v1677 = vld [vmem:[%s1496 + $0x5a0] sm:$0xff]
    %v1678 = vld [vmem:[%s1496 + $0x5a8] sm:$0xff]
    %v1679 = vld [vmem:[%s1496 + $0x5b0] sm:$0xff]
    %v1680 = vld [vmem:[%s1496 + $0x5b8] sm:$0xff]
    %v1681 = vld [vmem:[%s1496 + $0x5c0] sm:$0xff]
    %v1682 = vld [vmem:[%s1496 + $0x5c8] sm:$0xff]
    %v1683 = vld [vmem:[%s1496 + $0x5d0] sm:$0xff]
    %v1684 = vld [vmem:[%s1496 + $0x5d8] sm:$0xff]
    %v1685 = vld [vmem:[%s1496 + $0x5e0] sm:$0xff]
    %v1686 = vld [vmem:[%s1496 + $0x5e8] sm:$0xff]
    %v1687 = vld [vmem:[%s1496 + $0x5f0] sm:$0xff]
    %v1688 = vld [vmem:[%s1496 + $0x5f8] sm:$0xff]
    %s1689 = scalar_lea.vmem [#allocation6], 4608
    %v1690 = vld [vmem:[%s1689] sm:$0xff]
    %v1691 = vld [vmem:[%s1689 + $0x8] sm:$0xff]
    %v1692 = vld [vmem:[%s1689 + $0x10] sm:$0xff]
    %v1693 = vld [vmem:[%s1689 + $0x18] sm:$0xff]
    %v1694 = vld [vmem:[%s1689 + $0x20] sm:$0xff]
    %v1695 = vld [vmem:[%s1689 + $0x28] sm:$0xff]
    %v1696 = vld [vmem:[%s1689 + $0x30] sm:$0xff]
    %v1697 = vld [vmem:[%s1689 + $0x38] sm:$0xff]
    %v1698 = vld [vmem:[%s1689 + $0x40] sm:$0xff]
    %v1699 = vld [vmem:[%s1689 + $0x48] sm:$0xff]
    %v1700 = vld [vmem:[%s1689 + $0x50] sm:$0xff]
    %v1701 = vld [vmem:[%s1689 + $0x58] sm:$0xff]
    %v1702 = vld [vmem:[%s1689 + $0x60] sm:$0xff]
    %v1703 = vld [vmem:[%s1689 + $0x68] sm:$0xff]
    %v1704 = vld [vmem:[%s1689 + $0x70] sm:$0xff]
    %v1705 = vld [vmem:[%s1689 + $0x78] sm:$0xff]
    %v1706 = vld [vmem:[%s1689 + $0x80] sm:$0xff]
    %v1707 = vld [vmem:[%s1689 + $0x88] sm:$0xff]
    %v1708 = vld [vmem:[%s1689 + $0x90] sm:$0xff]
    %v1709 = vld [vmem:[%s1689 + $0x98] sm:$0xff]
    %v1710 = vld [vmem:[%s1689 + $0xa0] sm:$0xff]
    %v1711 = vld [vmem:[%s1689 + $0xa8] sm:$0xff]
    %v1712 = vld [vmem:[%s1689 + $0xb0] sm:$0xff]
    %v1713 = vld [vmem:[%s1689 + $0xb8] sm:$0xff]
    %v1714 = vld [vmem:[%s1689 + $0xc0] sm:$0xff]
    %v1715 = vld [vmem:[%s1689 + $0xc8] sm:$0xff]
    %v1716 = vld [vmem:[%s1689 + $0xd0] sm:$0xff]
    %v1717 = vld [vmem:[%s1689 + $0xd8] sm:$0xff]
    %v1718 = vld [vmem:[%s1689 + $0xe0] sm:$0xff]
    %v1719 = vld [vmem:[%s1689 + $0xe8] sm:$0xff]
    %v1720 = vld [vmem:[%s1689 + $0xf0] sm:$0xff]
    %v1721 = vld [vmem:[%s1689 + $0xf8] sm:$0xff]
    %v1722 = vld [vmem:[%s1689 + $0x100] sm:$0xff]
    %v1723 = vld [vmem:[%s1689 + $0x108] sm:$0xff]
    %v1724 = vld [vmem:[%s1689 + $0x110] sm:$0xff]
    %v1725 = vld [vmem:[%s1689 + $0x118] sm:$0xff]
    %v1726 = vld [vmem:[%s1689 + $0x120] sm:$0xff]
    %v1727 = vld [vmem:[%s1689 + $0x128] sm:$0xff]
    %v1728 = vld [vmem:[%s1689 + $0x130] sm:$0xff]
    %v1729 = vld [vmem:[%s1689 + $0x138] sm:$0xff]
    %v1730 = vld [vmem:[%s1689 + $0x140] sm:$0xff]
    %v1731 = vld [vmem:[%s1689 + $0x148] sm:$0xff]
    %v1732 = vld [vmem:[%s1689 + $0x150] sm:$0xff]
    %v1733 = vld [vmem:[%s1689 + $0x158] sm:$0xff]
    %v1734 = vld [vmem:[%s1689 + $0x160] sm:$0xff]
    %v1735 = vld [vmem:[%s1689 + $0x168] sm:$0xff]
    %v1736 = vld [vmem:[%s1689 + $0x170] sm:$0xff]
    %v1737 = vld [vmem:[%s1689 + $0x178] sm:$0xff]
    %v1738 = vld [vmem:[%s1689 + $0x180] sm:$0xff]
    %v1739 = vld [vmem:[%s1689 + $0x188] sm:$0xff]
    %v1740 = vld [vmem:[%s1689 + $0x190] sm:$0xff]
    %v1741 = vld [vmem:[%s1689 + $0x198] sm:$0xff]
    %v1742 = vld [vmem:[%s1689 + $0x1a0] sm:$0xff]
    %v1743 = vld [vmem:[%s1689 + $0x1a8] sm:$0xff]
    %v1744 = vld [vmem:[%s1689 + $0x1b0] sm:$0xff]
    %v1745 = vld [vmem:[%s1689 + $0x1b8] sm:$0xff]
    %v1746 = vld [vmem:[%s1689 + $0x1c0] sm:$0xff]
    %v1747 = vld [vmem:[%s1689 + $0x1c8] sm:$0xff]
    %v1748 = vld [vmem:[%s1689 + $0x1d0] sm:$0xff]
    %v1749 = vld [vmem:[%s1689 + $0x1d8] sm:$0xff]
    %v1750 = vld [vmem:[%s1689 + $0x1e0] sm:$0xff]
    %v1751 = vld [vmem:[%s1689 + $0x1e8] sm:$0xff]
    %v1752 = vld [vmem:[%s1689 + $0x1f0] sm:$0xff]
    %v1753 = vld [vmem:[%s1689 + $0x1f8] sm:$0xff]
    %v1754 = vld [vmem:[%s1689 + $0x200] sm:$0xff]
    %v1755 = vld [vmem:[%s1689 + $0x208] sm:$0xff]
    %v1756 = vld [vmem:[%s1689 + $0x210] sm:$0xff]
    %v1757 = vld [vmem:[%s1689 + $0x218] sm:$0xff]
    %v1758 = vld [vmem:[%s1689 + $0x220] sm:$0xff]
    %v1759 = vld [vmem:[%s1689 + $0x228] sm:$0xff]
    %v1760 = vld [vmem:[%s1689 + $0x230] sm:$0xff]
    %v1761 = vld [vmem:[%s1689 + $0x238] sm:$0xff]
    %v1762 = vld [vmem:[%s1689 + $0x240] sm:$0xff]
    %v1763 = vld [vmem:[%s1689 + $0x248] sm:$0xff]
    %v1764 = vld [vmem:[%s1689 + $0x250] sm:$0xff]
    %v1765 = vld [vmem:[%s1689 + $0x258] sm:$0xff]
    %v1766 = vld [vmem:[%s1689 + $0x260] sm:$0xff]
    %v1767 = vld [vmem:[%s1689 + $0x268] sm:$0xff]
    %v1768 = vld [vmem:[%s1689 + $0x270] sm:$0xff]
    %v1769 = vld [vmem:[%s1689 + $0x278] sm:$0xff]
    %v1770 = vld [vmem:[%s1689 + $0x280] sm:$0xff]
    %v1771 = vld [vmem:[%s1689 + $0x288] sm:$0xff]
    %v1772 = vld [vmem:[%s1689 + $0x290] sm:$0xff]
    %v1773 = vld [vmem:[%s1689 + $0x298] sm:$0xff]
    %v1774 = vld [vmem:[%s1689 + $0x2a0] sm:$0xff]
    %v1775 = vld [vmem:[%s1689 + $0x2a8] sm:$0xff]
    %v1776 = vld [vmem:[%s1689 + $0x2b0] sm:$0xff]
    %v1777 = vld [vmem:[%s1689 + $0x2b8] sm:$0xff]
    %v1778 = vld [vmem:[%s1689 + $0x2c0] sm:$0xff]
    %v1779 = vld [vmem:[%s1689 + $0x2c8] sm:$0xff]
    %v1780 = vld [vmem:[%s1689 + $0x2d0] sm:$0xff]
    %v1781 = vld [vmem:[%s1689 + $0x2d8] sm:$0xff]
    %v1782 = vld [vmem:[%s1689 + $0x2e0] sm:$0xff]
    %v1783 = vld [vmem:[%s1689 + $0x2e8] sm:$0xff]
    %v1784 = vld [vmem:[%s1689 + $0x2f0] sm:$0xff]
    %v1785 = vld [vmem:[%s1689 + $0x2f8] sm:$0xff]
    %v1786 = vld [vmem:[%s1689 + $0x300] sm:$0xff]
    %v1787 = vld [vmem:[%s1689 + $0x308] sm:$0xff]
    %v1788 = vld [vmem:[%s1689 + $0x310] sm:$0xff]
    %v1789 = vld [vmem:[%s1689 + $0x318] sm:$0xff]
    %v1790 = vld [vmem:[%s1689 + $0x320] sm:$0xff]
    %v1791 = vld [vmem:[%s1689 + $0x328] sm:$0xff]
    %v1792 = vld [vmem:[%s1689 + $0x330] sm:$0xff]
    %v1793 = vld [vmem:[%s1689 + $0x338] sm:$0xff]
    %v1794 = vld [vmem:[%s1689 + $0x340] sm:$0xff]
    %v1795 = vld [vmem:[%s1689 + $0x348] sm:$0xff]
    %v1796 = vld [vmem:[%s1689 + $0x350] sm:$0xff]
    %v1797 = vld [vmem:[%s1689 + $0x358] sm:$0xff]
    %v1798 = vld [vmem:[%s1689 + $0x360] sm:$0xff]
    %v1799 = vld [vmem:[%s1689 + $0x368] sm:$0xff]
    %v1800 = vld [vmem:[%s1689 + $0x370] sm:$0xff]
    %v1801 = vld [vmem:[%s1689 + $0x378] sm:$0xff]
    %v1802 = vld [vmem:[%s1689 + $0x380] sm:$0xff]
    %v1803 = vld [vmem:[%s1689 + $0x388] sm:$0xff]
    %v1804 = vld [vmem:[%s1689 + $0x390] sm:$0xff]
    %v1805 = vld [vmem:[%s1689 + $0x398] sm:$0xff]
    %v1806 = vld [vmem:[%s1689 + $0x3a0] sm:$0xff]
    %v1807 = vld [vmem:[%s1689 + $0x3a8] sm:$0xff]
    %v1808 = vld [vmem:[%s1689 + $0x3b0] sm:$0xff]
    %v1809 = vld [vmem:[%s1689 + $0x3b8] sm:$0xff]
    %v1810 = vld [vmem:[%s1689 + $0x3c0] sm:$0xff]
    %v1811 = vld [vmem:[%s1689 + $0x3c8] sm:$0xff]
    %v1812 = vld [vmem:[%s1689 + $0x3d0] sm:$0xff]
    %v1813 = vld [vmem:[%s1689 + $0x3d8] sm:$0xff]
    %v1814 = vld [vmem:[%s1689 + $0x3e0] sm:$0xff]
    %v1815 = vld [vmem:[%s1689 + $0x3e8] sm:$0xff]
    %v1816 = vld [vmem:[%s1689 + $0x3f0] sm:$0xff]
    %v1817 = vld [vmem:[%s1689 + $0x3f8] sm:$0xff]
    %v1818 = vld [vmem:[%s1689 + $0x400] sm:$0xff]
    %v1819 = vld [vmem:[%s1689 + $0x408] sm:$0xff]
    %v1820 = vld [vmem:[%s1689 + $0x410] sm:$0xff]
    %v1821 = vld [vmem:[%s1689 + $0x418] sm:$0xff]
    %v1822 = vld [vmem:[%s1689 + $0x420] sm:$0xff]
    %v1823 = vld [vmem:[%s1689 + $0x428] sm:$0xff]
    %v1824 = vld [vmem:[%s1689 + $0x430] sm:$0xff]
    %v1825 = vld [vmem:[%s1689 + $0x438] sm:$0xff]
    %v1826 = vld [vmem:[%s1689 + $0x440] sm:$0xff]
    %v1827 = vld [vmem:[%s1689 + $0x448] sm:$0xff]
    %v1828 = vld [vmem:[%s1689 + $0x450] sm:$0xff]
    %v1829 = vld [vmem:[%s1689 + $0x458] sm:$0xff]
    %v1830 = vld [vmem:[%s1689 + $0x460] sm:$0xff]
    %v1831 = vld [vmem:[%s1689 + $0x468] sm:$0xff]
    %v1832 = vld [vmem:[%s1689 + $0x470] sm:$0xff]
    %v1833 = vld [vmem:[%s1689 + $0x478] sm:$0xff]
    %v1834 = vld [vmem:[%s1689 + $0x480] sm:$0xff]
    %v1835 = vld [vmem:[%s1689 + $0x488] sm:$0xff]
    %v1836 = vld [vmem:[%s1689 + $0x490] sm:$0xff]
    %v1837 = vld [vmem:[%s1689 + $0x498] sm:$0xff]
    %v1838 = vld [vmem:[%s1689 + $0x4a0] sm:$0xff]
    %v1839 = vld [vmem:[%s1689 + $0x4a8] sm:$0xff]
    %v1840 = vld [vmem:[%s1689 + $0x4b0] sm:$0xff]
    %v1841 = vld [vmem:[%s1689 + $0x4b8] sm:$0xff]
    %v1842 = vld [vmem:[%s1689 + $0x4c0] sm:$0xff]
    %v1843 = vld [vmem:[%s1689 + $0x4c8] sm:$0xff]
    %v1844 = vld [vmem:[%s1689 + $0x4d0] sm:$0xff]
    %v1845 = vld [vmem:[%s1689 + $0x4d8] sm:$0xff]
    %v1846 = vld [vmem:[%s1689 + $0x4e0] sm:$0xff]
    %v1847 = vld [vmem:[%s1689 + $0x4e8] sm:$0xff]
    %v1848 = vld [vmem:[%s1689 + $0x4f0] sm:$0xff]
    %v1849 = vld [vmem:[%s1689 + $0x4f8] sm:$0xff]
    %v1850 = vld [vmem:[%s1689 + $0x500] sm:$0xff]
    %v1851 = vld [vmem:[%s1689 + $0x508] sm:$0xff]
    %v1852 = vld [vmem:[%s1689 + $0x510] sm:$0xff]
    %v1853 = vld [vmem:[%s1689 + $0x518] sm:$0xff]
    %v1854 = vld [vmem:[%s1689 + $0x520] sm:$0xff]
    %v1855 = vld [vmem:[%s1689 + $0x528] sm:$0xff]
    %v1856 = vld [vmem:[%s1689 + $0x530] sm:$0xff]
    %v1857 = vld [vmem:[%s1689 + $0x538] sm:$0xff]
    %v1858 = vld [vmem:[%s1689 + $0x540] sm:$0xff]
    %v1859 = vld [vmem:[%s1689 + $0x548] sm:$0xff]
    %v1860 = vld [vmem:[%s1689 + $0x550] sm:$0xff]
    %v1861 = vld [vmem:[%s1689 + $0x558] sm:$0xff]
    %v1862 = vld [vmem:[%s1689 + $0x560] sm:$0xff]
    %v1863 = vld [vmem:[%s1689 + $0x568] sm:$0xff]
    %v1864 = vld [vmem:[%s1689 + $0x570] sm:$0xff]
    %v1865 = vld [vmem:[%s1689 + $0x578] sm:$0xff]
    %v1866 = vld [vmem:[%s1689 + $0x580] sm:$0xff]
    %v1867 = vld [vmem:[%s1689 + $0x588] sm:$0xff]
    %v1868 = vld [vmem:[%s1689 + $0x590] sm:$0xff]
    %v1869 = vld [vmem:[%s1689 + $0x598] sm:$0xff]
    %v1870 = vld [vmem:[%s1689 + $0x5a0] sm:$0xff]
    %v1871 = vld [vmem:[%s1689 + $0x5a8] sm:$0xff]
    %v1872 = vld [vmem:[%s1689 + $0x5b0] sm:$0xff]
    %v1873 = vld [vmem:[%s1689 + $0x5b8] sm:$0xff]
    %v1874 = vld [vmem:[%s1689 + $0x5c0] sm:$0xff]
    %v1875 = vld [vmem:[%s1689 + $0x5c8] sm:$0xff]
    %v1876 = vld [vmem:[%s1689 + $0x5d0] sm:$0xff]
    %v1877 = vld [vmem:[%s1689 + $0x5d8] sm:$0xff]
    %v1878 = vld [vmem:[%s1689 + $0x5e0] sm:$0xff]
    %v1879 = vld [vmem:[%s1689 + $0x5e8] sm:$0xff]
    %v1880 = vld [vmem:[%s1689 + $0x5f0] sm:$0xff]
    %v1881 = vld [vmem:[%s1689 + $0x5f8] sm:$0xff]
    %1882 = vmatprep.subr.mxu0 %v1305
    %1883 = vmatpush1.msra.mxu0 %v1304
    %1884 = vmatprep.subr.mxu0 %v1309
    %1885 = vmatpush1.msra.mxu0 %v1308
    %1886 = vmatprep.subr.mxu0 %v1313
    %1887 = vmatpush1.msra.mxu0 %v1312
    %1888 = vmatprep.subr.mxu0 %v1317
    %1889 = vmatpush1.msra.mxu0 %v1316
    %1890 = vmatprep.subr.mxu0 %v1321
    %1891 = vmatpush1.msra.mxu0 %v1320
    %1892 = vmatprep.subr.mxu0 %v1325
    %1893 = vmatpush1.msra.mxu0 %v1324
    %1894 = vmatprep.subr.mxu0 %v1329
    %1895 = vmatpush1.msra.mxu0 %v1328
    %1896 = vmatprep.subr.mxu0 %v1333
    %1897 = vmatpush1.msra.mxu0 %v1332
    %1898 = vmatprep.subr.mxu0 %v1337
    %1899 = vmatpush1.msra.mxu0 %v1336
    %1900 = vmatprep.subr.mxu0 %v1341
    %1901 = vmatpush1.msra.mxu0 %v1340
    %1902 = vmatprep.subr.mxu0 %v1345
    %1903 = vmatpush1.msra.mxu0 %v1344
    %1904 = vmatprep.subr.mxu0 %v1349
    %1905 = vmatpush1.msra.mxu0 %v1348
    %1906 = vmatprep.subr.mxu0 %v1353
    %1907 = vmatpush1.msra.mxu0 %v1352
    %1908 = vmatprep.subr.mxu0 %v1357
    %1909 = vmatpush1.msra.mxu0 %v1356
    %1910 = vmatprep.subr.mxu0 %v1361
    %1911 = vmatpush1.msra.mxu0 %v1360
    %1912 = vmatprep.subr.mxu0 %v1365
    %1913 = vmatpush1.msra.mxu0 %v1364
    %1914 = vmatprep.subr.mxu0 %v1369
    %1915 = vmatpush1.msra.mxu0 %v1368
    %1916 = vmatprep.subr.mxu0 %v1373
    %1917 = vmatpush1.msra.mxu0 %v1372
    %1918 = vmatprep.subr.mxu0 %v1377
    %1919 = vmatpush1.msra.mxu0 %v1376
    %1920 = vmatprep.subr.mxu0 %v1381
    %1921 = vmatpush1.msra.mxu0 %v1380
    %1922 = vmatprep.subr.mxu0 %v1385
    %1923 = vmatpush1.msra.mxu0 %v1384
    %1924 = vmatprep.subr.mxu0 %v1389
    %1925 = vmatpush1.msra.mxu0 %v1388
    %1926 = vmatprep.subr.mxu0 %v1393
    %1927 = vmatpush1.msra.mxu0 %v1392
    %1928 = vmatprep.subr.mxu0 %v1397
    %1929 = vmatpush1.msra.mxu0 %v1396
    %1930 = vmatprep.subr.mxu0 %v1401
    %1931 = vmatpush1.msra.mxu0 %v1400
    %1932 = vmatprep.subr.mxu0 %v1405
    %1933 = vmatpush1.msra.mxu0 %v1404
    %1934 = vmatprep.subr.mxu0 %v1409
    %1935 = vmatpush1.msra.mxu0 %v1408
    %1936 = vmatprep.subr.mxu0 %v1413
    %1937 = vmatpush1.msra.mxu0 %v1412
    %1938 = vmatprep.subr.mxu0 %v1417
    %1939 = vmatpush1.msra.mxu0 %v1416
    %1940 = vmatprep.subr.mxu0 %v1421
    %1941 = vmatpush1.msra.mxu0 %v1420
    %1942 = vmatprep.subr.mxu0 %v1425
    %1943 = vmatpush1.msra.mxu0 %v1424
    %1944 = vmatprep.subr.mxu0 %v1429
    %1945 = vmatpush1.msra.mxu0 %v1428
    %1946 = vmatprep.mubr.f32.mxu0 %v1082
    %1947 = vmatmul.mubr.f32.gmra.mrb[0].mxu0 %v1081
    %v1948 = vpop.f32.mrb[0].mxu0
    %v1949 = vadd.f32 0.0, %v1948
    %v1950 = vpop.f32.mrb[0].mxu0
    %v1951 = vadd.f32 0.0, %v1950
    %1952 = vmatprep.mubr.f32.mxu0 %v1085
    %1953 = vmatmul.mubr.f32.gmra.mrb[0].mxu0 %v1084
    %v1954 = vpop.f32.mrb[0].mxu0
    %v1955 = vadd.f32 0.0, %v1954
    %v1956 = vpop.f32.mrb[0].mxu0
    %v1957 = vadd.f32 0.0, %v1956
    %1958 = vdwg.mxu0
    %1959 = vmatprep.subr.mxu0 %v1433
    %1960 = vmatpush1.msra.mxu0 %v1432
    %1961 = vmatprep.subr.mxu0 %v1437
    %1962 = vmatpush1.msra.mxu0 %v1436
    %1963 = vmatprep.subr.mxu0 %v1441
    %1964 = vmatpush1.msra.mxu0 %v1440
    %1965 = vmatprep.subr.mxu0 %v1445
    %1966 = vmatpush1.msra.mxu0 %v1444
    %1967 = vmatprep.subr.mxu0 %v1449
    %1968 = vmatpush1.msra.mxu0 %v1448
    %1969 = vmatprep.subr.mxu0 %v1453
    %1970 = vmatpush1.msra.mxu0 %v1452
    %1971 = vmatprep.subr.mxu0 %v1457
    %1972 = vmatpush1.msra.mxu0 %v1456
    %1973 = vmatprep.subr.mxu0 %v1461
    %1974 = vmatpush1.msra.mxu0 %v1460
    %1975 = vmatprep.subr.mxu0 %v1465
    %1976 = vmatpush1.msra.mxu0 %v1464
    %1977 = vmatprep.subr.mxu0 %v1469
    %1978 = vmatpush1.msra.mxu0 %v1468
    %1979 = vmatprep.subr.mxu0 %v1473
    %1980 = vmatpush1.msra.mxu0 %v1472
    %1981 = vmatprep.subr.mxu0 %v1477
    %1982 = vmatpush1.msra.mxu0 %v1476
    %1983 = vmatprep.subr.mxu0 %v1481
    %1984 = vmatpush1.msra.mxu0 %v1480
    %1985 = vmatprep.subr.mxu0 %v1485
    %1986 = vmatpush1.msra.mxu0 %v1484
    %1987 = vmatprep.subr.mxu0 %v1489
    %1988 = vmatpush1.msra.mxu0 %v1488
    %1989 = vmatprep.subr.mxu0 %v1493
    %1990 = vmatpush1.msra.mxu0 %v1492
    %1991 = vmatprep.subr.mxu0 0.0
    %1992 = vmatpush1.msra.mxu0 0.0
    %1993 = vmatprep.subr.mxu0 0.0
    %1994 = vmatpush1.msra.mxu0 0.0
    %1995 = vmatprep.subr.mxu0 0.0
    %1996 = vmatpush1.msra.mxu0 0.0
    %1997 = vmatprep.subr.mxu0 0.0
    %1998 = vmatpush1.msra.mxu0 0.0
    %1999 = vmatprep.subr.mxu0 0.0
    %2000 = vmatpush1.msra.mxu0 0.0
    %2001 = vmatprep.subr.mxu0 0.0
    %2002 = vmatpush1.msra.mxu0 0.0
    %2003 = vmatprep.subr.mxu0 0.0
    %2004 = vmatpush1.msra.mxu0 0.0
    %2005 = vmatprep.subr.mxu0 0.0
    %2006 = vmatpush1.msra.mxu0 0.0
    %2007 = vmatprep.subr.mxu0 0.0
    %2008 = vmatpush1.msra.mxu0 0.0
    %2009 = vmatprep.subr.mxu0 0.0
    %2010 = vmatpush1.msra.mxu0 0.0
    %2011 = vmatprep.subr.mxu0 0.0
    %2012 = vmatpush1.msra.mxu0 0.0
    %2013 = vmatprep.subr.mxu0 0.0
    %2014 = vmatpush1.msra.mxu0 0.0
    %2015 = vmatprep.subr.mxu0 0.0
    %2016 = vmatpush1.msra.mxu0 0.0
    %2017 = vmatprep.subr.mxu0 0.0
    %2018 = vmatpush1.msra.mxu0 0.0
    %2019 = vmatprep.subr.mxu0 0.0
    %2020 = vmatpush1.msra.mxu0 0.0
    %2021 = vmatprep.subr.mxu0 0.0
    %2022 = vmatpush1.msra.mxu0 0.0
    %2023 = vmatprep.mubr.f32.mxu0 0.0
    %2024 = vmatmul.mubr.f32.gmra.mrb[0].mxu0 %v1083
    %v2025 = vpop.f32.mrb[0].mxu0
    %v2026 = vadd.f32 %v1949, %v2025
    %v2027 = vpop.f32.mrb[0].mxu0
    %v2028 = vadd.f32 %v1951, %v2027
    %2029 = vmatprep.mubr.f32.mxu0 0.0
    %2030 = vmatmul.mubr.f32.gmra.mrb[0].mxu0 %v1086
    %v2031 = vpop.f32.mrb[0].mxu0
    %v2032 = vadd.f32 %v1955, %v2031
    %v2033 = vpop.f32.mrb[0].mxu0
    %v2034 = vadd.f32 %v1957, %v2033
    %2035 = vdwg.mxu0
    %2036 = vmatprep.subr.mxu0 %v1307
    %2037 = vmatpush1.msra.mxu0 %v1306
    %2038 = vmatprep.subr.mxu0 %v1311
    %2039 = vmatpush1.msra.mxu0 %v1310
    %2040 = vmatprep.subr.mxu0 %v1315
    %2041 = vmatpush1.msra.mxu0 %v1314
    %2042 = vmatprep.subr.mxu0 %v1319
    %2043 = vmatpush1.msra.mxu0 %v1318
    %2044 = vmatprep.subr.mxu0 %v1323
    %2045 = vmatpush1.msra.mxu0 %v1322
    %2046 = vmatprep.subr.mxu0 %v1327
    %2047 = vmatpush1.msra.mxu0 %v1326
    %2048 = vmatprep.subr.mxu0 %v1331
    %2049 = vmatpush1.msra.mxu0 %v1330
    %2050 = vmatprep.subr.mxu0 %v1335
    %2051 = vmatpush1.msra.mxu0 %v1334
    %2052 = vmatprep.subr.mxu0 %v1339
    %2053 = vmatpush1.msra.mxu0 %v1338
    %2054 = vmatprep.subr.mxu0 %v1343
    %2055 = vmatpush1.msra.mxu0 %v1342
    %2056 = vmatprep.subr.mxu0 %v1347
    %2057 = vmatpush1.msra.mxu0 %v1346
    %2058 = vmatprep.subr.mxu0 %v1351
    %2059 = vmatpush1.msra.mxu0 %v1350
    %2060 = vmatprep.subr.mxu0 %v1355
    %2061 = vmatpush1.msra.mxu0 %v1354
    %2062 = vmatprep.subr.mxu0 %v1359
    %2063 = vmatpush1.msra.mxu0 %v1358
    %2064 = vmatprep.subr.mxu0 %v1363
    %2065 = vmatpush1.msra.mxu0 %v1362
    %2066 = vmatprep.subr.mxu0 %v1367
    %2067 = vmatpush1.msra.mxu0 %v1366
    %2068 = vmatprep.subr.mxu0 %v1371
    %2069 = vmatpush1.msra.mxu0 %v1370
    %2070 = vmatprep.subr.mxu0 %v1375
    %2071 = vmatpush1.msra.mxu0 %v1374
    %2072 = vmatprep.subr.mxu0 %v1379
    %2073 = vmatpush1.msra.mxu0 %v1378
    %2074 = vmatprep.subr.mxu0 %v1383
    %2075 = vmatpush1.msra.mxu0 %v1382
    %2076 = vmatprep.subr.mxu0 %v1387
    %2077 = vmatpush1.msra.mxu0 %v1386
    %2078 = vmatprep.subr.mxu0 %v1391
    %2079 = vmatpush1.msra.mxu0 %v1390
    %2080 = vmatprep.subr.mxu0 %v1395
    %2081 = vmatpush1.msra.mxu0 %v1394
    %2082 = vmatprep.subr.mxu0 %v1399
    %2083 = vmatpush1.msra.mxu0 %v1398
    %2084 = vmatprep.subr.mxu0 %v1403
    %2085 = vmatpush1.msra.mxu0 %v1402
    %2086 = vmatprep.subr.mxu0 %v1407
    %2087 = vmatpush1.msra.mxu0 %v1406
    %2088 = vmatprep.subr.mxu0 %v1411
    %2089 = vmatpush1.msra.mxu0 %v1410
    %2090 = vmatprep.subr.mxu0 %v1415
    %2091 = vmatpush1.msra.mxu0 %v1414
    %2092 = vmatprep.subr.mxu0 %v1419
    %2093 = vmatpush1.msra.mxu0 %v1418
    %2094 = vmatprep.subr.mxu0 %v1423
    %2095 = vmatpush1.msra.mxu0 %v1422
    %2096 = vmatprep.subr.mxu0 %v1427
    %2097 = vmatpush1.msra.mxu0 %v1426
    %2098 = vmatprep.subr.mxu0 %v1431
    %2099 = vmatpush1.msra.mxu0 %v1430
    %2100 = vmatprep.mubr.f32.mxu0 %v1082
    %2101 = vmatmul.mubr.f32.gmra.mrb[0].mxu0 %v1081
    %v2102 = vpop.f32.mrb[0].mxu0
    %v2103 = vadd.f32 0.0, %v2102
    %v2104 = vpop.f32.mrb[0].mxu0
    %v2105 = vadd.f32 0.0, %v2104
    %2106 = vmatprep.mubr.f32.mxu0 %v1085
    %2107 = vmatmul.mubr.f32.gmra.mrb[0].mxu0 %v1084
    %v2108 = vpop.f32.mrb[0].mxu0
    %v2109 = vadd.f32 0.0, %v2108
    %v2110 = vpop.f32.mrb[0].mxu0
    %v2111 = vadd.f32 0.0, %v2110
    %2112 = vdwg.mxu0
    %2113 = vmatprep.subr.mxu0 %v1435
    %2114 = vmatpush1.msra.mxu0 %v1434
    %2115 = vmatprep.subr.mxu0 %v1439
    %2116 = vmatpush1.msra.mxu0 %v1438
    %2117 = vmatprep.subr.mxu0 %v1443
    %2118 = vmatpush1.msra.mxu0 %v1442
    %2119 = vmatprep.subr.mxu0 %v1447
    %2120 = vmatpush1.msra.mxu0 %v1446
    %2121 = vmatprep.subr.mxu0 %v1451
    %2122 = vmatpush1.msra.mxu0 %v1450
    %2123 = vmatprep.subr.mxu0 %v1455
    %2124 = vmatpush1.msra.mxu0 %v1454
    %2125 = vmatprep.subr.mxu0 %v1459
    %2126 = vmatpush1.msra.mxu0 %v1458
    %2127 = vmatprep.subr.mxu0 %v1463
    %2128 = vmatpush1.msra.mxu0 %v1462
    %2129 = vmatprep.subr.mxu0 %v1467
    %2130 = vmatpush1.msra.mxu0 %v1466
    %2131 = vmatprep.subr.mxu0 %v1471
    %2132 = vmatpush1.msra.mxu0 %v1470
    %2133 = vmatprep.subr.mxu0 %v1475
    %2134 = vmatpush1.msra.mxu0 %v1474
    %2135 = vmatprep.subr.mxu0 %v1479
    %2136 = vmatpush1.msra.mxu0 %v1478
    %2137 = vmatprep.subr.mxu0 %v1483
    %2138 = vmatpush1.msra.mxu0 %v1482
    %2139 = vmatprep.subr.mxu0 %v1487
    %2140 = vmatpush1.msra.mxu0 %v1486
    %2141 = vmatprep.subr.mxu0 %v1491
    %2142 = vmatpush1.msra.mxu0 %v1490
    %2143 = vmatprep.subr.mxu0 %v1495
    %2144 = vmatpush1.msra.mxu0 %v1494
    %2145 = vmatprep.subr.mxu0 0.0
    %2146 = vmatpush1.msra.mxu0 0.0
    %2147 = vmatprep.subr.mxu0 0.0
    %2148 = vmatpush1.msra.mxu0 0.0
    %2149 = vmatprep.subr.mxu0 0.0
    %2150 = vmatpush1.msra.mxu0 0.0
    %2151 = vmatprep.subr.mxu0 0.0
    %2152 = vmatpush1.msra.mxu0 0.0
    %2153 = vmatprep.subr.mxu0 0.0
    %2154 = vmatpush1.msra.mxu0 0.0
    %2155 = vmatprep.subr.mxu0 0.0
    %2156 = vmatpush1.msra.mxu0 0.0
    %2157 = vmatprep.subr.mxu0 0.0
    %2158 = vmatpush1.msra.mxu0 0.0
    %2159 = vmatprep.subr.mxu0 0.0
    %2160 = vmatpush1.msra.mxu0 0.0
    %2161 = vmatprep.subr.mxu0 0.0
    %2162 = vmatpush1.msra.mxu0 0.0
    %2163 = vmatprep.subr.mxu0 0.0
    %2164 = vmatpush1.msra.mxu0 0.0
    %2165 = vmatprep.subr.mxu0 0.0
    %2166 = vmatpush1.msra.mxu0 0.0
    %2167 = vmatprep.subr.mxu0 0.0
    %2168 = vmatpush1.msra.mxu0 0.0
    %2169 = vmatprep.subr.mxu0 0.0
    %2170 = vmatpush1.msra.mxu0 0.0
    %2171 = vmatprep.subr.mxu0 0.0
    %2172 = vmatpush1.msra.mxu0 0.0
    %2173 = vmatprep.subr.mxu0 0.0
    %2174 = vmatpush1.msra.mxu0 0.0
    %2175 = vmatprep.subr.mxu0 0.0
    %2176 = vmatpush1.msra.mxu0 0.0
    %2177 = vmatprep.mubr.f32.mxu0 0.0
    %2178 = vmatmul.mubr.f32.gmra.mrb[0].mxu0 %v1083
    %v2179 = vpop.f32.mrb[0].mxu0
    %v2180 = vadd.f32 %v2103, %v2179
    %v2181 = vpop.f32.mrb[0].mxu0
    %v2182 = vadd.f32 %v2105, %v2181
    %2183 = vmatprep.mubr.f32.mxu0 0.0
    %2184 = vmatmul.mubr.f32.gmra.mrb[0].mxu0 %v1086
    %v2185 = vpop.f32.mrb[0].mxu0
    %v2186 = vadd.f32 %v2109, %v2185
    %v2187 = vpop.f32.mrb[0].mxu0
    %v2188 = vadd.f32 %v2111, %v2187
    %2189 = vdwg.mxu0
    %2190 = vmatprep.subr.mxu0 %v1112
    %2191 = vmatpush1.msra.mxu0 %v1111
    %2192 = vmatprep.subr.mxu0 %v1116
    %2193 = vmatpush1.msra.mxu0 %v1115
    %2194 = vmatprep.subr.mxu0 %v1120
    %2195 = vmatpush1.msra.mxu0 %v1119
    %2196 = vmatprep.subr.mxu0 %v1124
    %2197 = vmatpush1.msra.mxu0 %v1123
    %2198 = vmatprep.subr.mxu0 %v1128
    %2199 = vmatpush1.msra.mxu0 %v1127
    %2200 = vmatprep.subr.mxu0 %v1132
    %2201 = vmatpush1.msra.mxu0 %v1131
    %2202 = vmatprep.subr.mxu0 %v1136
    %2203 = vmatpush1.msra.mxu0 %v1135
    %2204 = vmatprep.subr.mxu0 %v1140
    %2205 = vmatpush1.msra.mxu0 %v1139
    %2206 = vmatprep.subr.mxu0 %v1144
    %2207 = vmatpush1.msra.mxu0 %v1143
    %2208 = vmatprep.subr.mxu0 %v1148
    %2209 = vmatpush1.msra.mxu0 %v1147
    %2210 = vmatprep.subr.mxu0 %v1152
    %2211 = vmatpush1.msra.mxu0 %v1151
    %2212 = vmatprep.subr.mxu0 %v1156
    %2213 = vmatpush1.msra.mxu0 %v1155
    %2214 = vmatprep.subr.mxu0 %v1160
    %2215 = vmatpush1.msra.mxu0 %v1159
    %2216 = vmatprep.subr.mxu0 %v1164
    %2217 = vmatpush1.msra.mxu0 %v1163
    %2218 = vmatprep.subr.mxu0 %v1168
    %2219 = vmatpush1.msra.mxu0 %v1167
    %2220 = vmatprep.subr.mxu0 %v1172
    %2221 = vmatpush1.msra.mxu0 %v1171
    %2222 = vmatprep.subr.mxu0 %v1176
    %2223 = vmatpush1.msra.mxu0 %v1175
    %2224 = vmatprep.subr.mxu0 %v1180
    %2225 = vmatpush1.msra.mxu0 %v1179
    %2226 = vmatprep.subr.mxu0 %v1184
    %2227 = vmatpush1.msra.mxu0 %v1183
    %2228 = vmatprep.subr.mxu0 %v1188
    %2229 = vmatpush1.msra.mxu0 %v1187
    %2230 = vmatprep.subr.mxu0 %v1192
    %2231 = vmatpush1.msra.mxu0 %v1191
    %2232 = vmatprep.subr.mxu0 %v1196
    %2233 = vmatpush1.msra.mxu0 %v1195
    %2234 = vmatprep.subr.mxu0 %v1200
    %2235 = vmatpush1.msra.mxu0 %v1199
    %2236 = vmatprep.subr.mxu0 %v1204
    %2237 = vmatpush1.msra.mxu0 %v1203
    %2238 = vmatprep.subr.mxu0 %v1208
    %2239 = vmatpush1.msra.mxu0 %v1207
    %2240 = vmatprep.subr.mxu0 %v1212
    %2241 = vmatpush1.msra.mxu0 %v1211
    %2242 = vmatprep.subr.mxu0 %v1216
    %2243 = vmatpush1.msra.mxu0 %v1215
    %2244 = vmatprep.subr.mxu0 %v1220
    %2245 = vmatpush1.msra.mxu0 %v1219
    %2246 = vmatprep.subr.mxu0 %v1224
    %2247 = vmatpush1.msra.mxu0 %v1223
    %2248 = vmatprep.subr.mxu0 %v1228
    %2249 = vmatpush1.msra.mxu0 %v1227
    %2250 = vmatprep.subr.mxu0 %v1232
    %2251 = vmatpush1.msra.mxu0 %v1231
    %2252 = vmatprep.subr.mxu0 %v1236
    %2253 = vmatpush1.msra.mxu0 %v1235
    %2254 = vmatprep.mubr.f32.mxu0 %v1079
    %2255 = vmatmul.mubr.f32.gmra.mrb[0].mxu0 %v1078
    %v2256 = vpop.f32.mrb[0].mxu0
    %v2257 = vadd.f32 %v2026, %v2256
    %v2258 = vpop.f32.mrb[0].mxu0
    %v2259 = vadd.f32 %v2028, %v2258
    %2260 = vmatprep.mubr.f32.mxu0 %v1082
    %2261 = vmatmul.mubr.f32.gmra.mrb[0].mxu0 %v1081
    %v2262 = vpop.f32.mrb[0].mxu0
    %v2263 = vadd.f32 %v2032, %v2262
    %v2264 = vpop.f32.mrb[0].mxu0
    %v2265 = vadd.f32 %v2034, %v2264
    %2266 = vdwg.mxu0
    %2267 = vmatprep.subr.mxu0 %v1240
    %2268 = vmatpush1.msra.mxu0 %v1239
    %2269 = vmatprep.subr.mxu0 %v1244
    %2270 = vmatpush1.msra.mxu0 %v1243
    %2271 = vmatprep.subr.mxu0 %v1248
    %2272 = vmatpush1.msra.mxu0 %v1247
    %2273 = vmatprep.subr.mxu0 %v1252
    %2274 = vmatpush1.msra.mxu0 %v1251
    %2275 = vmatprep.subr.mxu0 %v1256
    %2276 = vmatpush1.msra.mxu0 %v1255
    %2277 = vmatprep.subr.mxu0 %v1260
    %2278 = vmatpush1.msra.mxu0 %v1259
    %2279 = vmatprep.subr.mxu0 %v1264
    %2280 = vmatpush1.msra.mxu0 %v1263
    %2281 = vmatprep.subr.mxu0 %v1268
    %2282 = vmatpush1.msra.mxu0 %v1267
    %2283 = vmatprep.subr.mxu0 %v1272
    %2284 = vmatpush1.msra.mxu0 %v1271
    %2285 = vmatprep.subr.mxu0 %v1276
    %2286 = vmatpush1.msra.mxu0 %v1275
    %2287 = vmatprep.subr.mxu0 %v1280
    %2288 = vmatpush1.msra.mxu0 %v1279
    %2289 = vmatprep.subr.mxu0 %v1284
    %2290 = vmatpush1.msra.mxu0 %v1283
    %2291 = vmatprep.subr.mxu0 %v1288
    %2292 = vmatpush1.msra.mxu0 %v1287
    %2293 = vmatprep.subr.mxu0 %v1292
    %2294 = vmatpush1.msra.mxu0 %v1291
    %2295 = vmatprep.subr.mxu0 %v1296
    %2296 = vmatpush1.msra.mxu0 %v1295
    %2297 = vmatprep.subr.mxu0 %v1300
    %2298 = vmatpush1.msra.mxu0 %v1299
    %2299 = vmatprep.subr.mxu0 0.0
    %2300 = vmatpush1.msra.mxu0 0.0
    %2301 = vmatprep.subr.mxu0 0.0
    %2302 = vmatpush1.msra.mxu0 0.0
    %2303 = vmatprep.subr.mxu0 0.0
    %2304 = vmatpush1.msra.mxu0 0.0
    %2305 = vmatprep.subr.mxu0 0.0
    %2306 = vmatpush1.msra.mxu0 0.0
    %2307 = vmatprep.subr.mxu0 0.0
    %2308 = vmatpush1.msra.mxu0 0.0
    %2309 = vmatprep.subr.mxu0 0.0
    %2310 = vmatpush1.msra.mxu0 0.0
    %2311 = vmatprep.subr.mxu0 0.0
    %2312 = vmatpush1.msra.mxu0 0.0
    %2313 = vmatprep.subr.mxu0 0.0
    %2314 = vmatpush1.msra.mxu0 0.0
    %2315 = vmatprep.subr.mxu0 0.0
    %2316 = vmatpush1.msra.mxu0 0.0
    %2317 = vmatprep.subr.mxu0 0.0
    %2318 = vmatpush1.msra.mxu0 0.0
    %2319 = vmatprep.subr.mxu0 0.0
    %2320 = vmatpush1.msra.mxu0 0.0
    %2321 = vmatprep.subr.mxu0 0.0
    %2322 = vmatpush1.msra.mxu0 0.0
    %2323 = vmatprep.subr.mxu0 0.0
    %2324 = vmatpush1.msra.mxu0 0.0
    %2325 = vmatprep.subr.mxu0 0.0
    %2326 = vmatpush1.msra.mxu0 0.0
    %2327 = vmatprep.subr.mxu0 0.0
    %2328 = vmatpush1.msra.mxu0 0.0
    %2329 = vmatprep.subr.mxu0 0.0
    %2330 = vmatpush1.msra.mxu0 0.0
    %2331 = vmatprep.mubr.f32.mxu0 0.0
    %2332 = vmatmul.mubr.f32.gmra.mrb[0].mxu0 %v1080
    %v2333 = vpop.f32.mrb[0].mxu0
    %v2334 = vadd.f32 %v2257, %v2333
    %v2335 = vpop.f32.mrb[0].mxu0
    %v2336 = vadd.f32 %v2259, %v2335
    %2337 = vmatprep.mubr.f32.mxu0 0.0
    %2338 = vmatmul.mubr.f32.gmra.mrb[0].mxu0 %v1083
    %v2339 = vpop.f32.mrb[0].mxu0
    %v2340 = vadd.f32 %v2263, %v2339
    %v2341 = vpop.f32.mrb[0].mxu0
    %v2342 = vadd.f32 %v2265, %v2341
    %2343 = vdwg.mxu0
    %2344 = vmatprep.subr.mxu0 %v1114
    %2345 = vmatpush1.msra.mxu0 %v1113
    %2346 = vmatprep.subr.mxu0 %v1118
    %2347 = vmatpush1.msra.mxu0 %v1117
    %2348 = vmatprep.subr.mxu0 %v1122
    %2349 = vmatpush1.msra.mxu0 %v1121
    %2350 = vmatprep.subr.mxu0 %v1126
    %2351 = vmatpush1.msra.mxu0 %v1125
    %2352 = vmatprep.subr.mxu0 %v1130
    %2353 = vmatpush1.msra.mxu0 %v1129
    %2354 = vmatprep.subr.mxu0 %v1134
    %2355 = vmatpush1.msra.mxu0 %v1133
    %2356 = vmatprep.subr.mxu0 %v1138
    %2357 = vmatpush1.msra.mxu0 %v1137
    %2358 = vmatprep.subr.mxu0 %v1142
    %2359 = vmatpush1.msra.mxu0 %v1141
    %2360 = vmatprep.subr.mxu0 %v1146
    %2361 = vmatpush1.msra.mxu0 %v1145
    %2362 = vmatprep.subr.mxu0 %v1150
    %2363 = vmatpush1.msra.mxu0 %v1149
    %2364 = vmatprep.subr.mxu0 %v1154
    %2365 = vmatpush1.msra.mxu0 %v1153
    %2366 = vmatprep.subr.mxu0 %v1158
    %2367 = vmatpush1.msra.mxu0 %v1157
    %2368 = vmatprep.subr.mxu0 %v1162
    %2369 = vmatpush1.msra.mxu0 %v1161
    %2370 = vmatprep.subr.mxu0 %v1166
    %2371 = vmatpush1.msra.mxu0 %v1165
    %2372 = vmatprep.subr.mxu0 %v1170
    %2373 = vmatpush1.msra.mxu0 %v1169
    %2374 = vmatprep.subr.mxu0 %v1174
    %2375 = vmatpush1.msra.mxu0 %v1173
    %2376 = vmatprep.subr.mxu0 %v1178
    %2377 = vmatpush1.msra.mxu0 %v1177
    %2378 = vmatprep.subr.mxu0 %v1182
    %2379 = vmatpush1.msra.mxu0 %v1181
    %2380 = vmatprep.subr.mxu0 %v1186
    %2381 = vmatpush1.msra.mxu0 %v1185
    %2382 = vmatprep.subr.mxu0 %v1190
    %2383 = vmatpush1.msra.mxu0 %v1189
    %2384 = vmatprep.subr.mxu0 %v1194
    %2385 = vmatpush1.msra.mxu0 %v1193
    %2386 = vmatprep.subr.mxu0 %v1198
    %2387 = vmatpush1.msra.mxu0 %v1197
    %2388 = vmatprep.subr.mxu0 %v1202
    %2389 = vmatpush1.msra.mxu0 %v1201
    %2390 = vmatprep.subr.mxu0 %v1206
    %2391 = vmatpush1.msra.mxu0 %v1205
    %2392 = vmatprep.subr.mxu0 %v1210
    %2393 = vmatpush1.msra.mxu0 %v1209
    %2394 = vmatprep.subr.mxu0 %v1214
    %2395 = vmatpush1.msra.mxu0 %v1213
    %2396 = vmatprep.subr.mxu0 %v1218
    %2397 = vmatpush1.msra.mxu0 %v1217
    %2398 = vmatprep.subr.mxu0 %v1222
    %2399 = vmatpush1.msra.mxu0 %v1221
    %2400 = vmatprep.subr.mxu0 %v1226
    %2401 = vmatpush1.msra.mxu0 %v1225
    %2402 = vmatprep.subr.mxu0 %v1230
    %2403 = vmatpush1.msra.mxu0 %v1229
    %2404 = vmatprep.subr.mxu0 %v1234
    %2405 = vmatpush1.msra.mxu0 %v1233
    %2406 = vmatprep.subr.mxu0 %v1238
    %2407 = vmatpush1.msra.mxu0 %v1237
    %2408 = vmatprep.mubr.f32.mxu0 %v1079
    %2409 = vmatmul.mubr.f32.gmra.mrb[0].mxu0 %v1078
    %v2410 = vpop.f32.mrb[0].mxu0
    %v2411 = vadd.f32 %v2180, %v2410
    %v2412 = vpop.f32.mrb[0].mxu0
    %v2413 = vadd.f32 %v2182, %v2412
    %2414 = vmatprep.mubr.f32.mxu0 %v1082
    %2415 = vmatmul.mubr.f32.gmra.mrb[0].mxu0 %v1081
    %v2416 = vpop.f32.mrb[0].mxu0
    %v2417 = vadd.f32 %v2186, %v2416
    %v2418 = vpop.f32.mrb[0].mxu0
    %v2419 = vadd.f32 %v2188, %v2418
    %2420 = vdwg.mxu0
    %2421 = vmatprep.subr.mxu0 %v1242
    %2422 = vmatpush1.msra.mxu0 %v1241
    %2423 = vmatprep.subr.mxu0 %v1246
    %2424 = vmatpush1.msra.mxu0 %v1245
    %2425 = vmatprep.subr.mxu0 %v1250
    %2426 = vmatpush1.msra.mxu0 %v1249
    %2427 = vmatprep.subr.mxu0 %v1254
    %2428 = vmatpush1.msra.mxu0 %v1253
    %2429 = vmatprep.subr.mxu0 %v1258
    %2430 = vmatpush1.msra.mxu0 %v1257
    %2431 = vmatprep.subr.mxu0 %v1262
    %2432 = vmatpush1.msra.mxu0 %v1261
    %2433 = vmatprep.subr.mxu0 %v1266
    %2434 = vmatpush1.msra.mxu0 %v1265
    %2435 = vmatprep.subr.mxu0 %v1270
    %2436 = vmatpush1.msra.mxu0 %v1269
    %2437 = vmatprep.subr.mxu0 %v1274
    %2438 = vmatpush1.msra.mxu0 %v1273
    %2439 = vmatprep.subr.mxu0 %v1278
    %2440 = vmatpush1.msra.mxu0 %v1277
    %2441 = vmatprep.subr.mxu0 %v1282
    %2442 = vmatpush1.msra.mxu0 %v1281
    %2443 = vmatprep.subr.mxu0 %v1286
    %2444 = vmatpush1.msra.mxu0 %v1285
    %2445 = vmatprep.subr.mxu0 %v1290
    %2446 = vmatpush1.msra.mxu0 %v1289
    %2447 = vmatprep.subr.mxu0 %v1294
    %2448 = vmatpush1.msra.mxu0 %v1293
    %2449 = vmatprep.subr.mxu0 %v1298
    %2450 = vmatpush1.msra.mxu0 %v1297
    %2451 = vmatprep.subr.mxu0 %v1302
    %2452 = vmatpush1.msra.mxu0 %v1301
    %2453 = vmatprep.subr.mxu0 0.0
    %2454 = vmatpush1.msra.mxu0 0.0
    %2455 = vmatprep.subr.mxu0 0.0
    %2456 = vmatpush1.msra.mxu0 0.0
    %2457 = vmatprep.subr.mxu0 0.0
    %2458 = vmatpush1.msra.mxu0 0.0
    %2459 = vmatprep.subr.mxu0 0.0
    %2460 = vmatpush1.msra.mxu0 0.0
    %2461 = vmatprep.subr.mxu0 0.0
    %2462 = vmatpush1.msra.mxu0 0.0
    %2463 = vmatprep.subr.mxu0 0.0
    %2464 = vmatpush1.msra.mxu0 0.0
    %2465 = vmatprep.subr.mxu0 0.0
    %2466 = vmatpush1.msra.mxu0 0.0
    %2467 = vmatprep.subr.mxu0 0.0
    %2468 = vmatpush1.msra.mxu0 0.0
    %2469 = vmatprep.subr.mxu0 0.0
    %2470 = vmatpush1.msra.mxu0 0.0
    %2471 = vmatprep.subr.mxu0 0.0
    %2472 = vmatpush1.msra.mxu0 0.0
    %2473 = vmatprep.subr.mxu0 0.0
    %2474 = vmatpush1.msra.mxu0 0.0
    %2475 = vmatprep.subr.mxu0 0.0
    %2476 = vmatpush1.msra.mxu0 0.0
    %2477 = vmatprep.subr.mxu0 0.0
    %2478 = vmatpush1.msra.mxu0 0.0
    %2479 = vmatprep.subr.mxu0 0.0
    %2480 = vmatpush1.msra.mxu0 0.0
    %2481 = vmatprep.subr.mxu0 0.0
    %2482 = vmatpush1.msra.mxu0 0.0
    %2483 = vmatprep.subr.mxu0 0.0
    %2484 = vmatpush1.msra.mxu0 0.0
    %2485 = vmatprep.mubr.f32.mxu0 0.0
    %2486 = vmatmul.mubr.f32.gmra.mrb[0].mxu0 %v1080
    %v2487 = vpop.f32.mrb[0].mxu0
    %v2488 = vadd.f32 %v2411, %v2487
    %v2489 = vpop.f32.mrb[0].mxu0
    %v2490 = vadd.f32 %v2413, %v2489
    %2491 = vmatprep.mubr.f32.mxu0 0.0
    %2492 = vmatmul.mubr.f32.gmra.mrb[0].mxu0 %v1083
    %v2493 = vpop.f32.mrb[0].mxu0
    %v2494 = vadd.f32 %v2417, %v2493
    %v2495 = vpop.f32.mrb[0].mxu0
    %v2496 = vadd.f32 %v2419, %v2495
    %2497 = vdwg.mxu0
    %2498 = vmatprep.subr.mxu0 %v1498
    %2499 = vmatpush1.msra.mxu0 %v1497
    %2500 = vmatprep.subr.mxu0 %v1502
    %2501 = vmatpush1.msra.mxu0 %v1501
    %2502 = vmatprep.subr.mxu0 %v1506
    %2503 = vmatpush1.msra.mxu0 %v1505
    %2504 = vmatprep.subr.mxu0 %v1510
    %2505 = vmatpush1.msra.mxu0 %v1509
    %2506 = vmatprep.subr.mxu0 %v1514
    %2507 = vmatpush1.msra.mxu0 %v1513
    %2508 = vmatprep.subr.mxu0 %v1518
    %2509 = vmatpush1.msra.mxu0 %v1517
    %2510 = vmatprep.subr.mxu0 %v1522
    %2511 = vmatpush1.msra.mxu0 %v1521
    %2512 = vmatprep.subr.mxu0 %v1526
    %2513 = vmatpush1.msra.mxu0 %v1525
    %2514 = vmatprep.subr.mxu0 %v1530
    %2515 = vmatpush1.msra.mxu0 %v1529
    %2516 = vmatprep.subr.mxu0 %v1534
    %2517 = vmatpush1.msra.mxu0 %v1533
    %2518 = vmatprep.subr.mxu0 %v1538
    %2519 = vmatpush1.msra.mxu0 %v1537
    %2520 = vmatprep.subr.mxu0 %v1542
    %2521 = vmatpush1.msra.mxu0 %v1541
    %2522 = vmatprep.subr.mxu0 %v1546
    %2523 = vmatpush1.msra.mxu0 %v1545
    %2524 = vmatprep.subr.mxu0 %v1550
    %2525 = vmatpush1.msra.mxu0 %v1549
    %2526 = vmatprep.subr.mxu0 %v1554
    %2527 = vmatpush1.msra.mxu0 %v1553
    %2528 = vmatprep.subr.mxu0 %v1558
    %2529 = vmatpush1.msra.mxu0 %v1557
    %2530 = vmatprep.subr.mxu0 %v1562
    %2531 = vmatpush1.msra.mxu0 %v1561
    %2532 = vmatprep.subr.mxu0 %v1566
    %2533 = vmatpush1.msra.mxu0 %v1565
    %2534 = vmatprep.subr.mxu0 %v1570
    %2535 = vmatpush1.msra.mxu0 %v1569
    %2536 = vmatprep.subr.mxu0 %v1574
    %2537 = vmatpush1.msra.mxu0 %v1573
    %2538 = vmatprep.subr.mxu0 %v1578
    %2539 = vmatpush1.msra.mxu0 %v1577
    %2540 = vmatprep.subr.mxu0 %v1582
    %2541 = vmatpush1.msra.mxu0 %v1581
    %2542 = vmatprep.subr.mxu0 %v1586
    %2543 = vmatpush1.msra.mxu0 %v1585
    %2544 = vmatprep.subr.mxu0 %v1590
    %2545 = vmatpush1.msra.mxu0 %v1589
    %2546 = vmatprep.subr.mxu0 %v1594
    %2547 = vmatpush1.msra.mxu0 %v1593
    %2548 = vmatprep.subr.mxu0 %v1598
    %2549 = vmatpush1.msra.mxu0 %v1597
    %2550 = vmatprep.subr.mxu0 %v1602
    %2551 = vmatpush1.msra.mxu0 %v1601
    %2552 = vmatprep.subr.mxu0 %v1606
    %2553 = vmatpush1.msra.mxu0 %v1605
    %2554 = vmatprep.subr.mxu0 %v1610
    %2555 = vmatpush1.msra.mxu0 %v1609
    %2556 = vmatprep.subr.mxu0 %v1614
    %2557 = vmatpush1.msra.mxu0 %v1613
    %2558 = vmatprep.subr.mxu0 %v1618
    %2559 = vmatpush1.msra.mxu0 %v1617
    %2560 = vmatprep.subr.mxu0 %v1622
    %2561 = vmatpush1.msra.mxu0 %v1621
    %2562 = vmatprep.mubr.f32.mxu0 %v1085
    %2563 = vmatmul.mubr.f32.gmra.mrb[0].mxu0 %v1084
    %v2564 = vpop.f32.mrb[0].mxu0
    %v2565 = vadd.f32 0.0, %v2564
    %v2566 = vpop.f32.mrb[0].mxu0
    %v2567 = vadd.f32 0.0, %v2566
    %2568 = vmatprep.mubr.f32.mxu0 %v1088
    %2569 = vmatmul.mubr.f32.gmra.mrb[0].mxu0 %v1087
    %v2570 = vpop.f32.mrb[0].mxu0
    %v2571 = vadd.f32 0.0, %v2570
    %v2572 = vpop.f32.mrb[0].mxu0
    %v2573 = vadd.f32 0.0, %v2572
    %2574 = vdwg.mxu0
    %2575 = vmatprep.subr.mxu0 %v1626
    %2576 = vmatpush1.msra.mxu0 %v1625
    %2577 = vmatprep.subr.mxu0 %v1630
    %2578 = vmatpush1.msra.mxu0 %v1629
    %2579 = vmatprep.subr.mxu0 %v1634
    %2580 = vmatpush1.msra.mxu0 %v1633
    %2581 = vmatprep.subr.mxu0 %v1638
    %2582 = vmatpush1.msra.mxu0 %v1637
    %2583 = vmatprep.subr.mxu0 %v1642
    %2584 = vmatpush1.msra.mxu0 %v1641
    %2585 = vmatprep.subr.mxu0 %v1646
    %2586 = vmatpush1.msra.mxu0 %v1645
    %2587 = vmatprep.subr.mxu0 %v1650
    %2588 = vmatpush1.msra.mxu0 %v1649
    %2589 = vmatprep.subr.mxu0 %v1654
    %2590 = vmatpush1.msra.mxu0 %v1653
    %2591 = vmatprep.subr.mxu0 %v1658
    %2592 = vmatpush1.msra.mxu0 %v1657
    %2593 = vmatprep.subr.mxu0 %v1662
    %2594 = vmatpush1.msra.mxu0 %v1661
    %2595 = vmatprep.subr.mxu0 %v1666
    %2596 = vmatpush1.msra.mxu0 %v1665
    %2597 = vmatprep.subr.mxu0 %v1670
    %2598 = vmatpush1.msra.mxu0 %v1669
    %2599 = vmatprep.subr.mxu0 %v1674
    %2600 = vmatpush1.msra.mxu0 %v1673
    %2601 = vmatprep.subr.mxu0 %v1678
    %2602 = vmatpush1.msra.mxu0 %v1677
    %2603 = vmatprep.subr.mxu0 %v1682
    %2604 = vmatpush1.msra.mxu0 %v1681
    %2605 = vmatprep.subr.mxu0 %v1686
    %2606 = vmatpush1.msra.mxu0 %v1685
    %2607 = vmatprep.subr.mxu0 0.0
    %2608 = vmatpush1.msra.mxu0 0.0
    %2609 = vmatprep.subr.mxu0 0.0
    %2610 = vmatpush1.msra.mxu0 0.0
    %2611 = vmatprep.subr.mxu0 0.0
    %2612 = vmatpush1.msra.mxu0 0.0
    %2613 = vmatprep.subr.mxu0 0.0
    %2614 = vmatpush1.msra.mxu0 0.0
    %2615 = vmatprep.subr.mxu0 0.0
    %2616 = vmatpush1.msra.mxu0 0.0
    %2617 = vmatprep.subr.mxu0 0.0
    %2618 = vmatpush1.msra.mxu0 0.0
    %2619 = vmatprep.subr.mxu0 0.0
    %2620 = vmatpush1.msra.mxu0 0.0
    %2621 = vmatprep.subr.mxu0 0.0
    %2622 = vmatpush1.msra.mxu0 0.0
    %2623 = vmatprep.subr.mxu0 0.0
    %2624 = vmatpush1.msra.mxu0 0.0
    %2625 = vmatprep.subr.mxu0 0.0
    %2626 = vmatpush1.msra.mxu0 0.0
    %2627 = vmatprep.subr.mxu0 0.0
    %2628 = vmatpush1.msra.mxu0 0.0
    %2629 = vmatprep.subr.mxu0 0.0
    %2630 = vmatpush1.msra.mxu0 0.0
    %2631 = vmatprep.subr.mxu0 0.0
    %2632 = vmatpush1.msra.mxu0 0.0
    %2633 = vmatprep.subr.mxu0 0.0
    %2634 = vmatpush1.msra.mxu0 0.0
    %2635 = vmatprep.subr.mxu0 0.0
    %2636 = vmatpush1.msra.mxu0 0.0
    %2637 = vmatprep.subr.mxu0 0.0
    %2638 = vmatpush1.msra.mxu0 0.0
    %2639 = vmatprep.mubr.f32.mxu0 0.0
    %2640 = vmatmul.mubr.f32.gmra.mrb[0].mxu0 %v1086
    %v2641 = vpop.f32.mrb[0].mxu0
    %v2642 = vadd.f32 %v2565, %v2641
    %v2643 = vpop.f32.mrb[0].mxu0
    %v2644 = vadd.f32 %v2567, %v2643
    %2645 = vmatprep.mubr.f32.mxu0 0.0
    %2646 = vmatmul.mubr.f32.gmra.mrb[0].mxu0 %v1089
    %v2647 = vpop.f32.mrb[0].mxu0
    %v2648 = vadd.f32 %v2571, %v2647
    %v2649 = vpop.f32.mrb[0].mxu0
    %v2650 = vadd.f32 %v2573, %v2649
    %2651 = vdwg.mxu0
    %2652 = vmatprep.subr.mxu0 %v1500
    %2653 = vmatpush1.msra.mxu0 %v1499
    %2654 = vmatprep.subr.mxu0 %v1504
    %2655 = vmatpush1.msra.mxu0 %v1503
    %2656 = vmatprep.subr.mxu0 %v1508
    %2657 = vmatpush1.msra.mxu0 %v1507
    %2658 = vmatprep.subr.mxu0 %v1512
    %2659 = vmatpush1.msra.mxu0 %v1511
    %2660 = vmatprep.subr.mxu0 %v1516
    %2661 = vmatpush1.msra.mxu0 %v1515
    %2662 = vmatprep.subr.mxu0 %v1520
    %2663 = vmatpush1.msra.mxu0 %v1519
    %2664 = vmatprep.subr.mxu0 %v1524
    %2665 = vmatpush1.msra.mxu0 %v1523
    %2666 = vmatprep.subr.mxu0 %v1528
    %2667 = vmatpush1.msra.mxu0 %v1527
    %2668 = vmatprep.subr.mxu0 %v1532
    %2669 = vmatpush1.msra.mxu0 %v1531
    %2670 = vmatprep.subr.mxu0 %v1536
    %2671 = vmatpush1.msra.mxu0 %v1535
    %2672 = vmatprep.subr.mxu0 %v1540
    %2673 = vmatpush1.msra.mxu0 %v1539
    %2674 = vmatprep.subr.mxu0 %v1544
    %2675 = vmatpush1.msra.mxu0 %v1543
    %2676 = vmatprep.subr.mxu0 %v1548
    %2677 = vmatpush1.msra.mxu0 %v1547
    %2678 = vmatprep.subr.mxu0 %v1552
    %2679 = vmatpush1.msra.mxu0 %v1551
    %2680 = vmatprep.subr.mxu0 %v1556
    %2681 = vmatpush1.msra.mxu0 %v1555
    %2682 = vmatprep.subr.mxu0 %v1560
    %2683 = vmatpush1.msra.mxu0 %v1559
    %2684 = vmatprep.subr.mxu0 %v1564
    %2685 = vmatpush1.msra.mxu0 %v1563
    %2686 = vmatprep.subr.mxu0 %v1568
    %2687 = vmatpush1.msra.mxu0 %v1567
    %2688 = vmatprep.subr.mxu0 %v1572
    %2689 = vmatpush1.msra.mxu0 %v1571
    %2690 = vmatprep.subr.mxu0 %v1576
    %2691 = vmatpush1.msra.mxu0 %v1575
    %2692 = vmatprep.subr.mxu0 %v1580
    %2693 = vmatpush1.msra.mxu0 %v1579
    %2694 = vmatprep.subr.mxu0 %v1584
    %2695 = vmatpush1.msra.mxu0 %v1583
    %2696 = vmatprep.subr.mxu0 %v1588
    %2697 = vmatpush1.msra.mxu0 %v1587
    %2698 = vmatprep.subr.mxu0 %v1592
    %2699 = vmatpush1.msra.mxu0 %v1591
    %2700 = vmatprep.subr.mxu0 %v1596
    %2701 = vmatpush1.msra.mxu0 %v1595
    %2702 = vmatprep.subr.mxu0 %v1600
    %2703 = vmatpush1.msra.mxu0 %v1599
    %2704 = vmatprep.subr.mxu0 %v1604
    %2705 = vmatpush1.msra.mxu0 %v1603
    %2706 = vmatprep.subr.mxu0 %v1608
    %2707 = vmatpush1.msra.mxu0 %v1607
    %2708 = vmatprep.subr.mxu0 %v1612
    %2709 = vmatpush1.msra.mxu0 %v1611
    %2710 = vmatprep.subr.mxu0 %v1616
    %2711 = vmatpush1.msra.mxu0 %v1615
    %2712 = vmatprep.subr.mxu0 %v1620
    %2713 = vmatpush1.msra.mxu0 %v1619
    %2714 = vmatprep.subr.mxu0 %v1624
    %2715 = vmatpush1.msra.mxu0 %v1623
    %2716 = vmatprep.mubr.f32.mxu0 %v1085
    %2717 = vmatmul.mubr.f32.gmra.mrb[0].mxu0 %v1084
    %v2718 = vpop.f32.mrb[0].mxu0
    %v2719 = vadd.f32 0.0, %v2718
    %v2720 = vpop.f32.mrb[0].mxu0
    %v2721 = vadd.f32 0.0, %v2720
    %2722 = vmatprep.mubr.f32.mxu0 %v1088
    %2723 = vmatmul.mubr.f32.gmra.mrb[0].mxu0 %v1087
    %v2724 = vpop.f32.mrb[0].mxu0
    %v2725 = vadd.f32 0.0, %v2724
    %v2726 = vpop.f32.mrb[0].mxu0
    %v2727 = vadd.f32 0.0, %v2726
    %2728 = vdwg.mxu0
    %2729 = vmatprep.subr.mxu0 %v1628
    %2730 = vmatpush1.msra.mxu0 %v1627
    %2731 = vmatprep.subr.mxu0 %v1632
    %2732 = vmatpush1.msra.mxu0 %v1631
    %2733 = vmatprep.subr.mxu0 %v1636
    %2734 = vmatpush1.msra.mxu0 %v1635
    %2735 = vmatprep.subr.mxu0 %v1640
    %2736 = vmatpush1.msra.mxu0 %v1639
    %2737 = vmatprep.subr.mxu0 %v1644
    %2738 = vmatpush1.msra.mxu0 %v1643
    %2739 = vmatprep.subr.mxu0 %v1648
    %2740 = vmatpush1.msra.mxu0 %v1647
    %2741 = vmatprep.subr.mxu0 %v1652
    %2742 = vmatpush1.msra.mxu0 %v1651
    %2743 = vmatprep.subr.mxu0 %v1656
    %2744 = vmatpush1.msra.mxu0 %v1655
    %2745 = vmatprep.subr.mxu0 %v1660
    %2746 = vmatpush1.msra.mxu0 %v1659
    %2747 = vmatprep.subr.mxu0 %v1664
    %2748 = vmatpush1.msra.mxu0 %v1663
    %2749 = vmatprep.subr.mxu0 %v1668
    %2750 = vmatpush1.msra.mxu0 %v1667
    %2751 = vmatprep.subr.mxu0 %v1672
    %2752 = vmatpush1.msra.mxu0 %v1671
    %2753 = vmatprep.subr.mxu0 %v1676
    %2754 = vmatpush1.msra.mxu0 %v1675
    %2755 = vmatprep.subr.mxu0 %v1680
    %2756 = vmatpush1.msra.mxu0 %v1679
    %2757 = vmatprep.subr.mxu0 %v1684
    %2758 = vmatpush1.msra.mxu0 %v1683
    %2759 = vmatprep.subr.mxu0 %v1688
    %2760 = vmatpush1.msra.mxu0 %v1687
    %2761 = vmatprep.subr.mxu0 0.0
    %2762 = vmatpush1.msra.mxu0 0.0
    %2763 = vmatprep.subr.mxu0 0.0
    %2764 = vmatpush1.msra.mxu0 0.0
    %2765 = vmatprep.subr.mxu0 0.0
    %2766 = vmatpush1.msra.mxu0 0.0
    %2767 = vmatprep.subr.mxu0 0.0
    %2768 = vmatpush1.msra.mxu0 0.0
    %2769 = vmatprep.subr.mxu0 0.0
    %2770 = vmatpush1.msra.mxu0 0.0
    %2771 = vmatprep.subr.mxu0 0.0
    %2772 = vmatpush1.msra.mxu0 0.0
    %2773 = vmatprep.subr.mxu0 0.0
    %2774 = vmatpush1.msra.mxu0 0.0
    %2775 = vmatprep.subr.mxu0 0.0
    %2776 = vmatpush1.msra.mxu0 0.0
    %2777 = vmatprep.subr.mxu0 0.0
    %2778 = vmatpush1.msra.mxu0 0.0
    %2779 = vmatprep.subr.mxu0 0.0
    %2780 = vmatpush1.msra.mxu0 0.0
    %2781 = vmatprep.subr.mxu0 0.0
    %2782 = vmatpush1.msra.mxu0 0.0
    %2783 = vmatprep.subr.mxu0 0.0
    %2784 = vmatpush1.msra.mxu0 0.0
    %2785 = vmatprep.subr.mxu0 0.0
    %2786 = vmatpush1.msra.mxu0 0.0
    %2787 = vmatprep.subr.mxu0 0.0
    %2788 = vmatpush1.msra.mxu0 0.0
    %2789 = vmatprep.subr.mxu0 0.0
    %2790 = vmatpush1.msra.mxu0 0.0
    %2791 = vmatprep.subr.mxu0 0.0
    %2792 = vmatpush1.msra.mxu0 0.0
    %2793 = vmatprep.mubr.f32.mxu0 0.0
    %2794 = vmatmul.mubr.f32.gmra.mrb[0].mxu0 %v1086
    %v2795 = vpop.f32.mrb[0].mxu0
    %v2796 = vadd.f32 %v2719, %v2795
    %v2797 = vpop.f32.mrb[0].mxu0
    %v2798 = vadd.f32 %v2721, %v2797
    %2799 = vmatprep.mubr.f32.mxu0 0.0
    %2800 = vmatmul.mubr.f32.gmra.mrb[0].mxu0 %v1089
    %v2801 = vpop.f32.mrb[0].mxu0
    %v2802 = vadd.f32 %v2725, %v2801
    %v2803 = vpop.f32.mrb[0].mxu0
    %v2804 = vadd.f32 %v2727, %v2803
    %2805 = vdwg.mxu0
    %v2806 = vadd.f32 %v2334, %v2642
    %v2807 = vadd.f32 %v2336, %v2644
    %v2808 = vadd.f32 %v2488, %v2796
    %v2809 = vadd.f32 %v2490, %v2798
    %v2810 = vadd.f32 %v2340, %v2648
    %v2811 = vadd.f32 %v2342, %v2650
    %v2812 = vadd.f32 %v2494, %v2802
    %v2813 = vadd.f32 %v2496, %v2804
    %2814 = vmatprep.subr.mxu0 %v1691
    %2815 = vmatpush1.msra.mxu0 %v1690
    %2816 = vmatprep.subr.mxu0 %v1695
    %2817 = vmatpush1.msra.mxu0 %v1694
    %2818 = vmatprep.subr.mxu0 %v1699
    %2819 = vmatpush1.msra.mxu0 %v1698
    %2820 = vmatprep.subr.mxu0 %v1703
    %2821 = vmatpush1.msra.mxu0 %v1702
    %2822 = vmatprep.subr.mxu0 %v1707
    %2823 = vmatpush1.msra.mxu0 %v1706
    %2824 = vmatprep.subr.mxu0 %v1711
    %2825 = vmatpush1.msra.mxu0 %v1710
    %2826 = vmatprep.subr.mxu0 %v1715
    %2827 = vmatpush1.msra.mxu0 %v1714
    %2828 = vmatprep.subr.mxu0 %v1719
    %2829 = vmatpush1.msra.mxu0 %v1718
    %2830 = vmatprep.subr.mxu0 %v1723
    %2831 = vmatpush1.msra.mxu0 %v1722
    %2832 = vmatprep.subr.mxu0 %v1727
    %2833 = vmatpush1.msra.mxu0 %v1726
    %2834 = vmatprep.subr.mxu0 %v1731
    %2835 = vmatpush1.msra.mxu0 %v1730
    %2836 = vmatprep.subr.mxu0 %v1735
    %2837 = vmatpush1.msra.mxu0 %v1734
    %2838 = vmatprep.subr.mxu0 %v1739
    %2839 = vmatpush1.msra.mxu0 %v1738
    %2840 = vmatprep.subr.mxu0 %v1743
    %2841 = vmatpush1.msra.mxu0 %v1742
    %2842 = vmatprep.subr.mxu0 %v1747
    %2843 = vmatpush1.msra.mxu0 %v1746
    %2844 = vmatprep.subr.mxu0 %v1751
    %2845 = vmatpush1.msra.mxu0 %v1750
    %2846 = vmatprep.subr.mxu0 %v1755
    %2847 = vmatpush1.msra.mxu0 %v1754
    %2848 = vmatprep.subr.mxu0 %v1759
    %2849 = vmatpush1.msra.mxu0 %v1758
    %2850 = vmatprep.subr.mxu0 %v1763
    %2851 = vmatpush1.msra.mxu0 %v1762
    %2852 = vmatprep.subr.mxu0 %v1767
    %2853 = vmatpush1.msra.mxu0 %v1766
    %2854 = vmatprep.subr.mxu0 %v1771
    %2855 = vmatpush1.msra.mxu0 %v1770
    %2856 = vmatprep.subr.mxu0 %v1775
    %2857 = vmatpush1.msra.mxu0 %v1774
    %2858 = vmatprep.subr.mxu0 %v1779
    %2859 = vmatpush1.msra.mxu0 %v1778
    %2860 = vmatprep.subr.mxu0 %v1783
    %2861 = vmatpush1.msra.mxu0 %v1782
    %2862 = vmatprep.subr.mxu0 %v1787
    %2863 = vmatpush1.msra.mxu0 %v1786
    %2864 = vmatprep.subr.mxu0 %v1791
    %2865 = vmatpush1.msra.mxu0 %v1790
    %2866 = vmatprep.subr.mxu0 %v1795
    %2867 = vmatpush1.msra.mxu0 %v1794
    %2868 = vmatprep.subr.mxu0 %v1799
    %2869 = vmatpush1.msra.mxu0 %v1798
    %2870 = vmatprep.subr.mxu0 %v1803
    %2871 = vmatpush1.msra.mxu0 %v1802
    %2872 = vmatprep.subr.mxu0 %v1807
    %2873 = vmatpush1.msra.mxu0 %v1806
    %2874 = vmatprep.subr.mxu0 %v1811
    %2875 = vmatpush1.msra.mxu0 %v1810
    %2876 = vmatprep.subr.mxu0 %v1815
    %2877 = vmatpush1.msra.mxu0 %v1814
    %2878 = vmatprep.mubr.f32.mxu0 %v1088
    %2879 = vmatmul.mubr.f32.gmra.mrb[0].mxu0 %v1087
    %v2880 = vpop.f32.mrb[0].mxu0
    %v2881 = vadd.f32 0.0, %v2880
    %v2882 = vpop.f32.mrb[0].mxu0
    %v2883 = vadd.f32 0.0, %v2882
    %2884 = vmatprep.mubr.f32.mxu0 %v1091
    %2885 = vmatmul.mubr.f32.gmra.mrb[0].mxu0 %v1090
    %v2886 = vpop.f32.mrb[0].mxu0
    %v2887 = vadd.f32 0.0, %v2886
    %v2888 = vpop.f32.mrb[0].mxu0
    %v2889 = vadd.f32 0.0, %v2888
    %2890 = vdwg.mxu0
    %2891 = vmatprep.subr.mxu0 %v1819
    %2892 = vmatpush1.msra.mxu0 %v1818
    %2893 = vmatprep.subr.mxu0 %v1823
    %2894 = vmatpush1.msra.mxu0 %v1822
    %2895 = vmatprep.subr.mxu0 %v1827
    %2896 = vmatpush1.msra.mxu0 %v1826
    %2897 = vmatprep.subr.mxu0 %v1831
    %2898 = vmatpush1.msra.mxu0 %v1830
    %2899 = vmatprep.subr.mxu0 %v1835
    %2900 = vmatpush1.msra.mxu0 %v1834
    %2901 = vmatprep.subr.mxu0 %v1839
    %2902 = vmatpush1.msra.mxu0 %v1838
    %2903 = vmatprep.subr.mxu0 %v1843
    %2904 = vmatpush1.msra.mxu0 %v1842
    %2905 = vmatprep.subr.mxu0 %v1847
    %2906 = vmatpush1.msra.mxu0 %v1846
    %2907 = vmatprep.subr.mxu0 %v1851
    %2908 = vmatpush1.msra.mxu0 %v1850
    %2909 = vmatprep.subr.mxu0 %v1855
    %2910 = vmatpush1.msra.mxu0 %v1854
    %2911 = vmatprep.subr.mxu0 %v1859
    %2912 = vmatpush1.msra.mxu0 %v1858
    %2913 = vmatprep.subr.mxu0 %v1863
    %2914 = vmatpush1.msra.mxu0 %v1862
    %2915 = vmatprep.subr.mxu0 %v1867
    %2916 = vmatpush1.msra.mxu0 %v1866
    %2917 = vmatprep.subr.mxu0 %v1871
    %2918 = vmatpush1.msra.mxu0 %v1870
    %2919 = vmatprep.subr.mxu0 %v1875
    %2920 = vmatpush1.msra.mxu0 %v1874
    %2921 = vmatprep.subr.mxu0 %v1879
    %2922 = vmatpush1.msra.mxu0 %v1878
    %2923 = vmatprep.subr.mxu0 0.0
    %2924 = vmatpush1.msra.mxu0 0.0
    %2925 = vmatprep.subr.mxu0 0.0
    %2926 = vmatpush1.msra.mxu0 0.0
    %2927 = vmatprep.subr.mxu0 0.0
    %2928 = vmatpush1.msra.mxu0 0.0
    %2929 = vmatprep.subr.mxu0 0.0
    %2930 = vmatpush1.msra.mxu0 0.0
    %2931 = vmatprep.subr.mxu0 0.0
    %2932 = vmatpush1.msra.mxu0 0.0
    %2933 = vmatprep.subr.mxu0 0.0
    %2934 = vmatpush1.msra.mxu0 0.0
    %2935 = vmatprep.subr.mxu0 0.0
    %2936 = vmatpush1.msra.mxu0 0.0
    %2937 = vmatprep.subr.mxu0 0.0
    %2938 = vmatpush1.msra.mxu0 0.0
    %2939 = vmatprep.subr.mxu0 0.0
    %2940 = vmatpush1.msra.mxu0 0.0
    %2941 = vmatprep.subr.mxu0 0.0
    %2942 = vmatpush1.msra.mxu0 0.0
    %2943 = vmatprep.subr.mxu0 0.0
    %2944 = vmatpush1.msra.mxu0 0.0
    %2945 = vmatprep.subr.mxu0 0.0
    %2946 = vmatpush1.msra.mxu0 0.0
    %2947 = vmatprep.subr.mxu0 0.0
    %2948 = vmatpush1.msra.mxu0 0.0
    %2949 = vmatprep.subr.mxu0 0.0
    %2950 = vmatpush1.msra.mxu0 0.0
    %2951 = vmatprep.subr.mxu0 0.0
    %2952 = vmatpush1.msra.mxu0 0.0
    %2953 = vmatprep.subr.mxu0 0.0
    %2954 = vmatpush1.msra.mxu0 0.0
    %2955 = vmatprep.mubr.f32.mxu0 0.0
    %2956 = vmatmul.mubr.f32.gmra.mrb[0].mxu0 %v1089
    %v2957 = vpop.f32.mrb[0].mxu0
    %v2958 = vadd.f32 %v2881, %v2957
    %v2959 = vpop.f32.mrb[0].mxu0
    %v2960 = vadd.f32 %v2883, %v2959
    %2961 = vmatprep.mubr.f32.mxu0 0.0
    %2962 = vmatmul.mubr.f32.gmra.mrb[0].mxu0 %v1092
    %v2963 = vpop.f32.mrb[0].mxu0
    %v2964 = vadd.f32 %v2887, %v2963
    %v2965 = vpop.f32.mrb[0].mxu0
    %v2966 = vadd.f32 %v2889, %v2965
    %2967 = vdwg.mxu0
    %2968 = vmatprep.subr.mxu0 %v1693
    %2969 = vmatpush1.msra.mxu0 %v1692
    %2970 = vmatprep.subr.mxu0 %v1697
    %2971 = vmatpush1.msra.mxu0 %v1696
    %2972 = vmatprep.subr.mxu0 %v1701
    %2973 = vmatpush1.msra.mxu0 %v1700
    %2974 = vmatprep.subr.mxu0 %v1705
    %2975 = vmatpush1.msra.mxu0 %v1704
    %2976 = vmatprep.subr.mxu0 %v1709
    %2977 = vmatpush1.msra.mxu0 %v1708
    %2978 = vmatprep.subr.mxu0 %v1713
    %2979 = vmatpush1.msra.mxu0 %v1712
    %2980 = vmatprep.subr.mxu0 %v1717
    %2981 = vmatpush1.msra.mxu0 %v1716
    %2982 = vmatprep.subr.mxu0 %v1721
    %2983 = vmatpush1.msra.mxu0 %v1720
    %2984 = vmatprep.subr.mxu0 %v1725
    %2985 = vmatpush1.msra.mxu0 %v1724
    %2986 = vmatprep.subr.mxu0 %v1729
    %2987 = vmatpush1.msra.mxu0 %v1728
    %2988 = vmatprep.subr.mxu0 %v1733
    %2989 = vmatpush1.msra.mxu0 %v1732
    %2990 = vmatprep.subr.mxu0 %v1737
    %2991 = vmatpush1.msra.mxu0 %v1736
    %2992 = vmatprep.subr.mxu0 %v1741
    %2993 = vmatpush1.msra.mxu0 %v1740
    %2994 = vmatprep.subr.mxu0 %v1745
    %2995 = vmatpush1.msra.mxu0 %v1744
    %2996 = vmatprep.subr.mxu0 %v1749
    %2997 = vmatpush1.msra.mxu0 %v1748
    %2998 = vmatprep.subr.mxu0 %v1753
    %2999 = vmatpush1.msra.mxu0 %v1752
    %3000 = vmatprep.subr.mxu0 %v1757
    %3001 = vmatpush1.msra.mxu0 %v1756
    %3002 = vmatprep.subr.mxu0 %v1761
    %3003 = vmatpush1.msra.mxu0 %v1760
    %3004 = vmatprep.subr.mxu0 %v1765
    %3005 = vmatpush1.msra.mxu0 %v1764
    %3006 = vmatprep.subr.mxu0 %v1769
    %3007 = vmatpush1.msra.mxu0 %v1768
    %3008 = vmatprep.subr.mxu0 %v1773
    %3009 = vmatpush1.msra.mxu0 %v1772
    %3010 = vmatprep.subr.mxu0 %v1777
    %3011 = vmatpush1.msra.mxu0 %v1776
    %3012 = vmatprep.subr.mxu0 %v1781
    %3013 = vmatpush1.msra.mxu0 %v1780
    %3014 = vmatprep.subr.mxu0 %v1785
    %3015 = vmatpush1.msra.mxu0 %v1784
    %3016 = vmatprep.subr.mxu0 %v1789
    %3017 = vmatpush1.msra.mxu0 %v1788
    %3018 = vmatprep.subr.mxu0 %v1793
    %3019 = vmatpush1.msra.mxu0 %v1792
    %3020 = vmatprep.subr.mxu0 %v1797
    %3021 = vmatpush1.msra.mxu0 %v1796
    %3022 = vmatprep.subr.mxu0 %v1801
    %3023 = vmatpush1.msra.mxu0 %v1800
    %3024 = vmatprep.subr.mxu0 %v1805
    %3025 = vmatpush1.msra.mxu0 %v1804
    %3026 = vmatprep.subr.mxu0 %v1809
    %3027 = vmatpush1.msra.mxu0 %v1808
    %3028 = vmatprep.subr.mxu0 %v1813
    %3029 = vmatpush1.msra.mxu0 %v1812
    %3030 = vmatprep.subr.mxu0 %v1817
    %3031 = vmatpush1.msra.mxu0 %v1816
    %3032 = vmatprep.mubr.f32.mxu0 %v1088
    %3033 = vmatmul.mubr.f32.gmra.mrb[0].mxu0 %v1087
    %v3034 = vpop.f32.mrb[0].mxu0
    %v3035 = vadd.f32 0.0, %v3034
    %v3036 = vpop.f32.mrb[0].mxu0
    %v3037 = vadd.f32 0.0, %v3036
    %3038 = vmatprep.mubr.f32.mxu0 %v1091
    %3039 = vmatmul.mubr.f32.gmra.mrb[0].mxu0 %v1090
    %v3040 = vpop.f32.mrb[0].mxu0
    %v3041 = vadd.f32 0.0, %v3040
    %v3042 = vpop.f32.mrb[0].mxu0
    %v3043 = vadd.f32 0.0, %v3042
    %3044 = vdwg.mxu0
    %3045 = vmatprep.subr.mxu0 %v1821
    %3046 = vmatpush1.msra.mxu0 %v1820
    %3047 = vmatprep.subr.mxu0 %v1825
    %3048 = vmatpush1.msra.mxu0 %v1824
    %3049 = vmatprep.subr.mxu0 %v1829
    %3050 = vmatpush1.msra.mxu0 %v1828
    %3051 = vmatprep.subr.mxu0 %v1833
    %3052 = vmatpush1.msra.mxu0 %v1832
    %3053 = vmatprep.subr.mxu0 %v1837
    %3054 = vmatpush1.msra.mxu0 %v1836
    %3055 = vmatprep.subr.mxu0 %v1841
    %3056 = vmatpush1.msra.mxu0 %v1840
    %3057 = vmatprep.subr.mxu0 %v1845
    %3058 = vmatpush1.msra.mxu0 %v1844
    %3059 = vmatprep.subr.mxu0 %v1849
    %3060 = vmatpush1.msra.mxu0 %v1848
    %3061 = vmatprep.subr.mxu0 %v1853
    %3062 = vmatpush1.msra.mxu0 %v1852
    %3063 = vmatprep.subr.mxu0 %v1857
    %3064 = vmatpush1.msra.mxu0 %v1856
    %3065 = vmatprep.subr.mxu0 %v1861
    %3066 = vmatpush1.msra.mxu0 %v1860
    %3067 = vmatprep.subr.mxu0 %v1865
    %3068 = vmatpush1.msra.mxu0 %v1864
    %3069 = vmatprep.subr.mxu0 %v1869
    %3070 = vmatpush1.msra.mxu0 %v1868
    %3071 = vmatprep.subr.mxu0 %v1873
    %3072 = vmatpush1.msra.mxu0 %v1872
    %3073 = vmatprep.subr.mxu0 %v1877
    %3074 = vmatpush1.msra.mxu0 %v1876
    %3075 = vmatprep.subr.mxu0 %v1881
    %3076 = vmatpush1.msra.mxu0 %v1880
    %3077 = vmatprep.subr.mxu0 0.0
    %3078 = vmatpush1.msra.mxu0 0.0
    %3079 = vmatprep.subr.mxu0 0.0
    %3080 = vmatpush1.msra.mxu0 0.0
    %3081 = vmatprep.subr.mxu0 0.0
    %3082 = vmatpush1.msra.mxu0 0.0
    %3083 = vmatprep.subr.mxu0 0.0
    %3084 = vmatpush1.msra.mxu0 0.0
    %3085 = vmatprep.subr.mxu0 0.0
    %3086 = vmatpush1.msra.mxu0 0.0
    %3087 = vmatprep.subr.mxu0 0.0
    %3088 = vmatpush1.msra.mxu0 0.0
    %3089 = vmatprep.subr.mxu0 0.0
    %3090 = vmatpush1.msra.mxu0 0.0
    %3091 = vmatprep.subr.mxu0 0.0
    %3092 = vmatpush1.msra.mxu0 0.0
    %3093 = vmatprep.subr.mxu0 0.0
    %3094 = vmatpush1.msra.mxu0 0.0
    %3095 = vmatprep.subr.mxu0 0.0
    %3096 = vmatpush1.msra.mxu0 0.0
    %3097 = vmatprep.subr.mxu0 0.0
    %3098 = vmatpush1.msra.mxu0 0.0
    %3099 = vmatprep.subr.mxu0 0.0
    %3100 = vmatpush1.msra.mxu0 0.0
    %3101 = vmatprep.subr.mxu0 0.0
    %3102 = vmatpush1.msra.mxu0 0.0
    %3103 = vmatprep.subr.mxu0 0.0
    %3104 = vmatpush1.msra.mxu0 0.0
    %3105 = vmatprep.subr.mxu0 0.0
    %3106 = vmatpush1.msra.mxu0 0.0
    %3107 = vmatprep.subr.mxu0 0.0
    %3108 = vmatpush1.msra.mxu0 0.0
    %3109 = vmatprep.mubr.f32.mxu0 0.0
    %3110 = vmatmul.mubr.f32.gmra.mrb[0].mxu0 %v1089
    %v3111 = vpop.f32.mrb[0].mxu0
    %v3112 = vadd.f32 %v3035, %v3111
    %v3113 = vpop.f32.mrb[0].mxu0
    %v3114 = vadd.f32 %v3037, %v3113
    %3115 = vmatprep.mubr.f32.mxu0 0.0
    %3116 = vmatmul.mubr.f32.gmra.mrb[0].mxu0 %v1092
    %v3117 = vpop.f32.mrb[0].mxu0
    %v3118 = vadd.f32 %v3041, %v3117
    %v3119 = vpop.f32.mrb[0].mxu0
    %v3120 = vadd.f32 %v3043, %v3119
    %3121 = vdwg.mxu0
    %v3122 = vadd.f32 %v2806, %v2958
    %v3123 = vadd.f32 %v2807, %v2960
    %v3124 = vadd.f32 %v2808, %v3112
    %v3125 = vadd.f32 %v2809, %v3114
    %v3126 = vadd.f32 %v2810, %v2964
    %v3127 = vadd.f32 %v2811, %v2966
    %v3128 = vadd.f32 %v2812, %v3118
    %v3129 = vadd.f32 %v2813, %v3120
    %v3130 = vmax.f32 %v3122, %v3124
    %v3131 = vmax.f32 %v3123, %v3125
    %v3132 = vmax.f32 %v3126, %v3128
    %v3133 = vmax.f32 %v3127, %v3129
    %v3134 = vmax.f32 %v3130, %v3132
    %v3135 = vmax.f32 %v3131, %v3133
    %v3136 = vld [vmem:[#allocation7] sm:$0x3]
    %v3138 = vlaneseq
    %v3139 = vshrl.u32 %v3138, 7
    %v3140 = vsub.s32 0, %v3139
    %v3141 = vrot.slane %v3136, %v3140
    %v3142 = vlaneseq
    %v3143 = vshrl.u32 %v3142, 7
    %v3144 = vsub.s32 1, %v3143
    %v3145 = vrot.slane %v3136, %v3144
    %v3148 = vadd.f32 %v3134, %v3141
    %v3149 = vadd.f32 %v3135, %v3145
    %v3150 = vmax.f32 %v3148, 0.0
    %v3151 = vmax.f32 %v3149, 0.0
    %v3152 = vld [vmem:[#allocation9] sm:$0xff]
    %v3153 = vld [vmem:[#allocation9 + $0x8] sm:$0xff]
    %v3154 = vld [vmem:[#allocation9 + $0x10] sm:$0xff]
    %v3155 = vld [vmem:[#allocation9 + $0x18] sm:$0xff]
    %v3156 = vld [vmem:[#allocation9 + $0x20] sm:$0xff]
    %v3157 = vld [vmem:[#allocation9 + $0x28] sm:$0xff]
    %v3158 = vld [vmem:[#allocation9 + $0x30] sm:$0xff]
    %v3159 = vld [vmem:[#allocation9 + $0x38] sm:$0xff]
    %v3160 = vld [vmem:[#allocation9 + $0x40] sm:$0xff]
    %v3161 = vld [vmem:[#allocation9 + $0x48] sm:$0xff]
    %v3162 = vld [vmem:[#allocation9 + $0x50] sm:$0xff]
    %v3163 = vld [vmem:[#allocation9 + $0x58] sm:$0xff]
    %v3164 = vld [vmem:[#allocation9 + $0x60] sm:$0xff]
    %v3165 = vld [vmem:[#allocation9 + $0x68] sm:$0xff]
    %v3166 = vld [vmem:[#allocation9 + $0x70] sm:$0xff]
    %v3167 = vld [vmem:[#allocation9 + $0x78] sm:$0xff]
    %v3168 = vld [vmem:[#allocation9 + $0x80] sm:$0xff]
    %v3169 = vld [vmem:[#allocation9 + $0x88] sm:$0xff]
    %v3170 = vld [vmem:[#allocation9 + $0x90] sm:$0xff]
    %v3171 = vld [vmem:[#allocation9 + $0x98] sm:$0xff]
    %v3172 = vld [vmem:[#allocation9 + $0xa0] sm:$0xff]
    %v3173 = vld [vmem:[#allocation9 + $0xa8] sm:$0xff]
    %v3174 = vld [vmem:[#allocation9 + $0xb0] sm:$0xff]
    %v3175 = vld [vmem:[#allocation9 + $0xb8] sm:$0xff]
    %v3176 = vld [vmem:[#allocation9 + $0xc0] sm:$0xff]
    %v3177 = vld [vmem:[#allocation9 + $0xc8] sm:$0xff]
    %v3178 = vld [vmem:[#allocation9 + $0xd0] sm:$0xff]
    %v3179 = vld [vmem:[#allocation9 + $0xd8] sm:$0xff]
    %v3180 = vld [vmem:[#allocation9 + $0xe0] sm:$0xff]
    %v3181 = vld [vmem:[#allocation9 + $0xe8] sm:$0xff]
    %v3182 = vld [vmem:[#allocation9 + $0xf0] sm:$0xff]
    %v3183 = vld [vmem:[#allocation9 + $0xf8] sm:$0xff]
    %3184 = vmatprep.subr.mxu0 %v1305
    %3185 = vmatpush1.msra.mxu0 %v1304
    %3186 = vmatprep.subr.mxu0 %v1309
    %3187 = vmatpush1.msra.mxu0 %v1308
    %3188 = vmatprep.subr.mxu0 %v1313
    %3189 = vmatpush1.msra.mxu0 %v1312
    %3190 = vmatprep.subr.mxu0 %v1317
    %3191 = vmatpush1.msra.mxu0 %v1316
    %3192 = vmatprep.subr.mxu0 %v1321
    %3193 = vmatpush1.msra.mxu0 %v1320
    %3194 = vmatprep.subr.mxu0 %v1325
    %3195 = vmatpush1.msra.mxu0 %v1324
    %3196 = vmatprep.subr.mxu0 %v1329
    %3197 = vmatpush1.msra.mxu0 %v1328
    %3198 = vmatprep.subr.mxu0 %v1333
    %3199 = vmatpush1.msra.mxu0 %v1332
    %3200 = vmatprep.subr.mxu0 %v1337
    %3201 = vmatpush1.msra.mxu0 %v1336
    %3202 = vmatprep.subr.mxu0 %v1341
    %3203 = vmatpush1.msra.mxu0 %v1340
    %3204 = vmatprep.subr.mxu0 %v1345
    %3205 = vmatpush1.msra.mxu0 %v1344
    %3206 = vmatprep.subr.mxu0 %v1349
    %3207 = vmatpush1.msra.mxu0 %v1348
    %3208 = vmatprep.subr.mxu0 %v1353
    %3209 = vmatpush1.msra.mxu0 %v1352
    %3210 = vmatprep.subr.mxu0 %v1357
    %3211 = vmatpush1.msra.mxu0 %v1356
    %3212 = vmatprep.subr.mxu0 %v1361
    %3213 = vmatpush1.msra.mxu0 %v1360
    %3214 = vmatprep.subr.mxu0 %v1365
    %3215 = vmatpush1.msra.mxu0 %v1364
    %3216 = vmatprep.subr.mxu0 %v1369
    %3217 = vmatpush1.msra.mxu0 %v1368
    %3218 = vmatprep.subr.mxu0 %v1373
    %3219 = vmatpush1.msra.mxu0 %v1372
    %3220 = vmatprep.subr.mxu0 %v1377
    %3221 = vmatpush1.msra.mxu0 %v1376
    %3222 = vmatprep.subr.mxu0 %v1381
    %3223 = vmatpush1.msra.mxu0 %v1380
    %3224 = vmatprep.subr.mxu0 %v1385
    %3225 = vmatpush1.msra.mxu0 %v1384
    %3226 = vmatprep.subr.mxu0 %v1389
    %3227 = vmatpush1.msra.mxu0 %v1388
    %3228 = vmatprep.subr.mxu0 %v1393
    %3229 = vmatpush1.msra.mxu0 %v1392
    %3230 = vmatprep.subr.mxu0 %v1397
    %3231 = vmatpush1.msra.mxu0 %v1396
    %3232 = vmatprep.subr.mxu0 %v1401
    %3233 = vmatpush1.msra.mxu0 %v1400
    %3234 = vmatprep.subr.mxu0 %v1405
    %3235 = vmatpush1.msra.mxu0 %v1404
    %3236 = vmatprep.subr.mxu0 %v1409
    %3237 = vmatpush1.msra.mxu0 %v1408
    %3238 = vmatprep.subr.mxu0 %v1413
    %3239 = vmatpush1.msra.mxu0 %v1412
    %3240 = vmatprep.subr.mxu0 %v1417
    %3241 = vmatpush1.msra.mxu0 %v1416
    %3242 = vmatprep.subr.mxu0 %v1421
    %3243 = vmatpush1.msra.mxu0 %v1420
    %3244 = vmatprep.subr.mxu0 %v1425
    %3245 = vmatpush1.msra.mxu0 %v1424
    %3246 = vmatprep.subr.mxu0 %v1429
    %3247 = vmatpush1.msra.mxu0 %v1428
    %3248 = vmatprep.mubr.f32.mxu0 %v1088
    %3249 = vmatmul.mubr.f32.gmra.mrb[0].mxu0 %v1087
    %v3250 = vpop.f32.mrb[0].mxu0
    %v3251 = vadd.f32 0.0, %v3250
    %v3252 = vpop.f32.mrb[0].mxu0
    %v3253 = vadd.f32 0.0, %v3252
    %3254 = vmatprep.mubr.f32.mxu0 %v1091
    %3255 = vmatmul.mubr.f32.gmra.mrb[0].mxu0 %v1090
    %v3256 = vpop.f32.mrb[0].mxu0
    %v3257 = vadd.f32 0.0, %v3256
    %v3258 = vpop.f32.mrb[0].mxu0
    %v3259 = vadd.f32 0.0, %v3258
    %3260 = vdwg.mxu0
    %3261 = vmatprep.subr.mxu0 %v1433
    %3262 = vmatpush1.msra.mxu0 %v1432
    %3263 = vmatprep.subr.mxu0 %v1437
    %3264 = vmatpush1.msra.mxu0 %v1436
    %3265 = vmatprep.subr.mxu0 %v1441
    %3266 = vmatpush1.msra.mxu0 %v1440
    %3267 = vmatprep.subr.mxu0 %v1445
    %3268 = vmatpush1.msra.mxu0 %v1444
    %3269 = vmatprep.subr.mxu0 %v1449
    %3270 = vmatpush1.msra.mxu0 %v1448
    %3271 = vmatprep.subr.mxu0 %v1453
    %3272 = vmatpush1.msra.mxu0 %v1452
    %3273 = vmatprep.subr.mxu0 %v1457
    %3274 = vmatpush1.msra.mxu0 %v1456
    %3275 = vmatprep.subr.mxu0 %v1461
    %3276 = vmatpush1.msra.mxu0 %v1460
    %3277 = vmatprep.subr.mxu0 %v1465
    %3278 = vmatpush1.msra.mxu0 %v1464
    %3279 = vmatprep.subr.mxu0 %v1469
    %3280 = vmatpush1.msra.mxu0 %v1468
    %3281 = vmatprep.subr.mxu0 %v1473
    %3282 = vmatpush1.msra.mxu0 %v1472
    %3283 = vmatprep.subr.mxu0 %v1477
    %3284 = vmatpush1.msra.mxu0 %v1476
    %3285 = vmatprep.subr.mxu0 %v1481
    %3286 = vmatpush1.msra.mxu0 %v1480
    %3287 = vmatprep.subr.mxu0 %v1485
    %3288 = vmatpush1.msra.mxu0 %v1484
    %3289 = vmatprep.subr.mxu0 %v1489
    %3290 = vmatpush1.msra.mxu0 %v1488
    %3291 = vmatprep.subr.mxu0 %v1493
    %3292 = vmatpush1.msra.mxu0 %v1492
    %3293 = vmatprep.subr.mxu0 0.0
    %3294 = vmatpush1.msra.mxu0 0.0
    %3295 = vmatprep.subr.mxu0 0.0
    %3296 = vmatpush1.msra.mxu0 0.0
    %3297 = vmatprep.subr.mxu0 0.0
    %3298 = vmatpush1.msra.mxu0 0.0
    %3299 = vmatprep.subr.mxu0 0.0
    %3300 = vmatpush1.msra.mxu0 0.0
    %3301 = vmatprep.subr.mxu0 0.0
    %3302 = vmatpush1.msra.mxu0 0.0
    %3303 = vmatprep.subr.mxu0 0.0
    %3304 = vmatpush1.msra.mxu0 0.0
    %3305 = vmatprep.subr.mxu0 0.0
    %3306 = vmatpush1.msra.mxu0 0.0
    %3307 = vmatprep.subr.mxu0 0.0
    %3308 = vmatpush1.msra.mxu0 0.0
    %3309 = vmatprep.subr.mxu0 0.0
    %3310 = vmatpush1.msra.mxu0 0.0
    %3311 = vmatprep.subr.mxu0 0.0
    %3312 = vmatpush1.msra.mxu0 0.0
    %3313 = vmatprep.subr.mxu0 0.0
    %3314 = vmatpush1.msra.mxu0 0.0
    %3315 = vmatprep.subr.mxu0 0.0
    %3316 = vmatpush1.msra.mxu0 0.0
    %3317 = vmatprep.subr.mxu0 0.0
    %3318 = vmatpush1.msra.mxu0 0.0
    %3319 = vmatprep.subr.mxu0 0.0
    %3320 = vmatpush1.msra.mxu0 0.0
    %3321 = vmatprep.subr.mxu0 0.0
    %3322 = vmatpush1.msra.mxu0 0.0
    %3323 = vmatprep.subr.mxu0 0.0
    %3324 = vmatpush1.msra.mxu0 0.0
    %3325 = vmatprep.mubr.f32.mxu0 0.0
    %3326 = vmatmul.mubr.f32.gmra.mrb[0].mxu0 %v1089
    %v3327 = vpop.f32.mrb[0].mxu0
    %v3328 = vadd.f32 %v3251, %v3327
    %v3329 = vpop.f32.mrb[0].mxu0
    %v3330 = vadd.f32 %v3253, %v3329
    %3331 = vmatprep.mubr.f32.mxu0 0.0
    %3332 = vmatmul.mubr.f32.gmra.mrb[0].mxu0 %v1092
    %v3333 = vpop.f32.mrb[0].mxu0
    %v3334 = vadd.f32 %v3257, %v3333
    %v3335 = vpop.f32.mrb[0].mxu0
    %v3336 = vadd.f32 %v3259, %v3335
    %3337 = vdwg.mxu0
    %3338 = vmatprep.subr.mxu0 %v1307
    %3339 = vmatpush1.msra.mxu0 %v1306
    %3340 = vmatprep.subr.mxu0 %v1311
    %3341 = vmatpush1.msra.mxu0 %v1310
    %3342 = vmatprep.subr.mxu0 %v1315
    %3343 = vmatpush1.msra.mxu0 %v1314
    %3344 = vmatprep.subr.mxu0 %v1319
    %3345 = vmatpush1.msra.mxu0 %v1318
    %3346 = vmatprep.subr.mxu0 %v1323
    %3347 = vmatpush1.msra.mxu0 %v1322
    %3348 = vmatprep.subr.mxu0 %v1327
    %3349 = vmatpush1.msra.mxu0 %v1326
    %3350 = vmatprep.subr.mxu0 %v1331
    %3351 = vmatpush1.msra.mxu0 %v1330
    %3352 = vmatprep.subr.mxu0 %v1335
    %3353 = vmatpush1.msra.mxu0 %v1334
    %3354 = vmatprep.subr.mxu0 %v1339
    %3355 = vmatpush1.msra.mxu0 %v1338
    %3356 = vmatprep.subr.mxu0 %v1343
    %3357 = vmatpush1.msra.mxu0 %v1342
    %3358 = vmatprep.subr.mxu0 %v1347
    %3359 = vmatpush1.msra.mxu0 %v1346
    %3360 = vmatprep.subr.mxu0 %v1351
    %3361 = vmatpush1.msra.mxu0 %v1350
    %3362 = vmatprep.subr.mxu0 %v1355
    %3363 = vmatpush1.msra.mxu0 %v1354
    %3364 = vmatprep.subr.mxu0 %v1359
    %3365 = vmatpush1.msra.mxu0 %v1358
    %3366 = vmatprep.subr.mxu0 %v1363
    %3367 = vmatpush1.msra.mxu0 %v1362
    %3368 = vmatprep.subr.mxu0 %v1367
    %3369 = vmatpush1.msra.mxu0 %v1366
    %3370 = vmatprep.subr.mxu0 %v1371
    %3371 = vmatpush1.msra.mxu0 %v1370
    %3372 = vmatprep.subr.mxu0 %v1375
    %3373 = vmatpush1.msra.mxu0 %v1374
    %3374 = vmatprep.subr.mxu0 %v1379
    %3375 = vmatpush1.msra.mxu0 %v1378
    %3376 = vmatprep.subr.mxu0 %v1383
    %3377 = vmatpush1.msra.mxu0 %v1382
    %3378 = vmatprep.subr.mxu0 %v1387
    %3379 = vmatpush1.msra.mxu0 %v1386
    %3380 = vmatprep.subr.mxu0 %v1391
    %3381 = vmatpush1.msra.mxu0 %v1390
    %3382 = vmatprep.subr.mxu0 %v1395
    %3383 = vmatpush1.msra.mxu0 %v1394
    %3384 = vmatprep.subr.mxu0 %v1399
    %3385 = vmatpush1.msra.mxu0 %v1398
    %3386 = vmatprep.subr.mxu0 %v1403
    %3387 = vmatpush1.msra.mxu0 %v1402
    %3388 = vmatprep.subr.mxu0 %v1407
    %3389 = vmatpush1.msra.mxu0 %v1406
    %3390 = vmatprep.subr.mxu0 %v1411
    %3391 = vmatpush1.msra.mxu0 %v1410
    %3392 = vmatprep.subr.mxu0 %v1415
    %3393 = vmatpush1.msra.mxu0 %v1414
    %3394 = vmatprep.subr.mxu0 %v1419
    %3395 = vmatpush1.msra.mxu0 %v1418
    %3396 = vmatprep.subr.mxu0 %v1423
    %3397 = vmatpush1.msra.mxu0 %v1422
    %3398 = vmatprep.subr.mxu0 %v1427
    %3399 = vmatpush1.msra.mxu0 %v1426
    %3400 = vmatprep.subr.mxu0 %v1431
    %3401 = vmatpush1.msra.mxu0 %v1430
    %3402 = vmatprep.mubr.f32.mxu0 %v1088
    %3403 = vmatmul.mubr.f32.gmra.mrb[0].mxu0 %v1087
    %v3404 = vpop.f32.mrb[0].mxu0
    %v3405 = vadd.f32 0.0, %v3404
    %v3406 = vpop.f32.mrb[0].mxu0
    %v3407 = vadd.f32 0.0, %v3406
    %3408 = vmatprep.mubr.f32.mxu0 %v1091
    %3409 = vmatmul.mubr.f32.gmra.mrb[0].mxu0 %v1090
    %v3410 = vpop.f32.mrb[0].mxu0
    %v3411 = vadd.f32 0.0, %v3410
    %v3412 = vpop.f32.mrb[0].mxu0
    %v3413 = vadd.f32 0.0, %v3412
    %3414 = vdwg.mxu0
    %3415 = vmatprep.subr.mxu0 %v1435
    %3416 = vmatpush1.msra.mxu0 %v1434
    %3417 = vmatprep.subr.mxu0 %v1439
    %3418 = vmatpush1.msra.mxu0 %v1438
    %3419 = vmatprep.subr.mxu0 %v1443
    %3420 = vmatpush1.msra.mxu0 %v1442
    %3421 = vmatprep.subr.mxu0 %v1447
    %3422 = vmatpush1.msra.mxu0 %v1446
    %3423 = vmatprep.subr.mxu0 %v1451
    %3424 = vmatpush1.msra.mxu0 %v1450
    %3425 = vmatprep.subr.mxu0 %v1455
    %3426 = vmatpush1.msra.mxu0 %v1454
    %3427 = vmatprep.subr.mxu0 %v1459
    %3428 = vmatpush1.msra.mxu0 %v1458
    %3429 = vmatprep.subr.mxu0 %v1463
    %3430 = vmatpush1.msra.mxu0 %v1462
    %3431 = vmatprep.subr.mxu0 %v1467
    %3432 = vmatpush1.msra.mxu0 %v1466
    %3433 = vmatprep.subr.mxu0 %v1471
    %3434 = vmatpush1.msra.mxu0 %v1470
    %3435 = vmatprep.subr.mxu0 %v1475
    %3436 = vmatpush1.msra.mxu0 %v1474
    %3437 = vmatprep.subr.mxu0 %v1479
    %3438 = vmatpush1.msra.mxu0 %v1478
    %3439 = vmatprep.subr.mxu0 %v1483
    %3440 = vmatpush1.msra.mxu0 %v1482
    %3441 = vmatprep.subr.mxu0 %v1487
    %3442 = vmatpush1.msra.mxu0 %v1486
    %3443 = vmatprep.subr.mxu0 %v1491
    %3444 = vmatpush1.msra.mxu0 %v1490
    %3445 = vmatprep.subr.mxu0 %v1495
    %3446 = vmatpush1.msra.mxu0 %v1494
    %3447 = vmatprep.subr.mxu0 0.0
    %3448 = vmatpush1.msra.mxu0 0.0
    %3449 = vmatprep.subr.mxu0 0.0
    %3450 = vmatpush1.msra.mxu0 0.0
    %3451 = vmatprep.subr.mxu0 0.0
    %3452 = vmatpush1.msra.mxu0 0.0
    %3453 = vmatprep.subr.mxu0 0.0
    %3454 = vmatpush1.msra.mxu0 0.0
    %3455 = vmatprep.subr.mxu0 0.0
    %3456 = vmatpush1.msra.mxu0 0.0
    %3457 = vmatprep.subr.mxu0 0.0
    %3458 = vmatpush1.msra.mxu0 0.0
    %3459 = vmatprep.subr.mxu0 0.0
    %3460 = vmatpush1.msra.mxu0 0.0
    %3461 = vmatprep.subr.mxu0 0.0
    %3462 = vmatpush1.msra.mxu0 0.0
    %3463 = vmatprep.subr.mxu0 0.0
    %3464 = vmatpush1.msra.mxu0 0.0
    %3465 = vmatprep.subr.mxu0 0.0
    %3466 = vmatpush1.msra.mxu0 0.0
    %3467 = vmatprep.subr.mxu0 0.0
    %3468 = vmatpush1.msra.mxu0 0.0
    %3469 = vmatprep.subr.mxu0 0.0
    %3470 = vmatpush1.msra.mxu0 0.0
    %3471 = vmatprep.subr.mxu0 0.0
    %3472 = vmatpush1.msra.mxu0 0.0
    %3473 = vmatprep.subr.mxu0 0.0
    %3474 = vmatpush1.msra.mxu0 0.0
    %3475 = vmatprep.subr.mxu0 0.0
    %3476 = vmatpush1.msra.mxu0 0.0
    %3477 = vmatprep.subr.mxu0 0.0
    %3478 = vmatpush1.msra.mxu0 0.0
    %3479 = vmatprep.mubr.f32.mxu0 0.0
    %3480 = vmatmul.mubr.f32.gmra.mrb[0].mxu0 %v1089
    %v3481 = vpop.f32.mrb[0].mxu0
    %v3482 = vadd.f32 %v3405, %v3481
    %v3483 = vpop.f32.mrb[0].mxu0
    %v3484 = vadd.f32 %v3407, %v3483
    %3485 = vmatprep.mubr.f32.mxu0 0.0
    %3486 = vmatmul.mubr.f32.gmra.mrb[0].mxu0 %v1092
    %v3487 = vpop.f32.mrb[0].mxu0
    %v3488 = vadd.f32 %v3411, %v3487
    %v3489 = vpop.f32.mrb[0].mxu0
    %v3490 = vadd.f32 %v3413, %v3489
    %3491 = vdwg.mxu0
    %3492 = vmatprep.subr.mxu0 %v1112
    %3493 = vmatpush1.msra.mxu0 %v1111
    %3494 = vmatprep.subr.mxu0 %v1116
    %3495 = vmatpush1.msra.mxu0 %v1115
    %3496 = vmatprep.subr.mxu0 %v1120
    %3497 = vmatpush1.msra.mxu0 %v1119
    %3498 = vmatprep.subr.mxu0 %v1124
    %3499 = vmatpush1.msra.mxu0 %v1123
    %3500 = vmatprep.subr.mxu0 %v1128
    %3501 = vmatpush1.msra.mxu0 %v1127
    %3502 = vmatprep.subr.mxu0 %v1132
    %3503 = vmatpush1.msra.mxu0 %v1131
    %3504 = vmatprep.subr.mxu0 %v1136
    %3505 = vmatpush1.msra.mxu0 %v1135
    %3506 = vmatprep.subr.mxu0 %v1140
    %3507 = vmatpush1.msra.mxu0 %v1139
    %3508 = vmatprep.subr.mxu0 %v1144
    %3509 = vmatpush1.msra.mxu0 %v1143
    %3510 = vmatprep.subr.mxu0 %v1148
    %3511 = vmatpush1.msra.mxu0 %v1147
    %3512 = vmatprep.subr.mxu0 %v1152
    %3513 = vmatpush1.msra.mxu0 %v1151
    %3514 = vmatprep.subr.mxu0 %v1156
    %3515 = vmatpush1.msra.mxu0 %v1155
    %3516 = vmatprep.subr.mxu0 %v1160
    %3517 = vmatpush1.msra.mxu0 %v1159
    %3518 = vmatprep.subr.mxu0 %v1164
    %3519 = vmatpush1.msra.mxu0 %v1163
    %3520 = vmatprep.subr.mxu0 %v1168
    %3521 = vmatpush1.msra.mxu0 %v1167
    %3522 = vmatprep.subr.mxu0 %v1172
    %3523 = vmatpush1.msra.mxu0 %v1171
    %3524 = vmatprep.subr.mxu0 %v1176
    %3525 = vmatpush1.msra.mxu0 %v1175
    %3526 = vmatprep.subr.mxu0 %v1180
    %3527 = vmatpush1.msra.mxu0 %v1179
    %3528 = vmatprep.subr.mxu0 %v1184
    %3529 = vmatpush1.msra.mxu0 %v1183
    %3530 = vmatprep.subr.mxu0 %v1188
    %3531 = vmatpush1.msra.mxu0 %v1187
    %3532 = vmatprep.subr.mxu0 %v1192
    %3533 = vmatpush1.msra.mxu0 %v1191
    %3534 = vmatprep.subr.mxu0 %v1196
    %3535 = vmatpush1.msra.mxu0 %v1195
    %3536 = vmatprep.subr.mxu0 %v1200
    %3537 = vmatpush1.msra.mxu0 %v1199
    %3538 = vmatprep.subr.mxu0 %v1204
    %3539 = vmatpush1.msra.mxu0 %v1203
    %3540 = vmatprep.subr.mxu0 %v1208
    %3541 = vmatpush1.msra.mxu0 %v1207
    %3542 = vmatprep.subr.mxu0 %v1212
    %3543 = vmatpush1.msra.mxu0 %v1211
    %3544 = vmatprep.subr.mxu0 %v1216
    %3545 = vmatpush1.msra.mxu0 %v1215
    %3546 = vmatprep.subr.mxu0 %v1220
    %3547 = vmatpush1.msra.mxu0 %v1219
    %3548 = vmatprep.subr.mxu0 %v1224
    %3549 = vmatpush1.msra.mxu0 %v1223
    %3550 = vmatprep.subr.mxu0 %v1228
    %3551 = vmatpush1.msra.mxu0 %v1227
    %3552 = vmatprep.subr.mxu0 %v1232
    %3553 = vmatpush1.msra.mxu0 %v1231
    %3554 = vmatprep.subr.mxu0 %v1236
    %3555 = vmatpush1.msra.mxu0 %v1235
    %3556 = vmatprep.mubr.f32.mxu0 %v1085
    %3557 = vmatmul.mubr.f32.gmra.mrb[0].mxu0 %v1084
    %v3558 = vpop.f32.mrb[0].mxu0
    %v3559 = vadd.f32 %v3328, %v3558
    %v3560 = vpop.f32.mrb[0].mxu0
    %v3561 = vadd.f32 %v3330, %v3560
    %3562 = vmatprep.mubr.f32.mxu0 %v1088
    %3563 = vmatmul.mubr.f32.gmra.mrb[0].mxu0 %v1087
    %v3564 = vpop.f32.mrb[0].mxu0
    %v3565 = vadd.f32 %v3334, %v3564
    %v3566 = vpop.f32.mrb[0].mxu0
    %v3567 = vadd.f32 %v3336, %v3566
    %3568 = vdwg.mxu0
    %3569 = vmatprep.subr.mxu0 %v1240
    %3570 = vmatpush1.msra.mxu0 %v1239
    %3571 = vmatprep.subr.mxu0 %v1244
    %3572 = vmatpush1.msra.mxu0 %v1243
    %3573 = vmatprep.subr.mxu0 %v1248
    %3574 = vmatpush1.msra.mxu0 %v1247
    %3575 = vmatprep.subr.mxu0 %v1252
    %3576 = vmatpush1.msra.mxu0 %v1251
    %3577 = vmatprep.subr.mxu0 %v1256
    %3578 = vmatpush1.msra.mxu0 %v1255
    %3579 = vmatprep.subr.mxu0 %v1260
    %3580 = vmatpush1.msra.mxu0 %v1259
    %3581 = vmatprep.subr.mxu0 %v1264
    %3582 = vmatpush1.msra.mxu0 %v1263
    %3583 = vmatprep.subr.mxu0 %v1268
    %3584 = vmatpush1.msra.mxu0 %v1267
    %3585 = vmatprep.subr.mxu0 %v1272
    %3586 = vmatpush1.msra.mxu0 %v1271
    %3587 = vmatprep.subr.mxu0 %v1276
    %3588 = vmatpush1.msra.mxu0 %v1275
    %3589 = vmatprep.subr.mxu0 %v1280
    %3590 = vmatpush1.msra.mxu0 %v1279
    %3591 = vmatprep.subr.mxu0 %v1284
    %3592 = vmatpush1.msra.mxu0 %v1283
    %3593 = vmatprep.subr.mxu0 %v1288
    %3594 = vmatpush1.msra.mxu0 %v1287
    %3595 = vmatprep.subr.mxu0 %v1292
    %3596 = vmatpush1.msra.mxu0 %v1291
    %3597 = vmatprep.subr.mxu0 %v1296
    %3598 = vmatpush1.msra.mxu0 %v1295
    %3599 = vmatprep.subr.mxu0 %v1300
    %3600 = vmatpush1.msra.mxu0 %v1299
    %3601 = vmatprep.subr.mxu0 0.0
    %3602 = vmatpush1.msra.mxu0 0.0
    %3603 = vmatprep.subr.mxu0 0.0
    %3604 = vmatpush1.msra.mxu0 0.0
    %3605 = vmatprep.subr.mxu0 0.0
    %3606 = vmatpush1.msra.mxu0 0.0
    %3607 = vmatprep.subr.mxu0 0.0
    %3608 = vmatpush1.msra.mxu0 0.0
    %3609 = vmatprep.subr.mxu0 0.0
    %3610 = vmatpush1.msra.mxu0 0.0
    %3611 = vmatprep.subr.mxu0 0.0
    %3612 = vmatpush1.msra.mxu0 0.0
    %3613 = vmatprep.subr.mxu0 0.0
    %3614 = vmatpush1.msra.mxu0 0.0
    %3615 = vmatprep.subr.mxu0 0.0
    %3616 = vmatpush1.msra.mxu0 0.0
    %3617 = vmatprep.subr.mxu0 0.0
    %3618 = vmatpush1.msra.mxu0 0.0
    %3619 = vmatprep.subr.mxu0 0.0
    %3620 = vmatpush1.msra.mxu0 0.0
    %3621 = vmatprep.subr.mxu0 0.0
    %3622 = vmatpush1.msra.mxu0 0.0
    %3623 = vmatprep.subr.mxu0 0.0
    %3624 = vmatpush1.msra.mxu0 0.0
    %3625 = vmatprep.subr.mxu0 0.0
    %3626 = vmatpush1.msra.mxu0 0.0
    %3627 = vmatprep.subr.mxu0 0.0
    %3628 = vmatpush1.msra.mxu0 0.0
    %3629 = vmatprep.subr.mxu0 0.0
    %3630 = vmatpush1.msra.mxu0 0.0
    %3631 = vmatprep.subr.mxu0 0.0
    %3632 = vmatpush1.msra.mxu0 0.0
    %3633 = vmatprep.mubr.f32.mxu0 0.0
    %3634 = vmatmul.mubr.f32.gmra.mrb[0].mxu0 %v1086
    %v3635 = vpop.f32.mrb[0].mxu0
    %v3636 = vadd.f32 %v3559, %v3635
    %v3637 = vpop.f32.mrb[0].mxu0
    %v3638 = vadd.f32 %v3561, %v3637
    %3639 = vmatprep.mubr.f32.mxu0 0.0
    %3640 = vmatmul.mubr.f32.gmra.mrb[0].mxu0 %v1089
    %v3641 = vpop.f32.mrb[0].mxu0
    %v3642 = vadd.f32 %v3565, %v3641
    %v3643 = vpop.f32.mrb[0].mxu0
    %v3644 = vadd.f32 %v3567, %v3643
    %3645 = vdwg.mxu0
    %3646 = vmatprep.subr.mxu0 %v1114
    %3647 = vmatpush1.msra.mxu0 %v1113
    %3648 = vmatprep.subr.mxu0 %v1118
    %3649 = vmatpush1.msra.mxu0 %v1117
    %3650 = vmatprep.subr.mxu0 %v1122
    %3651 = vmatpush1.msra.mxu0 %v1121
    %3652 = vmatprep.subr.mxu0 %v1126
    %3653 = vmatpush1.msra.mxu0 %v1125
    %3654 = vmatprep.subr.mxu0 %v1130
    %3655 = vmatpush1.msra.mxu0 %v1129
    %3656 = vmatprep.subr.mxu0 %v1134
    %3657 = vmatpush1.msra.mxu0 %v1133
    %3658 = vmatprep.subr.mxu0 %v1138
    %3659 = vmatpush1.msra.mxu0 %v1137
    %3660 = vmatprep.subr.mxu0 %v1142
    %3661 = vmatpush1.msra.mxu0 %v1141
    %3662 = vmatprep.subr.mxu0 %v1146
    %3663 = vmatpush1.msra.mxu0 %v1145
    %3664 = vmatprep.subr.mxu0 %v1150
    %3665 = vmatpush1.msra.mxu0 %v1149
    %3666 = vmatprep.subr.mxu0 %v1154
    %3667 = vmatpush1.msra.mxu0 %v1153
    %3668 = vmatprep.subr.mxu0 %v1158
    %3669 = vmatpush1.msra.mxu0 %v1157
    %3670 = vmatprep.subr.mxu0 %v1162
    %3671 = vmatpush1.msra.mxu0 %v1161
    %3672 = vmatprep.subr.mxu0 %v1166
    %3673 = vmatpush1.msra.mxu0 %v1165
    %3674 = vmatprep.subr.mxu0 %v1170
    %3675 = vmatpush1.msra.mxu0 %v1169
    %3676 = vmatprep.subr.mxu0 %v1174
    %3677 = vmatpush1.msra.mxu0 %v1173
    %3678 = vmatprep.subr.mxu0 %v1178
    %3679 = vmatpush1.msra.mxu0 %v1177
    %3680 = vmatprep.subr.mxu0 %v1182
    %3681 = vmatpush1.msra.mxu0 %v1181
    %3682 = vmatprep.subr.mxu0 %v1186
    %3683 = vmatpush1.msra.mxu0 %v1185
    %3684 = vmatprep.subr.mxu0 %v1190
    %3685 = vmatpush1.msra.mxu0 %v1189
    %3686 = vmatprep.subr.mxu0 %v1194
    %3687 = vmatpush1.msra.mxu0 %v1193
    %3688 = vmatprep.subr.mxu0 %v1198
    %3689 = vmatpush1.msra.mxu0 %v1197
    %3690 = vmatprep.subr.mxu0 %v1202
    %3691 = vmatpush1.msra.mxu0 %v1201
    %3692 = vmatprep.subr.mxu0 %v1206
    %3693 = vmatpush1.msra.mxu0 %v1205
    %3694 = vmatprep.subr.mxu0 %v1210
    %3695 = vmatpush1.msra.mxu0 %v1209
    %3696 = vmatprep.subr.mxu0 %v1214
    %3697 = vmatpush1.msra.mxu0 %v1213
    %3698 = vmatprep.subr.mxu0 %v1218
    %3699 = vmatpush1.msra.mxu0 %v1217
    %3700 = vmatprep.subr.mxu0 %v1222
    %3701 = vmatpush1.msra.mxu0 %v1221
    %3702 = vmatprep.subr.mxu0 %v1226
    %3703 = vmatpush1.msra.mxu0 %v1225
    %3704 = vmatprep.subr.mxu0 %v1230
    %3705 = vmatpush1.msra.mxu0 %v1229
    %3706 = vmatprep.subr.mxu0 %v1234
    %3707 = vmatpush1.msra.mxu0 %v1233
    %3708 = vmatprep.subr.mxu0 %v1238
    %3709 = vmatpush1.msra.mxu0 %v1237
    %3710 = vmatprep.mubr.f32.mxu0 %v1085
    %3711 = vmatmul.mubr.f32.gmra.mrb[0].mxu0 %v1084
    %v3712 = vpop.f32.mrb[0].mxu0
    %v3713 = vadd.f32 %v3482, %v3712
    %v3714 = vpop.f32.mrb[0].mxu0
    %v3715 = vadd.f32 %v3484, %v3714
    %3716 = vmatprep.mubr.f32.mxu0 %v1088
    %3717 = vmatmul.mubr.f32.gmra.mrb[0].mxu0 %v1087
    %v3718 = vpop.f32.mrb[0].mxu0
    %v3719 = vadd.f32 %v3488, %v3718
    %v3720 = vpop.f32.mrb[0].mxu0
    %v3721 = vadd.f32 %v3490, %v3720
    %3722 = vdwg.mxu0
    %3723 = vmatprep.subr.mxu0 %v1242
    %3724 = vmatpush1.msra.mxu0 %v1241
    %3725 = vmatprep.subr.mxu0 %v1246
    %3726 = vmatpush1.msra.mxu0 %v1245
    %3727 = vmatprep.subr.mxu0 %v1250
    %3728 = vmatpush1.msra.mxu0 %v1249
    %3729 = vmatprep.subr.mxu0 %v1254
    %3730 = vmatpush1.msra.mxu0 %v1253
    %3731 = vmatprep.subr.mxu0 %v1258
    %3732 = vmatpush1.msra.mxu0 %v1257
    %3733 = vmatprep.subr.mxu0 %v1262
    %3734 = vmatpush1.msra.mxu0 %v1261
    %3735 = vmatprep.subr.mxu0 %v1266
    %3736 = vmatpush1.msra.mxu0 %v1265
    %3737 = vmatprep.subr.mxu0 %v1270
    %3738 = vmatpush1.msra.mxu0 %v1269
    %3739 = vmatprep.subr.mxu0 %v1274
    %3740 = vmatpush1.msra.mxu0 %v1273
    %3741 = vmatprep.subr.mxu0 %v1278
    %3742 = vmatpush1.msra.mxu0 %v1277
    %3743 = vmatprep.subr.mxu0 %v1282
    %3744 = vmatpush1.msra.mxu0 %v1281
    %3745 = vmatprep.subr.mxu0 %v1286
    %3746 = vmatpush1.msra.mxu0 %v1285
    %3747 = vmatprep.subr.mxu0 %v1290
    %3748 = vmatpush1.msra.mxu0 %v1289
    %3749 = vmatprep.subr.mxu0 %v1294
    %3750 = vmatpush1.msra.mxu0 %v1293
    %3751 = vmatprep.subr.mxu0 %v1298
    %3752 = vmatpush1.msra.mxu0 %v1297
    %3753 = vmatprep.subr.mxu0 %v1302
    %3754 = vmatpush1.msra.mxu0 %v1301
    %3755 = vmatprep.subr.mxu0 0.0
    %3756 = vmatpush1.msra.mxu0 0.0
    %3757 = vmatprep.subr.mxu0 0.0
    %3758 = vmatpush1.msra.mxu0 0.0
    %3759 = vmatprep.subr.mxu0 0.0
    %3760 = vmatpush1.msra.mxu0 0.0
    %3761 = vmatprep.subr.mxu0 0.0
    %3762 = vmatpush1.msra.mxu0 0.0
    %3763 = vmatprep.subr.mxu0 0.0
    %3764 = vmatpush1.msra.mxu0 0.0
    %3765 = vmatprep.subr.mxu0 0.0
    %3766 = vmatpush1.msra.mxu0 0.0
    %3767 = vmatprep.subr.mxu0 0.0
    %3768 = vmatpush1.msra.mxu0 0.0
    %3769 = vmatprep.subr.mxu0 0.0
    %3770 = vmatpush1.msra.mxu0 0.0
    %3771 = vmatprep.subr.mxu0 0.0
    %3772 = vmatpush1.msra.mxu0 0.0
    %3773 = vmatprep.subr.mxu0 0.0
    %3774 = vmatpush1.msra.mxu0 0.0
    %3775 = vmatprep.subr.mxu0 0.0
    %3776 = vmatpush1.msra.mxu0 0.0
    %3777 = vmatprep.subr.mxu0 0.0
    %3778 = vmatpush1.msra.mxu0 0.0
    %3779 = vmatprep.subr.mxu0 0.0
    %3780 = vmatpush1.msra.mxu0 0.0
    %3781 = vmatprep.subr.mxu0 0.0
    %3782 = vmatpush1.msra.mxu0 0.0
    %3783 = vmatprep.subr.mxu0 0.0
    %3784 = vmatpush1.msra.mxu0 0.0
    %3785 = vmatprep.subr.mxu0 0.0
    %3786 = vmatpush1.msra.mxu0 0.0
    %3787 = vmatprep.mubr.f32.mxu0 0.0
    %3788 = vmatmul.mubr.f32.gmra.mrb[0].mxu0 %v1086
    %v3789 = vpop.f32.mrb[0].mxu0
    %v3790 = vadd.f32 %v3713, %v3789
    %v3791 = vpop.f32.mrb[0].mxu0
    %v3792 = vadd.f32 %v3715, %v3791
    %3793 = vmatprep.mubr.f32.mxu0 0.0
    %3794 = vmatmul.mubr.f32.gmra.mrb[0].mxu0 %v1089
    %v3795 = vpop.f32.mrb[0].mxu0
    %v3796 = vadd.f32 %v3719, %v3795
    %v3797 = vpop.f32.mrb[0].mxu0
    %v3798 = vadd.f32 %v3721, %v3797
    %3799 = vdwg.mxu0
    %3800 = vmatprep.subr.mxu0 %v1498
    %3801 = vmatpush1.msra.mxu0 %v1497
    %3802 = vmatprep.subr.mxu0 %v1502
    %3803 = vmatpush1.msra.mxu0 %v1501
    %3804 = vmatprep.subr.mxu0 %v1506
    %3805 = vmatpush1.msra.mxu0 %v1505
    %3806 = vmatprep.subr.mxu0 %v1510
    %3807 = vmatpush1.msra.mxu0 %v1509
    %3808 = vmatprep.subr.mxu0 %v1514
    %3809 = vmatpush1.msra.mxu0 %v1513
    %3810 = vmatprep.subr.mxu0 %v1518
    %3811 = vmatpush1.msra.mxu0 %v1517
    %3812 = vmatprep.subr.mxu0 %v1522
    %3813 = vmatpush1.msra.mxu0 %v1521
    %3814 = vmatprep.subr.mxu0 %v1526
    %3815 = vmatpush1.msra.mxu0 %v1525
    %3816 = vmatprep.subr.mxu0 %v1530
    %3817 = vmatpush1.msra.mxu0 %v1529
    %3818 = vmatprep.subr.mxu0 %v1534
    %3819 = vmatpush1.msra.mxu0 %v1533
    %3820 = vmatprep.subr.mxu0 %v1538
    %3821 = vmatpush1.msra.mxu0 %v1537
    %3822 = vmatprep.subr.mxu0 %v1542
    %3823 = vmatpush1.msra.mxu0 %v1541
    %3824 = vmatprep.subr.mxu0 %v1546
    %3825 = vmatpush1.msra.mxu0 %v1545
    %3826 = vmatprep.subr.mxu0 %v1550
    %3827 = vmatpush1.msra.mxu0 %v1549
    %3828 = vmatprep.subr.mxu0 %v1554
    %3829 = vmatpush1.msra.mxu0 %v1553
    %3830 = vmatprep.subr.mxu0 %v1558
    %3831 = vmatpush1.msra.mxu0 %v1557
    %3832 = vmatprep.subr.mxu0 %v1562
    %3833 = vmatpush1.msra.mxu0 %v1561
    %3834 = vmatprep.subr.mxu0 %v1566
    %3835 = vmatpush1.msra.mxu0 %v1565
    %3836 = vmatprep.subr.mxu0 %v1570
    %3837 = vmatpush1.msra.mxu0 %v1569
    %3838 = vmatprep.subr.mxu0 %v1574
    %3839 = vmatpush1.msra.mxu0 %v1573
    %3840 = vmatprep.subr.mxu0 %v1578
    %3841 = vmatpush1.msra.mxu0 %v1577
    %3842 = vmatprep.subr.mxu0 %v1582
    %3843 = vmatpush1.msra.mxu0 %v1581
    %3844 = vmatprep.subr.mxu0 %v1586
    %3845 = vmatpush1.msra.mxu0 %v1585
    %3846 = vmatprep.subr.mxu0 %v1590
    %3847 = vmatpush1.msra.mxu0 %v1589
    %3848 = vmatprep.subr.mxu0 %v1594
    %3849 = vmatpush1.msra.mxu0 %v1593
    %3850 = vmatprep.subr.mxu0 %v1598
    %3851 = vmatpush1.msra.mxu0 %v1597
    %3852 = vmatprep.subr.mxu0 %v1602
    %3853 = vmatpush1.msra.mxu0 %v1601
    %3854 = vmatprep.subr.mxu0 %v1606
    %3855 = vmatpush1.msra.mxu0 %v1605
    %3856 = vmatprep.subr.mxu0 %v1610
    %3857 = vmatpush1.msra.mxu0 %v1609
    %3858 = vmatprep.subr.mxu0 %v1614
    %3859 = vmatpush1.msra.mxu0 %v1613
    %3860 = vmatprep.subr.mxu0 %v1618
    %3861 = vmatpush1.msra.mxu0 %v1617
    %3862 = vmatprep.subr.mxu0 %v1622
    %3863 = vmatpush1.msra.mxu0 %v1621
    %3864 = vmatprep.mubr.f32.mxu0 %v1091
    %3865 = vmatmul.mubr.f32.gmra.mrb[0].mxu0 %v1090
    %v3866 = vpop.f32.mrb[0].mxu0
    %v3867 = vadd.f32 0.0, %v3866
    %v3868 = vpop.f32.mrb[0].mxu0
    %v3869 = vadd.f32 0.0, %v3868
    %3870 = vmatprep.mubr.f32.mxu0 %v1094
    %3871 = vmatmul.mubr.f32.gmra.mrb[0].mxu0 %v1093
    %v3872 = vpop.f32.mrb[0].mxu0
    %v3873 = vadd.f32 0.0, %v3872
    %v3874 = vpop.f32.mrb[0].mxu0
    %v3875 = vadd.f32 0.0, %v3874
    %3876 = vdwg.mxu0
    %3877 = vmatprep.subr.mxu0 %v1626
    %3878 = vmatpush1.msra.mxu0 %v1625
    %3879 = vmatprep.subr.mxu0 %v1630
    %3880 = vmatpush1.msra.mxu0 %v1629
    %3881 = vmatprep.subr.mxu0 %v1634
    %3882 = vmatpush1.msra.mxu0 %v1633
    %3883 = vmatprep.subr.mxu0 %v1638
    %3884 = vmatpush1.msra.mxu0 %v1637
    %3885 = vmatprep.subr.mxu0 %v1642
    %3886 = vmatpush1.msra.mxu0 %v1641
    %3887 = vmatprep.subr.mxu0 %v1646
    %3888 = vmatpush1.msra.mxu0 %v1645
    %3889 = vmatprep.subr.mxu0 %v1650
    %3890 = vmatpush1.msra.mxu0 %v1649
    %3891 = vmatprep.subr.mxu0 %v1654
    %3892 = vmatpush1.msra.mxu0 %v1653
    %3893 = vmatprep.subr.mxu0 %v1658
    %3894 = vmatpush1.msra.mxu0 %v1657
    %3895 = vmatprep.subr.mxu0 %v1662
    %3896 = vmatpush1.msra.mxu0 %v1661
    %3897 = vmatprep.subr.mxu0 %v1666
    %3898 = vmatpush1.msra.mxu0 %v1665
    %3899 = vmatprep.subr.mxu0 %v1670
    %3900 = vmatpush1.msra.mxu0 %v1669
    %3901 = vmatprep.subr.mxu0 %v1674
    %3902 = vmatpush1.msra.mxu0 %v1673
    %3903 = vmatprep.subr.mxu0 %v1678
    %3904 = vmatpush1.msra.mxu0 %v1677
    %3905 = vmatprep.subr.mxu0 %v1682
    %3906 = vmatpush1.msra.mxu0 %v1681
    %3907 = vmatprep.subr.mxu0 %v1686
    %3908 = vmatpush1.msra.mxu0 %v1685
    %3909 = vmatprep.subr.mxu0 0.0
    %3910 = vmatpush1.msra.mxu0 0.0
    %3911 = vmatprep.subr.mxu0 0.0
    %3912 = vmatpush1.msra.mxu0 0.0
    %3913 = vmatprep.subr.mxu0 0.0
    %3914 = vmatpush1.msra.mxu0 0.0
    %3915 = vmatprep.subr.mxu0 0.0
    %3916 = vmatpush1.msra.mxu0 0.0
    %3917 = vmatprep.subr.mxu0 0.0
    %3918 = vmatpush1.msra.mxu0 0.0
    %3919 = vmatprep.subr.mxu0 0.0
    %3920 = vmatpush1.msra.mxu0 0.0
    %3921 = vmatprep.subr.mxu0 0.0
    %3922 = vmatpush1.msra.mxu0 0.0
    %3923 = vmatprep.subr.mxu0 0.0
    %3924 = vmatpush1.msra.mxu0 0.0
    %3925 = vmatprep.subr.mxu0 0.0
    %3926 = vmatpush1.msra.mxu0 0.0
    %3927 = vmatprep.subr.mxu0 0.0
    %3928 = vmatpush1.msra.mxu0 0.0
    %3929 = vmatprep.subr.mxu0 0.0
    %3930 = vmatpush1.msra.mxu0 0.0
    %3931 = vmatprep.subr.mxu0 0.0
    %3932 = vmatpush1.msra.mxu0 0.0
    %3933 = vmatprep.subr.mxu0 0.0
    %3934 = vmatpush1.msra.mxu0 0.0
    %3935 = vmatprep.subr.mxu0 0.0
    %3936 = vmatpush1.msra.mxu0 0.0
    %3937 = vmatprep.subr.mxu0 0.0
    %3938 = vmatpush1.msra.mxu0 0.0
    %3939 = vmatprep.subr.mxu0 0.0
    %3940 = vmatpush1.msra.mxu0 0.0
    %3941 = vmatprep.mubr.f32.mxu0 0.0
    %3942 = vmatmul.mubr.f32.gmra.mrb[0].mxu0 %v1092
    %v3943 = vpop.f32.mrb[0].mxu0
    %v3944 = vadd.f32 %v3867, %v3943
    %v3945 = vpop.f32.mrb[0].mxu0
    %v3946 = vadd.f32 %v3869, %v3945
    %3947 = vmatprep.mubr.f32.mxu0 0.0
    %3948 = vmatmul.mubr.f32.gmra.mrb[0].mxu0 %v1095
    %v3949 = vpop.f32.mrb[0].mxu0
    %v3950 = vadd.f32 %v3873, %v3949
    %v3951 = vpop.f32.mrb[0].mxu0
    %v3952 = vadd.f32 %v3875, %v3951
    %3953 = vdwg.mxu0
    %3954 = vmatprep.subr.mxu0 %v1500
    %3955 = vmatpush1.msra.mxu0 %v1499
    %3956 = vmatprep.subr.mxu0 %v1504
    %3957 = vmatpush1.msra.mxu0 %v1503
    %3958 = vmatprep.subr.mxu0 %v1508
    %3959 = vmatpush1.msra.mxu0 %v1507
    %3960 = vmatprep.subr.mxu0 %v1512
    %3961 = vmatpush1.msra.mxu0 %v1511
    %3962 = vmatprep.subr.mxu0 %v1516
    %3963 = vmatpush1.msra.mxu0 %v1515
    %3964 = vmatprep.subr.mxu0 %v1520
    %3965 = vmatpush1.msra.mxu0 %v1519
    %3966 = vmatprep.subr.mxu0 %v1524
    %3967 = vmatpush1.msra.mxu0 %v1523
    %3968 = vmatprep.subr.mxu0 %v1528
    %3969 = vmatpush1.msra.mxu0 %v1527
    %3970 = vmatprep.subr.mxu0 %v1532
    %3971 = vmatpush1.msra.mxu0 %v1531
    %3972 = vmatprep.subr.mxu0 %v1536
    %3973 = vmatpush1.msra.mxu0 %v1535
    %3974 = vmatprep.subr.mxu0 %v1540
    %3975 = vmatpush1.msra.mxu0 %v1539
    %3976 = vmatprep.subr.mxu0 %v1544
    %3977 = vmatpush1.msra.mxu0 %v1543
    %3978 = vmatprep.subr.mxu0 %v1548
    %3979 = vmatpush1.msra.mxu0 %v1547
    %3980 = vmatprep.subr.mxu0 %v1552
    %3981 = vmatpush1.msra.mxu0 %v1551
    %3982 = vmatprep.subr.mxu0 %v1556
    %3983 = vmatpush1.msra.mxu0 %v1555
    %3984 = vmatprep.subr.mxu0 %v1560
    %3985 = vmatpush1.msra.mxu0 %v1559
    %3986 = vmatprep.subr.mxu0 %v1564
    %3987 = vmatpush1.msra.mxu0 %v1563
    %3988 = vmatprep.subr.mxu0 %v1568
    %3989 = vmatpush1.msra.mxu0 %v1567
    %3990 = vmatprep.subr.mxu0 %v1572
    %3991 = vmatpush1.msra.mxu0 %v1571
    %3992 = vmatprep.subr.mxu0 %v1576
    %3993 = vmatpush1.msra.mxu0 %v1575
    %3994 = vmatprep.subr.mxu0 %v1580
    %3995 = vmatpush1.msra.mxu0 %v1579
    %3996 = vmatprep.subr.mxu0 %v1584
    %3997 = vmatpush1.msra.mxu0 %v1583
    %3998 = vmatprep.subr.mxu0 %v1588
    %3999 = vmatpush1.msra.mxu0 %v1587
    %4000 = vmatprep.subr.mxu0 %v1592
    %4001 = vmatpush1.msra.mxu0 %v1591
    %4002 = vmatprep.subr.mxu0 %v1596
    %4003 = vmatpush1.msra.mxu0 %v1595
    %4004 = vmatprep.subr.mxu0 %v1600
    %4005 = vmatpush1.msra.mxu0 %v1599
    %4006 = vmatprep.subr.mxu0 %v1604
    %4007 = vmatpush1.msra.mxu0 %v1603
    %4008 = vmatprep.subr.mxu0 %v1608
    %4009 = vmatpush1.msra.mxu0 %v1607
    %4010 = vmatprep.subr.mxu0 %v1612
    %4011 = vmatpush1.msra.mxu0 %v1611
    %4012 = vmatprep.subr.mxu0 %v1616
    %4013 = vmatpush1.msra.mxu0 %v1615
    %4014 = vmatprep.subr.mxu0 %v1620
    %4015 = vmatpush1.msra.mxu0 %v1619
    %4016 = vmatprep.subr.mxu0 %v1624
    %4017 = vmatpush1.msra.mxu0 %v1623
    %4018 = vmatprep.mubr.f32.mxu0 %v1091
    %4019 = vmatmul.mubr.f32.gmra.mrb[0].mxu0 %v1090
    %v4020 = vpop.f32.mrb[0].mxu0
    %v4021 = vadd.f32 0.0, %v4020
    %v4022 = vpop.f32.mrb[0].mxu0
    %v4023 = vadd.f32 0.0, %v4022
    %4024 = vmatprep.mubr.f32.mxu0 %v1094
    %4025 = vmatmul.mubr.f32.gmra.mrb[0].mxu0 %v1093
    %v4026 = vpop.f32.mrb[0].mxu0
    %v4027 = vadd.f32 0.0, %v4026
    %v4028 = vpop.f32.mrb[0].mxu0
    %v4029 = vadd.f32 0.0, %v4028
    %4030 = vdwg.mxu0
    %4031 = vmatprep.subr.mxu0 %v1628
    %4032 = vmatpush1.msra.mxu0 %v1627
    %4033 = vmatprep.subr.mxu0 %v1632
    %4034 = vmatpush1.msra.mxu0 %v1631
    %4035 = vmatprep.subr.mxu0 %v1636
    %4036 = vmatpush1.msra.mxu0 %v1635
    %4037 = vmatprep.subr.mxu0 %v1640
    %4038 = vmatpush1.msra.mxu0 %v1639
    %4039 = vmatprep.subr.mxu0 %v1644
    %4040 = vmatpush1.msra.mxu0 %v1643
    %4041 = vmatprep.subr.mxu0 %v1648
    %4042 = vmatpush1.msra.mxu0 %v1647
    %4043 = vmatprep.subr.mxu0 %v1652
    %4044 = vmatpush1.msra.mxu0 %v1651
    %4045 = vmatprep.subr.mxu0 %v1656
    %4046 = vmatpush1.msra.mxu0 %v1655
    %4047 = vmatprep.subr.mxu0 %v1660
    %4048 = vmatpush1.msra.mxu0 %v1659
    %4049 = vmatprep.subr.mxu0 %v1664
    %4050 = vmatpush1.msra.mxu0 %v1663
    %4051 = vmatprep.subr.mxu0 %v1668
    %4052 = vmatpush1.msra.mxu0 %v1667
    %4053 = vmatprep.subr.mxu0 %v1672
    %4054 = vmatpush1.msra.mxu0 %v1671
    %4055 = vmatprep.subr.mxu0 %v1676
    %4056 = vmatpush1.msra.mxu0 %v1675
    %4057 = vmatprep.subr.mxu0 %v1680
    %4058 = vmatpush1.msra.mxu0 %v1679
    %4059 = vmatprep.subr.mxu0 %v1684
    %4060 = vmatpush1.msra.mxu0 %v1683
    %4061 = vmatprep.subr.mxu0 %v1688
    %4062 = vmatpush1.msra.mxu0 %v1687
    %4063 = vmatprep.subr.mxu0 0.0
    %4064 = vmatpush1.msra.mxu0 0.0
    %4065 = vmatprep.subr.mxu0 0.0
    %4066 = vmatpush1.msra.mxu0 0.0
    %4067 = vmatprep.subr.mxu0 0.0
    %4068 = vmatpush1.msra.mxu0 0.0
    %4069 = vmatprep.subr.mxu0 0.0
    %4070 = vmatpush1.msra.mxu0 0.0
    %4071 = vmatprep.subr.mxu0 0.0
    %4072 = vmatpush1.msra.mxu0 0.0
    %4073 = vmatprep.subr.mxu0 0.0
    %4074 = vmatpush1.msra.mxu0 0.0
    %4075 = vmatprep.subr.mxu0 0.0
    %4076 = vmatpush1.msra.mxu0 0.0
    %4077 = vmatprep.subr.mxu0 0.0
    %4078 = vmatpush1.msra.mxu0 0.0
    %4079 = vmatprep.subr.mxu0 0.0
    %4080 = vmatpush1.msra.mxu0 0.0
    %4081 = vmatprep.subr.mxu0 0.0
    %4082 = vmatpush1.msra.mxu0 0.0
    %4083 = vmatprep.subr.mxu0 0.0
    %4084 = vmatpush1.msra.mxu0 0.0
    %4085 = vmatprep.subr.mxu0 0.0
    %4086 = vmatpush1.msra.mxu0 0.0
    %4087 = vmatprep.subr.mxu0 0.0
    %4088 = vmatpush1.msra.mxu0 0.0
    %4089 = vmatprep.subr.mxu0 0.0
    %4090 = vmatpush1.msra.mxu0 0.0
    %4091 = vmatprep.subr.mxu0 0.0
    %4092 = vmatpush1.msra.mxu0 0.0
    %4093 = vmatprep.subr.mxu0 0.0
    %4094 = vmatpush1.msra.mxu0 0.0
    %4095 = vmatprep.mubr.f32.mxu0 0.0
    %4096 = vmatmul.mubr.f32.gmra.mrb[0].mxu0 %v1092
    %v4097 = vpop.f32.mrb[0].mxu0
    %v4098 = vadd.f32 %v4021, %v4097
    %v4099 = vpop.f32.mrb[0].mxu0
    %v4100 = vadd.f32 %v4023, %v4099
    %4101 = vmatprep.mubr.f32.mxu0 0.0
    %4102 = vmatmul.mubr.f32.gmra.mrb[0].mxu0 %v1095
    %v4103 = vpop.f32.mrb[0].mxu0
    %v4104 = vadd.f32 %v4027, %v4103
    %v4105 = vpop.f32.mrb[0].mxu0
    %v4106 = vadd.f32 %v4029, %v4105
    %4107 = vdwg.mxu0
    %v4108 = vadd.f32 %v3636, %v3944
    %v4109 = vadd.f32 %v3638, %v3946
    %v4110 = vadd.f32 %v3790, %v4098
    %v4111 = vadd.f32 %v3792, %v4100
    %v4112 = vadd.f32 %v3642, %v3950
    %v4113 = vadd.f32 %v3644, %v3952
    %v4114 = vadd.f32 %v3796, %v4104
    %v4115 = vadd.f32 %v3798, %v4106
    %4116 = vmatprep.subr.mxu0 %v1691
    %4117 = vmatpush1.msra.mxu0 %v1690
    %4118 = vmatprep.subr.mxu0 %v1695
    %4119 = vmatpush1.msra.mxu0 %v1694
    %4120 = vmatprep.subr.mxu0 %v1699
    %4121 = vmatpush1.msra.mxu0 %v1698
    %4122 = vmatprep.subr.mxu0 %v1703
    %4123 = vmatpush1.msra.mxu0 %v1702
    %4124 = vmatprep.subr.mxu0 %v1707
    %4125 = vmatpush1.msra.mxu0 %v1706
    %4126 = vmatprep.subr.mxu0 %v1711
    %4127 = vmatpush1.msra.mxu0 %v1710
    %4128 = vmatprep.subr.mxu0 %v1715
    %4129 = vmatpush1.msra.mxu0 %v1714
    %4130 = vmatprep.subr.mxu0 %v1719
    %4131 = vmatpush1.msra.mxu0 %v1718
    %4132 = vmatprep.subr.mxu0 %v1723
    %4133 = vmatpush1.msra.mxu0 %v1722
    %4134 = vmatprep.subr.mxu0 %v1727
    %4135 = vmatpush1.msra.mxu0 %v1726
    %4136 = vmatprep.subr.mxu0 %v1731
    %4137 = vmatpush1.msra.mxu0 %v1730
    %4138 = vmatprep.subr.mxu0 %v1735
    %4139 = vmatpush1.msra.mxu0 %v1734
    %4140 = vmatprep.subr.mxu0 %v1739
    %4141 = vmatpush1.msra.mxu0 %v1738
    %4142 = vmatprep.subr.mxu0 %v1743
    %4143 = vmatpush1.msra.mxu0 %v1742
    %4144 = vmatprep.subr.mxu0 %v1747
    %4145 = vmatpush1.msra.mxu0 %v1746
    %4146 = vmatprep.subr.mxu0 %v1751
    %4147 = vmatpush1.msra.mxu0 %v1750
    %4148 = vmatprep.subr.mxu0 %v1755
    %4149 = vmatpush1.msra.mxu0 %v1754
    %4150 = vmatprep.subr.mxu0 %v1759
    %4151 = vmatpush1.msra.mxu0 %v1758
    %4152 = vmatprep.subr.mxu0 %v1763
    %4153 = vmatpush1.msra.mxu0 %v1762
    %4154 = vmatprep.subr.mxu0 %v1767
    %4155 = vmatpush1.msra.mxu0 %v1766
    %4156 = vmatprep.subr.mxu0 %v1771
    %4157 = vmatpush1.msra.mxu0 %v1770
    %4158 = vmatprep.subr.mxu0 %v1775
    %4159 = vmatpush1.msra.mxu0 %v1774
    %4160 = vmatprep.subr.mxu0 %v1779
    %4161 = vmatpush1.msra.mxu0 %v1778
    %4162 = vmatprep.subr.mxu0 %v1783
    %4163 = vmatpush1.msra.mxu0 %v1782
    %4164 = vmatprep.subr.mxu0 %v1787
    %4165 = vmatpush1.msra.mxu0 %v1786
    %4166 = vmatprep.subr.mxu0 %v1791
    %4167 = vmatpush1.msra.mxu0 %v1790
    %4168 = vmatprep.subr.mxu0 %v1795
    %4169 = vmatpush1.msra.mxu0 %v1794
    %4170 = vmatprep.subr.mxu0 %v1799
    %4171 = vmatpush1.msra.mxu0 %v1798
    %4172 = vmatprep.subr.mxu0 %v1803
    %4173 = vmatpush1.msra.mxu0 %v1802
    %4174 = vmatprep.subr.mxu0 %v1807
    %4175 = vmatpush1.msra.mxu0 %v1806
    %4176 = vmatprep.subr.mxu0 %v1811
    %4177 = vmatpush1.msra.mxu0 %v1810
    %4178 = vmatprep.subr.mxu0 %v1815
    %4179 = vmatpush1.msra.mxu0 %v1814
    %4180 = vmatprep.mubr.f32.mxu0 %v1094
    %4181 = vmatmul.mubr.f32.gmra.mrb[0].mxu0 %v1093
    %v4182 = vpop.f32.mrb[0].mxu0
    %v4183 = vadd.f32 0.0, %v4182
    %v4184 = vpop.f32.mrb[0].mxu0
    %v4185 = vadd.f32 0.0, %v4184
    %4186 = vmatprep.mubr.f32.mxu0 %v1097
    %4187 = vmatmul.mubr.f32.gmra.mrb[0].mxu0 %v1096
    %v4188 = vpop.f32.mrb[0].mxu0
    %v4189 = vadd.f32 0.0, %v4188
    %v4190 = vpop.f32.mrb[0].mxu0
    %v4191 = vadd.f32 0.0, %v4190
    %4192 = vdwg.mxu0
    %4193 = vmatprep.subr.mxu0 %v1819
    %4194 = vmatpush1.msra.mxu0 %v1818
    %4195 = vmatprep.subr.mxu0 %v1823
    %4196 = vmatpush1.msra.mxu0 %v1822
    %4197 = vmatprep.subr.mxu0 %v1827
    %4198 = vmatpush1.msra.mxu0 %v1826
    %4199 = vmatprep.subr.mxu0 %v1831
    %4200 = vmatpush1.msra.mxu0 %v1830
    %4201 = vmatprep.subr.mxu0 %v1835
    %4202 = vmatpush1.msra.mxu0 %v1834
    %4203 = vmatprep.subr.mxu0 %v1839
    %4204 = vmatpush1.msra.mxu0 %v1838
    %4205 = vmatprep.subr.mxu0 %v1843
    %4206 = vmatpush1.msra.mxu0 %v1842
    %4207 = vmatprep.subr.mxu0 %v1847
    %4208 = vmatpush1.msra.mxu0 %v1846
    %4209 = vmatprep.subr.mxu0 %v1851
    %4210 = vmatpush1.msra.mxu0 %v1850
    %4211 = vmatprep.subr.mxu0 %v1855
    %4212 = vmatpush1.msra.mxu0 %v1854
    %4213 = vmatprep.subr.mxu0 %v1859
    %4214 = vmatpush1.msra.mxu0 %v1858
    %4215 = vmatprep.subr.mxu0 %v1863
    %4216 = vmatpush1.msra.mxu0 %v1862
    %4217 = vmatprep.subr.mxu0 %v1867
    %4218 = vmatpush1.msra.mxu0 %v1866
    %4219 = vmatprep.subr.mxu0 %v1871
    %4220 = vmatpush1.msra.mxu0 %v1870
    %4221 = vmatprep.subr.mxu0 %v1875
    %4222 = vmatpush1.msra.mxu0 %v1874
    %4223 = vmatprep.subr.mxu0 %v1879
    %4224 = vmatpush1.msra.mxu0 %v1878
    %4225 = vmatprep.subr.mxu0 0.0
    %4226 = vmatpush1.msra.mxu0 0.0
    %4227 = vmatprep.subr.mxu0 0.0
    %4228 = vmatpush1.msra.mxu0 0.0
    %4229 = vmatprep.subr.mxu0 0.0
    %4230 = vmatpush1.msra.mxu0 0.0
    %4231 = vmatprep.subr.mxu0 0.0
    %4232 = vmatpush1.msra.mxu0 0.0
    %4233 = vmatprep.subr.mxu0 0.0
    %4234 = vmatpush1.msra.mxu0 0.0
    %4235 = vmatprep.subr.mxu0 0.0
    %4236 = vmatpush1.msra.mxu0 0.0
    %4237 = vmatprep.subr.mxu0 0.0
    %4238 = vmatpush1.msra.mxu0 0.0
    %4239 = vmatprep.subr.mxu0 0.0
    %4240 = vmatpush1.msra.mxu0 0.0
    %4241 = vmatprep.subr.mxu0 0.0
    %4242 = vmatpush1.msra.mxu0 0.0
    %4243 = vmatprep.subr.mxu0 0.0
    %4244 = vmatpush1.msra.mxu0 0.0
    %4245 = vmatprep.subr.mxu0 0.0
    %4246 = vmatpush1.msra.mxu0 0.0
    %4247 = vmatprep.subr.mxu0 0.0
    %4248 = vmatpush1.msra.mxu0 0.0
    %4249 = vmatprep.subr.mxu0 0.0
    %4250 = vmatpush1.msra.mxu0 0.0
    %4251 = vmatprep.subr.mxu0 0.0
    %4252 = vmatpush1.msra.mxu0 0.0
    %4253 = vmatprep.subr.mxu0 0.0
    %4254 = vmatpush1.msra.mxu0 0.0
    %4255 = vmatprep.subr.mxu0 0.0
    %4256 = vmatpush1.msra.mxu0 0.0
    %4257 = vmatprep.mubr.f32.mxu0 0.0
    %4258 = vmatmul.mubr.f32.gmra.mrb[0].mxu0 %v1095
    %v4259 = vpop.f32.mrb[0].mxu0
    %v4260 = vadd.f32 %v4183, %v4259
    %v4261 = vpop.f32.mrb[0].mxu0
    %v4262 = vadd.f32 %v4185, %v4261
    %4263 = vmatprep.mubr.f32.mxu0 0.0
    %4264 = vmatmul.mubr.f32.gmra.mrb[0].mxu0 %v1098
    %v4265 = vpop.f32.mrb[0].mxu0
    %v4266 = vadd.f32 %v4189, %v4265
    %v4267 = vpop.f32.mrb[0].mxu0
    %v4268 = vadd.f32 %v4191, %v4267
    %4269 = vdwg.mxu0
    %4270 = vmatprep.subr.mxu0 %v1693
    %4271 = vmatpush1.msra.mxu0 %v1692
    %4272 = vmatprep.subr.mxu0 %v1697
    %4273 = vmatpush1.msra.mxu0 %v1696
    %4274 = vmatprep.subr.mxu0 %v1701
    %4275 = vmatpush1.msra.mxu0 %v1700
    %4276 = vmatprep.subr.mxu0 %v1705
    %4277 = vmatpush1.msra.mxu0 %v1704
    %4278 = vmatprep.subr.mxu0 %v1709
    %4279 = vmatpush1.msra.mxu0 %v1708
    %4280 = vmatprep.subr.mxu0 %v1713
    %4281 = vmatpush1.msra.mxu0 %v1712
    %4282 = vmatprep.subr.mxu0 %v1717
    %4283 = vmatpush1.msra.mxu0 %v1716
    %4284 = vmatprep.subr.mxu0 %v1721
    %4285 = vmatpush1.msra.mxu0 %v1720
    %4286 = vmatprep.subr.mxu0 %v1725
    %4287 = vmatpush1.msra.mxu0 %v1724
    %4288 = vmatprep.subr.mxu0 %v1729
    %4289 = vmatpush1.msra.mxu0 %v1728
    %4290 = vmatprep.subr.mxu0 %v1733
    %4291 = vmatpush1.msra.mxu0 %v1732
    %4292 = vmatprep.subr.mxu0 %v1737
    %4293 = vmatpush1.msra.mxu0 %v1736
    %4294 = vmatprep.subr.mxu0 %v1741
    %4295 = vmatpush1.msra.mxu0 %v1740
    %4296 = vmatprep.subr.mxu0 %v1745
    %4297 = vmatpush1.msra.mxu0 %v1744
    %4298 = vmatprep.subr.mxu0 %v1749
    %4299 = vmatpush1.msra.mxu0 %v1748
    %4300 = vmatprep.subr.mxu0 %v1753
    %4301 = vmatpush1.msra.mxu0 %v1752
    %4302 = vmatprep.subr.mxu0 %v1757
    %4303 = vmatpush1.msra.mxu0 %v1756
    %4304 = vmatprep.subr.mxu0 %v1761
    %4305 = vmatpush1.msra.mxu0 %v1760
    %4306 = vmatprep.subr.mxu0 %v1765
    %4307 = vmatpush1.msra.mxu0 %v1764
    %4308 = vmatprep.subr.mxu0 %v1769
    %4309 = vmatpush1.msra.mxu0 %v1768
    %4310 = vmatprep.subr.mxu0 %v1773
    %4311 = vmatpush1.msra.mxu0 %v1772
    %4312 = vmatprep.subr.mxu0 %v1777
    %4313 = vmatpush1.msra.mxu0 %v1776
    %4314 = vmatprep.subr.mxu0 %v1781
    %4315 = vmatpush1.msra.mxu0 %v1780
    %4316 = vmatprep.subr.mxu0 %v1785
    %4317 = vmatpush1.msra.mxu0 %v1784
    %4318 = vmatprep.subr.mxu0 %v1789
    %4319 = vmatpush1.msra.mxu0 %v1788
    %4320 = vmatprep.subr.mxu0 %v1793
    %4321 = vmatpush1.msra.mxu0 %v1792
    %4322 = vmatprep.subr.mxu0 %v1797
    %4323 = vmatpush1.msra.mxu0 %v1796
    %4324 = vmatprep.subr.mxu0 %v1801
    %4325 = vmatpush1.msra.mxu0 %v1800
    %4326 = vmatprep.subr.mxu0 %v1805
    %4327 = vmatpush1.msra.mxu0 %v1804
    %4328 = vmatprep.subr.mxu0 %v1809
    %4329 = vmatpush1.msra.mxu0 %v1808
    %4330 = vmatprep.subr.mxu0 %v1813
    %4331 = vmatpush1.msra.mxu0 %v1812
    %4332 = vmatprep.subr.mxu0 %v1817
    %4333 = vmatpush1.msra.mxu0 %v1816
    %4334 = vmatprep.mubr.f32.mxu0 %v1094
    %4335 = vmatmul.mubr.f32.gmra.mrb[0].mxu0 %v1093
    %v4336 = vpop.f32.mrb[0].mxu0
    %v4337 = vadd.f32 0.0, %v4336
    %v4338 = vpop.f32.mrb[0].mxu0
    %v4339 = vadd.f32 0.0, %v4338
    %4340 = vmatprep.mubr.f32.mxu0 %v1097
    %4341 = vmatmul.mubr.f32.gmra.mrb[0].mxu0 %v1096
    %v4342 = vpop.f32.mrb[0].mxu0
    %v4343 = vadd.f32 0.0, %v4342
    %v4344 = vpop.f32.mrb[0].mxu0
    %v4345 = vadd.f32 0.0, %v4344
    %4346 = vdwg.mxu0
    %4347 = vmatprep.subr.mxu0 %v1821
    %4348 = vmatpush1.msra.mxu0 %v1820
    %4349 = vmatprep.subr.mxu0 %v1825
    %4350 = vmatpush1.msra.mxu0 %v1824
    %4351 = vmatprep.subr.mxu0 %v1829
    %4352 = vmatpush1.msra.mxu0 %v1828
    %4353 = vmatprep.subr.mxu0 %v1833
    %4354 = vmatpush1.msra.mxu0 %v1832
    %4355 = vmatprep.subr.mxu0 %v1837
    %4356 = vmatpush1.msra.mxu0 %v1836
    %4357 = vmatprep.subr.mxu0 %v1841
    %4358 = vmatpush1.msra.mxu0 %v1840
    %4359 = vmatprep.subr.mxu0 %v1845
    %4360 = vmatpush1.msra.mxu0 %v1844
    %4361 = vmatprep.subr.mxu0 %v1849
    %4362 = vmatpush1.msra.mxu0 %v1848
    %4363 = vmatprep.subr.mxu0 %v1853
    %4364 = vmatpush1.msra.mxu0 %v1852
    %4365 = vmatprep.subr.mxu0 %v1857
    %4366 = vmatpush1.msra.mxu0 %v1856
    %4367 = vmatprep.subr.mxu0 %v1861
    %4368 = vmatpush1.msra.mxu0 %v1860
    %4369 = vmatprep.subr.mxu0 %v1865
    %4370 = vmatpush1.msra.mxu0 %v1864
    %4371 = vmatprep.subr.mxu0 %v1869
    %4372 = vmatpush1.msra.mxu0 %v1868
    %4373 = vmatprep.subr.mxu0 %v1873
    %4374 = vmatpush1.msra.mxu0 %v1872
    %4375 = vmatprep.subr.mxu0 %v1877
    %4376 = vmatpush1.msra.mxu0 %v1876
    %4377 = vmatprep.subr.mxu0 %v1881
    %4378 = vmatpush1.msra.mxu0 %v1880
    %4379 = vmatprep.subr.mxu0 0.0
    %4380 = vmatpush1.msra.mxu0 0.0
    %4381 = vmatprep.subr.mxu0 0.0
    %4382 = vmatpush1.msra.mxu0 0.0
    %4383 = vmatprep.subr.mxu0 0.0
    %4384 = vmatpush1.msra.mxu0 0.0
    %4385 = vmatprep.subr.mxu0 0.0
    %4386 = vmatpush1.msra.mxu0 0.0
    %4387 = vmatprep.subr.mxu0 0.0
    %4388 = vmatpush1.msra.mxu0 0.0
    %4389 = vmatprep.subr.mxu0 0.0
    %4390 = vmatpush1.msra.mxu0 0.0
    %4391 = vmatprep.subr.mxu0 0.0
    %4392 = vmatpush1.msra.mxu0 0.0
    %4393 = vmatprep.subr.mxu0 0.0
    %4394 = vmatpush1.msra.mxu0 0.0
    %4395 = vmatprep.subr.mxu0 0.0
    %4396 = vmatpush1.msra.mxu0 0.0
    %4397 = vmatprep.subr.mxu0 0.0
    %4398 = vmatpush1.msra.mxu0 0.0
    %4399 = vmatprep.subr.mxu0 0.0
    %4400 = vmatpush1.msra.mxu0 0.0
    %4401 = vmatprep.subr.mxu0 0.0
    %4402 = vmatpush1.msra.mxu0 0.0
    %4403 = vmatprep.subr.mxu0 0.0
    %4404 = vmatpush1.msra.mxu0 0.0
    %4405 = vmatprep.subr.mxu0 0.0
    %4406 = vmatpush1.msra.mxu0 0.0
    %4407 = vmatprep.subr.mxu0 0.0
    %4408 = vmatpush1.msra.mxu0 0.0
    %4409 = vmatprep.subr.mxu0 0.0
    %4410 = vmatpush1.msra.mxu0 0.0
    %4411 = vmatprep.mubr.f32.mxu0 0.0
    %4412 = vmatmul.mubr.f32.gmra.mrb[0].mxu0 %v1095
    %v4413 = vpop.f32.mrb[0].mxu0
    %v4414 = vadd.f32 %v4337, %v4413
    %v4415 = vpop.f32.mrb[0].mxu0
    %v4416 = vadd.f32 %v4339, %v4415
    %4417 = vmatprep.mubr.f32.mxu0 0.0
    %4418 = vmatmul.mubr.f32.gmra.mrb[0].mxu0 %v1098
    %v4419 = vpop.f32.mrb[0].mxu0
    %v4420 = vadd.f32 %v4343, %v4419
    %v4421 = vpop.f32.mrb[0].mxu0
    %v4422 = vadd.f32 %v4345, %v4421
    %4423 = vdwg.mxu0
    %v4424 = vadd.f32 %v4108, %v4260
    %v4425 = vadd.f32 %v4109, %v4262
    %v4426 = vadd.f32 %v4110, %v4414
    %v4427 = vadd.f32 %v4111, %v4416
    %v4428 = vadd.f32 %v4112, %v4266
    %v4429 = vadd.f32 %v4113, %v4268
    %v4430 = vadd.f32 %v4114, %v4420
    %v4431 = vadd.f32 %v4115, %v4422
    %v4432 = vmax.f32 %v4424, %v4426
    %v4433 = vmax.f32 %v4425, %v4427
    %v4434 = vmax.f32 %v4428, %v4430
    %v4435 = vmax.f32 %v4429, %v4431
    %v4436 = vmax.f32 %v4432, %v4434
    %v4437 = vmax.f32 %v4433, %v4435
    %v4438 = vadd.f32 %v4436, %v3141
    %v4439 = vadd.f32 %v4437, %v3145
    %v4440 = vmax.f32 %v4438, 0.0
    %v4441 = vmax.f32 %v4439, 0.0
    %s4442 = scalar_lea.vmem [#allocation9], 256
    %v4443 = vld [vmem:[%s4442] sm:$0xff]
    %v4444 = vld [vmem:[%s4442 + $0x8] sm:$0xff]
    %v4445 = vld [vmem:[%s4442 + $0x10] sm:$0xff]
    %v4446 = vld [vmem:[%s4442 + $0x18] sm:$0xff]
    %v4447 = vld [vmem:[%s4442 + $0x20] sm:$0xff]
    %v4448 = vld [vmem:[%s4442 + $0x28] sm:$0xff]
    %v4449 = vld [vmem:[%s4442 + $0x30] sm:$0xff]
    %v4450 = vld [vmem:[%s4442 + $0x38] sm:$0xff]
    %v4451 = vld [vmem:[%s4442 + $0x40] sm:$0xff]
    %v4452 = vld [vmem:[%s4442 + $0x48] sm:$0xff]
    %v4453 = vld [vmem:[%s4442 + $0x50] sm:$0xff]
    %v4454 = vld [vmem:[%s4442 + $0x58] sm:$0xff]
    %v4455 = vld [vmem:[%s4442 + $0x60] sm:$0xff]
    %v4456 = vld [vmem:[%s4442 + $0x68] sm:$0xff]
    %v4457 = vld [vmem:[%s4442 + $0x70] sm:$0xff]
    %v4458 = vld [vmem:[%s4442 + $0x78] sm:$0xff]
    %v4459 = vld [vmem:[%s4442 + $0x80] sm:$0xff]
    %v4460 = vld [vmem:[%s4442 + $0x88] sm:$0xff]
    %v4461 = vld [vmem:[%s4442 + $0x90] sm:$0xff]
    %v4462 = vld [vmem:[%s4442 + $0x98] sm:$0xff]
    %v4463 = vld [vmem:[%s4442 + $0xa0] sm:$0xff]
    %v4464 = vld [vmem:[%s4442 + $0xa8] sm:$0xff]
    %v4465 = vld [vmem:[%s4442 + $0xb0] sm:$0xff]
    %v4466 = vld [vmem:[%s4442 + $0xb8] sm:$0xff]
    %v4467 = vld [vmem:[%s4442 + $0xc0] sm:$0xff]
    %v4468 = vld [vmem:[%s4442 + $0xc8] sm:$0xff]
    %v4469 = vld [vmem:[%s4442 + $0xd0] sm:$0xff]
    %v4470 = vld [vmem:[%s4442 + $0xd8] sm:$0xff]
    %v4471 = vld [vmem:[%s4442 + $0xe0] sm:$0xff]
    %v4472 = vld [vmem:[%s4442 + $0xe8] sm:$0xff]
    %v4473 = vld [vmem:[%s4442 + $0xf0] sm:$0xff]
    %v4474 = vld [vmem:[%s4442 + $0xf8] sm:$0xff]
    %4475 = vmatprep.subr.mxu0 0.0
    %4476 = vmatpush1.msra.mxu0 %v4443
    %4477 = vmatprep.subr.mxu0 0.0
    %4478 = vmatpush1.msra.mxu0 %v4444
    %4479 = vmatprep.subr.mxu0 0.0
    %4480 = vmatpush1.msra.mxu0 %v4445
    %4481 = vmatprep.subr.mxu0 0.0
    %4482 = vmatpush1.msra.mxu0 %v4446
    %4483 = vmatprep.subr.mxu0 0.0
    %4484 = vmatpush1.msra.mxu0 %v4447
    %4485 = vmatprep.subr.mxu0 0.0
    %4486 = vmatpush1.msra.mxu0 %v4448
    %4487 = vmatprep.subr.mxu0 0.0
    %4488 = vmatpush1.msra.mxu0 %v4449
    %4489 = vmatprep.subr.mxu0 0.0
    %4490 = vmatpush1.msra.mxu0 %v4450
    %4491 = vmatprep.subr.mxu0 0.0
    %4492 = vmatpush1.msra.mxu0 %v4451
    %4493 = vmatprep.subr.mxu0 0.0
    %4494 = vmatpush1.msra.mxu0 %v4452
    %4495 = vmatprep.subr.mxu0 0.0
    %4496 = vmatpush1.msra.mxu0 %v4453
    %4497 = vmatprep.subr.mxu0 0.0
    %4498 = vmatpush1.msra.mxu0 %v4454
    %4499 = vmatprep.subr.mxu0 0.0
    %4500 = vmatpush1.msra.mxu0 %v4455
    %4501 = vmatprep.subr.mxu0 0.0
    %4502 = vmatpush1.msra.mxu0 %v4456
    %4503 = vmatprep.subr.mxu0 0.0
    %4504 = vmatpush1.msra.mxu0 %v4457
    %4505 = vmatprep.subr.mxu0 0.0
    %4506 = vmatpush1.msra.mxu0 %v4458
    %4507 = vmatprep.subr.mxu0 0.0
    %4508 = vmatpush1.msra.mxu0 %v4459
    %4509 = vmatprep.subr.mxu0 0.0
    %4510 = vmatpush1.msra.mxu0 %v4460
    %4511 = vmatprep.subr.mxu0 0.0
    %4512 = vmatpush1.msra.mxu0 %v4461
    %4513 = vmatprep.subr.mxu0 0.0
    %4514 = vmatpush1.msra.mxu0 %v4462
    %4515 = vmatprep.subr.mxu0 0.0
    %4516 = vmatpush1.msra.mxu0 %v4463
    %4517 = vmatprep.subr.mxu0 0.0
    %4518 = vmatpush1.msra.mxu0 %v4464
    %4519 = vmatprep.subr.mxu0 0.0
    %4520 = vmatpush1.msra.mxu0 %v4465
    %4521 = vmatprep.subr.mxu0 0.0
    %4522 = vmatpush1.msra.mxu0 %v4466
    %4523 = vmatprep.subr.mxu0 0.0
    %4524 = vmatpush1.msra.mxu0 %v4467
    %4525 = vmatprep.subr.mxu0 0.0
    %4526 = vmatpush1.msra.mxu0 %v4468
    %4527 = vmatprep.subr.mxu0 0.0
    %4528 = vmatpush1.msra.mxu0 %v4469
    %4529 = vmatprep.subr.mxu0 0.0
    %4530 = vmatpush1.msra.mxu0 %v4470
    %4531 = vmatprep.subr.mxu0 0.0
    %4532 = vmatpush1.msra.mxu0 %v4471
    %4533 = vmatprep.subr.mxu0 0.0
    %4534 = vmatpush1.msra.mxu0 %v4472
    %4535 = vmatprep.subr.mxu0 0.0
    %4536 = vmatpush1.msra.mxu0 %v4473
    %4537 = vmatprep.subr.mxu0 0.0
    %4538 = vmatpush1.msra.mxu0 %v4474
    %4539 = vmatprep.mubr.f32.mxu0 %v4441
    %4540 = vmatmul.mubr.f32.gmra.mrb[0].mxu0 %v4440
    %v4541 = vpop.f32.mrb[0].mxu0
    %v4542 = vadd.f32 0.0, %v4541
    %v4543 = vpop.f32.mrb[0].mxu0
    %4544 = vdwg.mxu0
    %4545 = vmatprep.subr.mxu0 0.0
    %4546 = vmatpush1.msra.mxu0 %v3152
    %4547 = vmatprep.subr.mxu0 0.0
    %4548 = vmatpush1.msra.mxu0 %v3153
    %4549 = vmatprep.subr.mxu0 0.0
    %4550 = vmatpush1.msra.mxu0 %v3154
    %4551 = vmatprep.subr.mxu0 0.0
    %4552 = vmatpush1.msra.mxu0 %v3155
    %4553 = vmatprep.subr.mxu0 0.0
    %4554 = vmatpush1.msra.mxu0 %v3156
    %4555 = vmatprep.subr.mxu0 0.0
    %4556 = vmatpush1.msra.mxu0 %v3157
    %4557 = vmatprep.subr.mxu0 0.0
    %4558 = vmatpush1.msra.mxu0 %v3158
    %4559 = vmatprep.subr.mxu0 0.0
    %4560 = vmatpush1.msra.mxu0 %v3159
    %4561 = vmatprep.subr.mxu0 0.0
    %4562 = vmatpush1.msra.mxu0 %v3160
    %4563 = vmatprep.subr.mxu0 0.0
    %4564 = vmatpush1.msra.mxu0 %v3161
    %4565 = vmatprep.subr.mxu0 0.0
    %4566 = vmatpush1.msra.mxu0 %v3162
    %4567 = vmatprep.subr.mxu0 0.0
    %4568 = vmatpush1.msra.mxu0 %v3163
    %4569 = vmatprep.subr.mxu0 0.0
    %4570 = vmatpush1.msra.mxu0 %v3164
    %4571 = vmatprep.subr.mxu0 0.0
    %4572 = vmatpush1.msra.mxu0 %v3165
    %4573 = vmatprep.subr.mxu0 0.0
    %4574 = vmatpush1.msra.mxu0 %v3166
    %4575 = vmatprep.subr.mxu0 0.0
    %4576 = vmatpush1.msra.mxu0 %v3167
    %4577 = vmatprep.subr.mxu0 0.0
    %4578 = vmatpush1.msra.mxu0 %v3168
    %4579 = vmatprep.subr.mxu0 0.0
    %4580 = vmatpush1.msra.mxu0 %v3169
    %4581 = vmatprep.subr.mxu0 0.0
    %4582 = vmatpush1.msra.mxu0 %v3170
    %4583 = vmatprep.subr.mxu0 0.0
    %4584 = vmatpush1.msra.mxu0 %v3171
    %4585 = vmatprep.subr.mxu0 0.0
    %4586 = vmatpush1.msra.mxu0 %v3172
    %4587 = vmatprep.subr.mxu0 0.0
    %4588 = vmatpush1.msra.mxu0 %v3173
    %4589 = vmatprep.subr.mxu0 0.0
    %4590 = vmatpush1.msra.mxu0 %v3174
    %4591 = vmatprep.subr.mxu0 0.0
    %4592 = vmatpush1.msra.mxu0 %v3175
    %4593 = vmatprep.subr.mxu0 0.0
    %4594 = vmatpush1.msra.mxu0 %v3176
    %4595 = vmatprep.subr.mxu0 0.0
    %4596 = vmatpush1.msra.mxu0 %v3177
    %4597 = vmatprep.subr.mxu0 0.0
    %4598 = vmatpush1.msra.mxu0 %v3178
    %4599 = vmatprep.subr.mxu0 0.0
    %4600 = vmatpush1.msra.mxu0 %v3179
    %4601 = vmatprep.subr.mxu0 0.0
    %4602 = vmatpush1.msra.mxu0 %v3180
    %4603 = vmatprep.subr.mxu0 0.0
    %4604 = vmatpush1.msra.mxu0 %v3181
    %4605 = vmatprep.subr.mxu0 0.0
    %4606 = vmatpush1.msra.mxu0 %v3182
    %4607 = vmatprep.subr.mxu0 0.0
    %4608 = vmatpush1.msra.mxu0 %v3183
    %4609 = vmatprep.mubr.f32.mxu0 %v3151
    %4610 = vmatmul.mubr.f32.gmra.mrb[0].mxu0 %v3150
    %v4611 = vpop.f32.mrb[0].mxu0
    %v4612 = vadd.f32 %v4542, %v4611
    %v4613 = vpop.f32.mrb[0].mxu0
    %4614 = vdwg.mxu0
    %4615 = vmatprep.subr.mxu0 %v1305
    %4616 = vmatpush1.msra.mxu0 %v1304
    %4617 = vmatprep.subr.mxu0 %v1309
    %4618 = vmatpush1.msra.mxu0 %v1308
    %4619 = vmatprep.subr.mxu0 %v1313
    %4620 = vmatpush1.msra.mxu0 %v1312
    %4621 = vmatprep.subr.mxu0 %v1317
    %4622 = vmatpush1.msra.mxu0 %v1316
    %4623 = vmatprep.subr.mxu0 %v1321
    %4624 = vmatpush1.msra.mxu0 %v1320
    %4625 = vmatprep.subr.mxu0 %v1325
    %4626 = vmatpush1.msra.mxu0 %v1324
    %4627 = vmatprep.subr.mxu0 %v1329
    %4628 = vmatpush1.msra.mxu0 %v1328
    %4629 = vmatprep.subr.mxu0 %v1333
    %4630 = vmatpush1.msra.mxu0 %v1332
    %4631 = vmatprep.subr.mxu0 %v1337
    %4632 = vmatpush1.msra.mxu0 %v1336
    %4633 = vmatprep.subr.mxu0 %v1341
    %4634 = vmatpush1.msra.mxu0 %v1340
    %4635 = vmatprep.subr.mxu0 %v1345
    %4636 = vmatpush1.msra.mxu0 %v1344
    %4637 = vmatprep.subr.mxu0 %v1349
    %4638 = vmatpush1.msra.mxu0 %v1348
    %4639 = vmatprep.subr.mxu0 %v1353
    %4640 = vmatpush1.msra.mxu0 %v1352
    %4641 = vmatprep.subr.mxu0 %v1357
    %4642 = vmatpush1.msra.mxu0 %v1356
    %4643 = vmatprep.subr.mxu0 %v1361
    %4644 = vmatpush1.msra.mxu0 %v1360
    %4645 = vmatprep.subr.mxu0 %v1365
    %4646 = vmatpush1.msra.mxu0 %v1364
    %4647 = vmatprep.subr.mxu0 %v1369
    %4648 = vmatpush1.msra.mxu0 %v1368
    %4649 = vmatprep.subr.mxu0 %v1373
    %4650 = vmatpush1.msra.mxu0 %v1372
    %4651 = vmatprep.subr.mxu0 %v1377
    %4652 = vmatpush1.msra.mxu0 %v1376
    %4653 = vmatprep.subr.mxu0 %v1381
    %4654 = vmatpush1.msra.mxu0 %v1380
    %4655 = vmatprep.subr.mxu0 %v1385
    %4656 = vmatpush1.msra.mxu0 %v1384
    %4657 = vmatprep.subr.mxu0 %v1389
    %4658 = vmatpush1.msra.mxu0 %v1388
    %4659 = vmatprep.subr.mxu0 %v1393
    %4660 = vmatpush1.msra.mxu0 %v1392
    %4661 = vmatprep.subr.mxu0 %v1397
    %4662 = vmatpush1.msra.mxu0 %v1396
    %4663 = vmatprep.subr.mxu0 %v1401
    %4664 = vmatpush1.msra.mxu0 %v1400
    %4665 = vmatprep.subr.mxu0 %v1405
    %4666 = vmatpush1.msra.mxu0 %v1404
    %4667 = vmatprep.subr.mxu0 %v1409
    %4668 = vmatpush1.msra.mxu0 %v1408
    %4669 = vmatprep.subr.mxu0 %v1413
    %4670 = vmatpush1.msra.mxu0 %v1412
    %4671 = vmatprep.subr.mxu0 %v1417
    %4672 = vmatpush1.msra.mxu0 %v1416
    %4673 = vmatprep.subr.mxu0 %v1421
    %4674 = vmatpush1.msra.mxu0 %v1420
    %4675 = vmatprep.subr.mxu0 %v1425
    %4676 = vmatpush1.msra.mxu0 %v1424
    %4677 = vmatprep.subr.mxu0 %v1429
    %4678 = vmatpush1.msra.mxu0 %v1428
    %4679 = vmatprep.mubr.f32.mxu0 %v1094
    %4680 = vmatmul.mubr.f32.gmra.mrb[0].mxu0 %v1093
    %v4681 = vpop.f32.mrb[0].mxu0
    %v4682 = vadd.f32 0.0, %v4681
    %v4683 = vpop.f32.mrb[0].mxu0
    %v4684 = vadd.f32 0.0, %v4683
    %4685 = vmatprep.mubr.f32.mxu0 %v1097
    %4686 = vmatmul.mubr.f32.gmra.mrb[0].mxu0 %v1096
    %v4687 = vpop.f32.mrb[0].mxu0
    %v4688 = vadd.f32 0.0, %v4687
    %v4689 = vpop.f32.mrb[0].mxu0
    %v4690 = vadd.f32 0.0, %v4689
    %4691 = vdwg.mxu0
    %4692 = vmatprep.subr.mxu0 %v1433
    %4693 = vmatpush1.msra.mxu0 %v1432
    %4694 = vmatprep.subr.mxu0 %v1437
    %4695 = vmatpush1.msra.mxu0 %v1436
    %4696 = vmatprep.subr.mxu0 %v1441
    %4697 = vmatpush1.msra.mxu0 %v1440
    %4698 = vmatprep.subr.mxu0 %v1445
    %4699 = vmatpush1.msra.mxu0 %v1444
    %4700 = vmatprep.subr.mxu0 %v1449
    %4701 = vmatpush1.msra.mxu0 %v1448
    %4702 = vmatprep.subr.mxu0 %v1453
    %4703 = vmatpush1.msra.mxu0 %v1452
    %4704 = vmatprep.subr.mxu0 %v1457
    %4705 = vmatpush1.msra.mxu0 %v1456
    %4706 = vmatprep.subr.mxu0 %v1461
    %4707 = vmatpush1.msra.mxu0 %v1460
    %4708 = vmatprep.subr.mxu0 %v1465
    %4709 = vmatpush1.msra.mxu0 %v1464
    %4710 = vmatprep.subr.mxu0 %v1469
    %4711 = vmatpush1.msra.mxu0 %v1468
    %4712 = vmatprep.subr.mxu0 %v1473
    %4713 = vmatpush1.msra.mxu0 %v1472
    %4714 = vmatprep.subr.mxu0 %v1477
    %4715 = vmatpush1.msra.mxu0 %v1476
    %4716 = vmatprep.subr.mxu0 %v1481
    %4717 = vmatpush1.msra.mxu0 %v1480
    %4718 = vmatprep.subr.mxu0 %v1485
    %4719 = vmatpush1.msra.mxu0 %v1484
    %4720 = vmatprep.subr.mxu0 %v1489
    %4721 = vmatpush1.msra.mxu0 %v1488
    %4722 = vmatprep.subr.mxu0 %v1493
    %4723 = vmatpush1.msra.mxu0 %v1492
    %4724 = vmatprep.subr.mxu0 0.0
    %4725 = vmatpush1.msra.mxu0 0.0
    %4726 = vmatprep.subr.mxu0 0.0
    %4727 = vmatpush1.msra.mxu0 0.0
    %4728 = vmatprep.subr.mxu0 0.0
    %4729 = vmatpush1.msra.mxu0 0.0
    %4730 = vmatprep.subr.mxu0 0.0
    %4731 = vmatpush1.msra.mxu0 0.0
    %4732 = vmatprep.subr.mxu0 0.0
    %4733 = vmatpush1.msra.mxu0 0.0
    %4734 = vmatprep.subr.mxu0 0.0
    %4735 = vmatpush1.msra.mxu0 0.0
    %4736 = vmatprep.subr.mxu0 0.0
    %4737 = vmatpush1.msra.mxu0 0.0
    %4738 = vmatprep.subr.mxu0 0.0
    %4739 = vmatpush1.msra.mxu0 0.0
    %4740 = vmatprep.subr.mxu0 0.0
    %4741 = vmatpush1.msra.mxu0 0.0
    %4742 = vmatprep.subr.mxu0 0.0
    %4743 = vmatpush1.msra.mxu0 0.0
    %4744 = vmatprep.subr.mxu0 0.0
    %4745 = vmatpush1.msra.mxu0 0.0
    %4746 = vmatprep.subr.mxu0 0.0
    %4747 = vmatpush1.msra.mxu0 0.0
    %4748 = vmatprep.subr.mxu0 0.0
    %4749 = vmatpush1.msra.mxu0 0.0
    %4750 = vmatprep.subr.mxu0 0.0
    %4751 = vmatpush1.msra.mxu0 0.0
    %4752 = vmatprep.subr.mxu0 0.0
    %4753 = vmatpush1.msra.mxu0 0.0
    %4754 = vmatprep.subr.mxu0 0.0
    %4755 = vmatpush1.msra.mxu0 0.0
    %4756 = vmatprep.mubr.f32.mxu0 0.0
    %4757 = vmatmul.mubr.f32.gmra.mrb[0].mxu0 %v1095
    %v4758 = vpop.f32.mrb[0].mxu0
    %v4759 = vadd.f32 %v4682, %v4758
    %v4760 = vpop.f32.mrb[0].mxu0
    %v4761 = vadd.f32 %v4684, %v4760
    %4762 = vmatprep.mubr.f32.mxu0 0.0
    %4763 = vmatmul.mubr.f32.gmra.mrb[0].mxu0 %v1098
    %v4764 = vpop.f32.mrb[0].mxu0
    %v4765 = vadd.f32 %v4688, %v4764
    %v4766 = vpop.f32.mrb[0].mxu0
    %v4767 = vadd.f32 %v4690, %v4766
    %4768 = vdwg.mxu0
    %4769 = vmatprep.subr.mxu0 %v1307
    %4770 = vmatpush1.msra.mxu0 %v1306
    %4771 = vmatprep.subr.mxu0 %v1311
    %4772 = vmatpush1.msra.mxu0 %v1310
    %4773 = vmatprep.subr.mxu0 %v1315
    %4774 = vmatpush1.msra.mxu0 %v1314
    %4775 = vmatprep.subr.mxu0 %v1319
    %4776 = vmatpush1.msra.mxu0 %v1318
    %4777 = vmatprep.subr.mxu0 %v1323
    %4778 = vmatpush1.msra.mxu0 %v1322
    %4779 = vmatprep.subr.mxu0 %v1327
    %4780 = vmatpush1.msra.mxu0 %v1326
    %4781 = vmatprep.subr.mxu0 %v1331
    %4782 = vmatpush1.msra.mxu0 %v1330
    %4783 = vmatprep.subr.mxu0 %v1335
    %4784 = vmatpush1.msra.mxu0 %v1334
    %4785 = vmatprep.subr.mxu0 %v1339
    %4786 = vmatpush1.msra.mxu0 %v1338
    %4787 = vmatprep.subr.mxu0 %v1343
    %4788 = vmatpush1.msra.mxu0 %v1342
    %4789 = vmatprep.subr.mxu0 %v1347
    %4790 = vmatpush1.msra.mxu0 %v1346
    %4791 = vmatprep.subr.mxu0 %v1351
    %4792 = vmatpush1.msra.mxu0 %v1350
    %4793 = vmatprep.subr.mxu0 %v1355
    %4794 = vmatpush1.msra.mxu0 %v1354
    %4795 = vmatprep.subr.mxu0 %v1359
    %4796 = vmatpush1.msra.mxu0 %v1358
    %4797 = vmatprep.subr.mxu0 %v1363
    %4798 = vmatpush1.msra.mxu0 %v1362
    %4799 = vmatprep.subr.mxu0 %v1367
    %4800 = vmatpush1.msra.mxu0 %v1366
    %4801 = vmatprep.subr.mxu0 %v1371
    %4802 = vmatpush1.msra.mxu0 %v1370
    %4803 = vmatprep.subr.mxu0 %v1375
    %4804 = vmatpush1.msra.mxu0 %v1374
    %4805 = vmatprep.subr.mxu0 %v1379
    %4806 = vmatpush1.msra.mxu0 %v1378
    %4807 = vmatprep.subr.mxu0 %v1383
    %4808 = vmatpush1.msra.mxu0 %v1382
    %4809 = vmatprep.subr.mxu0 %v1387
    %4810 = vmatpush1.msra.mxu0 %v1386
    %4811 = vmatprep.subr.mxu0 %v1391
    %4812 = vmatpush1.msra.mxu0 %v1390
    %4813 = vmatprep.subr.mxu0 %v1395
    %4814 = vmatpush1.msra.mxu0 %v1394
    %4815 = vmatprep.subr.mxu0 %v1399
    %4816 = vmatpush1.msra.mxu0 %v1398
    %4817 = vmatprep.subr.mxu0 %v1403
    %4818 = vmatpush1.msra.mxu0 %v1402
    %4819 = vmatprep.subr.mxu0 %v1407
    %4820 = vmatpush1.msra.mxu0 %v1406
    %4821 = vmatprep.subr.mxu0 %v1411
    %4822 = vmatpush1.msra.mxu0 %v1410
    %4823 = vmatprep.subr.mxu0 %v1415
    %4824 = vmatpush1.msra.mxu0 %v1414
    %4825 = vmatprep.subr.mxu0 %v1419
    %4826 = vmatpush1.msra.mxu0 %v1418
    %4827 = vmatprep.subr.mxu0 %v1423
    %4828 = vmatpush1.msra.mxu0 %v1422
    %4829 = vmatprep.subr.mxu0 %v1427
    %4830 = vmatpush1.msra.mxu0 %v1426
    %4831 = vmatprep.subr.mxu0 %v1431
    %4832 = vmatpush1.msra.mxu0 %v1430
    %4833 = vmatprep.mubr.f32.mxu0 %v1094
    %4834 = vmatmul.mubr.f32.gmra.mrb[0].mxu0 %v1093
    %v4835 = vpop.f32.mrb[0].mxu0
    %v4836 = vadd.f32 0.0, %v4835
    %v4837 = vpop.f32.mrb[0].mxu0
    %v4838 = vadd.f32 0.0, %v4837
    %4839 = vmatprep.mubr.f32.mxu0 %v1097
    %4840 = vmatmul.mubr.f32.gmra.mrb[0].mxu0 %v1096
    %v4841 = vpop.f32.mrb[0].mxu0
    %v4842 = vadd.f32 0.0, %v4841
    %v4843 = vpop.f32.mrb[0].mxu0
    %v4844 = vadd.f32 0.0, %v4843
    %4845 = vdwg.mxu0
    %4846 = vmatprep.subr.mxu0 %v1435
    %4847 = vmatpush1.msra.mxu0 %v1434
    %4848 = vmatprep.subr.mxu0 %v1439
    %4849 = vmatpush1.msra.mxu0 %v1438
    %4850 = vmatprep.subr.mxu0 %v1443
    %4851 = vmatpush1.msra.mxu0 %v1442
    %4852 = vmatprep.subr.mxu0 %v1447
    %4853 = vmatpush1.msra.mxu0 %v1446
    %4854 = vmatprep.subr.mxu0 %v1451
    %4855 = vmatpush1.msra.mxu0 %v1450
    %4856 = vmatprep.subr.mxu0 %v1455
    %4857 = vmatpush1.msra.mxu0 %v1454
    %4858 = vmatprep.subr.mxu0 %v1459
    %4859 = vmatpush1.msra.mxu0 %v1458
    %4860 = vmatprep.subr.mxu0 %v1463
    %4861 = vmatpush1.msra.mxu0 %v1462
    %4862 = vmatprep.subr.mxu0 %v1467
    %4863 = vmatpush1.msra.mxu0 %v1466
    %4864 = vmatprep.subr.mxu0 %v1471
    %4865 = vmatpush1.msra.mxu0 %v1470
    %4866 = vmatprep.subr.mxu0 %v1475
    %4867 = vmatpush1.msra.mxu0 %v1474
    %4868 = vmatprep.subr.mxu0 %v1479
    %4869 = vmatpush1.msra.mxu0 %v1478
    %4870 = vmatprep.subr.mxu0 %v1483
    %4871 = vmatpush1.msra.mxu0 %v1482
    %4872 = vmatprep.subr.mxu0 %v1487
    %4873 = vmatpush1.msra.mxu0 %v1486
    %4874 = vmatprep.subr.mxu0 %v1491
    %4875 = vmatpush1.msra.mxu0 %v1490
    %4876 = vmatprep.subr.mxu0 %v1495
    %4877 = vmatpush1.msra.mxu0 %v1494
    %4878 = vmatprep.subr.mxu0 0.0
    %4879 = vmatpush1.msra.mxu0 0.0
    %4880 = vmatprep.subr.mxu0 0.0
    %4881 = vmatpush1.msra.mxu0 0.0
    %4882 = vmatprep.subr.mxu0 0.0
    %4883 = vmatpush1.msra.mxu0 0.0
    %4884 = vmatprep.subr.mxu0 0.0
    %4885 = vmatpush1.msra.mxu0 0.0
    %4886 = vmatprep.subr.mxu0 0.0
    %4887 = vmatpush1.msra.mxu0 0.0
    %4888 = vmatprep.subr.mxu0 0.0
    %4889 = vmatpush1.msra.mxu0 0.0
    %4890 = vmatprep.subr.mxu0 0.0
    %4891 = vmatpush1.msra.mxu0 0.0
    %4892 = vmatprep.subr.mxu0 0.0
    %4893 = vmatpush1.msra.mxu0 0.0
    %4894 = vmatprep.subr.mxu0 0.0
    %4895 = vmatpush1.msra.mxu0 0.0
    %4896 = vmatprep.subr.mxu0 0.0
    %4897 = vmatpush1.msra.mxu0 0.0
    %4898 = vmatprep.subr.mxu0 0.0
    %4899 = vmatpush1.msra.mxu0 0.0
    %4900 = vmatprep.subr.mxu0 0.0
    %4901 = vmatpush1.msra.mxu0 0.0
    %4902 = vmatprep.subr.mxu0 0.0
    %4903 = vmatpush1.msra.mxu0 0.0
    %4904 = vmatprep.subr.mxu0 0.0
    %4905 = vmatpush1.msra.mxu0 0.0
    %4906 = vmatprep.subr.mxu0 0.0
    %4907 = vmatpush1.msra.mxu0 0.0
    %4908 = vmatprep.subr.mxu0 0.0
    %4909 = vmatpush1.msra.mxu0 0.0
    %4910 = vmatprep.mubr.f32.mxu0 0.0
    %4911 = vmatmul.mubr.f32.gmra.mrb[0].mxu0 %v1095
    %v4912 = vpop.f32.mrb[0].mxu0
    %v4913 = vadd.f32 %v4836, %v4912
    %v4914 = vpop.f32.mrb[0].mxu0
    %v4915 = vadd.f32 %v4838, %v4914
    %4916 = vmatprep.mubr.f32.mxu0 0.0
    %4917 = vmatmul.mubr.f32.gmra.mrb[0].mxu0 %v1098
    %v4918 = vpop.f32.mrb[0].mxu0
    %v4919 = vadd.f32 %v4842, %v4918
    %v4920 = vpop.f32.mrb[0].mxu0
    %v4921 = vadd.f32 %v4844, %v4920
    %4922 = vdwg.mxu0
    %4923 = vmatprep.subr.mxu0 %v1112
    %4924 = vmatpush1.msra.mxu0 %v1111
    %4925 = vmatprep.subr.mxu0 %v1116
    %4926 = vmatpush1.msra.mxu0 %v1115
    %4927 = vmatprep.subr.mxu0 %v1120
    %4928 = vmatpush1.msra.mxu0 %v1119
    %4929 = vmatprep.subr.mxu0 %v1124
    %4930 = vmatpush1.msra.mxu0 %v1123
    %4931 = vmatprep.subr.mxu0 %v1128
    %4932 = vmatpush1.msra.mxu0 %v1127
    %4933 = vmatprep.subr.mxu0 %v1132
    %4934 = vmatpush1.msra.mxu0 %v1131
    %4935 = vmatprep.subr.mxu0 %v1136
    %4936 = vmatpush1.msra.mxu0 %v1135
    %4937 = vmatprep.subr.mxu0 %v1140
    %4938 = vmatpush1.msra.mxu0 %v1139
    %4939 = vmatprep.subr.mxu0 %v1144
    %4940 = vmatpush1.msra.mxu0 %v1143
    %4941 = vmatprep.subr.mxu0 %v1148
    %4942 = vmatpush1.msra.mxu0 %v1147
    %4943 = vmatprep.subr.mxu0 %v1152
    %4944 = vmatpush1.msra.mxu0 %v1151
    %4945 = vmatprep.subr.mxu0 %v1156
    %4946 = vmatpush1.msra.mxu0 %v1155
    %4947 = vmatprep.subr.mxu0 %v1160
    %4948 = vmatpush1.msra.mxu0 %v1159
    %4949 = vmatprep.subr.mxu0 %v1164
    %4950 = vmatpush1.msra.mxu0 %v1163
    %4951 = vmatprep.subr.mxu0 %v1168
    %4952 = vmatpush1.msra.mxu0 %v1167
    %4953 = vmatprep.subr.mxu0 %v1172
    %4954 = vmatpush1.msra.mxu0 %v1171
    %4955 = vmatprep.subr.mxu0 %v1176
    %4956 = vmatpush1.msra.mxu0 %v1175
    %4957 = vmatprep.subr.mxu0 %v1180
    %4958 = vmatpush1.msra.mxu0 %v1179
    %4959 = vmatprep.subr.mxu0 %v1184
    %4960 = vmatpush1.msra.mxu0 %v1183
    %4961 = vmatprep.subr.mxu0 %v1188
    %4962 = vmatpush1.msra.mxu0 %v1187
    %4963 = vmatprep.subr.mxu0 %v1192
    %4964 = vmatpush1.msra.mxu0 %v1191
    %4965 = vmatprep.subr.mxu0 %v1196
    %4966 = vmatpush1.msra.mxu0 %v1195
    %4967 = vmatprep.subr.mxu0 %v1200
    %4968 = vmatpush1.msra.mxu0 %v1199
    %4969 = vmatprep.subr.mxu0 %v1204
    %4970 = vmatpush1.msra.mxu0 %v1203
    %4971 = vmatprep.subr.mxu0 %v1208
    %4972 = vmatpush1.msra.mxu0 %v1207
    %4973 = vmatprep.subr.mxu0 %v1212
    %4974 = vmatpush1.msra.mxu0 %v1211
    %4975 = vmatprep.subr.mxu0 %v1216
    %4976 = vmatpush1.msra.mxu0 %v1215
    %4977 = vmatprep.subr.mxu0 %v1220
    %4978 = vmatpush1.msra.mxu0 %v1219
    %4979 = vmatprep.subr.mxu0 %v1224
    %4980 = vmatpush1.msra.mxu0 %v1223
    %4981 = vmatprep.subr.mxu0 %v1228
    %4982 = vmatpush1.msra.mxu0 %v1227
    %4983 = vmatprep.subr.mxu0 %v1232
    %4984 = vmatpush1.msra.mxu0 %v1231
    %4985 = vmatprep.subr.mxu0 %v1236
    %4986 = vmatpush1.msra.mxu0 %v1235
    %4987 = vmatprep.mubr.f32.mxu0 %v1091
    %4988 = vmatmul.mubr.f32.gmra.mrb[0].mxu0 %v1090
    %v4989 = vpop.f32.mrb[0].mxu0
    %v4990 = vadd.f32 %v4759, %v4989
    %v4991 = vpop.f32.mrb[0].mxu0
    %v4992 = vadd.f32 %v4761, %v4991
    %4993 = vmatprep.mubr.f32.mxu0 %v1094
    %4994 = vmatmul.mubr.f32.gmra.mrb[0].mxu0 %v1093
    %v4995 = vpop.f32.mrb[0].mxu0
    %v4996 = vadd.f32 %v4765, %v4995
    %v4997 = vpop.f32.mrb[0].mxu0
    %v4998 = vadd.f32 %v4767, %v4997
    %4999 = vdwg.mxu0
    %5000 = vmatprep.subr.mxu0 %v1240
    %5001 = vmatpush1.msra.mxu0 %v1239
    %5002 = vmatprep.subr.mxu0 %v1244
    %5003 = vmatpush1.msra.mxu0 %v1243
    %5004 = vmatprep.subr.mxu0 %v1248
    %5005 = vmatpush1.msra.mxu0 %v1247
    %5006 = vmatprep.subr.mxu0 %v1252
    %5007 = vmatpush1.msra.mxu0 %v1251
    %5008 = vmatprep.subr.mxu0 %v1256
    %5009 = vmatpush1.msra.mxu0 %v1255
    %5010 = vmatprep.subr.mxu0 %v1260
    %5011 = vmatpush1.msra.mxu0 %v1259
    %5012 = vmatprep.subr.mxu0 %v1264
    %5013 = vmatpush1.msra.mxu0 %v1263
    %5014 = vmatprep.subr.mxu0 %v1268
    %5015 = vmatpush1.msra.mxu0 %v1267
    %5016 = vmatprep.subr.mxu0 %v1272
    %5017 = vmatpush1.msra.mxu0 %v1271
    %5018 = vmatprep.subr.mxu0 %v1276
    %5019 = vmatpush1.msra.mxu0 %v1275
    %5020 = vmatprep.subr.mxu0 %v1280
    %5021 = vmatpush1.msra.mxu0 %v1279
    %5022 = vmatprep.subr.mxu0 %v1284
    %5023 = vmatpush1.msra.mxu0 %v1283
    %5024 = vmatprep.subr.mxu0 %v1288
    %5025 = vmatpush1.msra.mxu0 %v1287
    %5026 = vmatprep.subr.mxu0 %v1292
    %5027 = vmatpush1.msra.mxu0 %v1291
    %5028 = vmatprep.subr.mxu0 %v1296
    %5029 = vmatpush1.msra.mxu0 %v1295
    %5030 = vmatprep.subr.mxu0 %v1300
    %5031 = vmatpush1.msra.mxu0 %v1299
    %5032 = vmatprep.subr.mxu0 0.0
    %5033 = vmatpush1.msra.mxu0 0.0
    %5034 = vmatprep.subr.mxu0 0.0
    %5035 = vmatpush1.msra.mxu0 0.0
    %5036 = vmatprep.subr.mxu0 0.0
    %5037 = vmatpush1.msra.mxu0 0.0
    %5038 = vmatprep.subr.mxu0 0.0
    %5039 = vmatpush1.msra.mxu0 0.0
    %5040 = vmatprep.subr.mxu0 0.0
    %5041 = vmatpush1.msra.mxu0 0.0
    %5042 = vmatprep.subr.mxu0 0.0
    %5043 = vmatpush1.msra.mxu0 0.0
    %5044 = vmatprep.subr.mxu0 0.0
    %5045 = vmatpush1.msra.mxu0 0.0
    %5046 = vmatprep.subr.mxu0 0.0
    %5047 = vmatpush1.msra.mxu0 0.0
    %5048 = vmatprep.subr.mxu0 0.0
    %5049 = vmatpush1.msra.mxu0 0.0
    %5050 = vmatprep.subr.mxu0 0.0
    %5051 = vmatpush1.msra.mxu0 0.0
    %5052 = vmatprep.subr.mxu0 0.0
    %5053 = vmatpush1.msra.mxu0 0.0
    %5054 = vmatprep.subr.mxu0 0.0
    %5055 = vmatpush1.msra.mxu0 0.0
    %5056 = vmatprep.subr.mxu0 0.0
    %5057 = vmatpush1.msra.mxu0 0.0
    %5058 = vmatprep.subr.mxu0 0.0
    %5059 = vmatpush1.msra.mxu0 0.0
    %5060 = vmatprep.subr.mxu0 0.0
    %5061 = vmatpush1.msra.mxu0 0.0
    %5062 = vmatprep.subr.mxu0 0.0
    %5063 = vmatpush1.msra.mxu0 0.0
    %5064 = vmatprep.mubr.f32.mxu0 0.0
    %5065 = vmatmul.mubr.f32.gmra.mrb[0].mxu0 %v1092
    %v5066 = vpop.f32.mrb[0].mxu0
    %v5067 = vadd.f32 %v4990, %v5066
    %v5068 = vpop.f32.mrb[0].mxu0
    %v5069 = vadd.f32 %v4992, %v5068
    %5070 = vmatprep.mubr.f32.mxu0 0.0
    %5071 = vmatmul.mubr.f32.gmra.mrb[0].mxu0 %v1095
    %v5072 = vpop.f32.mrb[0].mxu0
    %v5073 = vadd.f32 %v4996, %v5072
    %v5074 = vpop.f32.mrb[0].mxu0
    %v5075 = vadd.f32 %v4998, %v5074
    %5076 = vdwg.mxu0
    %5077 = vmatprep.subr.mxu0 %v1114
    %5078 = vmatpush1.msra.mxu0 %v1113
    %5079 = vmatprep.subr.mxu0 %v1118
    %5080 = vmatpush1.msra.mxu0 %v1117
    %5081 = vmatprep.subr.mxu0 %v1122
    %5082 = vmatpush1.msra.mxu0 %v1121
    %5083 = vmatprep.subr.mxu0 %v1126
    %5084 = vmatpush1.msra.mxu0 %v1125
    %5085 = vmatprep.subr.mxu0 %v1130
    %5086 = vmatpush1.msra.mxu0 %v1129
    %5087 = vmatprep.subr.mxu0 %v1134
    %5088 = vmatpush1.msra.mxu0 %v1133
    %5089 = vmatprep.subr.mxu0 %v1138
    %5090 = vmatpush1.msra.mxu0 %v1137
    %5091 = vmatprep.subr.mxu0 %v1142
    %5092 = vmatpush1.msra.mxu0 %v1141
    %5093 = vmatprep.subr.mxu0 %v1146
    %5094 = vmatpush1.msra.mxu0 %v1145
    %5095 = vmatprep.subr.mxu0 %v1150
    %5096 = vmatpush1.msra.mxu0 %v1149
    %5097 = vmatprep.subr.mxu0 %v1154
    %5098 = vmatpush1.msra.mxu0 %v1153
    %5099 = vmatprep.subr.mxu0 %v1158
    %5100 = vmatpush1.msra.mxu0 %v1157
    %5101 = vmatprep.subr.mxu0 %v1162
    %5102 = vmatpush1.msra.mxu0 %v1161
    %5103 = vmatprep.subr.mxu0 %v1166
    %5104 = vmatpush1.msra.mxu0 %v1165
    %5105 = vmatprep.subr.mxu0 %v1170
    %5106 = vmatpush1.msra.mxu0 %v1169
    %5107 = vmatprep.subr.mxu0 %v1174
    %5108 = vmatpush1.msra.mxu0 %v1173
    %5109 = vmatprep.subr.mxu0 %v1178
    %5110 = vmatpush1.msra.mxu0 %v1177
    %5111 = vmatprep.subr.mxu0 %v1182
    %5112 = vmatpush1.msra.mxu0 %v1181
    %5113 = vmatprep.subr.mxu0 %v1186
    %5114 = vmatpush1.msra.mxu0 %v1185
    %5115 = vmatprep.subr.mxu0 %v1190
    %5116 = vmatpush1.msra.mxu0 %v1189
    %5117 = vmatprep.subr.mxu0 %v1194
    %5118 = vmatpush1.msra.mxu0 %v1193
    %5119 = vmatprep.subr.mxu0 %v1198
    %5120 = vmatpush1.msra.mxu0 %v1197
    %5121 = vmatprep.subr.mxu0 %v1202
    %5122 = vmatpush1.msra.mxu0 %v1201
    %5123 = vmatprep.subr.mxu0 %v1206
    %5124 = vmatpush1.msra.mxu0 %v1205
    %5125 = vmatprep.subr.mxu0 %v1210
    %5126 = vmatpush1.msra.mxu0 %v1209
    %5127 = vmatprep.subr.mxu0 %v1214
    %5128 = vmatpush1.msra.mxu0 %v1213
    %5129 = vmatprep.subr.mxu0 %v1218
    %5130 = vmatpush1.msra.mxu0 %v1217
    %5131 = vmatprep.subr.mxu0 %v1222
    %5132 = vmatpush1.msra.mxu0 %v1221
    %5133 = vmatprep.subr.mxu0 %v1226
    %5134 = vmatpush1.msra.mxu0 %v1225
    %5135 = vmatprep.subr.mxu0 %v1230
    %5136 = vmatpush1.msra.mxu0 %v1229
    %5137 = vmatprep.subr.mxu0 %v1234
    %5138 = vmatpush1.msra.mxu0 %v1233
    %5139 = vmatprep.subr.mxu0 %v1238
    %5140 = vmatpush1.msra.mxu0 %v1237
    %5141 = vmatprep.mubr.f32.mxu0 %v1091
    %5142 = vmatmul.mubr.f32.gmra.mrb[0].mxu0 %v1090
    %v5143 = vpop.f32.mrb[0].mxu0
    %v5144 = vadd.f32 %v4913, %v5143
    %v5145 = vpop.f32.mrb[0].mxu0
    %v5146 = vadd.f32 %v4915, %v5145
    %5147 = vmatprep.mubr.f32.mxu0 %v1094
    %5148 = vmatmul.mubr.f32.gmra.mrb[0].mxu0 %v1093
    %v5149 = vpop.f32.mrb[0].mxu0
    %v5150 = vadd.f32 %v4919, %v5149
    %v5151 = vpop.f32.mrb[0].mxu0
    %v5152 = vadd.f32 %v4921, %v5151
    %5153 = vdwg.mxu0
    %5154 = vmatprep.subr.mxu0 %v1242
    %5155 = vmatpush1.msra.mxu0 %v1241
    %5156 = vmatprep.subr.mxu0 %v1246
    %5157 = vmatpush1.msra.mxu0 %v1245
    %5158 = vmatprep.subr.mxu0 %v1250
    %5159 = vmatpush1.msra.mxu0 %v1249
    %5160 = vmatprep.subr.mxu0 %v1254
    %5161 = vmatpush1.msra.mxu0 %v1253
    %5162 = vmatprep.subr.mxu0 %v1258
    %5163 = vmatpush1.msra.mxu0 %v1257
    %5164 = vmatprep.subr.mxu0 %v1262
    %5165 = vmatpush1.msra.mxu0 %v1261
    %5166 = vmatprep.subr.mxu0 %v1266
    %5167 = vmatpush1.msra.mxu0 %v1265
    %5168 = vmatprep.subr.mxu0 %v1270
    %5169 = vmatpush1.msra.mxu0 %v1269
    %5170 = vmatprep.subr.mxu0 %v1274
    %5171 = vmatpush1.msra.mxu0 %v1273
    %5172 = vmatprep.subr.mxu0 %v1278
    %5173 = vmatpush1.msra.mxu0 %v1277
    %5174 = vmatprep.subr.mxu0 %v1282
    %5175 = vmatpush1.msra.mxu0 %v1281
    %5176 = vmatprep.subr.mxu0 %v1286
    %5177 = vmatpush1.msra.mxu0 %v1285
    %5178 = vmatprep.subr.mxu0 %v1290
    %5179 = vmatpush1.msra.mxu0 %v1289
    %5180 = vmatprep.subr.mxu0 %v1294
    %5181 = vmatpush1.msra.mxu0 %v1293
    %5182 = vmatprep.subr.mxu0 %v1298
    %5183 = vmatpush1.msra.mxu0 %v1297
    %5184 = vmatprep.subr.mxu0 %v1302
    %5185 = vmatpush1.msra.mxu0 %v1301
    %5186 = vmatprep.subr.mxu0 0.0
    %5187 = vmatpush1.msra.mxu0 0.0
    %5188 = vmatprep.subr.mxu0 0.0
    %5189 = vmatpush1.msra.mxu0 0.0
    %5190 = vmatprep.subr.mxu0 0.0
    %5191 = vmatpush1.msra.mxu0 0.0
    %5192 = vmatprep.subr.mxu0 0.0
    %5193 = vmatpush1.msra.mxu0 0.0
    %5194 = vmatprep.subr.mxu0 0.0
    %5195 = vmatpush1.msra.mxu0 0.0
    %5196 = vmatprep.subr.mxu0 0.0
    %5197 = vmatpush1.msra.mxu0 0.0
    %5198 = vmatprep.subr.mxu0 0.0
    %5199 = vmatpush1.msra.mxu0 0.0
    %5200 = vmatprep.subr.mxu0 0.0
    %5201 = vmatpush1.msra.mxu0 0.0
    %5202 = vmatprep.subr.mxu0 0.0
    %5203 = vmatpush1.msra.mxu0 0.0
    %5204 = vmatprep.subr.mxu0 0.0
    %5205 = vmatpush1.msra.mxu0 0.0
    %5206 = vmatprep.subr.mxu0 0.0
    %5207 = vmatpush1.msra.mxu0 0.0
    %5208 = vmatprep.subr.mxu0 0.0
    %5209 = vmatpush1.msra.mxu0 0.0
    %5210 = vmatprep.subr.mxu0 0.0
    %5211 = vmatpush1.msra.mxu0 0.0
    %5212 = vmatprep.subr.mxu0 0.0
    %5213 = vmatpush1.msra.mxu0 0.0
    %5214 = vmatprep.subr.mxu0 0.0
    %5215 = vmatpush1.msra.mxu0 0.0
    %5216 = vmatprep.subr.mxu0 0.0
    %5217 = vmatpush1.msra.mxu0 0.0
    %5218 = vmatprep.mubr.f32.mxu0 0.0
    %5219 = vmatmul.mubr.f32.gmra.mrb[0].mxu0 %v1092
    %v5220 = vpop.f32.mrb[0].mxu0
    %v5221 = vadd.f32 %v5144, %v5220
    %v5222 = vpop.f32.mrb[0].mxu0
    %v5223 = vadd.f32 %v5146, %v5222
    %5224 = vmatprep.mubr.f32.mxu0 0.0
    %5225 = vmatmul.mubr.f32.gmra.mrb[0].mxu0 %v1095
    %v5226 = vpop.f32.mrb[0].mxu0
    %v5227 = vadd.f32 %v5150, %v5226
    %v5228 = vpop.f32.mrb[0].mxu0
    %v5229 = vadd.f32 %v5152, %v5228
    %5230 = vdwg.mxu0
    %5231 = vmatprep.subr.mxu0 %v1498
    %5232 = vmatpush1.msra.mxu0 %v1497
    %5233 = vmatprep.subr.mxu0 %v1502
    %5234 = vmatpush1.msra.mxu0 %v1501
    %5235 = vmatprep.subr.mxu0 %v1506
    %5236 = vmatpush1.msra.mxu0 %v1505
    %5237 = vmatprep.subr.mxu0 %v1510
    %5238 = vmatpush1.msra.mxu0 %v1509
    %5239 = vmatprep.subr.mxu0 %v1514
    %5240 = vmatpush1.msra.mxu0 %v1513
    %5241 = vmatprep.subr.mxu0 %v1518
    %5242 = vmatpush1.msra.mxu0 %v1517
    %5243 = vmatprep.subr.mxu0 %v1522
    %5244 = vmatpush1.msra.mxu0 %v1521
    %5245 = vmatprep.subr.mxu0 %v1526
    %5246 = vmatpush1.msra.mxu0 %v1525
    %5247 = vmatprep.subr.mxu0 %v1530
    %5248 = vmatpush1.msra.mxu0 %v1529
    %5249 = vmatprep.subr.mxu0 %v1534
    %5250 = vmatpush1.msra.mxu0 %v1533
    %5251 = vmatprep.subr.mxu0 %v1538
    %5252 = vmatpush1.msra.mxu0 %v1537
    %5253 = vmatprep.subr.mxu0 %v1542
    %5254 = vmatpush1.msra.mxu0 %v1541
    %5255 = vmatprep.subr.mxu0 %v1546
    %5256 = vmatpush1.msra.mxu0 %v1545
    %5257 = vmatprep.subr.mxu0 %v1550
    %5258 = vmatpush1.msra.mxu0 %v1549
    %5259 = vmatprep.subr.mxu0 %v1554
    %5260 = vmatpush1.msra.mxu0 %v1553
    %5261 = vmatprep.subr.mxu0 %v1558
    %5262 = vmatpush1.msra.mxu0 %v1557
    %5263 = vmatprep.subr.mxu0 %v1562
    %5264 = vmatpush1.msra.mxu0 %v1561
    %5265 = vmatprep.subr.mxu0 %v1566
    %5266 = vmatpush1.msra.mxu0 %v1565
    %5267 = vmatprep.subr.mxu0 %v1570
    %5268 = vmatpush1.msra.mxu0 %v1569
    %5269 = vmatprep.subr.mxu0 %v1574
    %5270 = vmatpush1.msra.mxu0 %v1573
    %5271 = vmatprep.subr.mxu0 %v1578
    %5272 = vmatpush1.msra.mxu0 %v1577
    %5273 = vmatprep.subr.mxu0 %v1582
    %5274 = vmatpush1.msra.mxu0 %v1581
    %5275 = vmatprep.subr.mxu0 %v1586
    %5276 = vmatpush1.msra.mxu0 %v1585
    %5277 = vmatprep.subr.mxu0 %v1590
    %5278 = vmatpush1.msra.mxu0 %v1589
    %5279 = vmatprep.subr.mxu0 %v1594
    %5280 = vmatpush1.msra.mxu0 %v1593
    %5281 = vmatprep.subr.mxu0 %v1598
    %5282 = vmatpush1.msra.mxu0 %v1597
    %5283 = vmatprep.subr.mxu0 %v1602
    %5284 = vmatpush1.msra.mxu0 %v1601
    %5285 = vmatprep.subr.mxu0 %v1606
    %5286 = vmatpush1.msra.mxu0 %v1605
    %5287 = vmatprep.subr.mxu0 %v1610
    %5288 = vmatpush1.msra.mxu0 %v1609
    %5289 = vmatprep.subr.mxu0 %v1614
    %5290 = vmatpush1.msra.mxu0 %v1613
    %5291 = vmatprep.subr.mxu0 %v1618
    %5292 = vmatpush1.msra.mxu0 %v1617
    %5293 = vmatprep.subr.mxu0 %v1622
    %5294 = vmatpush1.msra.mxu0 %v1621
    %5295 = vmatprep.mubr.f32.mxu0 %v1097
    %5296 = vmatmul.mubr.f32.gmra.mrb[0].mxu0 %v1096
    %v5297 = vpop.f32.mrb[0].mxu0
    %v5298 = vadd.f32 0.0, %v5297
    %v5299 = vpop.f32.mrb[0].mxu0
    %v5300 = vadd.f32 0.0, %v5299
    %5301 = vmatprep.mubr.f32.mxu0 %v1100
    %5302 = vmatmul.mubr.f32.gmra.mrb[0].mxu0 %v1099
    %v5303 = vpop.f32.mrb[0].mxu0
    %v5304 = vadd.f32 0.0, %v5303
    %v5305 = vpop.f32.mrb[0].mxu0
    %v5306 = vadd.f32 0.0, %v5305
    %5307 = vdwg.mxu0
    %5308 = vmatprep.subr.mxu0 %v1626
    %5309 = vmatpush1.msra.mxu0 %v1625
    %5310 = vmatprep.subr.mxu0 %v1630
    %5311 = vmatpush1.msra.mxu0 %v1629
    %5312 = vmatprep.subr.mxu0 %v1634
    %5313 = vmatpush1.msra.mxu0 %v1633
    %5314 = vmatprep.subr.mxu0 %v1638
    %5315 = vmatpush1.msra.mxu0 %v1637
    %5316 = vmatprep.subr.mxu0 %v1642
    %5317 = vmatpush1.msra.mxu0 %v1641
    %5318 = vmatprep.subr.mxu0 %v1646
    %5319 = vmatpush1.msra.mxu0 %v1645
    %5320 = vmatprep.subr.mxu0 %v1650
    %5321 = vmatpush1.msra.mxu0 %v1649
    %5322 = vmatprep.subr.mxu0 %v1654
    %5323 = vmatpush1.msra.mxu0 %v1653
    %5324 = vmatprep.subr.mxu0 %v1658
    %5325 = vmatpush1.msra.mxu0 %v1657
    %5326 = vmatprep.subr.mxu0 %v1662
    %5327 = vmatpush1.msra.mxu0 %v1661
    %5328 = vmatprep.subr.mxu0 %v1666
    %5329 = vmatpush1.msra.mxu0 %v1665
    %5330 = vmatprep.subr.mxu0 %v1670
    %5331 = vmatpush1.msra.mxu0 %v1669
    %5332 = vmatprep.subr.mxu0 %v1674
    %5333 = vmatpush1.msra.mxu0 %v1673
    %5334 = vmatprep.subr.mxu0 %v1678
    %5335 = vmatpush1.msra.mxu0 %v1677
    %5336 = vmatprep.subr.mxu0 %v1682
    %5337 = vmatpush1.msra.mxu0 %v1681
    %5338 = vmatprep.subr.mxu0 %v1686
    %5339 = vmatpush1.msra.mxu0 %v1685
    %5340 = vmatprep.subr.mxu0 0.0
    %5341 = vmatpush1.msra.mxu0 0.0
    %5342 = vmatprep.subr.mxu0 0.0
    %5343 = vmatpush1.msra.mxu0 0.0
    %5344 = vmatprep.subr.mxu0 0.0
    %5345 = vmatpush1.msra.mxu0 0.0
    %5346 = vmatprep.subr.mxu0 0.0
    %5347 = vmatpush1.msra.mxu0 0.0
    %5348 = vmatprep.subr.mxu0 0.0
    %5349 = vmatpush1.msra.mxu0 0.0
    %5350 = vmatprep.subr.mxu0 0.0
    %5351 = vmatpush1.msra.mxu0 0.0
    %5352 = vmatprep.subr.mxu0 0.0
    %5353 = vmatpush1.msra.mxu0 0.0
    %5354 = vmatprep.subr.mxu0 0.0
    %5355 = vmatpush1.msra.mxu0 0.0
    %5356 = vmatprep.subr.mxu0 0.0
    %5357 = vmatpush1.msra.mxu0 0.0
    %5358 = vmatprep.subr.mxu0 0.0
    %5359 = vmatpush1.msra.mxu0 0.0
    %5360 = vmatprep.subr.mxu0 0.0
    %5361 = vmatpush1.msra.mxu0 0.0
    %5362 = vmatprep.subr.mxu0 0.0
    %5363 = vmatpush1.msra.mxu0 0.0
    %5364 = vmatprep.subr.mxu0 0.0
    %5365 = vmatpush1.msra.mxu0 0.0
    %5366 = vmatprep.subr.mxu0 0.0
    %5367 = vmatpush1.msra.mxu0 0.0
    %5368 = vmatprep.subr.mxu0 0.0
    %5369 = vmatpush1.msra.mxu0 0.0
    %5370 = vmatprep.subr.mxu0 0.0
    %5371 = vmatpush1.msra.mxu0 0.0
    %5372 = vmatprep.mubr.f32.mxu0 0.0
    %5373 = vmatmul.mubr.f32.gmra.mrb[0].mxu0 %v1098
    %v5374 = vpop.f32.mrb[0].mxu0
    %v5375 = vadd.f32 %v5298, %v5374
    %v5376 = vpop.f32.mrb[0].mxu0
    %v5377 = vadd.f32 %v5300, %v5376
    %5378 = vmatprep.mubr.f32.mxu0 0.0
    %5379 = vmatmul.mubr.f32.gmra.mrb[0].mxu0 %v1101
    %v5380 = vpop.f32.mrb[0].mxu0
    %v5381 = vadd.f32 %v5304, %v5380
    %v5382 = vpop.f32.mrb[0].mxu0
    %v5383 = vadd.f32 %v5306, %v5382
    %5384 = vdwg.mxu0
    %5385 = vmatprep.subr.mxu0 %v1500
    %5386 = vmatpush1.msra.mxu0 %v1499
    %5387 = vmatprep.subr.mxu0 %v1504
    %5388 = vmatpush1.msra.mxu0 %v1503
    %5389 = vmatprep.subr.mxu0 %v1508
    %5390 = vmatpush1.msra.mxu0 %v1507
    %5391 = vmatprep.subr.mxu0 %v1512
    %5392 = vmatpush1.msra.mxu0 %v1511
    %5393 = vmatprep.subr.mxu0 %v1516
    %5394 = vmatpush1.msra.mxu0 %v1515
    %5395 = vmatprep.subr.mxu0 %v1520
    %5396 = vmatpush1.msra.mxu0 %v1519
    %5397 = vmatprep.subr.mxu0 %v1524
    %5398 = vmatpush1.msra.mxu0 %v1523
    %5399 = vmatprep.subr.mxu0 %v1528
    %5400 = vmatpush1.msra.mxu0 %v1527
    %5401 = vmatprep.subr.mxu0 %v1532
    %5402 = vmatpush1.msra.mxu0 %v1531
    %5403 = vmatprep.subr.mxu0 %v1536
    %5404 = vmatpush1.msra.mxu0 %v1535
    %5405 = vmatprep.subr.mxu0 %v1540
    %5406 = vmatpush1.msra.mxu0 %v1539
    %5407 = vmatprep.subr.mxu0 %v1544
    %5408 = vmatpush1.msra.mxu0 %v1543
    %5409 = vmatprep.subr.mxu0 %v1548
    %5410 = vmatpush1.msra.mxu0 %v1547
    %5411 = vmatprep.subr.mxu0 %v1552
    %5412 = vmatpush1.msra.mxu0 %v1551
    %5413 = vmatprep.subr.mxu0 %v1556
    %5414 = vmatpush1.msra.mxu0 %v1555
    %5415 = vmatprep.subr.mxu0 %v1560
    %5416 = vmatpush1.msra.mxu0 %v1559
    %5417 = vmatprep.subr.mxu0 %v1564
    %5418 = vmatpush1.msra.mxu0 %v1563
    %5419 = vmatprep.subr.mxu0 %v1568
    %5420 = vmatpush1.msra.mxu0 %v1567
    %5421 = vmatprep.subr.mxu0 %v1572
    %5422 = vmatpush1.msra.mxu0 %v1571
    %5423 = vmatprep.subr.mxu0 %v1576
    %5424 = vmatpush1.msra.mxu0 %v1575
    %5425 = vmatprep.subr.mxu0 %v1580
    %5426 = vmatpush1.msra.mxu0 %v1579
    %5427 = vmatprep.subr.mxu0 %v1584
    %5428 = vmatpush1.msra.mxu0 %v1583
    %5429 = vmatprep.subr.mxu0 %v1588
    %5430 = vmatpush1.msra.mxu0 %v1587
    %5431 = vmatprep.subr.mxu0 %v1592
    %5432 = vmatpush1.msra.mxu0 %v1591
    %5433 = vmatprep.subr.mxu0 %v1596
    %5434 = vmatpush1.msra.mxu0 %v1595
    %5435 = vmatprep.subr.mxu0 %v1600
    %5436 = vmatpush1.msra.mxu0 %v1599
    %5437 = vmatprep.subr.mxu0 %v1604
    %5438 = vmatpush1.msra.mxu0 %v1603
    %5439 = vmatprep.subr.mxu0 %v1608
    %5440 = vmatpush1.msra.mxu0 %v1607
    %5441 = vmatprep.subr.mxu0 %v1612
    %5442 = vmatpush1.msra.mxu0 %v1611
    %5443 = vmatprep.subr.mxu0 %v1616
    %5444 = vmatpush1.msra.mxu0 %v1615
    %5445 = vmatprep.subr.mxu0 %v1620
    %5446 = vmatpush1.msra.mxu0 %v1619
    %5447 = vmatprep.subr.mxu0 %v1624
    %5448 = vmatpush1.msra.mxu0 %v1623
    %5449 = vmatprep.mubr.f32.mxu0 %v1097
    %5450 = vmatmul.mubr.f32.gmra.mrb[0].mxu0 %v1096
    %v5451 = vpop.f32.mrb[0].mxu0
    %v5452 = vadd.f32 0.0, %v5451
    %v5453 = vpop.f32.mrb[0].mxu0
    %v5454 = vadd.f32 0.0, %v5453
    %5455 = vmatprep.mubr.f32.mxu0 %v1100
    %5456 = vmatmul.mubr.f32.gmra.mrb[0].mxu0 %v1099
    %v5457 = vpop.f32.mrb[0].mxu0
    %v5458 = vadd.f32 0.0, %v5457
    %v5459 = vpop.f32.mrb[0].mxu0
    %v5460 = vadd.f32 0.0, %v5459
    %5461 = vdwg.mxu0
    %5462 = vmatprep.subr.mxu0 %v1628
    %5463 = vmatpush1.msra.mxu0 %v1627
    %5464 = vmatprep.subr.mxu0 %v1632
    %5465 = vmatpush1.msra.mxu0 %v1631
    %5466 = vmatprep.subr.mxu0 %v1636
    %5467 = vmatpush1.msra.mxu0 %v1635
    %5468 = vmatprep.subr.mxu0 %v1640
    %5469 = vmatpush1.msra.mxu0 %v1639
    %5470 = vmatprep.subr.mxu0 %v1644
    %5471 = vmatpush1.msra.mxu0 %v1643
    %5472 = vmatprep.subr.mxu0 %v1648
    %5473 = vmatpush1.msra.mxu0 %v1647
    %5474 = vmatprep.subr.mxu0 %v1652
    %5475 = vmatpush1.msra.mxu0 %v1651
    %5476 = vmatprep.subr.mxu0 %v1656
    %5477 = vmatpush1.msra.mxu0 %v1655
    %5478 = vmatprep.subr.mxu0 %v1660
    %5479 = vmatpush1.msra.mxu0 %v1659
    %5480 = vmatprep.subr.mxu0 %v1664
    %5481 = vmatpush1.msra.mxu0 %v1663
    %5482 = vmatprep.subr.mxu0 %v1668
    %5483 = vmatpush1.msra.mxu0 %v1667
    %5484 = vmatprep.subr.mxu0 %v1672
    %5485 = vmatpush1.msra.mxu0 %v1671
    %5486 = vmatprep.subr.mxu0 %v1676
    %5487 = vmatpush1.msra.mxu0 %v1675
    %5488 = vmatprep.subr.mxu0 %v1680
    %5489 = vmatpush1.msra.mxu0 %v1679
    %5490 = vmatprep.subr.mxu0 %v1684
    %5491 = vmatpush1.msra.mxu0 %v1683
    %5492 = vmatprep.subr.mxu0 %v1688
    %5493 = vmatpush1.msra.mxu0 %v1687
    %5494 = vmatprep.subr.mxu0 0.0
    %5495 = vmatpush1.msra.mxu0 0.0
    %5496 = vmatprep.subr.mxu0 0.0
    %5497 = vmatpush1.msra.mxu0 0.0
    %5498 = vmatprep.subr.mxu0 0.0
    %5499 = vmatpush1.msra.mxu0 0.0
    %5500 = vmatprep.subr.mxu0 0.0
    %5501 = vmatpush1.msra.mxu0 0.0
    %5502 = vmatprep.subr.mxu0 0.0
    %5503 = vmatpush1.msra.mxu0 0.0
    %5504 = vmatprep.subr.mxu0 0.0
    %5505 = vmatpush1.msra.mxu0 0.0
    %5506 = vmatprep.subr.mxu0 0.0
    %5507 = vmatpush1.msra.mxu0 0.0
    %5508 = vmatprep.subr.mxu0 0.0
    %5509 = vmatpush1.msra.mxu0 0.0
    %5510 = vmatprep.subr.mxu0 0.0
    %5511 = vmatpush1.msra.mxu0 0.0
    %5512 = vmatprep.subr.mxu0 0.0
    %5513 = vmatpush1.msra.mxu0 0.0
    %5514 = vmatprep.subr.mxu0 0.0
    %5515 = vmatpush1.msra.mxu0 0.0
    %5516 = vmatprep.subr.mxu0 0.0
    %5517 = vmatpush1.msra.mxu0 0.0
    %5518 = vmatprep.subr.mxu0 0.0
    %5519 = vmatpush1.msra.mxu0 0.0
    %5520 = vmatprep.subr.mxu0 0.0
    %5521 = vmatpush1.msra.mxu0 0.0
    %5522 = vmatprep.subr.mxu0 0.0
    %5523 = vmatpush1.msra.mxu0 0.0
    %5524 = vmatprep.subr.mxu0 0.0
    %5525 = vmatpush1.msra.mxu0 0.0
    %5526 = vmatprep.mubr.f32.mxu0 0.0
    %5527 = vmatmul.mubr.f32.gmra.mrb[0].mxu0 %v1098
    %v5528 = vpop.f32.mrb[0].mxu0
    %v5529 = vadd.f32 %v5452, %v5528
    %v5530 = vpop.f32.mrb[0].mxu0
    %v5531 = vadd.f32 %v5454, %v5530
    %5532 = vmatprep.mubr.f32.mxu0 0.0
    %5533 = vmatmul.mubr.f32.gmra.mrb[0].mxu0 %v1101
    %v5534 = vpop.f32.mrb[0].mxu0
    %v5535 = vadd.f32 %v5458, %v5534
    %v5536 = vpop.f32.mrb[0].mxu0
    %v5537 = vadd.f32 %v5460, %v5536
    %5538 = vdwg.mxu0
    %v5539 = vadd.f32 %v5067, %v5375
    %v5540 = vadd.f32 %v5069, %v5377
    %v5541 = vadd.f32 %v5221, %v5529
    %v5542 = vadd.f32 %v5223, %v5531
    %v5543 = vadd.f32 %v5073, %v5381
    %v5544 = vadd.f32 %v5075, %v5383
    %v5545 = vadd.f32 %v5227, %v5535
    %v5546 = vadd.f32 %v5229, %v5537
    %5547 = vmatprep.subr.mxu0 %v1691
    %5548 = vmatpush1.msra.mxu0 %v1690
    %5549 = vmatprep.subr.mxu0 %v1695
    %5550 = vmatpush1.msra.mxu0 %v1694
    %5551 = vmatprep.subr.mxu0 %v1699
    %5552 = vmatpush1.msra.mxu0 %v1698
    %5553 = vmatprep.subr.mxu0 %v1703
    %5554 = vmatpush1.msra.mxu0 %v1702
    %5555 = vmatprep.subr.mxu0 %v1707
    %5556 = vmatpush1.msra.mxu0 %v1706
    %5557 = vmatprep.subr.mxu0 %v1711
    %5558 = vmatpush1.msra.mxu0 %v1710
    %5559 = vmatprep.subr.mxu0 %v1715
    %5560 = vmatpush1.msra.mxu0 %v1714
    %5561 = vmatprep.subr.mxu0 %v1719
    %5562 = vmatpush1.msra.mxu0 %v1718
    %5563 = vmatprep.subr.mxu0 %v1723
    %5564 = vmatpush1.msra.mxu0 %v1722
    %5565 = vmatprep.subr.mxu0 %v1727
    %5566 = vmatpush1.msra.mxu0 %v1726
    %5567 = vmatprep.subr.mxu0 %v1731
    %5568 = vmatpush1.msra.mxu0 %v1730
    %5569 = vmatprep.subr.mxu0 %v1735
    %5570 = vmatpush1.msra.mxu0 %v1734
    %5571 = vmatprep.subr.mxu0 %v1739
    %5572 = vmatpush1.msra.mxu0 %v1738
    %5573 = vmatprep.subr.mxu0 %v1743
    %5574 = vmatpush1.msra.mxu0 %v1742
    %5575 = vmatprep.subr.mxu0 %v1747
    %5576 = vmatpush1.msra.mxu0 %v1746
    %5577 = vmatprep.subr.mxu0 %v1751
    %5578 = vmatpush1.msra.mxu0 %v1750
    %5579 = vmatprep.subr.mxu0 %v1755
    %5580 = vmatpush1.msra.mxu0 %v1754
    %5581 = vmatprep.subr.mxu0 %v1759
    %5582 = vmatpush1.msra.mxu0 %v1758
    %5583 = vmatprep.subr.mxu0 %v1763
    %5584 = vmatpush1.msra.mxu0 %v1762
    %5585 = vmatprep.subr.mxu0 %v1767
    %5586 = vmatpush1.msra.mxu0 %v1766
    %5587 = vmatprep.subr.mxu0 %v1771
    %5588 = vmatpush1.msra.mxu0 %v1770
    %5589 = vmatprep.subr.mxu0 %v1775
    %5590 = vmatpush1.msra.mxu0 %v1774
    %5591 = vmatprep.subr.mxu0 %v1779
    %5592 = vmatpush1.msra.mxu0 %v1778
    %5593 = vmatprep.subr.mxu0 %v1783
    %5594 = vmatpush1.msra.mxu0 %v1782
    %5595 = vmatprep.subr.mxu0 %v1787
    %5596 = vmatpush1.msra.mxu0 %v1786
    %5597 = vmatprep.subr.mxu0 %v1791
    %5598 = vmatpush1.msra.mxu0 %v1790
    %5599 = vmatprep.subr.mxu0 %v1795
    %5600 = vmatpush1.msra.mxu0 %v1794
    %5601 = vmatprep.subr.mxu0 %v1799
    %5602 = vmatpush1.msra.mxu0 %v1798
    %5603 = vmatprep.subr.mxu0 %v1803
    %5604 = vmatpush1.msra.mxu0 %v1802
    %5605 = vmatprep.subr.mxu0 %v1807
    %5606 = vmatpush1.msra.mxu0 %v1806
    %5607 = vmatprep.subr.mxu0 %v1811
    %5608 = vmatpush1.msra.mxu0 %v1810
    %5609 = vmatprep.subr.mxu0 %v1815
    %5610 = vmatpush1.msra.mxu0 %v1814
    %5611 = vmatprep.mubr.f32.mxu0 %v1100
    %5612 = vmatmul.mubr.f32.gmra.mrb[0].mxu0 %v1099
    %v5613 = vpop.f32.mrb[0].mxu0
    %v5614 = vadd.f32 0.0, %v5613
    %v5615 = vpop.f32.mrb[0].mxu0
    %v5616 = vadd.f32 0.0, %v5615
    %5617 = vmatprep.mubr.f32.mxu0 %v1103
    %5618 = vmatmul.mubr.f32.gmra.mrb[0].mxu0 %v1102
    %v5619 = vpop.f32.mrb[0].mxu0
    %v5620 = vadd.f32 0.0, %v5619
    %v5621 = vpop.f32.mrb[0].mxu0
    %v5622 = vadd.f32 0.0, %v5621
    %5623 = vdwg.mxu0
    %5624 = vmatprep.subr.mxu0 %v1819
    %5625 = vmatpush1.msra.mxu0 %v1818
    %5626 = vmatprep.subr.mxu0 %v1823
    %5627 = vmatpush1.msra.mxu0 %v1822
    %5628 = vmatprep.subr.mxu0 %v1827
    %5629 = vmatpush1.msra.mxu0 %v1826
    %5630 = vmatprep.subr.mxu0 %v1831
    %5631 = vmatpush1.msra.mxu0 %v1830
    %5632 = vmatprep.subr.mxu0 %v1835
    %5633 = vmatpush1.msra.mxu0 %v1834
    %5634 = vmatprep.subr.mxu0 %v1839
    %5635 = vmatpush1.msra.mxu0 %v1838
    %5636 = vmatprep.subr.mxu0 %v1843
    %5637 = vmatpush1.msra.mxu0 %v1842
    %5638 = vmatprep.subr.mxu0 %v1847
    %5639 = vmatpush1.msra.mxu0 %v1846
    %5640 = vmatprep.subr.mxu0 %v1851
    %5641 = vmatpush1.msra.mxu0 %v1850
    %5642 = vmatprep.subr.mxu0 %v1855
    %5643 = vmatpush1.msra.mxu0 %v1854
    %5644 = vmatprep.subr.mxu0 %v1859
    %5645 = vmatpush1.msra.mxu0 %v1858
    %5646 = vmatprep.subr.mxu0 %v1863
    %5647 = vmatpush1.msra.mxu0 %v1862
    %5648 = vmatprep.subr.mxu0 %v1867
    %5649 = vmatpush1.msra.mxu0 %v1866
    %5650 = vmatprep.subr.mxu0 %v1871
    %5651 = vmatpush1.msra.mxu0 %v1870
    %5652 = vmatprep.subr.mxu0 %v1875
    %5653 = vmatpush1.msra.mxu0 %v1874
    %5654 = vmatprep.subr.mxu0 %v1879
    %5655 = vmatpush1.msra.mxu0 %v1878
    %5656 = vmatprep.subr.mxu0 0.0
    %5657 = vmatpush1.msra.mxu0 0.0
    %5658 = vmatprep.subr.mxu0 0.0
    %5659 = vmatpush1.msra.mxu0 0.0
    %5660 = vmatprep.subr.mxu0 0.0
    %5661 = vmatpush1.msra.mxu0 0.0
    %5662 = vmatprep.subr.mxu0 0.0
    %5663 = vmatpush1.msra.mxu0 0.0
    %5664 = vmatprep.subr.mxu0 0.0
    %5665 = vmatpush1.msra.mxu0 0.0
    %5666 = vmatprep.subr.mxu0 0.0
    %5667 = vmatpush1.msra.mxu0 0.0
    %5668 = vmatprep.subr.mxu0 0.0
    %5669 = vmatpush1.msra.mxu0 0.0
    %5670 = vmatprep.subr.mxu0 0.0
    %5671 = vmatpush1.msra.mxu0 0.0
    %5672 = vmatprep.subr.mxu0 0.0
    %5673 = vmatpush1.msra.mxu0 0.0
    %5674 = vmatprep.subr.mxu0 0.0
    %5675 = vmatpush1.msra.mxu0 0.0
    %5676 = vmatprep.subr.mxu0 0.0
    %5677 = vmatpush1.msra.mxu0 0.0
    %5678 = vmatprep.subr.mxu0 0.0
    %5679 = vmatpush1.msra.mxu0 0.0
    %5680 = vmatprep.subr.mxu0 0.0
    %5681 = vmatpush1.msra.mxu0 0.0
    %5682 = vmatprep.subr.mxu0 0.0
    %5683 = vmatpush1.msra.mxu0 0.0
    %5684 = vmatprep.subr.mxu0 0.0
    %5685 = vmatpush1.msra.mxu0 0.0
    %5686 = vmatprep.subr.mxu0 0.0
    %5687 = vmatpush1.msra.mxu0 0.0
    %5688 = vmatprep.mubr.f32.mxu0 0.0
    %5689 = vmatmul.mubr.f32.gmra.mrb[0].mxu0 %v1101
    %v5690 = vpop.f32.mrb[0].mxu0
    %v5691 = vadd.f32 %v5614, %v5690
    %v5692 = vpop.f32.mrb[0].mxu0
    %v5693 = vadd.f32 %v5616, %v5692
    %5694 = vmatprep.mubr.f32.mxu0 0.0
    %5695 = vmatmul.mubr.f32.gmra.mrb[0].mxu0 %v1104
    %v5696 = vpop.f32.mrb[0].mxu0
    %v5697 = vadd.f32 %v5620, %v5696
    %v5698 = vpop.f32.mrb[0].mxu0
    %v5699 = vadd.f32 %v5622, %v5698
    %5700 = vdwg.mxu0
    %5701 = vmatprep.subr.mxu0 %v1693
    %5702 = vmatpush1.msra.mxu0 %v1692
    %5703 = vmatprep.subr.mxu0 %v1697
    %5704 = vmatpush1.msra.mxu0 %v1696
    %5705 = vmatprep.subr.mxu0 %v1701
    %5706 = vmatpush1.msra.mxu0 %v1700
    %5707 = vmatprep.subr.mxu0 %v1705
    %5708 = vmatpush1.msra.mxu0 %v1704
    %5709 = vmatprep.subr.mxu0 %v1709
    %5710 = vmatpush1.msra.mxu0 %v1708
    %5711 = vmatprep.subr.mxu0 %v1713
    %5712 = vmatpush1.msra.mxu0 %v1712
    %5713 = vmatprep.subr.mxu0 %v1717
    %5714 = vmatpush1.msra.mxu0 %v1716
    %5715 = vmatprep.subr.mxu0 %v1721
    %5716 = vmatpush1.msra.mxu0 %v1720
    %5717 = vmatprep.subr.mxu0 %v1725
    %5718 = vmatpush1.msra.mxu0 %v1724
    %5719 = vmatprep.subr.mxu0 %v1729
    %5720 = vmatpush1.msra.mxu0 %v1728
    %5721 = vmatprep.subr.mxu0 %v1733
    %5722 = vmatpush1.msra.mxu0 %v1732
    %5723 = vmatprep.subr.mxu0 %v1737
    %5724 = vmatpush1.msra.mxu0 %v1736
    %5725 = vmatprep.subr.mxu0 %v1741
    %5726 = vmatpush1.msra.mxu0 %v1740
    %5727 = vmatprep.subr.mxu0 %v1745
    %5728 = vmatpush1.msra.mxu0 %v1744
    %5729 = vmatprep.subr.mxu0 %v1749
    %5730 = vmatpush1.msra.mxu0 %v1748
    %5731 = vmatprep.subr.mxu0 %v1753
    %5732 = vmatpush1.msra.mxu0 %v1752
    %5733 = vmatprep.subr.mxu0 %v1757
    %5734 = vmatpush1.msra.mxu0 %v1756
    %5735 = vmatprep.subr.mxu0 %v1761
    %5736 = vmatpush1.msra.mxu0 %v1760
    %5737 = vmatprep.subr.mxu0 %v1765
    %5738 = vmatpush1.msra.mxu0 %v1764
    %5739 = vmatprep.subr.mxu0 %v1769
    %5740 = vmatpush1.msra.mxu0 %v1768
    %5741 = vmatprep.subr.mxu0 %v1773
    %5742 = vmatpush1.msra.mxu0 %v1772
    %5743 = vmatprep.subr.mxu0 %v1777
    %5744 = vmatpush1.msra.mxu0 %v1776
    %5745 = vmatprep.subr.mxu0 %v1781
    %5746 = vmatpush1.msra.mxu0 %v1780
    %5747 = vmatprep.subr.mxu0 %v1785
    %5748 = vmatpush1.msra.mxu0 %v1784
    %5749 = vmatprep.subr.mxu0 %v1789
    %5750 = vmatpush1.msra.mxu0 %v1788
    %5751 = vmatprep.subr.mxu0 %v1793
    %5752 = vmatpush1.msra.mxu0 %v1792
    %5753 = vmatprep.subr.mxu0 %v1797
    %5754 = vmatpush1.msra.mxu0 %v1796
    %5755 = vmatprep.subr.mxu0 %v1801
    %5756 = vmatpush1.msra.mxu0 %v1800
    %5757 = vmatprep.subr.mxu0 %v1805
    %5758 = vmatpush1.msra.mxu0 %v1804
    %5759 = vmatprep.subr.mxu0 %v1809
    %5760 = vmatpush1.msra.mxu0 %v1808
    %5761 = vmatprep.subr.mxu0 %v1813
    %5762 = vmatpush1.msra.mxu0 %v1812
    %5763 = vmatprep.subr.mxu0 %v1817
    %5764 = vmatpush1.msra.mxu0 %v1816
    %5765 = vmatprep.mubr.f32.mxu0 %v1100
    %5766 = vmatmul.mubr.f32.gmra.mrb[0].mxu0 %v1099
    %v5767 = vpop.f32.mrb[0].mxu0
    %v5768 = vadd.f32 0.0, %v5767
    %v5769 = vpop.f32.mrb[0].mxu0
    %v5770 = vadd.f32 0.0, %v5769
    %5771 = vmatprep.mubr.f32.mxu0 %v1103
    %5772 = vmatmul.mubr.f32.gmra.mrb[0].mxu0 %v1102
    %v5773 = vpop.f32.mrb[0].mxu0
    %v5774 = vadd.f32 0.0, %v5773
    %v5775 = vpop.f32.mrb[0].mxu0
    %v5776 = vadd.f32 0.0, %v5775
    %5777 = vdwg.mxu0
    %5778 = vmatprep.subr.mxu0 %v1821
    %5779 = vmatpush1.msra.mxu0 %v1820
    %5780 = vmatprep.subr.mxu0 %v1825
    %5781 = vmatpush1.msra.mxu0 %v1824
    %5782 = vmatprep.subr.mxu0 %v1829
    %5783 = vmatpush1.msra.mxu0 %v1828
    %5784 = vmatprep.subr.mxu0 %v1833
    %5785 = vmatpush1.msra.mxu0 %v1832
    %5786 = vmatprep.subr.mxu0 %v1837
    %5787 = vmatpush1.msra.mxu0 %v1836
    %5788 = vmatprep.subr.mxu0 %v1841
    %5789 = vmatpush1.msra.mxu0 %v1840
    %5790 = vmatprep.subr.mxu0 %v1845
    %5791 = vmatpush1.msra.mxu0 %v1844
    %5792 = vmatprep.subr.mxu0 %v1849
    %5793 = vmatpush1.msra.mxu0 %v1848
    %5794 = vmatprep.subr.mxu0 %v1853
    %5795 = vmatpush1.msra.mxu0 %v1852
    %5796 = vmatprep.subr.mxu0 %v1857
    %5797 = vmatpush1.msra.mxu0 %v1856
    %5798 = vmatprep.subr.mxu0 %v1861
    %5799 = vmatpush1.msra.mxu0 %v1860
    %5800 = vmatprep.subr.mxu0 %v1865
    %5801 = vmatpush1.msra.mxu0 %v1864
    %5802 = vmatprep.subr.mxu0 %v1869
    %5803 = vmatpush1.msra.mxu0 %v1868
    %5804 = vmatprep.subr.mxu0 %v1873
    %5805 = vmatpush1.msra.mxu0 %v1872
    %5806 = vmatprep.subr.mxu0 %v1877
    %5807 = vmatpush1.msra.mxu0 %v1876
    %5808 = vmatprep.subr.mxu0 %v1881
    %5809 = vmatpush1.msra.mxu0 %v1880
    %5810 = vmatprep.subr.mxu0 0.0
    %5811 = vmatpush1.msra.mxu0 0.0
    %5812 = vmatprep.subr.mxu0 0.0
    %5813 = vmatpush1.msra.mxu0 0.0
    %5814 = vmatprep.subr.mxu0 0.0
    %5815 = vmatpush1.msra.mxu0 0.0
    %5816 = vmatprep.subr.mxu0 0.0
    %5817 = vmatpush1.msra.mxu0 0.0
    %5818 = vmatprep.subr.mxu0 0.0
    %5819 = vmatpush1.msra.mxu0 0.0
    %5820 = vmatprep.subr.mxu0 0.0
    %5821 = vmatpush1.msra.mxu0 0.0
    %5822 = vmatprep.subr.mxu0 0.0
    %5823 = vmatpush1.msra.mxu0 0.0
    %5824 = vmatprep.subr.mxu0 0.0
    %5825 = vmatpush1.msra.mxu0 0.0
    %5826 = vmatprep.subr.mxu0 0.0
    %5827 = vmatpush1.msra.mxu0 0.0
    %5828 = vmatprep.subr.mxu0 0.0
    %5829 = vmatpush1.msra.mxu0 0.0
    %5830 = vmatprep.subr.mxu0 0.0
    %5831 = vmatpush1.msra.mxu0 0.0
    %5832 = vmatprep.subr.mxu0 0.0
    %5833 = vmatpush1.msra.mxu0 0.0
    %5834 = vmatprep.subr.mxu0 0.0
    %5835 = vmatpush1.msra.mxu0 0.0
    %5836 = vmatprep.subr.mxu0 0.0
    %5837 = vmatpush1.msra.mxu0 0.0
    %5838 = vmatprep.subr.mxu0 0.0
    %5839 = vmatpush1.msra.mxu0 0.0
    %5840 = vmatprep.subr.mxu0 0.0
    %5841 = vmatpush1.msra.mxu0 0.0
    %5842 = vmatprep.mubr.f32.mxu0 0.0
    %5843 = vmatmul.mubr.f32.gmra.mrb[0].mxu0 %v1101
    %v5844 = vpop.f32.mrb[0].mxu0
    %v5845 = vadd.f32 %v5768, %v5844
    %v5846 = vpop.f32.mrb[0].mxu0
    %v5847 = vadd.f32 %v5770, %v5846
    %5848 = vmatprep.mubr.f32.mxu0 0.0
    %5849 = vmatmul.mubr.f32.gmra.mrb[0].mxu0 %v1104
    %v5850 = vpop.f32.mrb[0].mxu0
    %v5851 = vadd.f32 %v5774, %v5850
    %v5852 = vpop.f32.mrb[0].mxu0
    %v5853 = vadd.f32 %v5776, %v5852
    %5854 = vdwg.mxu0
    %v5855 = vadd.f32 %v5539, %v5691
    %v5856 = vadd.f32 %v5540, %v5693
    %v5857 = vadd.f32 %v5541, %v5845
    %v5858 = vadd.f32 %v5542, %v5847
    %v5859 = vadd.f32 %v5543, %v5697
    %v5860 = vadd.f32 %v5544, %v5699
    %v5861 = vadd.f32 %v5545, %v5851
    %v5862 = vadd.f32 %v5546, %v5853
    %v5863 = vmax.f32 %v5855, %v5857
    %v5864 = vmax.f32 %v5856, %v5858
    %v5865 = vmax.f32 %v5859, %v5861
    %v5866 = vmax.f32 %v5860, %v5862
    %v5867 = vmax.f32 %v5863, %v5865
    %v5868 = vmax.f32 %v5864, %v5866
    %v5869 = vadd.f32 %v5867, %v3141
    %v5870 = vadd.f32 %v5868, %v3145
    %v5871 = vmax.f32 %v5869, 0.0
    %v5872 = vmax.f32 %v5870, 0.0
    %s5873 = scalar_lea.vmem [#allocation9], 512
    %v5874 = vld [vmem:[%s5873] sm:$0xff]
    %v5875 = vld [vmem:[%s5873 + $0x8] sm:$0xff]
    %v5876 = vld [vmem:[%s5873 + $0x10] sm:$0xff]
    %v5877 = vld [vmem:[%s5873 + $0x18] sm:$0xff]
    %v5878 = vld [vmem:[%s5873 + $0x20] sm:$0xff]
    %v5879 = vld [vmem:[%s5873 + $0x28] sm:$0xff]
    %v5880 = vld [vmem:[%s5873 + $0x30] sm:$0xff]
    %v5881 = vld [vmem:[%s5873 + $0x38] sm:$0xff]
    %v5882 = vld [vmem:[%s5873 + $0x40] sm:$0xff]
    %v5883 = vld [vmem:[%s5873 + $0x48] sm:$0xff]
    %v5884 = vld [vmem:[%s5873 + $0x50] sm:$0xff]
    %v5885 = vld [vmem:[%s5873 + $0x58] sm:$0xff]
    %v5886 = vld [vmem:[%s5873 + $0x60] sm:$0xff]
    %v5887 = vld [vmem:[%s5873 + $0x68] sm:$0xff]
    %v5888 = vld [vmem:[%s5873 + $0x70] sm:$0xff]
    %v5889 = vld [vmem:[%s5873 + $0x78] sm:$0xff]
    %v5890 = vld [vmem:[%s5873 + $0x80] sm:$0xff]
    %v5891 = vld [vmem:[%s5873 + $0x88] sm:$0xff]
    %v5892 = vld [vmem:[%s5873 + $0x90] sm:$0xff]
    %v5893 = vld [vmem:[%s5873 + $0x98] sm:$0xff]
    %v5894 = vld [vmem:[%s5873 + $0xa0] sm:$0xff]
    %v5895 = vld [vmem:[%s5873 + $0xa8] sm:$0xff]
    %v5896 = vld [vmem:[%s5873 + $0xb0] sm:$0xff]
    %v5897 = vld [vmem:[%s5873 + $0xb8] sm:$0xff]
    %v5898 = vld [vmem:[%s5873 + $0xc0] sm:$0xff]
    %v5899 = vld [vmem:[%s5873 + $0xc8] sm:$0xff]
    %v5900 = vld [vmem:[%s5873 + $0xd0] sm:$0xff]
    %v5901 = vld [vmem:[%s5873 + $0xd8] sm:$0xff]
    %v5902 = vld [vmem:[%s5873 + $0xe0] sm:$0xff]
    %v5903 = vld [vmem:[%s5873 + $0xe8] sm:$0xff]
    %v5904 = vld [vmem:[%s5873 + $0xf0] sm:$0xff]
    %v5905 = vld [vmem:[%s5873 + $0xf8] sm:$0xff]
    %5906 = vmatprep.subr.mxu0 0.0
    %5907 = vmatpush1.msra.mxu0 %v5874
    %5908 = vmatprep.subr.mxu0 0.0
    %5909 = vmatpush1.msra.mxu0 %v5875
    %5910 = vmatprep.subr.mxu0 0.0
    %5911 = vmatpush1.msra.mxu0 %v5876
    %5912 = vmatprep.subr.mxu0 0.0
    %5913 = vmatpush1.msra.mxu0 %v5877
    %5914 = vmatprep.subr.mxu0 0.0
    %5915 = vmatpush1.msra.mxu0 %v5878
    %5916 = vmatprep.subr.mxu0 0.0
    %5917 = vmatpush1.msra.mxu0 %v5879
    %5918 = vmatprep.subr.mxu0 0.0
    %5919 = vmatpush1.msra.mxu0 %v5880
    %5920 = vmatprep.subr.mxu0 0.0
    %5921 = vmatpush1.msra.mxu0 %v5881
    %5922 = vmatprep.subr.mxu0 0.0
    %5923 = vmatpush1.msra.mxu0 %v5882
    %5924 = vmatprep.subr.mxu0 0.0
    %5925 = vmatpush1.msra.mxu0 %v5883
    %5926 = vmatprep.subr.mxu0 0.0
    %5927 = vmatpush1.msra.mxu0 %v5884
    %5928 = vmatprep.subr.mxu0 0.0
    %5929 = vmatpush1.msra.mxu0 %v5885
    %5930 = vmatprep.subr.mxu0 0.0
    %5931 = vmatpush1.msra.mxu0 %v5886
    %5932 = vmatprep.subr.mxu0 0.0
    %5933 = vmatpush1.msra.mxu0 %v5887
    %5934 = vmatprep.subr.mxu0 0.0
    %5935 = vmatpush1.msra.mxu0 %v5888
    %5936 = vmatprep.subr.mxu0 0.0
    %5937 = vmatpush1.msra.mxu0 %v5889
    %5938 = vmatprep.subr.mxu0 0.0
    %5939 = vmatpush1.msra.mxu0 %v5890
    %5940 = vmatprep.subr.mxu0 0.0
    %5941 = vmatpush1.msra.mxu0 %v5891
    %5942 = vmatprep.subr.mxu0 0.0
    %5943 = vmatpush1.msra.mxu0 %v5892
    %5944 = vmatprep.subr.mxu0 0.0
    %5945 = vmatpush1.msra.mxu0 %v5893
    %5946 = vmatprep.subr.mxu0 0.0
    %5947 = vmatpush1.msra.mxu0 %v5894
    %5948 = vmatprep.subr.mxu0 0.0
    %5949 = vmatpush1.msra.mxu0 %v5895
    %5950 = vmatprep.subr.mxu0 0.0
    %5951 = vmatpush1.msra.mxu0 %v5896
    %5952 = vmatprep.subr.mxu0 0.0
    %5953 = vmatpush1.msra.mxu0 %v5897
    %5954 = vmatprep.subr.mxu0 0.0
    %5955 = vmatpush1.msra.mxu0 %v5898
    %5956 = vmatprep.subr.mxu0 0.0
    %5957 = vmatpush1.msra.mxu0 %v5899
    %5958 = vmatprep.subr.mxu0 0.0
    %5959 = vmatpush1.msra.mxu0 %v5900
    %5960 = vmatprep.subr.mxu0 0.0
    %5961 = vmatpush1.msra.mxu0 %v5901
    %5962 = vmatprep.subr.mxu0 0.0
    %5963 = vmatpush1.msra.mxu0 %v5902
    %5964 = vmatprep.subr.mxu0 0.0
    %5965 = vmatpush1.msra.mxu0 %v5903
    %5966 = vmatprep.subr.mxu0 0.0
    %5967 = vmatpush1.msra.mxu0 %v5904
    %5968 = vmatprep.subr.mxu0 0.0
    %5969 = vmatpush1.msra.mxu0 %v5905
    %5970 = vmatprep.mubr.f32.mxu0 %v5872
    %5971 = vmatmul.mubr.f32.gmra.mrb[0].mxu0 %v5871
    %v5972 = vpop.f32.mrb[0].mxu0
    %v5973 = vadd.f32 0.0, %v5972
    %v5974 = vpop.f32.mrb[0].mxu0
    %5975 = vdwg.mxu0
    %v5976 = vadd.f32 %v4612, %v5973
    %5977 = vmatprep.subr.mxu0 %v1305
    %5978 = vmatpush1.msra.mxu0 %v1304
    %5979 = vmatprep.subr.mxu0 %v1309
    %5980 = vmatpush1.msra.mxu0 %v1308
    %5981 = vmatprep.subr.mxu0 %v1313
    %5982 = vmatpush1.msra.mxu0 %v1312
    %5983 = vmatprep.subr.mxu0 %v1317
    %5984 = vmatpush1.msra.mxu0 %v1316
    %5985 = vmatprep.subr.mxu0 %v1321
    %5986 = vmatpush1.msra.mxu0 %v1320
    %5987 = vmatprep.subr.mxu0 %v1325
    %5988 = vmatpush1.msra.mxu0 %v1324
    %5989 = vmatprep.subr.mxu0 %v1329
    %5990 = vmatpush1.msra.mxu0 %v1328
    %5991 = vmatprep.subr.mxu0 %v1333
    %5992 = vmatpush1.msra.mxu0 %v1332
    %5993 = vmatprep.subr.mxu0 %v1337
    %5994 = vmatpush1.msra.mxu0 %v1336
    %5995 = vmatprep.subr.mxu0 %v1341
    %5996 = vmatpush1.msra.mxu0 %v1340
    %5997 = vmatprep.subr.mxu0 %v1345
    %5998 = vmatpush1.msra.mxu0 %v1344
    %5999 = vmatprep.subr.mxu0 %v1349
    %6000 = vmatpush1.msra.mxu0 %v1348
    %6001 = vmatprep.subr.mxu0 %v1353
    %6002 = vmatpush1.msra.mxu0 %v1352
    %6003 = vmatprep.subr.mxu0 %v1357
    %6004 = vmatpush1.msra.mxu0 %v1356
    %6005 = vmatprep.subr.mxu0 %v1361
    %6006 = vmatpush1.msra.mxu0 %v1360
    %6007 = vmatprep.subr.mxu0 %v1365
    %6008 = vmatpush1.msra.mxu0 %v1364
    %6009 = vmatprep.subr.mxu0 %v1369
    %6010 = vmatpush1.msra.mxu0 %v1368
    %6011 = vmatprep.subr.mxu0 %v1373
    %6012 = vmatpush1.msra.mxu0 %v1372
    %6013 = vmatprep.subr.mxu0 %v1377
    %6014 = vmatpush1.msra.mxu0 %v1376
    %6015 = vmatprep.subr.mxu0 %v1381
    %6016 = vmatpush1.msra.mxu0 %v1380
    %6017 = vmatprep.subr.mxu0 %v1385
    %6018 = vmatpush1.msra.mxu0 %v1384
    %6019 = vmatprep.subr.mxu0 %v1389
    %6020 = vmatpush1.msra.mxu0 %v1388
    %6021 = vmatprep.subr.mxu0 %v1393
    %6022 = vmatpush1.msra.mxu0 %v1392
    %6023 = vmatprep.subr.mxu0 %v1397
    %6024 = vmatpush1.msra.mxu0 %v1396
    %6025 = vmatprep.subr.mxu0 %v1401
    %6026 = vmatpush1.msra.mxu0 %v1400
    %6027 = vmatprep.subr.mxu0 %v1405
    %6028 = vmatpush1.msra.mxu0 %v1404
    %6029 = vmatprep.subr.mxu0 %v1409
    %6030 = vmatpush1.msra.mxu0 %v1408
    %6031 = vmatprep.subr.mxu0 %v1413
    %6032 = vmatpush1.msra.mxu0 %v1412
    %6033 = vmatprep.subr.mxu0 %v1417
    %6034 = vmatpush1.msra.mxu0 %v1416
    %6035 = vmatprep.subr.mxu0 %v1421
    %6036 = vmatpush1.msra.mxu0 %v1420
    %6037 = vmatprep.subr.mxu0 %v1425
    %6038 = vmatpush1.msra.mxu0 %v1424
    %6039 = vmatprep.subr.mxu0 %v1429
    %6040 = vmatpush1.msra.mxu0 %v1428
    %6041 = vmatprep.mubr.f32.mxu0 %v1100
    %6042 = vmatmul.mubr.f32.gmra.mrb[0].mxu0 %v1099
    %v6043 = vpop.f32.mrb[0].mxu0
    %v6044 = vadd.f32 0.0, %v6043
    %v6045 = vpop.f32.mrb[0].mxu0
    %v6046 = vadd.f32 0.0, %v6045
    %6047 = vmatprep.mubr.f32.mxu0 %v1103
    %6048 = vmatmul.mubr.f32.gmra.mrb[0].mxu0 %v1102
    %v6049 = vpop.f32.mrb[0].mxu0
    %v6050 = vadd.f32 0.0, %v6049
    %v6051 = vpop.f32.mrb[0].mxu0
    %v6052 = vadd.f32 0.0, %v6051
    %6053 = vdwg.mxu0
    %6054 = vmatprep.subr.mxu0 %v1433
    %6055 = vmatpush1.msra.mxu0 %v1432
    %6056 = vmatprep.subr.mxu0 %v1437
    %6057 = vmatpush1.msra.mxu0 %v1436
    %6058 = vmatprep.subr.mxu0 %v1441
    %6059 = vmatpush1.msra.mxu0 %v1440
    %6060 = vmatprep.subr.mxu0 %v1445
    %6061 = vmatpush1.msra.mxu0 %v1444
    %6062 = vmatprep.subr.mxu0 %v1449
    %6063 = vmatpush1.msra.mxu0 %v1448
    %6064 = vmatprep.subr.mxu0 %v1453
    %6065 = vmatpush1.msra.mxu0 %v1452
    %6066 = vmatprep.subr.mxu0 %v1457
    %6067 = vmatpush1.msra.mxu0 %v1456
    %6068 = vmatprep.subr.mxu0 %v1461
    %6069 = vmatpush1.msra.mxu0 %v1460
    %6070 = vmatprep.subr.mxu0 %v1465
    %6071 = vmatpush1.msra.mxu0 %v1464
    %6072 = vmatprep.subr.mxu0 %v1469
    %6073 = vmatpush1.msra.mxu0 %v1468
    %6074 = vmatprep.subr.mxu0 %v1473
    %6075 = vmatpush1.msra.mxu0 %v1472
    %6076 = vmatprep.subr.mxu0 %v1477
    %6077 = vmatpush1.msra.mxu0 %v1476
    %6078 = vmatprep.subr.mxu0 %v1481
    %6079 = vmatpush1.msra.mxu0 %v1480
    %6080 = vmatprep.subr.mxu0 %v1485
    %6081 = vmatpush1.msra.mxu0 %v1484
    %6082 = vmatprep.subr.mxu0 %v1489
    %6083 = vmatpush1.msra.mxu0 %v1488
    %6084 = vmatprep.subr.mxu0 %v1493
    %6085 = vmatpush1.msra.mxu0 %v1492
    %6086 = vmatprep.subr.mxu0 0.0
    %6087 = vmatpush1.msra.mxu0 0.0
    %6088 = vmatprep.subr.mxu0 0.0
    %6089 = vmatpush1.msra.mxu0 0.0
    %6090 = vmatprep.subr.mxu0 0.0
    %6091 = vmatpush1.msra.mxu0 0.0
    %6092 = vmatprep.subr.mxu0 0.0
    %6093 = vmatpush1.msra.mxu0 0.0
    %6094 = vmatprep.subr.mxu0 0.0
    %6095 = vmatpush1.msra.mxu0 0.0
    %6096 = vmatprep.subr.mxu0 0.0
    %6097 = vmatpush1.msra.mxu0 0.0
    %6098 = vmatprep.subr.mxu0 0.0
    %6099 = vmatpush1.msra.mxu0 0.0
    %6100 = vmatprep.subr.mxu0 0.0
    %6101 = vmatpush1.msra.mxu0 0.0
    %6102 = vmatprep.subr.mxu0 0.0
    %6103 = vmatpush1.msra.mxu0 0.0
    %6104 = vmatprep.subr.mxu0 0.0
    %6105 = vmatpush1.msra.mxu0 0.0
    %6106 = vmatprep.subr.mxu0 0.0
    %6107 = vmatpush1.msra.mxu0 0.0
    %6108 = vmatprep.subr.mxu0 0.0
    %6109 = vmatpush1.msra.mxu0 0.0
    %6110 = vmatprep.subr.mxu0 0.0
    %6111 = vmatpush1.msra.mxu0 0.0
    %6112 = vmatprep.subr.mxu0 0.0
    %6113 = vmatpush1.msra.mxu0 0.0
    %6114 = vmatprep.subr.mxu0 0.0
    %6115 = vmatpush1.msra.mxu0 0.0
    %6116 = vmatprep.subr.mxu0 0.0
    %6117 = vmatpush1.msra.mxu0 0.0
    %6118 = vmatprep.mubr.f32.mxu0 0.0
    %6119 = vmatmul.mubr.f32.gmra.mrb[0].mxu0 %v1101
    %v6120 = vpop.f32.mrb[0].mxu0
    %v6121 = vadd.f32 %v6044, %v6120
    %v6122 = vpop.f32.mrb[0].mxu0
    %v6123 = vadd.f32 %v6046, %v6122
    %6124 = vmatprep.mubr.f32.mxu0 0.0
    %6125 = vmatmul.mubr.f32.gmra.mrb[0].mxu0 %v1104
    %v6126 = vpop.f32.mrb[0].mxu0
    %v6127 = vadd.f32 %v6050, %v6126
    %v6128 = vpop.f32.mrb[0].mxu0
    %v6129 = vadd.f32 %v6052, %v6128
    %6130 = vdwg.mxu0
    %6131 = vmatprep.subr.mxu0 %v1307
    %6132 = vmatpush1.msra.mxu0 %v1306
    %6133 = vmatprep.subr.mxu0 %v1311
    %6134 = vmatpush1.msra.mxu0 %v1310
    %6135 = vmatprep.subr.mxu0 %v1315
    %6136 = vmatpush1.msra.mxu0 %v1314
    %6137 = vmatprep.subr.mxu0 %v1319
    %6138 = vmatpush1.msra.mxu0 %v1318
    %6139 = vmatprep.subr.mxu0 %v1323
    %6140 = vmatpush1.msra.mxu0 %v1322
    %6141 = vmatprep.subr.mxu0 %v1327
    %6142 = vmatpush1.msra.mxu0 %v1326
    %6143 = vmatprep.subr.mxu0 %v1331
    %6144 = vmatpush1.msra.mxu0 %v1330
    %6145 = vmatprep.subr.mxu0 %v1335
    %6146 = vmatpush1.msra.mxu0 %v1334
    %6147 = vmatprep.subr.mxu0 %v1339
    %6148 = vmatpush1.msra.mxu0 %v1338
    %6149 = vmatprep.subr.mxu0 %v1343
    %6150 = vmatpush1.msra.mxu0 %v1342
    %6151 = vmatprep.subr.mxu0 %v1347
    %6152 = vmatpush1.msra.mxu0 %v1346
    %6153 = vmatprep.subr.mxu0 %v1351
    %6154 = vmatpush1.msra.mxu0 %v1350
    %6155 = vmatprep.subr.mxu0 %v1355
    %6156 = vmatpush1.msra.mxu0 %v1354
    %6157 = vmatprep.subr.mxu0 %v1359
    %6158 = vmatpush1.msra.mxu0 %v1358
    %6159 = vmatprep.subr.mxu0 %v1363
    %6160 = vmatpush1.msra.mxu0 %v1362
    %6161 = vmatprep.subr.mxu0 %v1367
    %6162 = vmatpush1.msra.mxu0 %v1366
    %6163 = vmatprep.subr.mxu0 %v1371
    %6164 = vmatpush1.msra.mxu0 %v1370
    %6165 = vmatprep.subr.mxu0 %v1375
    %6166 = vmatpush1.msra.mxu0 %v1374
    %6167 = vmatprep.subr.mxu0 %v1379
    %6168 = vmatpush1.msra.mxu0 %v1378
    %6169 = vmatprep.subr.mxu0 %v1383
    %6170 = vmatpush1.msra.mxu0 %v1382
    %6171 = vmatprep.subr.mxu0 %v1387
    %6172 = vmatpush1.msra.mxu0 %v1386
    %6173 = vmatprep.subr.mxu0 %v1391
    %6174 = vmatpush1.msra.mxu0 %v1390
    %6175 = vmatprep.subr.mxu0 %v1395
    %6176 = vmatpush1.msra.mxu0 %v1394
    %6177 = vmatprep.subr.mxu0 %v1399
    %6178 = vmatpush1.msra.mxu0 %v1398
    %6179 = vmatprep.subr.mxu0 %v1403
    %6180 = vmatpush1.msra.mxu0 %v1402
    %6181 = vmatprep.subr.mxu0 %v1407
    %6182 = vmatpush1.msra.mxu0 %v1406
    %6183 = vmatprep.subr.mxu0 %v1411
    %6184 = vmatpush1.msra.mxu0 %v1410
    %6185 = vmatprep.subr.mxu0 %v1415
    %6186 = vmatpush1.msra.mxu0 %v1414
    %6187 = vmatprep.subr.mxu0 %v1419
    %6188 = vmatpush1.msra.mxu0 %v1418
    %6189 = vmatprep.subr.mxu0 %v1423
    %6190 = vmatpush1.msra.mxu0 %v1422
    %6191 = vmatprep.subr.mxu0 %v1427
    %6192 = vmatpush1.msra.mxu0 %v1426
    %6193 = vmatprep.subr.mxu0 %v1431
    %6194 = vmatpush1.msra.mxu0 %v1430
    %6195 = vmatprep.mubr.f32.mxu0 %v1100
    %6196 = vmatmul.mubr.f32.gmra.mrb[0].mxu0 %v1099
    %v6197 = vpop.f32.mrb[0].mxu0
    %v6198 = vadd.f32 0.0, %v6197
    %v6199 = vpop.f32.mrb[0].mxu0
    %v6200 = vadd.f32 0.0, %v6199
    %6201 = vmatprep.mubr.f32.mxu0 %v1103
    %6202 = vmatmul.mubr.f32.gmra.mrb[0].mxu0 %v1102
    %v6203 = vpop.f32.mrb[0].mxu0
    %v6204 = vadd.f32 0.0, %v6203
    %v6205 = vpop.f32.mrb[0].mxu0
    %v6206 = vadd.f32 0.0, %v6205
    %6207 = vdwg.mxu0
    %6208 = vmatprep.subr.mxu0 %v1435
    %6209 = vmatpush1.msra.mxu0 %v1434
    %6210 = vmatprep.subr.mxu0 %v1439
    %6211 = vmatpush1.msra.mxu0 %v1438
    %6212 = vmatprep.subr.mxu0 %v1443
    %6213 = vmatpush1.msra.mxu0 %v1442
    %6214 = vmatprep.subr.mxu0 %v1447
    %6215 = vmatpush1.msra.mxu0 %v1446
    %6216 = vmatprep.subr.mxu0 %v1451
    %6217 = vmatpush1.msra.mxu0 %v1450
    %6218 = vmatprep.subr.mxu0 %v1455
    %6219 = vmatpush1.msra.mxu0 %v1454
    %6220 = vmatprep.subr.mxu0 %v1459
    %6221 = vmatpush1.msra.mxu0 %v1458
    %6222 = vmatprep.subr.mxu0 %v1463
    %6223 = vmatpush1.msra.mxu0 %v1462
    %6224 = vmatprep.subr.mxu0 %v1467
    %6225 = vmatpush1.msra.mxu0 %v1466
    %6226 = vmatprep.subr.mxu0 %v1471
    %6227 = vmatpush1.msra.mxu0 %v1470
    %6228 = vmatprep.subr.mxu0 %v1475
    %6229 = vmatpush1.msra.mxu0 %v1474
    %6230 = vmatprep.subr.mxu0 %v1479
    %6231 = vmatpush1.msra.mxu0 %v1478
    %6232 = vmatprep.subr.mxu0 %v1483
    %6233 = vmatpush1.msra.mxu0 %v1482
    %6234 = vmatprep.subr.mxu0 %v1487
    %6235 = vmatpush1.msra.mxu0 %v1486
    %6236 = vmatprep.subr.mxu0 %v1491
    %6237 = vmatpush1.msra.mxu0 %v1490
    %6238 = vmatprep.subr.mxu0 %v1495
    %6239 = vmatpush1.msra.mxu0 %v1494
    %6240 = vmatprep.subr.mxu0 0.0
    %6241 = vmatpush1.msra.mxu0 0.0
    %6242 = vmatprep.subr.mxu0 0.0
    %6243 = vmatpush1.msra.mxu0 0.0
    %6244 = vmatprep.subr.mxu0 0.0
    %6245 = vmatpush1.msra.mxu0 0.0
    %6246 = vmatprep.subr.mxu0 0.0
    %6247 = vmatpush1.msra.mxu0 0.0
    %6248 = vmatprep.subr.mxu0 0.0
    %6249 = vmatpush1.msra.mxu0 0.0
    %6250 = vmatprep.subr.mxu0 0.0
    %6251 = vmatpush1.msra.mxu0 0.0
    %6252 = vmatprep.subr.mxu0 0.0
    %6253 = vmatpush1.msra.mxu0 0.0
    %6254 = vmatprep.subr.mxu0 0.0
    %6255 = vmatpush1.msra.mxu0 0.0
    %6256 = vmatprep.subr.mxu0 0.0
    %6257 = vmatpush1.msra.mxu0 0.0
    %6258 = vmatprep.subr.mxu0 0.0
    %6259 = vmatpush1.msra.mxu0 0.0
    %6260 = vmatprep.subr.mxu0 0.0
    %6261 = vmatpush1.msra.mxu0 0.0
    %6262 = vmatprep.subr.mxu0 0.0
    %6263 = vmatpush1.msra.mxu0 0.0
    %6264 = vmatprep.subr.mxu0 0.0
    %6265 = vmatpush1.msra.mxu0 0.0
    %6266 = vmatprep.subr.mxu0 0.0
    %6267 = vmatpush1.msra.mxu0 0.0
    %6268 = vmatprep.subr.mxu0 0.0
    %6269 = vmatpush1.msra.mxu0 0.0
    %6270 = vmatprep.subr.mxu0 0.0
    %6271 = vmatpush1.msra.mxu0 0.0
    %6272 = vmatprep.mubr.f32.mxu0 0.0
    %6273 = vmatmul.mubr.f32.gmra.mrb[0].mxu0 %v1101
    %v6274 = vpop.f32.mrb[0].mxu0
    %v6275 = vadd.f32 %v6198, %v6274
    %v6276 = vpop.f32.mrb[0].mxu0
    %v6277 = vadd.f32 %v6200, %v6276
    %6278 = vmatprep.mubr.f32.mxu0 0.0
    %6279 = vmatmul.mubr.f32.gmra.mrb[0].mxu0 %v1104
    %v6280 = vpop.f32.mrb[0].mxu0
    %v6281 = vadd.f32 %v6204, %v6280
    %v6282 = vpop.f32.mrb[0].mxu0
    %v6283 = vadd.f32 %v6206, %v6282
    %6284 = vdwg.mxu0
    %6285 = vmatprep.subr.mxu0 %v1112
    %6286 = vmatpush1.msra.mxu0 %v1111
    %6287 = vmatprep.subr.mxu0 %v1116
    %6288 = vmatpush1.msra.mxu0 %v1115
    %6289 = vmatprep.subr.mxu0 %v1120
    %6290 = vmatpush1.msra.mxu0 %v1119
    %6291 = vmatprep.subr.mxu0 %v1124
    %6292 = vmatpush1.msra.mxu0 %v1123
    %6293 = vmatprep.subr.mxu0 %v1128
    %6294 = vmatpush1.msra.mxu0 %v1127
    %6295 = vmatprep.subr.mxu0 %v1132
    %6296 = vmatpush1.msra.mxu0 %v1131
    %6297 = vmatprep.subr.mxu0 %v1136
    %6298 = vmatpush1.msra.mxu0 %v1135
    %6299 = vmatprep.subr.mxu0 %v1140
    %6300 = vmatpush1.msra.mxu0 %v1139
    %6301 = vmatprep.subr.mxu0 %v1144
    %6302 = vmatpush1.msra.mxu0 %v1143
    %6303 = vmatprep.subr.mxu0 %v1148
    %6304 = vmatpush1.msra.mxu0 %v1147
    %6305 = vmatprep.subr.mxu0 %v1152
    %6306 = vmatpush1.msra.mxu0 %v1151
    %6307 = vmatprep.subr.mxu0 %v1156
    %6308 = vmatpush1.msra.mxu0 %v1155
    %6309 = vmatprep.subr.mxu0 %v1160
    %6310 = vmatpush1.msra.mxu0 %v1159
    %6311 = vmatprep.subr.mxu0 %v1164
    %6312 = vmatpush1.msra.mxu0 %v1163
    %6313 = vmatprep.subr.mxu0 %v1168
    %6314 = vmatpush1.msra.mxu0 %v1167
    %6315 = vmatprep.subr.mxu0 %v1172
    %6316 = vmatpush1.msra.mxu0 %v1171
    %6317 = vmatprep.subr.mxu0 %v1176
    %6318 = vmatpush1.msra.mxu0 %v1175
    %6319 = vmatprep.subr.mxu0 %v1180
    %6320 = vmatpush1.msra.mxu0 %v1179
    %6321 = vmatprep.subr.mxu0 %v1184
    %6322 = vmatpush1.msra.mxu0 %v1183
    %6323 = vmatprep.subr.mxu0 %v1188
    %6324 = vmatpush1.msra.mxu0 %v1187
    %6325 = vmatprep.subr.mxu0 %v1192
    %6326 = vmatpush1.msra.mxu0 %v1191
    %6327 = vmatprep.subr.mxu0 %v1196
    %6328 = vmatpush1.msra.mxu0 %v1195
    %6329 = vmatprep.subr.mxu0 %v1200
    %6330 = vmatpush1.msra.mxu0 %v1199
    %6331 = vmatprep.subr.mxu0 %v1204
    %6332 = vmatpush1.msra.mxu0 %v1203
    %6333 = vmatprep.subr.mxu0 %v1208
    %6334 = vmatpush1.msra.mxu0 %v1207
    %6335 = vmatprep.subr.mxu0 %v1212
    %6336 = vmatpush1.msra.mxu0 %v1211
    %6337 = vmatprep.subr.mxu0 %v1216
    %6338 = vmatpush1.msra.mxu0 %v1215
    %6339 = vmatprep.subr.mxu0 %v1220
    %6340 = vmatpush1.msra.mxu0 %v1219
    %6341 = vmatprep.subr.mxu0 %v1224
    %6342 = vmatpush1.msra.mxu0 %v1223
    %6343 = vmatprep.subr.mxu0 %v1228
    %6344 = vmatpush1.msra.mxu0 %v1227
    %6345 = vmatprep.subr.mxu0 %v1232
    %6346 = vmatpush1.msra.mxu0 %v1231
    %6347 = vmatprep.subr.mxu0 %v1236
    %6348 = vmatpush1.msra.mxu0 %v1235
    %6349 = vmatprep.mubr.f32.mxu0 %v1097
    %6350 = vmatmul.mubr.f32.gmra.mrb[0].mxu0 %v1096
    %v6351 = vpop.f32.mrb[0].mxu0
    %v6352 = vadd.f32 %v6121, %v6351
    %v6353 = vpop.f32.mrb[0].mxu0
    %v6354 = vadd.f32 %v6123, %v6353
    %6355 = vmatprep.mubr.f32.mxu0 %v1100
    %6356 = vmatmul.mubr.f32.gmra.mrb[0].mxu0 %v1099
    %v6357 = vpop.f32.mrb[0].mxu0
    %v6358 = vadd.f32 %v6127, %v6357
    %v6359 = vpop.f32.mrb[0].mxu0
    %v6360 = vadd.f32 %v6129, %v6359
    %6361 = vdwg.mxu0
    %6362 = vmatprep.subr.mxu0 %v1240
    %6363 = vmatpush1.msra.mxu0 %v1239
    %6364 = vmatprep.subr.mxu0 %v1244
    %6365 = vmatpush1.msra.mxu0 %v1243
    %6366 = vmatprep.subr.mxu0 %v1248
    %6367 = vmatpush1.msra.mxu0 %v1247
    %6368 = vmatprep.subr.mxu0 %v1252
    %6369 = vmatpush1.msra.mxu0 %v1251
    %6370 = vmatprep.subr.mxu0 %v1256
    %6371 = vmatpush1.msra.mxu0 %v1255
    %6372 = vmatprep.subr.mxu0 %v1260
    %6373 = vmatpush1.msra.mxu0 %v1259
    %6374 = vmatprep.subr.mxu0 %v1264
    %6375 = vmatpush1.msra.mxu0 %v1263
    %6376 = vmatprep.subr.mxu0 %v1268
    %6377 = vmatpush1.msra.mxu0 %v1267
    %6378 = vmatprep.subr.mxu0 %v1272
    %6379 = vmatpush1.msra.mxu0 %v1271
    %6380 = vmatprep.subr.mxu0 %v1276
    %6381 = vmatpush1.msra.mxu0 %v1275
    %6382 = vmatprep.subr.mxu0 %v1280
    %6383 = vmatpush1.msra.mxu0 %v1279
    %6384 = vmatprep.subr.mxu0 %v1284
    %6385 = vmatpush1.msra.mxu0 %v1283
    %6386 = vmatprep.subr.mxu0 %v1288
    %6387 = vmatpush1.msra.mxu0 %v1287
    %6388 = vmatprep.subr.mxu0 %v1292
    %6389 = vmatpush1.msra.mxu0 %v1291
    %6390 = vmatprep.subr.mxu0 %v1296
    %6391 = vmatpush1.msra.mxu0 %v1295
    %6392 = vmatprep.subr.mxu0 %v1300
    %6393 = vmatpush1.msra.mxu0 %v1299
    %6394 = vmatprep.subr.mxu0 0.0
    %6395 = vmatpush1.msra.mxu0 0.0
    %6396 = vmatprep.subr.mxu0 0.0
    %6397 = vmatpush1.msra.mxu0 0.0
    %6398 = vmatprep.subr.mxu0 0.0
    %6399 = vmatpush1.msra.mxu0 0.0
    %6400 = vmatprep.subr.mxu0 0.0
    %6401 = vmatpush1.msra.mxu0 0.0
    %6402 = vmatprep.subr.mxu0 0.0
    %6403 = vmatpush1.msra.mxu0 0.0
    %6404 = vmatprep.subr.mxu0 0.0
    %6405 = vmatpush1.msra.mxu0 0.0
    %6406 = vmatprep.subr.mxu0 0.0
    %6407 = vmatpush1.msra.mxu0 0.0
    %6408 = vmatprep.subr.mxu0 0.0
    %6409 = vmatpush1.msra.mxu0 0.0
    %6410 = vmatprep.subr.mxu0 0.0
    %6411 = vmatpush1.msra.mxu0 0.0
    %6412 = vmatprep.subr.mxu0 0.0
    %6413 = vmatpush1.msra.mxu0 0.0
    %6414 = vmatprep.subr.mxu0 0.0
    %6415 = vmatpush1.msra.mxu0 0.0
    %6416 = vmatprep.subr.mxu0 0.0
    %6417 = vmatpush1.msra.mxu0 0.0
    %6418 = vmatprep.subr.mxu0 0.0
    %6419 = vmatpush1.msra.mxu0 0.0
    %6420 = vmatprep.subr.mxu0 0.0
    %6421 = vmatpush1.msra.mxu0 0.0
    %6422 = vmatprep.subr.mxu0 0.0
    %6423 = vmatpush1.msra.mxu0 0.0
    %6424 = vmatprep.subr.mxu0 0.0
    %6425 = vmatpush1.msra.mxu0 0.0
    %6426 = vmatprep.mubr.f32.mxu0 0.0
    %6427 = vmatmul.mubr.f32.gmra.mrb[0].mxu0 %v1098
    %v6428 = vpop.f32.mrb[0].mxu0
    %v6429 = vadd.f32 %v6352, %v6428
    %v6430 = vpop.f32.mrb[0].mxu0
    %v6431 = vadd.f32 %v6354, %v6430
    %6432 = vmatprep.mubr.f32.mxu0 0.0
    %6433 = vmatmul.mubr.f32.gmra.mrb[0].mxu0 %v1101
    %v6434 = vpop.f32.mrb[0].mxu0
    %v6435 = vadd.f32 %v6358, %v6434
    %v6436 = vpop.f32.mrb[0].mxu0
    %v6437 = vadd.f32 %v6360, %v6436
    %6438 = vdwg.mxu0
    %6439 = vmatprep.subr.mxu0 %v1114
    %6440 = vmatpush1.msra.mxu0 %v1113
    %6441 = vmatprep.subr.mxu0 %v1118
    %6442 = vmatpush1.msra.mxu0 %v1117
    %6443 = vmatprep.subr.mxu0 %v1122
    %6444 = vmatpush1.msra.mxu0 %v1121
    %6445 = vmatprep.subr.mxu0 %v1126
    %6446 = vmatpush1.msra.mxu0 %v1125
    %6447 = vmatprep.subr.mxu0 %v1130
    %6448 = vmatpush1.msra.mxu0 %v1129
    %6449 = vmatprep.subr.mxu0 %v1134
    %6450 = vmatpush1.msra.mxu0 %v1133
    %6451 = vmatprep.subr.mxu0 %v1138
    %6452 = vmatpush1.msra.mxu0 %v1137
    %6453 = vmatprep.subr.mxu0 %v1142
    %6454 = vmatpush1.msra.mxu0 %v1141
    %6455 = vmatprep.subr.mxu0 %v1146
    %6456 = vmatpush1.msra.mxu0 %v1145
    %6457 = vmatprep.subr.mxu0 %v1150
    %6458 = vmatpush1.msra.mxu0 %v1149
    %6459 = vmatprep.subr.mxu0 %v1154
    %6460 = vmatpush1.msra.mxu0 %v1153
    %6461 = vmatprep.subr.mxu0 %v1158
    %6462 = vmatpush1.msra.mxu0 %v1157
    %6463 = vmatprep.subr.mxu0 %v1162
    %6464 = vmatpush1.msra.mxu0 %v1161
    %6465 = vmatprep.subr.mxu0 %v1166
    %6466 = vmatpush1.msra.mxu0 %v1165
    %6467 = vmatprep.subr.mxu0 %v1170
    %6468 = vmatpush1.msra.mxu0 %v1169
    %6469 = vmatprep.subr.mxu0 %v1174
    %6470 = vmatpush1.msra.mxu0 %v1173
    %6471 = vmatprep.subr.mxu0 %v1178
    %6472 = vmatpush1.msra.mxu0 %v1177
    %6473 = vmatprep.subr.mxu0 %v1182
    %6474 = vmatpush1.msra.mxu0 %v1181
    %6475 = vmatprep.subr.mxu0 %v1186
    %6476 = vmatpush1.msra.mxu0 %v1185
    %6477 = vmatprep.subr.mxu0 %v1190
    %6478 = vmatpush1.msra.mxu0 %v1189
    %6479 = vmatprep.subr.mxu0 %v1194
    %6480 = vmatpush1.msra.mxu0 %v1193
    %6481 = vmatprep.subr.mxu0 %v1198
    %6482 = vmatpush1.msra.mxu0 %v1197
    %6483 = vmatprep.subr.mxu0 %v1202
    %6484 = vmatpush1.msra.mxu0 %v1201
    %6485 = vmatprep.subr.mxu0 %v1206
    %6486 = vmatpush1.msra.mxu0 %v1205
    %6487 = vmatprep.subr.mxu0 %v1210
    %6488 = vmatpush1.msra.mxu0 %v1209
    %6489 = vmatprep.subr.mxu0 %v1214
    %6490 = vmatpush1.msra.mxu0 %v1213
    %6491 = vmatprep.subr.mxu0 %v1218
    %6492 = vmatpush1.msra.mxu0 %v1217
    %6493 = vmatprep.subr.mxu0 %v1222
    %6494 = vmatpush1.msra.mxu0 %v1221
    %6495 = vmatprep.subr.mxu0 %v1226
    %6496 = vmatpush1.msra.mxu0 %v1225
    %6497 = vmatprep.subr.mxu0 %v1230
    %6498 = vmatpush1.msra.mxu0 %v1229
    %6499 = vmatprep.subr.mxu0 %v1234
    %6500 = vmatpush1.msra.mxu0 %v1233
    %6501 = vmatprep.subr.mxu0 %v1238
    %6502 = vmatpush1.msra.mxu0 %v1237
    %6503 = vmatprep.mubr.f32.mxu0 %v1097
    %6504 = vmatmul.mubr.f32.gmra.mrb[0].mxu0 %v1096
    %v6505 = vpop.f32.mrb[0].mxu0
    %v6506 = vadd.f32 %v6275, %v6505
    %v6507 = vpop.f32.mrb[0].mxu0
    %v6508 = vadd.f32 %v6277, %v6507
    %6509 = vmatprep.mubr.f32.mxu0 %v1100
    %6510 = vmatmul.mubr.f32.gmra.mrb[0].mxu0 %v1099
    %v6511 = vpop.f32.mrb[0].mxu0
    %v6512 = vadd.f32 %v6281, %v6511
    %v6513 = vpop.f32.mrb[0].mxu0
    %v6514 = vadd.f32 %v6283, %v6513
    %6515 = vdwg.mxu0
    %6516 = vmatprep.subr.mxu0 %v1242
    %6517 = vmatpush1.msra.mxu0 %v1241
    %6518 = vmatprep.subr.mxu0 %v1246
    %6519 = vmatpush1.msra.mxu0 %v1245
    %6520 = vmatprep.subr.mxu0 %v1250
    %6521 = vmatpush1.msra.mxu0 %v1249
    %6522 = vmatprep.subr.mxu0 %v1254
    %6523 = vmatpush1.msra.mxu0 %v1253
    %6524 = vmatprep.subr.mxu0 %v1258
    %6525 = vmatpush1.msra.mxu0 %v1257
    %6526 = vmatprep.subr.mxu0 %v1262
    %6527 = vmatpush1.msra.mxu0 %v1261
    %6528 = vmatprep.subr.mxu0 %v1266
    %6529 = vmatpush1.msra.mxu0 %v1265
    %6530 = vmatprep.subr.mxu0 %v1270
    %6531 = vmatpush1.msra.mxu0 %v1269
    %6532 = vmatprep.subr.mxu0 %v1274
    %6533 = vmatpush1.msra.mxu0 %v1273
    %6534 = vmatprep.subr.mxu0 %v1278
    %6535 = vmatpush1.msra.mxu0 %v1277
    %6536 = vmatprep.subr.mxu0 %v1282
    %6537 = vmatpush1.msra.mxu0 %v1281
    %6538 = vmatprep.subr.mxu0 %v1286
    %6539 = vmatpush1.msra.mxu0 %v1285
    %6540 = vmatprep.subr.mxu0 %v1290
    %6541 = vmatpush1.msra.mxu0 %v1289
    %6542 = vmatprep.subr.mxu0 %v1294
    %6543 = vmatpush1.msra.mxu0 %v1293
    %6544 = vmatprep.subr.mxu0 %v1298
    %6545 = vmatpush1.msra.mxu0 %v1297
    %6546 = vmatprep.subr.mxu0 %v1302
    %6547 = vmatpush1.msra.mxu0 %v1301
    %6548 = vmatprep.subr.mxu0 0.0
    %6549 = vmatpush1.msra.mxu0 0.0
    %6550 = vmatprep.subr.mxu0 0.0
    %6551 = vmatpush1.msra.mxu0 0.0
    %6552 = vmatprep.subr.mxu0 0.0
    %6553 = vmatpush1.msra.mxu0 0.0
    %6554 = vmatprep.subr.mxu0 0.0
    %6555 = vmatpush1.msra.mxu0 0.0
    %6556 = vmatprep.subr.mxu0 0.0
    %6557 = vmatpush1.msra.mxu0 0.0
    %6558 = vmatprep.subr.mxu0 0.0
    %6559 = vmatpush1.msra.mxu0 0.0
    %6560 = vmatprep.subr.mxu0 0.0
    %6561 = vmatpush1.msra.mxu0 0.0
    %6562 = vmatprep.subr.mxu0 0.0
    %6563 = vmatpush1.msra.mxu0 0.0
    %6564 = vmatprep.subr.mxu0 0.0
    %6565 = vmatpush1.msra.mxu0 0.0
    %6566 = vmatprep.subr.mxu0 0.0
    %6567 = vmatpush1.msra.mxu0 0.0
    %6568 = vmatprep.subr.mxu0 0.0
    %6569 = vmatpush1.msra.mxu0 0.0
    %6570 = vmatprep.subr.mxu0 0.0
    %6571 = vmatpush1.msra.mxu0 0.0
    %6572 = vmatprep.subr.mxu0 0.0
    %6573 = vmatpush1.msra.mxu0 0.0
    %6574 = vmatprep.subr.mxu0 0.0
    %6575 = vmatpush1.msra.mxu0 0.0
    %6576 = vmatprep.subr.mxu0 0.0
    %6577 = vmatpush1.msra.mxu0 0.0
    %6578 = vmatprep.subr.mxu0 0.0
    %6579 = vmatpush1.msra.mxu0 0.0
    %6580 = vmatprep.mubr.f32.mxu0 0.0
    %6581 = vmatmul.mubr.f32.gmra.mrb[0].mxu0 %v1098
    %v6582 = vpop.f32.mrb[0].mxu0
    %v6583 = vadd.f32 %v6506, %v6582
    %v6584 = vpop.f32.mrb[0].mxu0
    %v6585 = vadd.f32 %v6508, %v6584
    %6586 = vmatprep.mubr.f32.mxu0 0.0
    %6587 = vmatmul.mubr.f32.gmra.mrb[0].mxu0 %v1101
    %v6588 = vpop.f32.mrb[0].mxu0
    %v6589 = vadd.f32 %v6512, %v6588
    %v6590 = vpop.f32.mrb[0].mxu0
    %v6591 = vadd.f32 %v6514, %v6590
    %6592 = vdwg.mxu0
    %6593 = vmatprep.subr.mxu0 %v1498
    %6594 = vmatpush1.msra.mxu0 %v1497
    %6595 = vmatprep.subr.mxu0 %v1502
    %6596 = vmatpush1.msra.mxu0 %v1501
    %6597 = vmatprep.subr.mxu0 %v1506
    %6598 = vmatpush1.msra.mxu0 %v1505
    %6599 = vmatprep.subr.mxu0 %v1510
    %6600 = vmatpush1.msra.mxu0 %v1509
    %6601 = vmatprep.subr.mxu0 %v1514
    %6602 = vmatpush1.msra.mxu0 %v1513
    %6603 = vmatprep.subr.mxu0 %v1518
    %6604 = vmatpush1.msra.mxu0 %v1517
    %6605 = vmatprep.subr.mxu0 %v1522
    %6606 = vmatpush1.msra.mxu0 %v1521
    %6607 = vmatprep.subr.mxu0 %v1526
    %6608 = vmatpush1.msra.mxu0 %v1525
    %6609 = vmatprep.subr.mxu0 %v1530
    %6610 = vmatpush1.msra.mxu0 %v1529
    %6611 = vmatprep.subr.mxu0 %v1534
    %6612 = vmatpush1.msra.mxu0 %v1533
    %6613 = vmatprep.subr.mxu0 %v1538
    %6614 = vmatpush1.msra.mxu0 %v1537
    %6615 = vmatprep.subr.mxu0 %v1542
    %6616 = vmatpush1.msra.mxu0 %v1541
    %6617 = vmatprep.subr.mxu0 %v1546
    %6618 = vmatpush1.msra.mxu0 %v1545
    %6619 = vmatprep.subr.mxu0 %v1550
    %6620 = vmatpush1.msra.mxu0 %v1549
    %6621 = vmatprep.subr.mxu0 %v1554
    %6622 = vmatpush1.msra.mxu0 %v1553
    %6623 = vmatprep.subr.mxu0 %v1558
    %6624 = vmatpush1.msra.mxu0 %v1557
    %6625 = vmatprep.subr.mxu0 %v1562
    %6626 = vmatpush1.msra.mxu0 %v1561
    %6627 = vmatprep.subr.mxu0 %v1566
    %6628 = vmatpush1.msra.mxu0 %v1565
    %6629 = vmatprep.subr.mxu0 %v1570
    %6630 = vmatpush1.msra.mxu0 %v1569
    %6631 = vmatprep.subr.mxu0 %v1574
    %6632 = vmatpush1.msra.mxu0 %v1573
    %6633 = vmatprep.subr.mxu0 %v1578
    %6634 = vmatpush1.msra.mxu0 %v1577
    %6635 = vmatprep.subr.mxu0 %v1582
    %6636 = vmatpush1.msra.mxu0 %v1581
    %6637 = vmatprep.subr.mxu0 %v1586
    %6638 = vmatpush1.msra.mxu0 %v1585
    %6639 = vmatprep.subr.mxu0 %v1590
    %6640 = vmatpush1.msra.mxu0 %v1589
    %6641 = vmatprep.subr.mxu0 %v1594
    %6642 = vmatpush1.msra.mxu0 %v1593
    %6643 = vmatprep.subr.mxu0 %v1598
    %6644 = vmatpush1.msra.mxu0 %v1597
    %6645 = vmatprep.subr.mxu0 %v1602
    %6646 = vmatpush1.msra.mxu0 %v1601
    %6647 = vmatprep.subr.mxu0 %v1606
    %6648 = vmatpush1.msra.mxu0 %v1605
    %6649 = vmatprep.subr.mxu0 %v1610
    %6650 = vmatpush1.msra.mxu0 %v1609
    %6651 = vmatprep.subr.mxu0 %v1614
    %6652 = vmatpush1.msra.mxu0 %v1613
    %6653 = vmatprep.subr.mxu0 %v1618
    %6654 = vmatpush1.msra.mxu0 %v1617
    %6655 = vmatprep.subr.mxu0 %v1622
    %6656 = vmatpush1.msra.mxu0 %v1621
    %6657 = vmatprep.mubr.f32.mxu0 %v1103
    %6658 = vmatmul.mubr.f32.gmra.mrb[0].mxu0 %v1102
    %v6659 = vpop.f32.mrb[0].mxu0
    %v6660 = vadd.f32 0.0, %v6659
    %v6661 = vpop.f32.mrb[0].mxu0
    %v6662 = vadd.f32 0.0, %v6661
    %6663 = vmatprep.mubr.f32.mxu0 %v1106
    %6664 = vmatmul.mubr.f32.gmra.mrb[0].mxu0 %v1105
    %v6665 = vpop.f32.mrb[0].mxu0
    %v6666 = vadd.f32 0.0, %v6665
    %v6667 = vpop.f32.mrb[0].mxu0
    %v6668 = vadd.f32 0.0, %v6667
    %6669 = vdwg.mxu0
    %6670 = vmatprep.subr.mxu0 %v1626
    %6671 = vmatpush1.msra.mxu0 %v1625
    %6672 = vmatprep.subr.mxu0 %v1630
    %6673 = vmatpush1.msra.mxu0 %v1629
    %6674 = vmatprep.subr.mxu0 %v1634
    %6675 = vmatpush1.msra.mxu0 %v1633
    %6676 = vmatprep.subr.mxu0 %v1638
    %6677 = vmatpush1.msra.mxu0 %v1637
    %6678 = vmatprep.subr.mxu0 %v1642
    %6679 = vmatpush1.msra.mxu0 %v1641
    %6680 = vmatprep.subr.mxu0 %v1646
    %6681 = vmatpush1.msra.mxu0 %v1645
    %6682 = vmatprep.subr.mxu0 %v1650
    %6683 = vmatpush1.msra.mxu0 %v1649
    %6684 = vmatprep.subr.mxu0 %v1654
    %6685 = vmatpush1.msra.mxu0 %v1653
    %6686 = vmatprep.subr.mxu0 %v1658
    %6687 = vmatpush1.msra.mxu0 %v1657
    %6688 = vmatprep.subr.mxu0 %v1662
    %6689 = vmatpush1.msra.mxu0 %v1661
    %6690 = vmatprep.subr.mxu0 %v1666
    %6691 = vmatpush1.msra.mxu0 %v1665
    %6692 = vmatprep.subr.mxu0 %v1670
    %6693 = vmatpush1.msra.mxu0 %v1669
    %6694 = vmatprep.subr.mxu0 %v1674
    %6695 = vmatpush1.msra.mxu0 %v1673
    %6696 = vmatprep.subr.mxu0 %v1678
    %6697 = vmatpush1.msra.mxu0 %v1677
    %6698 = vmatprep.subr.mxu0 %v1682
    %6699 = vmatpush1.msra.mxu0 %v1681
    %6700 = vmatprep.subr.mxu0 %v1686
    %6701 = vmatpush1.msra.mxu0 %v1685
    %6702 = vmatprep.subr.mxu0 0.0
    %6703 = vmatpush1.msra.mxu0 0.0
    %6704 = vmatprep.subr.mxu0 0.0
    %6705 = vmatpush1.msra.mxu0 0.0
    %6706 = vmatprep.subr.mxu0 0.0
    %6707 = vmatpush1.msra.mxu0 0.0
    %6708 = vmatprep.subr.mxu0 0.0
    %6709 = vmatpush1.msra.mxu0 0.0
    %6710 = vmatprep.subr.mxu0 0.0
    %6711 = vmatpush1.msra.mxu0 0.0
    %6712 = vmatprep.subr.mxu0 0.0
    %6713 = vmatpush1.msra.mxu0 0.0
    %6714 = vmatprep.subr.mxu0 0.0
    %6715 = vmatpush1.msra.mxu0 0.0
    %6716 = vmatprep.subr.mxu0 0.0
    %6717 = vmatpush1.msra.mxu0 0.0
    %6718 = vmatprep.subr.mxu0 0.0
    %6719 = vmatpush1.msra.mxu0 0.0
    %6720 = vmatprep.subr.mxu0 0.0
    %6721 = vmatpush1.msra.mxu0 0.0
    %6722 = vmatprep.subr.mxu0 0.0
    %6723 = vmatpush1.msra.mxu0 0.0
    %6724 = vmatprep.subr.mxu0 0.0
    %6725 = vmatpush1.msra.mxu0 0.0
    %6726 = vmatprep.subr.mxu0 0.0
    %6727 = vmatpush1.msra.mxu0 0.0
    %6728 = vmatprep.subr.mxu0 0.0
    %6729 = vmatpush1.msra.mxu0 0.0
    %6730 = vmatprep.subr.mxu0 0.0
    %6731 = vmatpush1.msra.mxu0 0.0
    %6732 = vmatprep.subr.mxu0 0.0
    %6733 = vmatpush1.msra.mxu0 0.0
    %6734 = vmatprep.mubr.f32.mxu0 0.0
    %6735 = vmatmul.mubr.f32.gmra.mrb[0].mxu0 %v1104
    %v6736 = vpop.f32.mrb[0].mxu0
    %v6737 = vadd.f32 %v6660, %v6736
    %v6738 = vpop.f32.mrb[0].mxu0
    %v6739 = vadd.f32 %v6662, %v6738
    %6740 = vmatprep.mubr.f32.mxu0 0.0
    %6741 = vmatmul.mubr.f32.gmra.mrb[0].mxu0 %v1107
    %v6742 = vpop.f32.mrb[0].mxu0
    %v6743 = vadd.f32 %v6666, %v6742
    %v6744 = vpop.f32.mrb[0].mxu0
    %v6745 = vadd.f32 %v6668, %v6744
    %6746 = vdwg.mxu0
    %6747 = vmatprep.subr.mxu0 %v1500
    %6748 = vmatpush1.msra.mxu0 %v1499
    %6749 = vmatprep.subr.mxu0 %v1504
    %6750 = vmatpush1.msra.mxu0 %v1503
    %6751 = vmatprep.subr.mxu0 %v1508
    %6752 = vmatpush1.msra.mxu0 %v1507
    %6753 = vmatprep.subr.mxu0 %v1512
    %6754 = vmatpush1.msra.mxu0 %v1511
    %6755 = vmatprep.subr.mxu0 %v1516
    %6756 = vmatpush1.msra.mxu0 %v1515
    %6757 = vmatprep.subr.mxu0 %v1520
    %6758 = vmatpush1.msra.mxu0 %v1519
    %6759 = vmatprep.subr.mxu0 %v1524
    %6760 = vmatpush1.msra.mxu0 %v1523
    %6761 = vmatprep.subr.mxu0 %v1528
    %6762 = vmatpush1.msra.mxu0 %v1527
    %6763 = vmatprep.subr.mxu0 %v1532
    %6764 = vmatpush1.msra.mxu0 %v1531
    %6765 = vmatprep.subr.mxu0 %v1536
    %6766 = vmatpush1.msra.mxu0 %v1535
    %6767 = vmatprep.subr.mxu0 %v1540
    %6768 = vmatpush1.msra.mxu0 %v1539
    %6769 = vmatprep.subr.mxu0 %v1544
    %6770 = vmatpush1.msra.mxu0 %v1543
    %6771 = vmatprep.subr.mxu0 %v1548
    %6772 = vmatpush1.msra.mxu0 %v1547
    %6773 = vmatprep.subr.mxu0 %v1552
    %6774 = vmatpush1.msra.mxu0 %v1551
    %6775 = vmatprep.subr.mxu0 %v1556
    %6776 = vmatpush1.msra.mxu0 %v1555
    %6777 = vmatprep.subr.mxu0 %v1560
    %6778 = vmatpush1.msra.mxu0 %v1559
    %6779 = vmatprep.subr.mxu0 %v1564
    %6780 = vmatpush1.msra.mxu0 %v1563
    %6781 = vmatprep.subr.mxu0 %v1568
    %6782 = vmatpush1.msra.mxu0 %v1567
    %6783 = vmatprep.subr.mxu0 %v1572
    %6784 = vmatpush1.msra.mxu0 %v1571
    %6785 = vmatprep.subr.mxu0 %v1576
    %6786 = vmatpush1.msra.mxu0 %v1575
    %6787 = vmatprep.subr.mxu0 %v1580
    %6788 = vmatpush1.msra.mxu0 %v1579
    %6789 = vmatprep.subr.mxu0 %v1584
    %6790 = vmatpush1.msra.mxu0 %v1583
    %6791 = vmatprep.subr.mxu0 %v1588
    %6792 = vmatpush1.msra.mxu0 %v1587
    %6793 = vmatprep.subr.mxu0 %v1592
    %6794 = vmatpush1.msra.mxu0 %v1591
    %6795 = vmatprep.subr.mxu0 %v1596
    %6796 = vmatpush1.msra.mxu0 %v1595
    %6797 = vmatprep.subr.mxu0 %v1600
    %6798 = vmatpush1.msra.mxu0 %v1599
    %6799 = vmatprep.subr.mxu0 %v1604
    %6800 = vmatpush1.msra.mxu0 %v1603
    %6801 = vmatprep.subr.mxu0 %v1608
    %6802 = vmatpush1.msra.mxu0 %v1607
    %6803 = vmatprep.subr.mxu0 %v1612
    %6804 = vmatpush1.msra.mxu0 %v1611
    %6805 = vmatprep.subr.mxu0 %v1616
    %6806 = vmatpush1.msra.mxu0 %v1615
    %6807 = vmatprep.subr.mxu0 %v1620
    %6808 = vmatpush1.msra.mxu0 %v1619
    %6809 = vmatprep.subr.mxu0 %v1624
    %6810 = vmatpush1.msra.mxu0 %v1623
    %6811 = vmatprep.mubr.f32.mxu0 %v1103
    %6812 = vmatmul.mubr.f32.gmra.mrb[0].mxu0 %v1102
    %v6813 = vpop.f32.mrb[0].mxu0
    %v6814 = vadd.f32 0.0, %v6813
    %v6815 = vpop.f32.mrb[0].mxu0
    %v6816 = vadd.f32 0.0, %v6815
    %6817 = vmatprep.mubr.f32.mxu0 %v1106
    %6818 = vmatmul.mubr.f32.gmra.mrb[0].mxu0 %v1105
    %v6819 = vpop.f32.mrb[0].mxu0
    %v6820 = vadd.f32 0.0, %v6819
    %v6821 = vpop.f32.mrb[0].mxu0
    %v6822 = vadd.f32 0.0, %v6821
    %6823 = vdwg.mxu0
    %6824 = vmatprep.subr.mxu0 %v1628
    %6825 = vmatpush1.msra.mxu0 %v1627
    %6826 = vmatprep.subr.mxu0 %v1632
    %6827 = vmatpush1.msra.mxu0 %v1631
    %6828 = vmatprep.subr.mxu0 %v1636
    %6829 = vmatpush1.msra.mxu0 %v1635
    %6830 = vmatprep.subr.mxu0 %v1640
    %6831 = vmatpush1.msra.mxu0 %v1639
    %6832 = vmatprep.subr.mxu0 %v1644
    %6833 = vmatpush1.msra.mxu0 %v1643
    %6834 = vmatprep.subr.mxu0 %v1648
    %6835 = vmatpush1.msra.mxu0 %v1647
    %6836 = vmatprep.subr.mxu0 %v1652
    %6837 = vmatpush1.msra.mxu0 %v1651
    %6838 = vmatprep.subr.mxu0 %v1656
    %6839 = vmatpush1.msra.mxu0 %v1655
    %6840 = vmatprep.subr.mxu0 %v1660
    %6841 = vmatpush1.msra.mxu0 %v1659
    %6842 = vmatprep.subr.mxu0 %v1664
    %6843 = vmatpush1.msra.mxu0 %v1663
    %6844 = vmatprep.subr.mxu0 %v1668
    %6845 = vmatpush1.msra.mxu0 %v1667
    %6846 = vmatprep.subr.mxu0 %v1672
    %6847 = vmatpush1.msra.mxu0 %v1671
    %6848 = vmatprep.subr.mxu0 %v1676
    %6849 = vmatpush1.msra.mxu0 %v1675
    %6850 = vmatprep.subr.mxu0 %v1680
    %6851 = vmatpush1.msra.mxu0 %v1679
    %6852 = vmatprep.subr.mxu0 %v1684
    %6853 = vmatpush1.msra.mxu0 %v1683
    %6854 = vmatprep.subr.mxu0 %v1688
    %6855 = vmatpush1.msra.mxu0 %v1687
    %6856 = vmatprep.subr.mxu0 0.0
    %6857 = vmatpush1.msra.mxu0 0.0
    %6858 = vmatprep.subr.mxu0 0.0
    %6859 = vmatpush1.msra.mxu0 0.0
    %6860 = vmatprep.subr.mxu0 0.0
    %6861 = vmatpush1.msra.mxu0 0.0
    %6862 = vmatprep.subr.mxu0 0.0
    %6863 = vmatpush1.msra.mxu0 0.0
    %6864 = vmatprep.subr.mxu0 0.0
    %6865 = vmatpush1.msra.mxu0 0.0
    %6866 = vmatprep.subr.mxu0 0.0
    %6867 = vmatpush1.msra.mxu0 0.0
    %6868 = vmatprep.subr.mxu0 0.0
    %6869 = vmatpush1.msra.mxu0 0.0
    %6870 = vmatprep.subr.mxu0 0.0
    %6871 = vmatpush1.msra.mxu0 0.0
    %6872 = vmatprep.subr.mxu0 0.0
    %6873 = vmatpush1.msra.mxu0 0.0
    %6874 = vmatprep.subr.mxu0 0.0
    %6875 = vmatpush1.msra.mxu0 0.0
    %6876 = vmatprep.subr.mxu0 0.0
    %6877 = vmatpush1.msra.mxu0 0.0
    %6878 = vmatprep.subr.mxu0 0.0
    %6879 = vmatpush1.msra.mxu0 0.0
    %6880 = vmatprep.subr.mxu0 0.0
    %6881 = vmatpush1.msra.mxu0 0.0
    %6882 = vmatprep.subr.mxu0 0.0
    %6883 = vmatpush1.msra.mxu0 0.0
    %6884 = vmatprep.subr.mxu0 0.0
    %6885 = vmatpush1.msra.mxu0 0.0
    %6886 = vmatprep.subr.mxu0 0.0
    %6887 = vmatpush1.msra.mxu0 0.0
    %6888 = vmatprep.mubr.f32.mxu0 0.0
    %6889 = vmatmul.mubr.f32.gmra.mrb[0].mxu0 %v1104
    %v6890 = vpop.f32.mrb[0].mxu0
    %v6891 = vadd.f32 %v6814, %v6890
    %v6892 = vpop.f32.mrb[0].mxu0
    %v6893 = vadd.f32 %v6816, %v6892
    %6894 = vmatprep.mubr.f32.mxu0 0.0
    %6895 = vmatmul.mubr.f32.gmra.mrb[0].mxu0 %v1107
    %v6896 = vpop.f32.mrb[0].mxu0
    %v6897 = vadd.f32 %v6820, %v6896
    %v6898 = vpop.f32.mrb[0].mxu0
    %v6899 = vadd.f32 %v6822, %v6898
    %6900 = vdwg.mxu0
    %v6901 = vadd.f32 %v6429, %v6737
    %v6902 = vadd.f32 %v6431, %v6739
    %v6903 = vadd.f32 %v6583, %v6891
    %v6904 = vadd.f32 %v6585, %v6893
    %v6905 = vadd.f32 %v6435, %v6743
    %v6906 = vadd.f32 %v6437, %v6745
    %v6907 = vadd.f32 %v6589, %v6897
    %v6908 = vadd.f32 %v6591, %v6899
    %6909 = vmatprep.subr.mxu0 %v1691
    %6910 = vmatpush1.msra.mxu0 %v1690
    %6911 = vmatprep.subr.mxu0 %v1695
    %6912 = vmatpush1.msra.mxu0 %v1694
    %6913 = vmatprep.subr.mxu0 %v1699
    %6914 = vmatpush1.msra.mxu0 %v1698
    %6915 = vmatprep.subr.mxu0 %v1703
    %6916 = vmatpush1.msra.mxu0 %v1702
    %6917 = vmatprep.subr.mxu0 %v1707
    %6918 = vmatpush1.msra.mxu0 %v1706
    %6919 = vmatprep.subr.mxu0 %v1711
    %6920 = vmatpush1.msra.mxu0 %v1710
    %6921 = vmatprep.subr.mxu0 %v1715
    %6922 = vmatpush1.msra.mxu0 %v1714
    %6923 = vmatprep.subr.mxu0 %v1719
    %6924 = vmatpush1.msra.mxu0 %v1718
    %6925 = vmatprep.subr.mxu0 %v1723
    %6926 = vmatpush1.msra.mxu0 %v1722
    %6927 = vmatprep.subr.mxu0 %v1727
    %6928 = vmatpush1.msra.mxu0 %v1726
    %6929 = vmatprep.subr.mxu0 %v1731
    %6930 = vmatpush1.msra.mxu0 %v1730
    %6931 = vmatprep.subr.mxu0 %v1735
    %6932 = vmatpush1.msra.mxu0 %v1734
    %6933 = vmatprep.subr.mxu0 %v1739
    %6934 = vmatpush1.msra.mxu0 %v1738
    %6935 = vmatprep.subr.mxu0 %v1743
    %6936 = vmatpush1.msra.mxu0 %v1742
    %6937 = vmatprep.subr.mxu0 %v1747
    %6938 = vmatpush1.msra.mxu0 %v1746
    %6939 = vmatprep.subr.mxu0 %v1751
    %6940 = vmatpush1.msra.mxu0 %v1750
    %6941 = vmatprep.subr.mxu0 %v1755
    %6942 = vmatpush1.msra.mxu0 %v1754
    %6943 = vmatprep.subr.mxu0 %v1759
    %6944 = vmatpush1.msra.mxu0 %v1758
    %6945 = vmatprep.subr.mxu0 %v1763
    %6946 = vmatpush1.msra.mxu0 %v1762
    %6947 = vmatprep.subr.mxu0 %v1767
    %6948 = vmatpush1.msra.mxu0 %v1766
    %6949 = vmatprep.subr.mxu0 %v1771
    %6950 = vmatpush1.msra.mxu0 %v1770
    %6951 = vmatprep.subr.mxu0 %v1775
    %6952 = vmatpush1.msra.mxu0 %v1774
    %6953 = vmatprep.subr.mxu0 %v1779
    %6954 = vmatpush1.msra.mxu0 %v1778
    %6955 = vmatprep.subr.mxu0 %v1783
    %6956 = vmatpush1.msra.mxu0 %v1782
    %6957 = vmatprep.subr.mxu0 %v1787
    %6958 = vmatpush1.msra.mxu0 %v1786
    %6959 = vmatprep.subr.mxu0 %v1791
    %6960 = vmatpush1.msra.mxu0 %v1790
    %6961 = vmatprep.subr.mxu0 %v1795
    %6962 = vmatpush1.msra.mxu0 %v1794
    %6963 = vmatprep.subr.mxu0 %v1799
    %6964 = vmatpush1.msra.mxu0 %v1798
    %6965 = vmatprep.subr.mxu0 %v1803
    %6966 = vmatpush1.msra.mxu0 %v1802
    %6967 = vmatprep.subr.mxu0 %v1807
    %6968 = vmatpush1.msra.mxu0 %v1806
    %6969 = vmatprep.subr.mxu0 %v1811
    %6970 = vmatpush1.msra.mxu0 %v1810
    %6971 = vmatprep.subr.mxu0 %v1815
    %6972 = vmatpush1.msra.mxu0 %v1814
    %6973 = vmatprep.mubr.f32.mxu0 %v1106
    %6974 = vmatmul.mubr.f32.gmra.mrb[0].mxu0 %v1105
    %v6975 = vpop.f32.mrb[0].mxu0
    %v6976 = vadd.f32 0.0, %v6975
    %v6977 = vpop.f32.mrb[0].mxu0
    %v6978 = vadd.f32 0.0, %v6977
    %6979 = vmatprep.mubr.f32.mxu0 %v1109
    %6980 = vmatmul.mubr.f32.gmra.mrb[0].mxu0 %v1108
    %v6981 = vpop.f32.mrb[0].mxu0
    %v6982 = vadd.f32 0.0, %v6981
    %v6983 = vpop.f32.mrb[0].mxu0
    %v6984 = vadd.f32 0.0, %v6983
    %6985 = vdwg.mxu0
    %6986 = vmatprep.subr.mxu0 %v1819
    %6987 = vmatpush1.msra.mxu0 %v1818
    %6988 = vmatprep.subr.mxu0 %v1823
    %6989 = vmatpush1.msra.mxu0 %v1822
    %6990 = vmatprep.subr.mxu0 %v1827
    %6991 = vmatpush1.msra.mxu0 %v1826
    %6992 = vmatprep.subr.mxu0 %v1831
    %6993 = vmatpush1.msra.mxu0 %v1830
    %6994 = vmatprep.subr.mxu0 %v1835
    %6995 = vmatpush1.msra.mxu0 %v1834
    %6996 = vmatprep.subr.mxu0 %v1839
    %6997 = vmatpush1.msra.mxu0 %v1838
    %6998 = vmatprep.subr.mxu0 %v1843
    %6999 = vmatpush1.msra.mxu0 %v1842
    %7000 = vmatprep.subr.mxu0 %v1847
    %7001 = vmatpush1.msra.mxu0 %v1846
    %7002 = vmatprep.subr.mxu0 %v1851
    %7003 = vmatpush1.msra.mxu0 %v1850
    %7004 = vmatprep.subr.mxu0 %v1855
    %7005 = vmatpush1.msra.mxu0 %v1854
    %7006 = vmatprep.subr.mxu0 %v1859
    %7007 = vmatpush1.msra.mxu0 %v1858
    %7008 = vmatprep.subr.mxu0 %v1863
    %7009 = vmatpush1.msra.mxu0 %v1862
    %7010 = vmatprep.subr.mxu0 %v1867
    %7011 = vmatpush1.msra.mxu0 %v1866
    %7012 = vmatprep.subr.mxu0 %v1871
    %7013 = vmatpush1.msra.mxu0 %v1870
    %7014 = vmatprep.subr.mxu0 %v1875
    %7015 = vmatpush1.msra.mxu0 %v1874
    %7016 = vmatprep.subr.mxu0 %v1879
    %7017 = vmatpush1.msra.mxu0 %v1878
    %7018 = vmatprep.subr.mxu0 0.0
    %7019 = vmatpush1.msra.mxu0 0.0
    %7020 = vmatprep.subr.mxu0 0.0
    %7021 = vmatpush1.msra.mxu0 0.0
    %7022 = vmatprep.subr.mxu0 0.0
    %7023 = vmatpush1.msra.mxu0 0.0
    %7024 = vmatprep.subr.mxu0 0.0
    %7025 = vmatpush1.msra.mxu0 0.0
    %7026 = vmatprep.subr.mxu0 0.0
    %7027 = vmatpush1.msra.mxu0 0.0
    %7028 = vmatprep.subr.mxu0 0.0
    %7029 = vmatpush1.msra.mxu0 0.0
    %7030 = vmatprep.subr.mxu0 0.0
    %7031 = vmatpush1.msra.mxu0 0.0
    %7032 = vmatprep.subr.mxu0 0.0
    %7033 = vmatpush1.msra.mxu0 0.0
    %7034 = vmatprep.subr.mxu0 0.0
    %7035 = vmatpush1.msra.mxu0 0.0
    %7036 = vmatprep.subr.mxu0 0.0
    %7037 = vmatpush1.msra.mxu0 0.0
    %7038 = vmatprep.subr.mxu0 0.0
    %7039 = vmatpush1.msra.mxu0 0.0
    %7040 = vmatprep.subr.mxu0 0.0
    %7041 = vmatpush1.msra.mxu0 0.0
    %7042 = vmatprep.subr.mxu0 0.0
    %7043 = vmatpush1.msra.mxu0 0.0
    %7044 = vmatprep.subr.mxu0 0.0
    %7045 = vmatpush1.msra.mxu0 0.0
    %7046 = vmatprep.subr.mxu0 0.0
    %7047 = vmatpush1.msra.mxu0 0.0
    %7048 = vmatprep.subr.mxu0 0.0
    %7049 = vmatpush1.msra.mxu0 0.0
    %7050 = vmatprep.mubr.f32.mxu0 0.0
    %7051 = vmatmul.mubr.f32.gmra.mrb[0].mxu0 %v1107
    %v7052 = vpop.f32.mrb[0].mxu0
    %v7053 = vadd.f32 %v6976, %v7052
    %v7054 = vpop.f32.mrb[0].mxu0
    %v7055 = vadd.f32 %v6978, %v7054
    %7056 = vmatprep.mubr.f32.mxu0 0.0
    %7057 = vmatmul.mubr.f32.gmra.mrb[0].mxu0 %v1110
    %v7058 = vpop.f32.mrb[0].mxu0
    %v7059 = vadd.f32 %v6982, %v7058
    %v7060 = vpop.f32.mrb[0].mxu0
    %v7061 = vadd.f32 %v6984, %v7060
    %7062 = vdwg.mxu0
    %7063 = vmatprep.subr.mxu0 %v1693
    %7064 = vmatpush1.msra.mxu0 %v1692
    %7065 = vmatprep.subr.mxu0 %v1697
    %7066 = vmatpush1.msra.mxu0 %v1696
    %7067 = vmatprep.subr.mxu0 %v1701
    %7068 = vmatpush1.msra.mxu0 %v1700
    %7069 = vmatprep.subr.mxu0 %v1705
    %7070 = vmatpush1.msra.mxu0 %v1704
    %7071 = vmatprep.subr.mxu0 %v1709
    %7072 = vmatpush1.msra.mxu0 %v1708
    %7073 = vmatprep.subr.mxu0 %v1713
    %7074 = vmatpush1.msra.mxu0 %v1712
    %7075 = vmatprep.subr.mxu0 %v1717
    %7076 = vmatpush1.msra.mxu0 %v1716
    %7077 = vmatprep.subr.mxu0 %v1721
    %7078 = vmatpush1.msra.mxu0 %v1720
    %7079 = vmatprep.subr.mxu0 %v1725
    %7080 = vmatpush1.msra.mxu0 %v1724
    %7081 = vmatprep.subr.mxu0 %v1729
    %7082 = vmatpush1.msra.mxu0 %v1728
    %7083 = vmatprep.subr.mxu0 %v1733
    %7084 = vmatpush1.msra.mxu0 %v1732
    %7085 = vmatprep.subr.mxu0 %v1737
    %7086 = vmatpush1.msra.mxu0 %v1736
    %7087 = vmatprep.subr.mxu0 %v1741
    %7088 = vmatpush1.msra.mxu0 %v1740
    %7089 = vmatprep.subr.mxu0 %v1745
    %7090 = vmatpush1.msra.mxu0 %v1744
    %7091 = vmatprep.subr.mxu0 %v1749
    %7092 = vmatpush1.msra.mxu0 %v1748
    %7093 = vmatprep.subr.mxu0 %v1753
    %7094 = vmatpush1.msra.mxu0 %v1752
    %7095 = vmatprep.subr.mxu0 %v1757
    %7096 = vmatpush1.msra.mxu0 %v1756
    %7097 = vmatprep.subr.mxu0 %v1761
    %7098 = vmatpush1.msra.mxu0 %v1760
    %7099 = vmatprep.subr.mxu0 %v1765
    %7100 = vmatpush1.msra.mxu0 %v1764
    %7101 = vmatprep.subr.mxu0 %v1769
    %7102 = vmatpush1.msra.mxu0 %v1768
    %7103 = vmatprep.subr.mxu0 %v1773
    %7104 = vmatpush1.msra.mxu0 %v1772
    %7105 = vmatprep.subr.mxu0 %v1777
    %7106 = vmatpush1.msra.mxu0 %v1776
    %7107 = vmatprep.subr.mxu0 %v1781
    %7108 = vmatpush1.msra.mxu0 %v1780
    %7109 = vmatprep.subr.mxu0 %v1785
    %7110 = vmatpush1.msra.mxu0 %v1784
    %7111 = vmatprep.subr.mxu0 %v1789
    %7112 = vmatpush1.msra.mxu0 %v1788
    %7113 = vmatprep.subr.mxu0 %v1793
    %7114 = vmatpush1.msra.mxu0 %v1792
    %7115 = vmatprep.subr.mxu0 %v1797
    %7116 = vmatpush1.msra.mxu0 %v1796
    %7117 = vmatprep.subr.mxu0 %v1801
    %7118 = vmatpush1.msra.mxu0 %v1800
    %7119 = vmatprep.subr.mxu0 %v1805
    %7120 = vmatpush1.msra.mxu0 %v1804
    %7121 = vmatprep.subr.mxu0 %v1809
    %7122 = vmatpush1.msra.mxu0 %v1808
    %7123 = vmatprep.subr.mxu0 %v1813
    %7124 = vmatpush1.msra.mxu0 %v1812
    %7125 = vmatprep.subr.mxu0 %v1817
    %7126 = vmatpush1.msra.mxu0 %v1816
    %7127 = vmatprep.mubr.f32.mxu0 %v1106
    %7128 = vmatmul.mubr.f32.gmra.mrb[0].mxu0 %v1105
    %v7129 = vpop.f32.mrb[0].mxu0
    %v7130 = vadd.f32 0.0, %v7129
    %v7131 = vpop.f32.mrb[0].mxu0
    %v7132 = vadd.f32 0.0, %v7131
    %7133 = vmatprep.mubr.f32.mxu0 %v1109
    %7134 = vmatmul.mubr.f32.gmra.mrb[0].mxu0 %v1108
    %v7135 = vpop.f32.mrb[0].mxu0
    %v7136 = vadd.f32 0.0, %v7135
    %v7137 = vpop.f32.mrb[0].mxu0
    %v7138 = vadd.f32 0.0, %v7137
    %7139 = vdwg.mxu0
    %7140 = vmatprep.subr.mxu0 %v1821
    %7141 = vmatpush1.msra.mxu0 %v1820
    %7142 = vmatprep.subr.mxu0 %v1825
    %7143 = vmatpush1.msra.mxu0 %v1824
    %7144 = vmatprep.subr.mxu0 %v1829
    %7145 = vmatpush1.msra.mxu0 %v1828
    %7146 = vmatprep.subr.mxu0 %v1833
    %7147 = vmatpush1.msra.mxu0 %v1832
    %7148 = vmatprep.subr.mxu0 %v1837
    %7149 = vmatpush1.msra.mxu0 %v1836
    %7150 = vmatprep.subr.mxu0 %v1841
    %7151 = vmatpush1.msra.mxu0 %v1840
    %7152 = vmatprep.subr.mxu0 %v1845
    %7153 = vmatpush1.msra.mxu0 %v1844
    %7154 = vmatprep.subr.mxu0 %v1849
    %7155 = vmatpush1.msra.mxu0 %v1848
    %7156 = vmatprep.subr.mxu0 %v1853
    %7157 = vmatpush1.msra.mxu0 %v1852
    %7158 = vmatprep.subr.mxu0 %v1857
    %7159 = vmatpush1.msra.mxu0 %v1856
    %7160 = vmatprep.subr.mxu0 %v1861
    %7161 = vmatpush1.msra.mxu0 %v1860
    %7162 = vmatprep.subr.mxu0 %v1865
    %7163 = vmatpush1.msra.mxu0 %v1864
    %7164 = vmatprep.subr.mxu0 %v1869
    %7165 = vmatpush1.msra.mxu0 %v1868
    %7166 = vmatprep.subr.mxu0 %v1873
    %7167 = vmatpush1.msra.mxu0 %v1872
    %7168 = vmatprep.subr.mxu0 %v1877
    %7169 = vmatpush1.msra.mxu0 %v1876
    %7170 = vmatprep.subr.mxu0 %v1881
    %7171 = vmatpush1.msra.mxu0 %v1880
    %7172 = vmatprep.subr.mxu0 0.0
    %7173 = vmatpush1.msra.mxu0 0.0
    %7174 = vmatprep.subr.mxu0 0.0
    %7175 = vmatpush1.msra.mxu0 0.0
    %7176 = vmatprep.subr.mxu0 0.0
    %7177 = vmatpush1.msra.mxu0 0.0
    %7178 = vmatprep.subr.mxu0 0.0
    %7179 = vmatpush1.msra.mxu0 0.0
    %7180 = vmatprep.subr.mxu0 0.0
    %7181 = vmatpush1.msra.mxu0 0.0
    %7182 = vmatprep.subr.mxu0 0.0
    %7183 = vmatpush1.msra.mxu0 0.0
    %7184 = vmatprep.subr.mxu0 0.0
    %7185 = vmatpush1.msra.mxu0 0.0
    %7186 = vmatprep.subr.mxu0 0.0
    %7187 = vmatpush1.msra.mxu0 0.0
    %7188 = vmatprep.subr.mxu0 0.0
    %7189 = vmatpush1.msra.mxu0 0.0
    %7190 = vmatprep.subr.mxu0 0.0
    %7191 = vmatpush1.msra.mxu0 0.0
    %7192 = vmatprep.subr.mxu0 0.0
    %7193 = vmatpush1.msra.mxu0 0.0
    %7194 = vmatprep.subr.mxu0 0.0
    %7195 = vmatpush1.msra.mxu0 0.0
    %7196 = vmatprep.subr.mxu0 0.0
    %7197 = vmatpush1.msra.mxu0 0.0
    %7198 = vmatprep.subr.mxu0 0.0
    %7199 = vmatpush1.msra.mxu0 0.0
    %7200 = vmatprep.subr.mxu0 0.0
    %7201 = vmatpush1.msra.mxu0 0.0
    %7202 = vmatprep.subr.mxu0 0.0
    %7203 = vmatpush1.msra.mxu0 0.0
    %7204 = vmatprep.mubr.f32.mxu0 0.0
    %7205 = vmatmul.mubr.f32.gmra.mrb[0].mxu0 %v1107
    %v7206 = vpop.f32.mrb[0].mxu0
    %v7207 = vadd.f32 %v7130, %v7206
    %v7208 = vpop.f32.mrb[0].mxu0
    %v7209 = vadd.f32 %v7132, %v7208
    %7210 = vmatprep.mubr.f32.mxu0 0.0
    %7211 = vmatmul.mubr.f32.gmra.mrb[0].mxu0 %v1110
    %v7212 = vpop.f32.mrb[0].mxu0
    %v7213 = vadd.f32 %v7136, %v7212
    %v7214 = vpop.f32.mrb[0].mxu0
    %v7215 = vadd.f32 %v7138, %v7214
    %7216 = vdwg.mxu0
    %v7217 = vadd.f32 %v6901, %v7053
    %v7218 = vadd.f32 %v6902, %v7055
    %v7219 = vadd.f32 %v6903, %v7207
    %v7220 = vadd.f32 %v6904, %v7209
    %v7221 = vadd.f32 %v6905, %v7059
    %v7222 = vadd.f32 %v6906, %v7061
    %v7223 = vadd.f32 %v6907, %v7213
    %v7224 = vadd.f32 %v6908, %v7215
    %v7225 = vmax.f32 %v7217, %v7219
    %v7226 = vmax.f32 %v7218, %v7220
    %v7227 = vmax.f32 %v7221, %v7223
    %v7228 = vmax.f32 %v7222, %v7224
    %v7229 = vmax.f32 %v7225, %v7227
    %v7230 = vmax.f32 %v7226, %v7228
    %v7231 = vadd.f32 %v7229, %v3141
    %v7232 = vadd.f32 %v7230, %v3145
    %v7233 = vmax.f32 %v7231, 0.0
    %v7234 = vmax.f32 %v7232, 0.0
    %s7235 = scalar_lea.vmem [#allocation9], 768
    %v7236 = vld [vmem:[%s7235] sm:$0xff]
    %v7237 = vld [vmem:[%s7235 + $0x8] sm:$0xff]
    %v7238 = vld [vmem:[%s7235 + $0x10] sm:$0xff]
    %v7239 = vld [vmem:[%s7235 + $0x18] sm:$0xff]
    %v7240 = vld [vmem:[%s7235 + $0x20] sm:$0xff]
    %v7241 = vld [vmem:[%s7235 + $0x28] sm:$0xff]
    %v7242 = vld [vmem:[%s7235 + $0x30] sm:$0xff]
    %v7243 = vld [vmem:[%s7235 + $0x38] sm:$0xff]
    %v7244 = vld [vmem:[%s7235 + $0x40] sm:$0xff]
    %v7245 = vld [vmem:[%s7235 + $0x48] sm:$0xff]
    %v7246 = vld [vmem:[%s7235 + $0x50] sm:$0xff]
    %v7247 = vld [vmem:[%s7235 + $0x58] sm:$0xff]
    %v7248 = vld [vmem:[%s7235 + $0x60] sm:$0xff]
    %v7249 = vld [vmem:[%s7235 + $0x68] sm:$0xff]
    %v7250 = vld [vmem:[%s7235 + $0x70] sm:$0xff]
    %v7251 = vld [vmem:[%s7235 + $0x78] sm:$0xff]
    %v7252 = vld [vmem:[%s7235 + $0x80] sm:$0xff]
    %v7253 = vld [vmem:[%s7235 + $0x88] sm:$0xff]
    %v7254 = vld [vmem:[%s7235 + $0x90] sm:$0xff]
    %v7255 = vld [vmem:[%s7235 + $0x98] sm:$0xff]
    %v7256 = vld [vmem:[%s7235 + $0xa0] sm:$0xff]
    %v7257 = vld [vmem:[%s7235 + $0xa8] sm:$0xff]
    %v7258 = vld [vmem:[%s7235 + $0xb0] sm:$0xff]
    %v7259 = vld [vmem:[%s7235 + $0xb8] sm:$0xff]
    %v7260 = vld [vmem:[%s7235 + $0xc0] sm:$0xff]
    %v7261 = vld [vmem:[%s7235 + $0xc8] sm:$0xff]
    %v7262 = vld [vmem:[%s7235 + $0xd0] sm:$0xff]
    %v7263 = vld [vmem:[%s7235 + $0xd8] sm:$0xff]
    %v7264 = vld [vmem:[%s7235 + $0xe0] sm:$0xff]
    %v7265 = vld [vmem:[%s7235 + $0xe8] sm:$0xff]
    %v7266 = vld [vmem:[%s7235 + $0xf0] sm:$0xff]
    %v7267 = vld [vmem:[%s7235 + $0xf8] sm:$0xff]
    %7268 = vmatprep.subr.mxu0 0.0
    %7269 = vmatpush1.msra.mxu0 %v7236
    %7270 = vmatprep.subr.mxu0 0.0
    %7271 = vmatpush1.msra.mxu0 %v7237
    %7272 = vmatprep.subr.mxu0 0.0
    %7273 = vmatpush1.msra.mxu0 %v7238
    %7274 = vmatprep.subr.mxu0 0.0
    %7275 = vmatpush1.msra.mxu0 %v7239
    %7276 = vmatprep.subr.mxu0 0.0
    %7277 = vmatpush1.msra.mxu0 %v7240
    %7278 = vmatprep.subr.mxu0 0.0
    %7279 = vmatpush1.msra.mxu0 %v7241
    %7280 = vmatprep.subr.mxu0 0.0
    %7281 = vmatpush1.msra.mxu0 %v7242
    %7282 = vmatprep.subr.mxu0 0.0
    %7283 = vmatpush1.msra.mxu0 %v7243
    %7284 = vmatprep.subr.mxu0 0.0
    %7285 = vmatpush1.msra.mxu0 %v7244
    %7286 = vmatprep.subr.mxu0 0.0
    %7287 = vmatpush1.msra.mxu0 %v7245
    %7288 = vmatprep.subr.mxu0 0.0
    %7289 = vmatpush1.msra.mxu0 %v7246
    %7290 = vmatprep.subr.mxu0 0.0
    %7291 = vmatpush1.msra.mxu0 %v7247
    %7292 = vmatprep.subr.mxu0 0.0
    %7293 = vmatpush1.msra.mxu0 %v7248
    %7294 = vmatprep.subr.mxu0 0.0
    %7295 = vmatpush1.msra.mxu0 %v7249
    %7296 = vmatprep.subr.mxu0 0.0
    %7297 = vmatpush1.msra.mxu0 %v7250
    %7298 = vmatprep.subr.mxu0 0.0
    %7299 = vmatpush1.msra.mxu0 %v7251
    %7300 = vmatprep.subr.mxu0 0.0
    %7301 = vmatpush1.msra.mxu0 %v7252
    %7302 = vmatprep.subr.mxu0 0.0
    %7303 = vmatpush1.msra.mxu0 %v7253
    %7304 = vmatprep.subr.mxu0 0.0
    %7305 = vmatpush1.msra.mxu0 %v7254
    %7306 = vmatprep.subr.mxu0 0.0
    %7307 = vmatpush1.msra.mxu0 %v7255
    %7308 = vmatprep.subr.mxu0 0.0
    %7309 = vmatpush1.msra.mxu0 %v7256
    %7310 = vmatprep.subr.mxu0 0.0
    %7311 = vmatpush1.msra.mxu0 %v7257
    %7312 = vmatprep.subr.mxu0 0.0
    %7313 = vmatpush1.msra.mxu0 %v7258
    %7314 = vmatprep.subr.mxu0 0.0
    %7315 = vmatpush1.msra.mxu0 %v7259
    %7316 = vmatprep.subr.mxu0 0.0
    %7317 = vmatpush1.msra.mxu0 %v7260
    %7318 = vmatprep.subr.mxu0 0.0
    %7319 = vmatpush1.msra.mxu0 %v7261
    %7320 = vmatprep.subr.mxu0 0.0
    %7321 = vmatpush1.msra.mxu0 %v7262
    %7322 = vmatprep.subr.mxu0 0.0
    %7323 = vmatpush1.msra.mxu0 %v7263
    %7324 = vmatprep.subr.mxu0 0.0
    %7325 = vmatpush1.msra.mxu0 %v7264
    %7326 = vmatprep.subr.mxu0 0.0
    %7327 = vmatpush1.msra.mxu0 %v7265
    %7328 = vmatprep.subr.mxu0 0.0
    %7329 = vmatpush1.msra.mxu0 %v7266
    %7330 = vmatprep.subr.mxu0 0.0
    %7331 = vmatpush1.msra.mxu0 %v7267
    %7332 = vmatprep.mubr.f32.mxu0 %v7234
    %7333 = vmatmul.mubr.f32.gmra.mrb[0].mxu0 %v7233
    %v7334 = vpop.f32.mrb[0].mxu0
    %v7335 = vadd.f32 0.0, %v7334
    %v7336 = vpop.f32.mrb[0].mxu0
    %7337 = vdwg.mxu0
    %v7338 = vadd.f32 %v5976, %v7335
    %v7339 = vld [vmem:[#allocation10] sm:$0x1]
    %v7341 = vlaneseq
    %v7342 = vshrl.u32 %v7341, 7
    %v7343 = vsub.s32 0, %v7342
    %v7344 = vrot.slane %v7339, %v7343
    %v7346 = vadd.f32 %v7338, %v7344
    %v7347 = vmax.f32 %v7346, 0.0
    %v7348 = vld [vmem:[#allocation12] sm:$0xff]
    %v7349 = vld [vmem:[#allocation12 + $0x8] sm:$0xff]
    %v7350 = vld [vmem:[#allocation12 + $0x10] sm:$0xff]
    %v7351 = vld [vmem:[#allocation12 + $0x18] sm:$0xff]
    %v7352 = vld [vmem:[#allocation12 + $0x20] sm:$0xff]
    %v7353 = vld [vmem:[#allocation12 + $0x28] sm:$0xff]
    %v7354 = vld [vmem:[#allocation12 + $0x30] sm:$0xff]
    %v7355 = vld [vmem:[#allocation12 + $0x38] sm:$0xff]
    %v7356 = vld [vmem:[#allocation12 + $0x40] sm:$0xff]
    %v7357 = vld [vmem:[#allocation12 + $0x48] sm:$0xff]
    %v7358 = vld [vmem:[#allocation12 + $0x50] sm:$0xff]
    %v7359 = vld [vmem:[#allocation12 + $0x58] sm:$0xff]
    %v7360 = vld [vmem:[#allocation12 + $0x60] sm:$0xff]
    %v7361 = vld [vmem:[#allocation12 + $0x68] sm:$0xff]
    %v7362 = vld [vmem:[#allocation12 + $0x70] sm:$0xff]
    %v7363 = vld [vmem:[#allocation12 + $0x78] sm:$0xff]
    %v7364 = vld [vmem:[#allocation13] sm:$0x1]
    %v7366 = vlaneseq
    %v7367 = vshrl.u32 %v7366, 7
    %v7368 = vsub.s32 0, %v7367
    %v7369 = vrot.slane %v7364, %v7368
    %7371 = vmatprep.subr.mxu0 0.0
    %7372 = vmatpush1.msra.mxu0 %v7348
    %7373 = vmatprep.subr.mxu0 0.0
    %7374 = vmatpush1.msra.mxu0 %v7349
    %7375 = vmatprep.subr.mxu0 0.0
    %7376 = vmatpush1.msra.mxu0 %v7350
    %7377 = vmatprep.subr.mxu0 0.0
    %7378 = vmatpush1.msra.mxu0 %v7351
    %7379 = vmatprep.subr.mxu0 0.0
    %7380 = vmatpush1.msra.mxu0 %v7352
    %7381 = vmatprep.subr.mxu0 0.0
    %7382 = vmatpush1.msra.mxu0 %v7353
    %7383 = vmatprep.subr.mxu0 0.0
    %7384 = vmatpush1.msra.mxu0 %v7354
    %7385 = vmatprep.subr.mxu0 0.0
    %7386 = vmatpush1.msra.mxu0 %v7355
    %7387 = vmatprep.subr.mxu0 0.0
    %7388 = vmatpush1.msra.mxu0 %v7356
    %7389 = vmatprep.subr.mxu0 0.0
    %7390 = vmatpush1.msra.mxu0 %v7357
    %7391 = vmatprep.subr.mxu0 0.0
    %7392 = vmatpush1.msra.mxu0 %v7358
    %7393 = vmatprep.subr.mxu0 0.0
    %7394 = vmatpush1.msra.mxu0 %v7359
    %7395 = vmatprep.subr.mxu0 0.0
    %7396 = vmatpush1.msra.mxu0 %v7360
    %7397 = vmatprep.subr.mxu0 0.0
    %7398 = vmatpush1.msra.mxu0 %v7361
    %7399 = vmatprep.subr.mxu0 0.0
    %7400 = vmatpush1.msra.mxu0 %v7362
    %7401 = vmatprep.subr.mxu0 0.0
    %7402 = vmatpush1.msra.mxu0 %v7363
    %7403 = vmatprep.subr.mxu0 0.0
    %7404 = vmatpush1.msra.mxu0 0.0
    %7405 = vmatprep.subr.mxu0 0.0
    %7406 = vmatpush1.msra.mxu0 0.0
    %7407 = vmatprep.subr.mxu0 0.0
    %7408 = vmatpush1.msra.mxu0 0.0
    %7409 = vmatprep.subr.mxu0 0.0
    %7410 = vmatpush1.msra.mxu0 0.0
    %7411 = vmatprep.subr.mxu0 0.0
    %7412 = vmatpush1.msra.mxu0 0.0
    %7413 = vmatprep.subr.mxu0 0.0
    %7414 = vmatpush1.msra.mxu0 0.0
    %7415 = vmatprep.subr.mxu0 0.0
    %7416 = vmatpush1.msra.mxu0 0.0
    %7417 = vmatprep.subr.mxu0 0.0
    %7418 = vmatpush1.msra.mxu0 0.0
    %7419 = vmatprep.subr.mxu0 0.0
    %7420 = vmatpush1.msra.mxu0 0.0
    %7421 = vmatprep.subr.mxu0 0.0
    %7422 = vmatpush1.msra.mxu0 0.0
    %7423 = vmatprep.subr.mxu0 0.0
    %7424 = vmatpush1.msra.mxu0 0.0
    %7425 = vmatprep.subr.mxu0 0.0
    %7426 = vmatpush1.msra.mxu0 0.0
    %7427 = vmatprep.subr.mxu0 0.0
    %7428 = vmatpush1.msra.mxu0 0.0
    %7429 = vmatprep.subr.mxu0 0.0
    %7430 = vmatpush1.msra.mxu0 0.0
    %7431 = vmatprep.subr.mxu0 0.0
    %7432 = vmatpush1.msra.mxu0 0.0
    %7433 = vmatprep.subr.mxu0 0.0
    %7434 = vmatpush1.msra.mxu0 0.0
    %7435 = vmatprep.mubr.f32.mxu0 0.0
    %7436 = vmatmul.mubr.f32.gmra.mrb[0].mxu0 %v7347
    %v7437 = vpop.f32.mrb[0].mxu0
    %v7438 = vadd.f32 %v7369, %v7437
    %v7439 = vpop.f32.mrb[0].mxu0
    %7440 = vdwg.mxu0
    %v7441 = vlaneseq
    %v7442 = vand.u32 %v7441, 127
    %vm7443 = vcmp.lt.s32.totalorder %v7442, 10
    %v7444 = vsel %vm7443, %v7438, -1e+30
    %7445 = vmax.xlane.f32.xlu0 %v7444
    %v7446 = vpop.xlane.xlu0 %7445
    %v7447 = vsub.f32 %v7444, %v7446
    %v7448 = vmul.f32 %v7447, 1.442695
    %v7449 = vpow.pop %v7448
    %7450 = vadd.xlane.f32.xlu0 %v7449
    %v7451 = vpop.xlane.xlu0 %7450
    %v7452 = vlog2.pop %v7451
    %v7453 = vmul.f32 %v7452, 0.6931472
    %v7454 = vsub.f32 %v7447, %v7453
    %7455 = vst [vmem:[%s9] sm:$0xff] %v7454
    // Predicated region
    $region70: #{net_forward.1} parent=1 // pred_check
      _
    $region71: #{net_forward.1} parent=1 // pred_check_branch
      %7457 = sbr.rel (0) target = $region73
    $region72: #{net_forward.1} parent=1 // pred_region
      _
    $region73: #{net_forward.1} parent=1 // pred_fallthru
      _
    // Predicated region
    $region74: #{net_forward.1} parent=1 // pred_check
      _
    $region75: #{net_forward.1} parent=1 // pred_check_branch
      %7459 = sbr.rel (0) target = $region77
    $region76: #{net_forward.1} parent=1 // pred_region
      _
    $region77: #{net_forward.1} parent=1 // pred_fallthru
      _
    %7460 = vsyncpa [#allocation3], 1
    %7461 = vsyncpa [#allocation5], 1
    %7462 = vsyncpa [#allocation8], 1
    %7463 = vsyncpa [#allocation11], 1
    %7464 = vsyncpa [#allocation14], 1

</llo_original>
